<compile_context>
chip_gen: v5e
topology: v5e:2x2
jax: 0.10.0
libtpu: 0.0.40
codegen_flags: <defaults>
</compile_context>

<pallas_src>
import jax
import jax.numpy as jnp
from jax.experimental import pallas as pl
from jax.experimental.pallas import tpu as pltpu

FEAT_DIM = 2048          # ResNet-50 layer4 channels (ClassBlock input_dim)
BOTTLENECK = 512         # ClassBlock num_bottleneck
BN_EPS = 1e-5


def _head_kernel(feat_ref, w1_ref, b1_ref, gamma_ref, beta_ref,
                 mean_ref, var_ref, w2_ref, b2_ref, out_ref, acc_ref):
    """Fused: global-avg-pool -> Linear(2048,512) -> BN1d(eval) -> Linear(512,ncls_pad).

    Grid: (batch tiles [parallel], channel tiles [arbitrary, reduction]).
      feat_ref : (bt, ct, HW) NCHW feature tile: channels on sublanes, spatial on lanes
      w1_ref   : (ct, 512)    matching rows of the first Linear weight (bf16)
      acc_ref  : (bt, 512)    running f32 accumulator of pooled @ W1
    """
    k = pl.program_id(1)

    @pl.when(k == 0)
    def _init():
        acc_ref[...] = jnp.zeros_like(acc_ref)

    hw = feat_ref.shape[2]
    # adaptive_avg_pool2d: reduce the lane (spatial) axis, accumulating in f32.
    pooled = jnp.sum(feat_ref[...], axis=2, dtype=jnp.float32) * (1.0 / hw)   # (bt, ct)
    acc_ref[...] += jnp.dot(pooled, w1_ref[...].astype(jnp.float32),
                            preferred_element_type=jnp.float32)

    @pl.when(k == pl.num_programs(1) - 1)
    def _finalize():
        h = acc_ref[...] + b1_ref[...]                         # Linear bias, (1,512) bcast
        inv = jax.lax.rsqrt(var_ref[...] + BN_EPS)             # BatchNorm1d (eval, running stats)
        h = (h - mean_ref[...]) * inv * gamma_ref[...] + beta_ref[...]
        # Dropout(p=0.5) is identity in eval mode.
        logits = jnp.dot(h, w2_ref[...], preferred_element_type=jnp.float32)
        out_ref[...] = (logits + b2_ref[...]).astype(out_ref.dtype)


def _pick_tiles(batch, hw, feat_itemsize, w1_itemsize, budget_bytes=8 << 20):
    """Choose (b_tile, c_tile) so the double-buffered feature + W1 blocks stay within
    `budget_bytes`.  Prefers the largest channel tile (fewest grid steps); tiles the
    batch (multiples of 8) only when one full-batch block would not fit."""
    half = budget_bytes // 2                     # feature + W1 blocks are double-buffered
    for c_tile in (2048, 1024, 512, 256):
        if FEAT_DIM % c_tile:
            continue
        w1_blk = c_tile * BOTTLENECK * w1_itemsize
        per_sample = c_tile * hw * feat_itemsize
        cap = (half - w1_blk) // per_sample
        if cap >= batch:
            return batch, c_tile
        b_tile = max((d for d in range(8, batch + 1, 8)
                      if batch % d == 0 and d <= cap), default=0)
        if b_tile:
            return b_tile, c_tile
    return batch, 256                            # fallback: rely on vmem_limit_bytes


def ft_net_beifen_head_forward(feat_nchw, prepared_params, *, b_tile=None, c_tile=None):
    """feat_nchw: (B, 2048, H, W) backbone feature map.  Returns (B, class_num) f32 logits."""
    (w1, b1_2d, gamma_2d, beta_2d, rmean_2d, rvar_2d,
     w2_pad, b2_pad, class_num) = prepared_params
    B, C, H, W = feat_nchw.shape
    assert C == FEAT_DIM
    hw = H * W
    ncls_pad = w2_pad.shape[1]

    # NCHW -> (B, C, HW): a pure reshape, NO transpose / extra HBM pass.
    feat = feat_nchw.reshape(B, C, hw)

    auto_bt, auto_ct = _pick_tiles(B, hw, feat.dtype.itemsize, w1.dtype.itemsize)
    b_tile = auto_bt if b_tile is None else b_tile
    c_tile = auto_ct if c_tile is None else c_tile
    assert C % c_tile == 0 and B % b_tile == 0

    grid = (B // b_tile, C // c_tile)
    vec_spec = pl.BlockSpec((1, BOTTLENECK), lambda b, k: (0, 0))

    # Explicit VMEM budget (keeps v7x's 64 MiB physical VMEM honest).
    feat_blk = b_tile * c_tile * hw * feat.dtype.itemsize
    w1_blk = c_tile * BOTTLENECK * w1.dtype.itemsize
    fixed = 4 * (5 * BOTTLENECK + BOTTLENECK * ncls_pad + ncls_pad
                 + b_tile * ncls_pad + b_tile * BOTTLENECK)
    vmem_limit = int(min(64 << 20,
                         max(16 << 20, 2 * (feat_blk + w1_blk + fixed) + (2 << 20))))

    out_pad = pl.pallas_call(
        _head_kernel,
        out_shape=jax.ShapeDtypeStruct((B, ncls_pad), jnp.float32),
        grid_spec=pltpu.PrefetchScalarGridSpec(
            num_scalar_prefetch=0,
            grid=grid,
            in_specs=[
                pl.BlockSpec((b_tile, c_tile, hw), lambda b, k: (b, k, 0)),   # features
                pl.BlockSpec((c_tile, BOTTLENECK), lambda b, k: (k, 0)),      # W1 rows (bf16)
                vec_spec,                                                     # b1
                vec_spec,                                                     # gamma
                vec_spec,                                                     # beta
                vec_spec,                                                     # running mean
                vec_spec,                                                     # running var
                pl.BlockSpec((BOTTLENECK, ncls_pad), lambda b, k: (0, 0)),    # W2 (padded)
                pl.BlockSpec((1, ncls_pad), lambda b, k: (0, 0)),             # b2 (padded)
            ],
            out_specs=pl.BlockSpec((b_tile, ncls_pad), lambda b, k: (b, 0)),
            scratch_shapes=[pltpu.VMEM((b_tile, BOTTLENECK), jnp.float32)],
        ),
        compiler_params=pltpu.CompilerParams(
            dimension_semantics=("parallel", "arbitrary"),
            vmem_limit_bytes=vmem_limit),
    )(feat, w1, b1_2d, gamma_2d, beta_2d, rmean_2d, rvar_2d, w2_pad, b2_pad)

    return out_pad[:, :class_num]


def init_params(key, class_num):
    """Deterministic init mirroring weights_init_kaiming / weights_init_classifier."""
    k1, k2, k3 = jax.random.split(key, 3)
    # Linear(2048, 512): kaiming_normal_(mode='fan_out') -> std = sqrt(2 / fan_out)
    w1 = jax.random.normal(k1, (FEAT_DIM, BOTTLENECK), jnp.float32) * jnp.sqrt(2.0 / BOTTLENECK)
    b1 = jnp.zeros((BOTTLENECK,), jnp.float32)
    # BatchNorm1d(512): weight ~ N(1, 0.02), bias = 0, running stats (0, 1)
    gamma = 1.0 + 0.02 * jax.random.normal(k2, (BOTTLENECK,), jnp.float32)
    beta = jnp.zeros((BOTTLENECK,), jnp.float32)
    rmean = jnp.zeros((BOTTLENECK,), jnp.float32)
    rvar = jnp.ones((BOTTLENECK,), jnp.float32)
    # classifier Linear(512, class_num): weight ~ N(0, 0.001), bias = 0
    w2 = 0.001 * jax.random.normal(k3, (BOTTLENECK, class_num), jnp.float32)
    b2 = jnp.zeros((class_num,), jnp.float32)
    return (w1, b1, gamma, beta, rmean, rvar, w2, b2)


def prepare_params(params, class_num):
    """One-time (model-load) prep: bf16 W1, 2-D per-feature rows, class padding to 128 lanes."""
    w1, b1, gamma, beta, rmean, rvar, w2, b2 = params
    ncls_pad = max(128, ((class_num + 127) // 128) * 128)
    w1_bf16 = w1.astype(jnp.bfloat16)                  # halves the dominant HBM stream
    w2_pad = jnp.zeros((BOTTLENECK, ncls_pad), jnp.float32).at[:, :class_num].set(w2)
    b2_pad = jnp.zeros((1, ncls_pad), jnp.float32).at[0, :class_num].set(b2)
    as_row = lambda v: v.reshape(1, BOTTLENECK)
    return (w1_bf16, as_row(b1), as_row(gamma), as_row(beta),
            as_row(rmean), as_row(rvar), w2_pad, b2_pad, class_num)


def reference_forward(feat_nchw, prepared_params):
    """Pure-JAX reference of the same head (eval-mode semantics) on the same params."""
    w1, b1, gamma, beta, rmean, rvar, w2, b2, class_num = prepared_params
    v = jnp.mean(feat_nchw.astype(jnp.float32), axis=(2, 3))          # (B, 2048)
    h = v @ w1.astype(jnp.float32) + b1[0]
    h = (h - rmean[0]) * jax.lax.rsqrt(rvar[0] + BN_EPS) * gamma[0] + beta[0]
    return (h @ w2 + b2[0])[:, :class_num]


if __name__ == "__main__":
    key = jax.random.PRNGKey(0)
    k_feat, k_params = jax.random.split(key)

    B, H, W = 2, 7, 7          # ResNet-50 on 224x224 -> 7x7 layer4 feature map
    class_num = 16

    # Backbone feature-map stand-in (see TODO at top), NCHW, bf16 as a backbone would emit.
    feat = jax.random.normal(k_feat, (B, FEAT_DIM, H, W), jnp.float32).astype(jnp.bfloat16)

    raw_params = init_params(k_params, class_num)
    prepared = prepare_params(raw_params, class_num)

    # Auto tiles (largest channel tile -> minimal grid steps at this size).
    out = ft_net_beifen_head_forward(feat, prepared)
    out = jax.block_until_ready(out)
    # Also exercise the multi-step channel-reduction / accumulator path.
    out_multi = ft_net_beifen_head_forward(feat, prepared, b_tile=B, c_tile=512)
    out_multi = jax.block_until_ready(out_multi)

    ref = reference_forward(feat, prepared)
    assert out.shape == (B, class_num)
    assert jnp.allclose(out, ref, rtol=1e-3, atol=1e-3), "mismatch vs reference (auto tiles)"
    assert jnp.allclose(out_multi, ref, rtol=1e-3, atol=1e-3), "mismatch vs reference (c_tile=512)"

    print("KERNEL_OK")
</pallas_src>

<mosaic_0001>
module attributes {stable_mosaic.version = 11 : i64} {
  func.func @_head_kernel(%arg0: i32, %arg1: i32, %arg2: memref<2x2048x49xbf16, #tpu.memory_space<vmem>>, %arg3: memref<2048x512xbf16, #tpu.memory_space<vmem>>, %arg4: memref<1x512xf32, #tpu.memory_space<vmem>>, %arg5: memref<1x512xf32, #tpu.memory_space<vmem>>, %arg6: memref<1x512xf32, #tpu.memory_space<vmem>>, %arg7: memref<1x512xf32, #tpu.memory_space<vmem>>, %arg8: memref<1x512xf32, #tpu.memory_space<vmem>>, %arg9: memref<512x128xf32, #tpu.memory_space<vmem>>, %arg10: memref<1x128xf32, #tpu.memory_space<vmem>>, %arg11: memref<2x128xf32, #tpu.memory_space<vmem>>, %arg12: memref<2x512xf32, #tpu.memory_space<vmem>>) attributes {dimension_semantics = [#tpu.dimension_semantics<parallel>, #tpu.dimension_semantics<arbitrary>], iteration_bounds = array<i64: 1, 1>, scalar_prefetch = 0 : i64, scratch_operands = 1 : i64, tpu.core_type = #tpu.core_type<tc>, window_params = [{transform_indices = @transform_0, window_bounds = array<i64: 2, 2048, 49>}, {transform_indices = @transform_1, window_bounds = array<i64: 2048, 512>}, {pipeline_mode = #tpu.pipeline_mode<synchronous>, transform_indices = @transform_2, window_bounds = array<i64: 1, 512>}, {pipeline_mode = #tpu.pipeline_mode<synchronous>, transform_indices = @transform_3, window_bounds = array<i64: 1, 512>}, {pipeline_mode = #tpu.pipeline_mode<synchronous>, transform_indices = @transform_4, window_bounds = array<i64: 1, 512>}, {pipeline_mode = #tpu.pipeline_mode<synchronous>, transform_indices = @transform_5, window_bounds = array<i64: 1, 512>}, {pipeline_mode = #tpu.pipeline_mode<synchronous>, transform_indices = @transform_6, window_bounds = array<i64: 1, 512>}, {pipeline_mode = #tpu.pipeline_mode<synchronous>, transform_indices = @transform_7, window_bounds = array<i64: 512, 128>}, {pipeline_mode = #tpu.pipeline_mode<synchronous>, transform_indices = @transform_8, window_bounds = array<i64: 1, 128>}, {transform_indices = @transform_9, window_bounds = array<i64: 2, 128>}]} {
    %c0_i32 = arith.constant 0 : i32
    %0 = arith.cmpi eq, %arg1, %c0_i32 : i32
    %1 = arith.extui %0 : i1 to i32
    %c0_i32_0 = arith.constant 0 : i32
    %2 = arith.cmpi ne, %1, %c0_i32_0 : i32
    scf.if %2 {
      %cst_13 = arith.constant 0.000000e+00 : f32
      %17 = vector.broadcast %cst_13 : f32 to vector<2x512xf32>
      %c0_14 = arith.constant 0 : index
      %c0_15 = arith.constant 0 : index
      %18 = vector.load %arg12[%c0_14, %c0_15] : memref<2x512xf32, #tpu.memory_space<vmem>>, vector<2x512xf32>
      tpu.vector_store %arg12[%c0_14, %c0_15], %17 {strides = array<i32>} : memref<2x512xf32, #tpu.memory_space<vmem>>, vector<2x512xf32>,
    } else {
    }
    %c0 = arith.constant 0 : index
    %c0_1 = arith.constant 0 : index
    %c0_2 = arith.constant 0 : index
    %3 = vector.load %arg2[%c0, %c0_1, %c0_2] : memref<2x2048x49xbf16, #tpu.memory_space<vmem>>, vector<2x2048x49xbf16>
    %4 = arith.extf %3 : vector<2x2048x49xbf16> to vector<2x2048x49xf32>
    %cst = arith.constant dense<0.000000e+00> : vector<2x2048xf32>
    %5 = vector.multi_reduction <add>, %4, %cst [2] : vector<2x2048x49xf32> to vector<2x2048xf32>
    %cst_3 = arith.constant 0.0204081628 : f32
    %6 = vector.broadcast %cst_3 : f32 to vector<2x2048xf32>
    %7 = arith.mulf %5, %6 : vector<2x2048xf32>
    %c0_4 = arith.constant 0 : index
    %c0_5 = arith.constant 0 : index
    %8 = vector.load %arg12[%c0_4, %c0_5] : memref<2x512xf32, #tpu.memory_space<vmem>>, vector<2x512xf32>
    %c0_6 = arith.constant 0 : index
    %c0_7 = arith.constant 0 : index
    %9 = vector.load %arg3[%c0_6, %c0_7] : memref<2048x512xbf16, #tpu.memory_space<vmem>>, vector<2048x512xbf16>
    %10 = arith.extf %9 : vector<2048x512xbf16> to vector<2048x512xf32>
    %cst_8 = arith.constant dense<0.000000e+00> : vector<2x512xf32>
    %11 = tpu.matmul %7, %10, %cst_8 {dimension_numbers = #tpu.dot_dimension_numbers<[1], [0], [0], [1], [0, 0, 1, 1], [], []>} : vector<2x2048xf32>, vector<2048x512xf32>, vector<2x512xf32> -> vector<2x512xf32>
    %12 = arith.addf %8, %11 : vector<2x512xf32>
    %c0_9 = arith.constant 0 : index
    %c0_10 = arith.constant 0 : index
    %13 = vector.load %arg12[%c0_9, %c0_10] : memref<2x512xf32, #tpu.memory_space<vmem>>, vector<2x512xf32>
    tpu.vector_store %arg12[%c0_9, %c0_10], %12 {strides = array<i32>} : memref<2x512xf32, #tpu.memory_space<vmem>>, vector<2x512xf32>,
    %c0_i32_11 = arith.constant 0 : i32
    %14 = arith.cmpi eq, %arg1, %c0_i32_11 : i32
    %15 = arith.extui %14 : i1 to i32
    %c0_i32_12 = arith.constant 0 : i32
    %16 = arith.cmpi ne, %15, %c0_i32_12 : i32
    scf.if %16 {
      %c0_13 = arith.constant 0 : index
      %c0_14 = arith.constant 0 : index
      %17 = vector.load %arg12[%c0_13, %c0_14] : memref<2x512xf32, #tpu.memory_space<vmem>>, vector<2x512xf32>
      %c0_15 = arith.constant 0 : index
      %c0_16 = arith.constant 0 : index
      %18 = vector.load %arg4[%c0_15, %c0_16] : memref<1x512xf32, #tpu.memory_space<vmem>>, vector<1x512xf32>
      %19 = vector.broadcast %18 : vector<1x512xf32> to vector<2x512xf32>
      %20 = arith.addf %17, %19 : vector<2x512xf32>
      %c0_17 = arith.constant 0 : index
      %c0_18 = arith.constant 0 : index
      %21 = vector.load %arg8[%c0_17, %c0_18] : memref<1x512xf32, #tpu.memory_space<vmem>>, vector<1x512xf32>
      %cst_19 = arith.constant 9.99999974E-6 : f32
      %22 = vector.broadcast %cst_19 : f32 to vector<1x512xf32>
      %23 = arith.addf %21, %22 : vector<1x512xf32>
      %24 = math.rsqrt %23 : vector<1x512xf32>
      %c0_20 = arith.constant 0 : index
      %c0_21 = arith.constant 0 : index
      %25 = vector.load %arg7[%c0_20, %c0_21] : memref<1x512xf32, #tpu.memory_space<vmem>>, vector<1x512xf32>
      %26 = vector.broadcast %25 : vector<1x512xf32> to vector<2x512xf32>
      %27 = arith.subf %20, %26 : vector<2x512xf32>
      %28 = vector.broadcast %24 : vector<1x512xf32> to vector<2x512xf32>
      %29 = arith.mulf %27, %28 : vector<2x512xf32>
      %c0_22 = arith.constant 0 : index
      %c0_23 = arith.constant 0 : index
      %30 = vector.load %arg5[%c0_22, %c0_23] : memref<1x512xf32, #tpu.memory_space<vmem>>, vector<1x512xf32>
      %31 = vector.broadcast %30 : vector<1x512xf32> to vector<2x512xf32>
      %32 = arith.mulf %29, %31 : vector<2x512xf32>
      %c0_24 = arith.constant 0 : index
      %c0_25 = arith.constant 0 : index
      %33 = vector.load %arg6[%c0_24, %c0_25] : memref<1x512xf32, #tpu.memory_space<vmem>>, vector<1x512xf32>
      %34 = vector.broadcast %33 : vector<1x512xf32> to vector<2x512xf32>
      %35 = arith.addf %32, %34 : vector<2x512xf32>
      %c0_26 = arith.constant 0 : index
      %c0_27 = arith.constant 0 : index
      %36 = vector.load %arg9[%c0_26, %c0_27] : memref<512x128xf32, #tpu.memory_space<vmem>>, vector<512x128xf32>
      %cst_28 = arith.constant dense<0.000000e+00> : vector<2x128xf32>
      %37 = tpu.matmul %35, %36, %cst_28 {dimension_numbers = #tpu.dot_dimension_numbers<[1], [0], [0], [1], [0, 0, 1, 1], [], []>} : vector<2x512xf32>, vector<512x128xf32>, vector<2x128xf32> -> vector<2x128xf32>
      %c0_29 = arith.constant 0 : index
      %c0_30 = arith.constant 0 : index
      %38 = vector.load %arg10[%c0_29, %c0_30] : memref<1x128xf32, #tpu.memory_space<vmem>>, vector<1x128xf32>
      %39 = vector.broadcast %38 : vector<1x128xf32> to vector<2x128xf32>
      %40 = arith.addf %37, %39 : vector<2x128xf32>
      %c0_31 = arith.constant 0 : index
      %c0_32 = arith.constant 0 : index
      %41 = vector.load %arg11[%c0_31, %c0_32] : memref<2x128xf32, #tpu.memory_space<vmem>>, vector<2x128xf32>
      tpu.vector_store %arg11[%c0_31, %c0_32], %40 {strides = array<i32>} : memref<2x128xf32, #tpu.memory_space<vmem>>, vector<2x128xf32>,
    } else {
    }
    return
  }
  func.func @transform_0(%arg0: i32, %arg1: i32) -> (i32, i32, i32) {
    %c0_i32 = arith.constant 0 : i32
    %c0_i32_0 = arith.constant 0 : i32
    return %arg0, %arg1, %c0_i32 : i32, i32, i32
  }
  func.func @transform_1(%arg0: i32, %arg1: i32) -> (i32, i32) {
    %c0_i32 = arith.constant 0 : i32
    %c0_i32_0 = arith.constant 0 : i32
    return %arg1, %c0_i32 : i32, i32
  }
  func.func @transform_2(%arg0: i32, %arg1: i32) -> (i32, i32) {
    %c0_i32 = arith.constant 0 : i32
    %c0_i32_0 = arith.constant 0 : i32
    %c0_i32_1 = arith.constant 0 : i32
    return %c0_i32, %c0_i32_0 : i32, i32
  }
  func.func @transform_3(%arg0: i32, %arg1: i32) -> (i32, i32) {
    %c0_i32 = arith.constant 0 : i32
    %c0_i32_0 = arith.constant 0 : i32
    %c0_i32_1 = arith.constant 0 : i32
    return %c0_i32, %c0_i32_0 : i32, i32
  }
  func.func @transform_4(%arg0: i32, %arg1: i32) -> (i32, i32) {
    %c0_i32 = arith.constant 0 : i32
    %c0_i32_0 = arith.constant 0 : i32
    %c0_i32_1 = arith.constant 0 : i32
    return %c0_i32, %c0_i32_0 : i32, i32
  }
  func.func @transform_5(%arg0: i32, %arg1: i32) -> (i32, i32) {
    %c0_i32 = arith.constant 0 : i32
    %c0_i32_0 = arith.constant 0 : i32
    %c0_i32_1 = arith.constant 0 : i32
    return %c0_i32, %c0_i32_0 : i32, i32
  }
  func.func @transform_6(%arg0: i32, %arg1: i32) -> (i32, i32) {
    %c0_i32 = arith.constant 0 : i32
    %c0_i32_0 = arith.constant 0 : i32
    %c0_i32_1 = arith.constant 0 : i32
    return %c0_i32, %c0_i32_0 : i32, i32
  }
  func.func @transform_7(%arg0: i32, %arg1: i32) -> (i32, i32) {
    %c0_i32 = arith.constant 0 : i32
    %c0_i32_0 = arith.constant 0 : i32
    %c0_i32_1 = arith.constant 0 : i32
    return %c0_i32, %c0_i32_0 : i32, i32
  }
  func.func @transform_8(%arg0: i32, %arg1: i32) -> (i32, i32) {
    %c0_i32 = arith.constant 0 : i32
    %c0_i32_0 = arith.constant 0 : i32
    %c0_i32_1 = arith.constant 0 : i32
    return %c0_i32, %c0_i32_0 : i32, i32
  }
  func.func @transform_9(%arg0: i32, %arg1: i32) -> (i32, i32) {
    %c0_i32 = arith.constant 0 : i32
    %c0_i32_0 = arith.constant 0 : i32
    return %arg0, %c0_i32 : i32, i32
  }
}

</mosaic_0001>

<llo_original>
// kernel: tpu_custom_call.1
$region0: #{tpu_custom_call.1}
  #allocation0 [shape = 'u32[]', space=smem, size = 0x4, offset = 0x4, fixed_abs, tag = 'smem constant byte address 0x4 - core index']
  #allocation1 [shape = 'u32[72,128]{1,0:T(1,128)}', space=vmem, size = 0x9000, scoped, tag = 'internal scratch']
  #allocation2 [shape = 'f32[2,512]{1,0:T(2,128)}', space=vmem, size = 0x1000, scoped, tag = 'scratch operand']
  %s0 = inlined_call_operand.vmem [shape: bf16[2,2048,49], index: 0, kind: input, shape index: {}]
  %s1 = inlined_call_operand.hbm [shape: bf16[2048,512], index: 1, kind: input, shape index: {}]
  %s2 = inlined_call_operand.hbm [shape: f32[1,512], index: 2, kind: input, shape index: {}]
  %s3 = inlined_call_operand.hbm [shape: f32[1,512], index: 3, kind: input, shape index: {}]
  %s4 = inlined_call_operand.hbm [shape: f32[1,512], index: 4, kind: input, shape index: {}]
  %s5 = inlined_call_operand.hbm [shape: f32[1,512], index: 5, kind: input, shape index: {}]
  %s6 = inlined_call_operand.hbm [shape: f32[1,512], index: 6, kind: input, shape index: {}]
  %s7 = inlined_call_operand.hbm [shape: f32[512,128], index: 7, kind: input, shape index: {}]
  %s8 = inlined_call_operand.hbm [shape: f32[1,128], index: 8, kind: input, shape index: {}]
  %s9 = inlined_call_operand.hbm [shape: f32[2,128], index: 9, kind: output, shape index: {}]
  %s10 = sld [smem:[#allocation0]]
  $region86: #{tpu_custom_call.1} parent=0
    _
  %s12 = ssub.s32 1, %s10
  %s13 = scalar_select 0, %s12, %s10
  $region1: #{tpu_custom_call.1} parent=0
    #allocation3 [shape = 'u8[2097152]{0}', space=vmem, size = 0x200000, scoped, tag = 'input window, operand 1, single buffered']
    #allocation4 [shape = 's32[1]{0}', space=sflag, size = 0x4, scoped, tag = 'scoped memory for tpu_custom_call.1']
    #allocation5 [shape = 's32[1]{0}', space=sflag, size = 0x4, scoped, tag = 'scoped memory for tpu_custom_call.1']
    #allocation6 [shape = 'u8[2048]{0}', space=vmem, size = 0x800, scoped, tag = 'input window, operand 2, single buffered']
    #allocation7 [shape = 's32[1]{0}', space=sflag, size = 0x4, scoped, tag = 'scoped memory for tpu_custom_call.1']
    #allocation8 [shape = 'u8[2048]{0}', space=vmem, size = 0x800, scoped, tag = 'input window, operand 3, single buffered']
    #allocation9 [shape = 'u8[2048]{0}', space=vmem, size = 0x800, scoped, tag = 'input window, operand 4, single buffered']
    #allocation10 [shape = 's32[1]{0}', space=sflag, size = 0x4, scoped, tag = 'scoped memory for tpu_custom_call.1']
    #allocation11 [shape = 'u8[2048]{0}', space=vmem, size = 0x800, scoped, tag = 'input window, operand 5, single buffered']
    #allocation12 [shape = 'u8[2048]{0}', space=vmem, size = 0x800, scoped, tag = 'input window, operand 6, single buffered']
    #allocation13 [shape = 's32[1]{0}', space=sflag, size = 0x4, scoped, tag = 'scoped memory for tpu_custom_call.1']
    #allocation14 [shape = 'u8[262144]{0}', space=vmem, size = 0x40000, scoped, tag = 'input window, operand 7, single buffered']
    #allocation15 [shape = 'u8[512]{0}', space=vmem, size = 0x400, scoped, tag = 'input window, operand 8, single buffered']
    #allocation16 [shape = 's32[1]{0}', space=sflag, size = 0x4, scoped, tag = 'scoped memory for tpu_custom_call.1']
    #allocation17 [shape = 'u8[1024]{0}', space=vmem, size = 0x400, scoped, tag = 'output window, operand 0, single buffered']
    %14 = vsyncpa [#allocation4], 0
    %15 = vsyncpa [#allocation7], 0
    %16 = vsyncpa [#allocation10], 0
    %17 = vsyncpa [#allocation13], 0
    %18 = vsyncpa [#allocation16], 0
    %19 = vsyncpa [#allocation5], 0
    // Predicated region
    $region2: #{tpu_custom_call.1} parent=1 // pred_check
      _
    $region3: #{tpu_custom_call.1} parent=1 // pred_check_branch
      %21 = sbr.rel (0) target = $region5
    $region4: #{tpu_custom_call.1} parent=1 // pred_region
      _
    $region5: #{tpu_custom_call.1} parent=1 // pred_fallthru
      _
    // Predicated region
    $region6: #{tpu_custom_call.1} parent=1 // pred_check
      _
    $region7: #{tpu_custom_call.1} parent=1 // pred_check_branch
      %23 = sbr.rel (0) target = $region9
    $region8: #{tpu_custom_call.1} parent=1 // pred_region
      %25 = vsyncadd [#allocation4], 0
      %s26 = sshll.u32 %s1, 4
      %s27 = int_to_ptr.hbm [resolvable:$true] %s26
      %s28 = sshll.u32 [#allocation3], 4
      %s29 = int_to_ptr.vmem [resolvable:$true] %s28
      %34 = dma.hbm_to_vmem [thread:$0]  %s27, 65536, %s29, [#allocation4], 256, 256, 16
    $region9: #{tpu_custom_call.1} parent=1 // pred_fallthru
      _
    // Predicated region
    $region10: #{tpu_custom_call.1} parent=1 // pred_check
      _
    $region11: #{tpu_custom_call.1} parent=1 // pred_check_branch
      %36 = sbr.rel (0) target = $region13
    $region12: #{tpu_custom_call.1} parent=1 // pred_region
      %38 = vsyncadd [#allocation7], 0
      %s40 = sshll.u32 %s2, 4
      %s41 = int_to_ptr.hbm [resolvable:$true] %s40
      %s42 = sshll.u32 [#allocation6], 4
      %s43 = int_to_ptr.vmem [resolvable:$true] %s42
      %45 = dma.hbm_to_vmem [thread:$0]  %s41, 64, %s43, [#allocation7]
    $region13: #{tpu_custom_call.1} parent=1 // pred_fallthru
      _
    // Predicated region
    $region14: #{tpu_custom_call.1} parent=1 // pred_check
      _
    $region15: #{tpu_custom_call.1} parent=1 // pred_check_branch
      %47 = sbr.rel (0) target = $region17
    $region16: #{tpu_custom_call.1} parent=1 // pred_region
      %49 = vsyncadd [#allocation7], 0
      %s51 = sshll.u32 %s3, 4
      %s52 = int_to_ptr.hbm [resolvable:$true] %s51
      %s53 = sshll.u32 [#allocation8], 4
      %s54 = int_to_ptr.vmem [resolvable:$true] %s53
      %56 = dma.hbm_to_vmem [thread:$0]  %s52, 64, %s54, [#allocation7]
    $region17: #{tpu_custom_call.1} parent=1 // pred_fallthru
      _
    // Predicated region
    $region18: #{tpu_custom_call.1} parent=1 // pred_check
      _
    $region19: #{tpu_custom_call.1} parent=1 // pred_check_branch
      %58 = sbr.rel (0) target = $region21
    $region20: #{tpu_custom_call.1} parent=1 // pred_region
      %60 = vsyncadd [#allocation10], 0
      %s62 = sshll.u32 %s4, 4
      %s63 = int_to_ptr.hbm [resolvable:$true] %s62
      %s64 = sshll.u32 [#allocation9], 4
      %s65 = int_to_ptr.vmem [resolvable:$true] %s64
      %67 = dma.hbm_to_vmem [thread:$0]  %s63, 64, %s65, [#allocation10]
    $region21: #{tpu_custom_call.1} parent=1 // pred_fallthru
      _
    // Predicated region
    $region22: #{tpu_custom_call.1} parent=1 // pred_check
      _
    $region23: #{tpu_custom_call.1} parent=1 // pred_check_branch
      %69 = sbr.rel (0) target = $region25
    $region24: #{tpu_custom_call.1} parent=1 // pred_region
      %71 = vsyncadd [#allocation10], 0
      %s73 = sshll.u32 %s5, 4
      %s74 = int_to_ptr.hbm [resolvable:$true] %s73
      %s75 = sshll.u32 [#allocation11], 4
      %s76 = int_to_ptr.vmem [resolvable:$true] %s75
      %78 = dma.hbm_to_vmem [thread:$0]  %s74, 64, %s76, [#allocation10]
    $region25: #{tpu_custom_call.1} parent=1 // pred_fallthru
      _
    // Predicated region
    $region26: #{tpu_custom_call.1} parent=1 // pred_check
      _
    $region27: #{tpu_custom_call.1} parent=1 // pred_check_branch
      %80 = sbr.rel (0) target = $region29
    $region28: #{tpu_custom_call.1} parent=1 // pred_region
      %82 = vsyncadd [#allocation13], 0
      %s84 = sshll.u32 %s6, 4
      %s85 = int_to_ptr.hbm [resolvable:$true] %s84
      %s86 = sshll.u32 [#allocation12], 4
      %s87 = int_to_ptr.vmem [resolvable:$true] %s86
      %89 = dma.hbm_to_vmem [thread:$0]  %s85, 64, %s87, [#allocation13]
    $region29: #{tpu_custom_call.1} parent=1 // pred_fallthru
      _
    // Predicated region
    $region30: #{tpu_custom_call.1} parent=1 // pred_check
      _
    $region31: #{tpu_custom_call.1} parent=1 // pred_check_branch
      %91 = sbr.rel (0) target = $region33
    $region32: #{tpu_custom_call.1} parent=1 // pred_region
      %93 = vsyncadd [#allocation13], 0
      %s94 = sshll.u32 %s7, 4
      %s95 = int_to_ptr.hbm [resolvable:$true] %s94
      %s96 = sshll.u32 [#allocation14], 4
      %s97 = int_to_ptr.vmem [resolvable:$true] %s96
      %102 = dma.hbm_to_vmem [thread:$0]  %s95, 8192, %s97, [#allocation13], 128, 128, 8
    $region33: #{tpu_custom_call.1} parent=1 // pred_fallthru
      _
    // Predicated region
    $region34: #{tpu_custom_call.1} parent=1 // pred_check
      _
    $region35: #{tpu_custom_call.1} parent=1 // pred_check_branch
      %104 = sbr.rel (0) target = $region37
    $region36: #{tpu_custom_call.1} parent=1 // pred_region
      %106 = vsyncadd [#allocation16], 0
      %s108 = sshll.u32 %s8, 4
      %s109 = int_to_ptr.hbm [resolvable:$true] %s108
      %s110 = sshll.u32 [#allocation15], 4
      %s111 = int_to_ptr.vmem [resolvable:$true] %s110
      %113 = dma.hbm_to_vmem [thread:$0]  %s109, 16, %s111, [#allocation16]
    $region37: #{tpu_custom_call.1} parent=1 // pred_fallthru
      _
    // Predicated region
    $region38: #{tpu_custom_call.1} parent=1 // pred_check
      _
    $region39: #{tpu_custom_call.1} parent=1 // pred_check_branch
      %115 = sbr.rel (0) target = $region41
    $region40: #{tpu_custom_call.1} parent=1 // pred_region
      %117 = dma.done [#allocation4], 65536
    $region41: #{tpu_custom_call.1} parent=1 // pred_fallthru
      _
    // Predicated region
    $region42: #{tpu_custom_call.1} parent=1 // pred_check
      _
    $region43: #{tpu_custom_call.1} parent=1 // pred_check_branch
      %119 = sbr.rel (0) target = $region45
    $region44: #{tpu_custom_call.1} parent=1 // pred_region
      %121 = dma.done [#allocation7], 64
    $region45: #{tpu_custom_call.1} parent=1 // pred_fallthru
      _
    // Predicated region
    $region46: #{tpu_custom_call.1} parent=1 // pred_check
      _
    $region47: #{tpu_custom_call.1} parent=1 // pred_check_branch
      %123 = sbr.rel (0) target = $region49
    $region48: #{tpu_custom_call.1} parent=1 // pred_region
      %125 = dma.done [#allocation7], 64
    $region49: #{tpu_custom_call.1} parent=1 // pred_fallthru
      _
    // Predicated region
    $region50: #{tpu_custom_call.1} parent=1 // pred_check
      _
    $region51: #{tpu_custom_call.1} parent=1 // pred_check_branch
      %127 = sbr.rel (0) target = $region53
    $region52: #{tpu_custom_call.1} parent=1 // pred_region
      %129 = dma.done [#allocation10], 64
    $region53: #{tpu_custom_call.1} parent=1 // pred_fallthru
      _
    // Predicated region
    $region54: #{tpu_custom_call.1} parent=1 // pred_check
      _
    $region55: #{tpu_custom_call.1} parent=1 // pred_check_branch
      %131 = sbr.rel (0) target = $region57
    $region56: #{tpu_custom_call.1} parent=1 // pred_region
      %133 = dma.done [#allocation10], 64
    $region57: #{tpu_custom_call.1} parent=1 // pred_fallthru
      _
    // Predicated region
    $region58: #{tpu_custom_call.1} parent=1 // pred_check
      _
    $region59: #{tpu_custom_call.1} parent=1 // pred_check_branch
      %135 = sbr.rel (0) target = $region61
    $region60: #{tpu_custom_call.1} parent=1 // pred_region
      %137 = dma.done [#allocation13], 64
    $region61: #{tpu_custom_call.1} parent=1 // pred_fallthru
      _
    // Predicated region
    $region62: #{tpu_custom_call.1} parent=1 // pred_check
      _
    $region63: #{tpu_custom_call.1} parent=1 // pred_check_branch
      %139 = sbr.rel (0) target = $region65
    $region64: #{tpu_custom_call.1} parent=1 // pred_region
      %141 = dma.done [#allocation13], 8192
    $region65: #{tpu_custom_call.1} parent=1 // pred_fallthru
      _
    // Predicated region
    $region66: #{tpu_custom_call.1} parent=1 // pred_check
      _
    $region67: #{tpu_custom_call.1} parent=1 // pred_check_branch
      %143 = sbr.rel (0) target = $region69
    $region68: #{tpu_custom_call.1} parent=1 // pred_region
      %145 = dma.done [#allocation16], 16
    $region69: #{tpu_custom_call.1} parent=1 // pred_fallthru
      _
    %p146 = scmp.eq.s32.totalorder 0, 0
    // Predicated region
    $region70: #{tpu_custom_call.1} parent=1 // pred_check
      %p147 = pneg %p146
    $region71: #{tpu_custom_call.1} parent=1 // pred_check_branch
      %149 = sbr.rel (%p147) target = $region73
    $region72: #{tpu_custom_call.1} parent=1 // pred_region
      %150 = vst [vmem:[#allocation2] sm:$0xff] 0.0
    $region73: #{tpu_custom_call.1} parent=1 // pred_fallthru
      _
    %v151 = vld [vmem:[%s0] sm:$0xf]
    %v152 = vld [vmem:[%s0 + $0x4] sm:$0xf]
    %v153 = vld [vmem:[%s0 + $0x8] sm:$0xf]
    %v154 = vld [vmem:[%s0 + $0xc] sm:$0xf]
    %v155 = vld [vmem:[%s0 + $0x10] sm:$0xf]
    %v156 = vld [vmem:[%s0 + $0x14] sm:$0xf]
    %v157 = vld [vmem:[%s0 + $0x18] sm:$0xf]
    %v158 = vld [vmem:[%s0 + $0x1c] sm:$0xf]
    %v159 = vld [vmem:[%s0 + $0x20] sm:$0xf]
    %v160 = vld [vmem:[%s0 + $0x24] sm:$0xf]
    %v161 = vld [vmem:[%s0 + $0x28] sm:$0xf]
    %v162 = vld [vmem:[%s0 + $0x2c] sm:$0xf]
    %v163 = vld [vmem:[%s0 + $0x30] sm:$0xf]
    %v164 = vld [vmem:[%s0 + $0x34] sm:$0xf]
    %v165 = vld [vmem:[%s0 + $0x38] sm:$0xf]
    %v166 = vld [vmem:[%s0 + $0x3c] sm:$0xf]
    %v167 = vld [vmem:[%s0 + $0x40] sm:$0xf]
    %v168 = vld [vmem:[%s0 + $0x44] sm:$0xf]
    %v169 = vld [vmem:[%s0 + $0x48] sm:$0xf]
    %v170 = vld [vmem:[%s0 + $0x4c] sm:$0xf]
    %v171 = vld [vmem:[%s0 + $0x50] sm:$0xf]
    %v172 = vld [vmem:[%s0 + $0x54] sm:$0xf]
    %v173 = vld [vmem:[%s0 + $0x58] sm:$0xf]
    %v174 = vld [vmem:[%s0 + $0x5c] sm:$0xf]
    %v175 = vld [vmem:[%s0 + $0x60] sm:$0xf]
    %v176 = vld [vmem:[%s0 + $0x64] sm:$0xf]
    %v177 = vld [vmem:[%s0 + $0x68] sm:$0xf]
    %v178 = vld [vmem:[%s0 + $0x6c] sm:$0xf]
    %v179 = vld [vmem:[%s0 + $0x70] sm:$0xf]
    %v180 = vld [vmem:[%s0 + $0x74] sm:$0xf]
    %v181 = vld [vmem:[%s0 + $0x78] sm:$0xf]
    %v182 = vld [vmem:[%s0 + $0x7c] sm:$0xf]
    %v183 = vld [vmem:[%s0 + $0x80] sm:$0xf]
    %v184 = vld [vmem:[%s0 + $0x84] sm:$0xf]
    %v185 = vld [vmem:[%s0 + $0x88] sm:$0xf]
    %v186 = vld [vmem:[%s0 + $0x8c] sm:$0xf]
    %v187 = vld [vmem:[%s0 + $0x90] sm:$0xf]
    %v188 = vld [vmem:[%s0 + $0x94] sm:$0xf]
    %v189 = vld [vmem:[%s0 + $0x98] sm:$0xf]
    %v190 = vld [vmem:[%s0 + $0x9c] sm:$0xf]
    %v191 = vld [vmem:[%s0 + $0xa0] sm:$0xf]
    %v192 = vld [vmem:[%s0 + $0xa4] sm:$0xf]
    %v193 = vld [vmem:[%s0 + $0xa8] sm:$0xf]
    %v194 = vld [vmem:[%s0 + $0xac] sm:$0xf]
    %v195 = vld [vmem:[%s0 + $0xb0] sm:$0xf]
    %v196 = vld [vmem:[%s0 + $0xb4] sm:$0xf]
    %v197 = vld [vmem:[%s0 + $0xb8] sm:$0xf]
    %v198 = vld [vmem:[%s0 + $0xbc] sm:$0xf]
    %v199 = vld [vmem:[%s0 + $0xc0] sm:$0xf]
    %v200 = vld [vmem:[%s0 + $0xc4] sm:$0xf]
    %v201 = vld [vmem:[%s0 + $0xc8] sm:$0xf]
    %v202 = vld [vmem:[%s0 + $0xcc] sm:$0xf]
    %v203 = vld [vmem:[%s0 + $0xd0] sm:$0xf]
    %v204 = vld [vmem:[%s0 + $0xd4] sm:$0xf]
    %v205 = vld [vmem:[%s0 + $0xd8] sm:$0xf]
    %v206 = vld [vmem:[%s0 + $0xdc] sm:$0xf]
    %v207 = vld [vmem:[%s0 + $0xe0] sm:$0xf]
    %v208 = vld [vmem:[%s0 + $0xe4] sm:$0xf]
    %v209 = vld [vmem:[%s0 + $0xe8] sm:$0xf]
    %v210 = vld [vmem:[%s0 + $0xec] sm:$0xf]
    %v211 = vld [vmem:[%s0 + $0xf0] sm:$0xf]
    %v212 = vld [vmem:[%s0 + $0xf4] sm:$0xf]
    %v213 = vld [vmem:[%s0 + $0xf8] sm:$0xf]
    %v214 = vld [vmem:[%s0 + $0xfc] sm:$0xf]
    %v215 = vld [vmem:[%s0 + $0x100] sm:$0xf]
    %v216 = vld [vmem:[%s0 + $0x104] sm:$0xf]
    %v217 = vld [vmem:[%s0 + $0x108] sm:$0xf]
    %v218 = vld [vmem:[%s0 + $0x10c] sm:$0xf]
    %v219 = vld [vmem:[%s0 + $0x110] sm:$0xf]
    %v220 = vld [vmem:[%s0 + $0x114] sm:$0xf]
    %v221 = vld [vmem:[%s0 + $0x118] sm:$0xf]
    %v222 = vld [vmem:[%s0 + $0x11c] sm:$0xf]
    %v223 = vld [vmem:[%s0 + $0x120] sm:$0xf]
    %v224 = vld [vmem:[%s0 + $0x124] sm:$0xf]
    %v225 = vld [vmem:[%s0 + $0x128] sm:$0xf]
    %v226 = vld [vmem:[%s0 + $0x12c] sm:$0xf]
    %v227 = vld [vmem:[%s0 + $0x130] sm:$0xf]
    %v228 = vld [vmem:[%s0 + $0x134] sm:$0xf]
    %v229 = vld [vmem:[%s0 + $0x138] sm:$0xf]
    %v230 = vld [vmem:[%s0 + $0x13c] sm:$0xf]
    %v231 = vld [vmem:[%s0 + $0x140] sm:$0xf]
    %v232 = vld [vmem:[%s0 + $0x144] sm:$0xf]
    %v233 = vld [vmem:[%s0 + $0x148] sm:$0xf]
    %v234 = vld [vmem:[%s0 + $0x14c] sm:$0xf]
    %v235 = vld [vmem:[%s0 + $0x150] sm:$0xf]
    %v236 = vld [vmem:[%s0 + $0x154] sm:$0xf]
    %v237 = vld [vmem:[%s0 + $0x158] sm:$0xf]
    %v238 = vld [vmem:[%s0 + $0x15c] sm:$0xf]
    %v239 = vld [vmem:[%s0 + $0x160] sm:$0xf]
    %v240 = vld [vmem:[%s0 + $0x164] sm:$0xf]
    %v241 = vld [vmem:[%s0 + $0x168] sm:$0xf]
    %v242 = vld [vmem:[%s0 + $0x16c] sm:$0xf]
    %v243 = vld [vmem:[%s0 + $0x170] sm:$0xf]
    %v244 = vld [vmem:[%s0 + $0x174] sm:$0xf]
    %v245 = vld [vmem:[%s0 + $0x178] sm:$0xf]
    %v246 = vld [vmem:[%s0 + $0x17c] sm:$0xf]
    %v247 = vld [vmem:[%s0 + $0x180] sm:$0xf]
    %v248 = vld [vmem:[%s0 + $0x184] sm:$0xf]
    %v249 = vld [vmem:[%s0 + $0x188] sm:$0xf]
    %v250 = vld [vmem:[%s0 + $0x18c] sm:$0xf]
    %v251 = vld [vmem:[%s0 + $0x190] sm:$0xf]
    %v252 = vld [vmem:[%s0 + $0x194] sm:$0xf]
    %v253 = vld [vmem:[%s0 + $0x198] sm:$0xf]
    %v254 = vld [vmem:[%s0 + $0x19c] sm:$0xf]
    %v255 = vld [vmem:[%s0 + $0x1a0] sm:$0xf]
    %v256 = vld [vmem:[%s0 + $0x1a4] sm:$0xf]
    %v257 = vld [vmem:[%s0 + $0x1a8] sm:$0xf]
    %v258 = vld [vmem:[%s0 + $0x1ac] sm:$0xf]
    %v259 = vld [vmem:[%s0 + $0x1b0] sm:$0xf]
    %v260 = vld [vmem:[%s0 + $0x1b4] sm:$0xf]
    %v261 = vld [vmem:[%s0 + $0x1b8] sm:$0xf]
    %v262 = vld [vmem:[%s0 + $0x1bc] sm:$0xf]
    %v263 = vld [vmem:[%s0 + $0x1c0] sm:$0xf]
    %v264 = vld [vmem:[%s0 + $0x1c4] sm:$0xf]
    %v265 = vld [vmem:[%s0 + $0x1c8] sm:$0xf]
    %v266 = vld [vmem:[%s0 + $0x1cc] sm:$0xf]
    %v267 = vld [vmem:[%s0 + $0x1d0] sm:$0xf]
    %v268 = vld [vmem:[%s0 + $0x1d4] sm:$0xf]
    %v269 = vld [vmem:[%s0 + $0x1d8] sm:$0xf]
    %v270 = vld [vmem:[%s0 + $0x1dc] sm:$0xf]
    %v271 = vld [vmem:[%s0 + $0x1e0] sm:$0xf]
    %v272 = vld [vmem:[%s0 + $0x1e4] sm:$0xf]
    %v273 = vld [vmem:[%s0 + $0x1e8] sm:$0xf]
    %v274 = vld [vmem:[%s0 + $0x1ec] sm:$0xf]
    %v275 = vld [vmem:[%s0 + $0x1f0] sm:$0xf]
    %v276 = vld [vmem:[%s0 + $0x1f4] sm:$0xf]
    %v277 = vld [vmem:[%s0 + $0x1f8] sm:$0xf]
    %v278 = vld [vmem:[%s0 + $0x1fc] sm:$0xf]
    %v279 = vld [vmem:[%s0 + $0x200] sm:$0xf]
    %v280 = vld [vmem:[%s0 + $0x204] sm:$0xf]
    %v281 = vld [vmem:[%s0 + $0x208] sm:$0xf]
    %v282 = vld [vmem:[%s0 + $0x20c] sm:$0xf]
    %v283 = vld [vmem:[%s0 + $0x210] sm:$0xf]
    %v284 = vld [vmem:[%s0 + $0x214] sm:$0xf]
    %v285 = vld [vmem:[%s0 + $0x218] sm:$0xf]
    %v286 = vld [vmem:[%s0 + $0x21c] sm:$0xf]
    %v287 = vld [vmem:[%s0 + $0x220] sm:$0xf]
    %v288 = vld [vmem:[%s0 + $0x224] sm:$0xf]
    %v289 = vld [vmem:[%s0 + $0x228] sm:$0xf]
    %v290 = vld [vmem:[%s0 + $0x22c] sm:$0xf]
    %v291 = vld [vmem:[%s0 + $0x230] sm:$0xf]
    %v292 = vld [vmem:[%s0 + $0x234] sm:$0xf]
    %v293 = vld [vmem:[%s0 + $0x238] sm:$0xf]
    %v294 = vld [vmem:[%s0 + $0x23c] sm:$0xf]
    %v295 = vld [vmem:[%s0 + $0x240] sm:$0xf]
    %v296 = vld [vmem:[%s0 + $0x244] sm:$0xf]
    %v297 = vld [vmem:[%s0 + $0x248] sm:$0xf]
    %v298 = vld [vmem:[%s0 + $0x24c] sm:$0xf]
    %v299 = vld [vmem:[%s0 + $0x250] sm:$0xf]
    %v300 = vld [vmem:[%s0 + $0x254] sm:$0xf]
    %v301 = vld [vmem:[%s0 + $0x258] sm:$0xf]
    %v302 = vld [vmem:[%s0 + $0x25c] sm:$0xf]
    %v303 = vld [vmem:[%s0 + $0x260] sm:$0xf]
    %v304 = vld [vmem:[%s0 + $0x264] sm:$0xf]
    %v305 = vld [vmem:[%s0 + $0x268] sm:$0xf]
    %v306 = vld [vmem:[%s0 + $0x26c] sm:$0xf]
    %v307 = vld [vmem:[%s0 + $0x270] sm:$0xf]
    %v308 = vld [vmem:[%s0 + $0x274] sm:$0xf]
    %v309 = vld [vmem:[%s0 + $0x278] sm:$0xf]
    %v310 = vld [vmem:[%s0 + $0x27c] sm:$0xf]
    %v311 = vld [vmem:[%s0 + $0x280] sm:$0xf]
    %v312 = vld [vmem:[%s0 + $0x284] sm:$0xf]
    %v313 = vld [vmem:[%s0 + $0x288] sm:$0xf]
    %v314 = vld [vmem:[%s0 + $0x28c] sm:$0xf]
    %v315 = vld [vmem:[%s0 + $0x290] sm:$0xf]
    %v316 = vld [vmem:[%s0 + $0x294] sm:$0xf]
    %v317 = vld [vmem:[%s0 + $0x298] sm:$0xf]
    %v318 = vld [vmem:[%s0 + $0x29c] sm:$0xf]
    %v319 = vld [vmem:[%s0 + $0x2a0] sm:$0xf]
    %v320 = vld [vmem:[%s0 + $0x2a4] sm:$0xf]
    %v321 = vld [vmem:[%s0 + $0x2a8] sm:$0xf]
    %v322 = vld [vmem:[%s0 + $0x2ac] sm:$0xf]
    %v323 = vld [vmem:[%s0 + $0x2b0] sm:$0xf]
    %v324 = vld [vmem:[%s0 + $0x2b4] sm:$0xf]
    %v325 = vld [vmem:[%s0 + $0x2b8] sm:$0xf]
    %v326 = vld [vmem:[%s0 + $0x2bc] sm:$0xf]
    %v327 = vld [vmem:[%s0 + $0x2c0] sm:$0xf]
    %v328 = vld [vmem:[%s0 + $0x2c4] sm:$0xf]
    %v329 = vld [vmem:[%s0 + $0x2c8] sm:$0xf]
    %v330 = vld [vmem:[%s0 + $0x2cc] sm:$0xf]
    %v331 = vld [vmem:[%s0 + $0x2d0] sm:$0xf]
    %v332 = vld [vmem:[%s0 + $0x2d4] sm:$0xf]
    %v333 = vld [vmem:[%s0 + $0x2d8] sm:$0xf]
    %v334 = vld [vmem:[%s0 + $0x2dc] sm:$0xf]
    %v335 = vld [vmem:[%s0 + $0x2e0] sm:$0xf]
    %v336 = vld [vmem:[%s0 + $0x2e4] sm:$0xf]
    %v337 = vld [vmem:[%s0 + $0x2e8] sm:$0xf]
    %v338 = vld [vmem:[%s0 + $0x2ec] sm:$0xf]
    %v339 = vld [vmem:[%s0 + $0x2f0] sm:$0xf]
    %v340 = vld [vmem:[%s0 + $0x2f4] sm:$0xf]
    %v341 = vld [vmem:[%s0 + $0x2f8] sm:$0xf]
    %v342 = vld [vmem:[%s0 + $0x2fc] sm:$0xf]
    %v343 = vld [vmem:[%s0 + $0x300] sm:$0xf]
    %v344 = vld [vmem:[%s0 + $0x304] sm:$0xf]
    %v345 = vld [vmem:[%s0 + $0x308] sm:$0xf]
    %v346 = vld [vmem:[%s0 + $0x30c] sm:$0xf]
    %v347 = vld [vmem:[%s0 + $0x310] sm:$0xf]
    %v348 = vld [vmem:[%s0 + $0x314] sm:$0xf]
    %v349 = vld [vmem:[%s0 + $0x318] sm:$0xf]
    %v350 = vld [vmem:[%s0 + $0x31c] sm:$0xf]
    %v351 = vld [vmem:[%s0 + $0x320] sm:$0xf]
    %v352 = vld [vmem:[%s0 + $0x324] sm:$0xf]
    %v353 = vld [vmem:[%s0 + $0x328] sm:$0xf]
    %v354 = vld [vmem:[%s0 + $0x32c] sm:$0xf]
    %v355 = vld [vmem:[%s0 + $0x330] sm:$0xf]
    %v356 = vld [vmem:[%s0 + $0x334] sm:$0xf]
    %v357 = vld [vmem:[%s0 + $0x338] sm:$0xf]
    %v358 = vld [vmem:[%s0 + $0x33c] sm:$0xf]
    %v359 = vld [vmem:[%s0 + $0x340] sm:$0xf]
    %v360 = vld [vmem:[%s0 + $0x344] sm:$0xf]
    %v361 = vld [vmem:[%s0 + $0x348] sm:$0xf]
    %v362 = vld [vmem:[%s0 + $0x34c] sm:$0xf]
    %v363 = vld [vmem:[%s0 + $0x350] sm:$0xf]
    %v364 = vld [vmem:[%s0 + $0x354] sm:$0xf]
    %v365 = vld [vmem:[%s0 + $0x358] sm:$0xf]
    %v366 = vld [vmem:[%s0 + $0x35c] sm:$0xf]
    %v367 = vld [vmem:[%s0 + $0x360] sm:$0xf]
    %v368 = vld [vmem:[%s0 + $0x364] sm:$0xf]
    %v369 = vld [vmem:[%s0 + $0x368] sm:$0xf]
    %v370 = vld [vmem:[%s0 + $0x36c] sm:$0xf]
    %v371 = vld [vmem:[%s0 + $0x370] sm:$0xf]
    %v372 = vld [vmem:[%s0 + $0x374] sm:$0xf]
    %v373 = vld [vmem:[%s0 + $0x378] sm:$0xf]
    %v374 = vld [vmem:[%s0 + $0x37c] sm:$0xf]
    %v375 = vld [vmem:[%s0 + $0x380] sm:$0xf]
    %v376 = vld [vmem:[%s0 + $0x384] sm:$0xf]
    %v377 = vld [vmem:[%s0 + $0x388] sm:$0xf]
    %v378 = vld [vmem:[%s0 + $0x38c] sm:$0xf]
    %v379 = vld [vmem:[%s0 + $0x390] sm:$0xf]
    %v380 = vld [vmem:[%s0 + $0x394] sm:$0xf]
    %v381 = vld [vmem:[%s0 + $0x398] sm:$0xf]
    %v382 = vld [vmem:[%s0 + $0x39c] sm:$0xf]
    %v383 = vld [vmem:[%s0 + $0x3a0] sm:$0xf]
    %v384 = vld [vmem:[%s0 + $0x3a4] sm:$0xf]
    %v385 = vld [vmem:[%s0 + $0x3a8] sm:$0xf]
    %v386 = vld [vmem:[%s0 + $0x3ac] sm:$0xf]
    %v387 = vld [vmem:[%s0 + $0x3b0] sm:$0xf]
    %v388 = vld [vmem:[%s0 + $0x3b4] sm:$0xf]
    %v389 = vld [vmem:[%s0 + $0x3b8] sm:$0xf]
    %v390 = vld [vmem:[%s0 + $0x3bc] sm:$0xf]
    %v391 = vld [vmem:[%s0 + $0x3c0] sm:$0xf]
    %v392 = vld [vmem:[%s0 + $0x3c4] sm:$0xf]
    %v393 = vld [vmem:[%s0 + $0x3c8] sm:$0xf]
    %v394 = vld [vmem:[%s0 + $0x3cc] sm:$0xf]
    %v395 = vld [vmem:[%s0 + $0x3d0] sm:$0xf]
    %v396 = vld [vmem:[%s0 + $0x3d4] sm:$0xf]
    %v397 = vld [vmem:[%s0 + $0x3d8] sm:$0xf]
    %v398 = vld [vmem:[%s0 + $0x3dc] sm:$0xf]
    %v399 = vld [vmem:[%s0 + $0x3e0] sm:$0xf]
    %v400 = vld [vmem:[%s0 + $0x3e4] sm:$0xf]
    %v401 = vld [vmem:[%s0 + $0x3e8] sm:$0xf]
    %v402 = vld [vmem:[%s0 + $0x3ec] sm:$0xf]
    %v403 = vld [vmem:[%s0 + $0x3f0] sm:$0xf]
    %v404 = vld [vmem:[%s0 + $0x3f4] sm:$0xf]
    %v405 = vld [vmem:[%s0 + $0x3f8] sm:$0xf]
    %v406 = vld [vmem:[%s0 + $0x3fc] sm:$0xf]
    %v407 = vld [vmem:[%s0 + $0x400] sm:$0xf]
    %v408 = vld [vmem:[%s0 + $0x404] sm:$0xf]
    %v409 = vld [vmem:[%s0 + $0x408] sm:$0xf]
    %v410 = vld [vmem:[%s0 + $0x40c] sm:$0xf]
    %v411 = vld [vmem:[%s0 + $0x410] sm:$0xf]
    %v412 = vld [vmem:[%s0 + $0x414] sm:$0xf]
    %v413 = vld [vmem:[%s0 + $0x418] sm:$0xf]
    %v414 = vld [vmem:[%s0 + $0x41c] sm:$0xf]
    %v415 = vld [vmem:[%s0 + $0x420] sm:$0xf]
    %v416 = vld [vmem:[%s0 + $0x424] sm:$0xf]
    %v417 = vld [vmem:[%s0 + $0x428] sm:$0xf]
    %v418 = vld [vmem:[%s0 + $0x42c] sm:$0xf]
    %v419 = vld [vmem:[%s0 + $0x430] sm:$0xf]
    %v420 = vld [vmem:[%s0 + $0x434] sm:$0xf]
    %v421 = vld [vmem:[%s0 + $0x438] sm:$0xf]
    %v422 = vld [vmem:[%s0 + $0x43c] sm:$0xf]
    %v423 = vld [vmem:[%s0 + $0x440] sm:$0xf]
    %v424 = vld [vmem:[%s0 + $0x444] sm:$0xf]
    %v425 = vld [vmem:[%s0 + $0x448] sm:$0xf]
    %v426 = vld [vmem:[%s0 + $0x44c] sm:$0xf]
    %v427 = vld [vmem:[%s0 + $0x450] sm:$0xf]
    %v428 = vld [vmem:[%s0 + $0x454] sm:$0xf]
    %v429 = vld [vmem:[%s0 + $0x458] sm:$0xf]
    %v430 = vld [vmem:[%s0 + $0x45c] sm:$0xf]
    %v431 = vld [vmem:[%s0 + $0x460] sm:$0xf]
    %v432 = vld [vmem:[%s0 + $0x464] sm:$0xf]
    %v433 = vld [vmem:[%s0 + $0x468] sm:$0xf]
    %v434 = vld [vmem:[%s0 + $0x46c] sm:$0xf]
    %v435 = vld [vmem:[%s0 + $0x470] sm:$0xf]
    %v436 = vld [vmem:[%s0 + $0x474] sm:$0xf]
    %v437 = vld [vmem:[%s0 + $0x478] sm:$0xf]
    %v438 = vld [vmem:[%s0 + $0x47c] sm:$0xf]
    %v439 = vld [vmem:[%s0 + $0x480] sm:$0xf]
    %v440 = vld [vmem:[%s0 + $0x484] sm:$0xf]
    %v441 = vld [vmem:[%s0 + $0x488] sm:$0xf]
    %v442 = vld [vmem:[%s0 + $0x48c] sm:$0xf]
    %v443 = vld [vmem:[%s0 + $0x490] sm:$0xf]
    %v444 = vld [vmem:[%s0 + $0x494] sm:$0xf]
    %v445 = vld [vmem:[%s0 + $0x498] sm:$0xf]
    %v446 = vld [vmem:[%s0 + $0x49c] sm:$0xf]
    %v447 = vld [vmem:[%s0 + $0x4a0] sm:$0xf]
    %v448 = vld [vmem:[%s0 + $0x4a4] sm:$0xf]
    %v449 = vld [vmem:[%s0 + $0x4a8] sm:$0xf]
    %v450 = vld [vmem:[%s0 + $0x4ac] sm:$0xf]
    %v451 = vld [vmem:[%s0 + $0x4b0] sm:$0xf]
    %v452 = vld [vmem:[%s0 + $0x4b4] sm:$0xf]
    %v453 = vld [vmem:[%s0 + $0x4b8] sm:$0xf]
    %v454 = vld [vmem:[%s0 + $0x4bc] sm:$0xf]
    %v455 = vld [vmem:[%s0 + $0x4c0] sm:$0xf]
    %v456 = vld [vmem:[%s0 + $0x4c4] sm:$0xf]
    %v457 = vld [vmem:[%s0 + $0x4c8] sm:$0xf]
    %v458 = vld [vmem:[%s0 + $0x4cc] sm:$0xf]
    %v459 = vld [vmem:[%s0 + $0x4d0] sm:$0xf]
    %v460 = vld [vmem:[%s0 + $0x4d4] sm:$0xf]
    %v461 = vld [vmem:[%s0 + $0x4d8] sm:$0xf]
    %v462 = vld [vmem:[%s0 + $0x4dc] sm:$0xf]
    %v463 = vld [vmem:[%s0 + $0x4e0] sm:$0xf]
    %v464 = vld [vmem:[%s0 + $0x4e4] sm:$0xf]
    %v465 = vld [vmem:[%s0 + $0x4e8] sm:$0xf]
    %v466 = vld [vmem:[%s0 + $0x4ec] sm:$0xf]
    %v467 = vld [vmem:[%s0 + $0x4f0] sm:$0xf]
    %v468 = vld [vmem:[%s0 + $0x4f4] sm:$0xf]
    %v469 = vld [vmem:[%s0 + $0x4f8] sm:$0xf]
    %v470 = vld [vmem:[%s0 + $0x4fc] sm:$0xf]
    %v471 = vld [vmem:[%s0 + $0x500] sm:$0xf]
    %v472 = vld [vmem:[%s0 + $0x504] sm:$0xf]
    %v473 = vld [vmem:[%s0 + $0x508] sm:$0xf]
    %v474 = vld [vmem:[%s0 + $0x50c] sm:$0xf]
    %v475 = vld [vmem:[%s0 + $0x510] sm:$0xf]
    %v476 = vld [vmem:[%s0 + $0x514] sm:$0xf]
    %v477 = vld [vmem:[%s0 + $0x518] sm:$0xf]
    %v478 = vld [vmem:[%s0 + $0x51c] sm:$0xf]
    %v479 = vld [vmem:[%s0 + $0x520] sm:$0xf]
    %v480 = vld [vmem:[%s0 + $0x524] sm:$0xf]
    %v481 = vld [vmem:[%s0 + $0x528] sm:$0xf]
    %v482 = vld [vmem:[%s0 + $0x52c] sm:$0xf]
    %v483 = vld [vmem:[%s0 + $0x530] sm:$0xf]
    %v484 = vld [vmem:[%s0 + $0x534] sm:$0xf]
    %v485 = vld [vmem:[%s0 + $0x538] sm:$0xf]
    %v486 = vld [vmem:[%s0 + $0x53c] sm:$0xf]
    %v487 = vld [vmem:[%s0 + $0x540] sm:$0xf]
    %v488 = vld [vmem:[%s0 + $0x544] sm:$0xf]
    %v489 = vld [vmem:[%s0 + $0x548] sm:$0xf]
    %v490 = vld [vmem:[%s0 + $0x54c] sm:$0xf]
    %v491 = vld [vmem:[%s0 + $0x550] sm:$0xf]
    %v492 = vld [vmem:[%s0 + $0x554] sm:$0xf]
    %v493 = vld [vmem:[%s0 + $0x558] sm:$0xf]
    %v494 = vld [vmem:[%s0 + $0x55c] sm:$0xf]
    %v495 = vld [vmem:[%s0 + $0x560] sm:$0xf]
    %v496 = vld [vmem:[%s0 + $0x564] sm:$0xf]
    %v497 = vld [vmem:[%s0 + $0x568] sm:$0xf]
    %v498 = vld [vmem:[%s0 + $0x56c] sm:$0xf]
    %v499 = vld [vmem:[%s0 + $0x570] sm:$0xf]
    %v500 = vld [vmem:[%s0 + $0x574] sm:$0xf]
    %v501 = vld [vmem:[%s0 + $0x578] sm:$0xf]
    %v502 = vld [vmem:[%s0 + $0x57c] sm:$0xf]
    %v503 = vld [vmem:[%s0 + $0x580] sm:$0xf]
    %v504 = vld [vmem:[%s0 + $0x584] sm:$0xf]
    %v505 = vld [vmem:[%s0 + $0x588] sm:$0xf]
    %v506 = vld [vmem:[%s0 + $0x58c] sm:$0xf]
    %v507 = vld [vmem:[%s0 + $0x590] sm:$0xf]
    %v508 = vld [vmem:[%s0 + $0x594] sm:$0xf]
    %v509 = vld [vmem:[%s0 + $0x598] sm:$0xf]
    %v510 = vld [vmem:[%s0 + $0x59c] sm:$0xf]
    %v511 = vld [vmem:[%s0 + $0x5a0] sm:$0xf]
    %v512 = vld [vmem:[%s0 + $0x5a4] sm:$0xf]
    %v513 = vld [vmem:[%s0 + $0x5a8] sm:$0xf]
    %v514 = vld [vmem:[%s0 + $0x5ac] sm:$0xf]
    %v515 = vld [vmem:[%s0 + $0x5b0] sm:$0xf]
    %v516 = vld [vmem:[%s0 + $0x5b4] sm:$0xf]
    %v517 = vld [vmem:[%s0 + $0x5b8] sm:$0xf]
    %v518 = vld [vmem:[%s0 + $0x5bc] sm:$0xf]
    %v519 = vld [vmem:[%s0 + $0x5c0] sm:$0xf]
    %v520 = vld [vmem:[%s0 + $0x5c4] sm:$0xf]
    %v521 = vld [vmem:[%s0 + $0x5c8] sm:$0xf]
    %v522 = vld [vmem:[%s0 + $0x5cc] sm:$0xf]
    %v523 = vld [vmem:[%s0 + $0x5d0] sm:$0xf]
    %v524 = vld [vmem:[%s0 + $0x5d4] sm:$0xf]
    %v525 = vld [vmem:[%s0 + $0x5d8] sm:$0xf]
    %v526 = vld [vmem:[%s0 + $0x5dc] sm:$0xf]
    %v527 = vld [vmem:[%s0 + $0x5e0] sm:$0xf]
    %v528 = vld [vmem:[%s0 + $0x5e4] sm:$0xf]
    %v529 = vld [vmem:[%s0 + $0x5e8] sm:$0xf]
    %v530 = vld [vmem:[%s0 + $0x5ec] sm:$0xf]
    %v531 = vld [vmem:[%s0 + $0x5f0] sm:$0xf]
    %v532 = vld [vmem:[%s0 + $0x5f4] sm:$0xf]
    %v533 = vld [vmem:[%s0 + $0x5f8] sm:$0xf]
    %v534 = vld [vmem:[%s0 + $0x5fc] sm:$0xf]
    %v535 = vld [vmem:[%s0 + $0x600] sm:$0xf]
    %v536 = vld [vmem:[%s0 + $0x604] sm:$0xf]
    %v537 = vld [vmem:[%s0 + $0x608] sm:$0xf]
    %v538 = vld [vmem:[%s0 + $0x60c] sm:$0xf]
    %v539 = vld [vmem:[%s0 + $0x610] sm:$0xf]
    %v540 = vld [vmem:[%s0 + $0x614] sm:$0xf]
    %v541 = vld [vmem:[%s0 + $0x618] sm:$0xf]
    %v542 = vld [vmem:[%s0 + $0x61c] sm:$0xf]
    %v543 = vld [vmem:[%s0 + $0x620] sm:$0xf]
    %v544 = vld [vmem:[%s0 + $0x624] sm:$0xf]
    %v545 = vld [vmem:[%s0 + $0x628] sm:$0xf]
    %v546 = vld [vmem:[%s0 + $0x62c] sm:$0xf]
    %v547 = vld [vmem:[%s0 + $0x630] sm:$0xf]
    %v548 = vld [vmem:[%s0 + $0x634] sm:$0xf]
    %v549 = vld [vmem:[%s0 + $0x638] sm:$0xf]
    %v550 = vld [vmem:[%s0 + $0x63c] sm:$0xf]
    %v551 = vld [vmem:[%s0 + $0x640] sm:$0xf]
    %v552 = vld [vmem:[%s0 + $0x644] sm:$0xf]
    %v553 = vld [vmem:[%s0 + $0x648] sm:$0xf]
    %v554 = vld [vmem:[%s0 + $0x64c] sm:$0xf]
    %v555 = vld [vmem:[%s0 + $0x650] sm:$0xf]
    %v556 = vld [vmem:[%s0 + $0x654] sm:$0xf]
    %v557 = vld [vmem:[%s0 + $0x658] sm:$0xf]
    %v558 = vld [vmem:[%s0 + $0x65c] sm:$0xf]
    %v559 = vld [vmem:[%s0 + $0x660] sm:$0xf]
    %v560 = vld [vmem:[%s0 + $0x664] sm:$0xf]
    %v561 = vld [vmem:[%s0 + $0x668] sm:$0xf]
    %v562 = vld [vmem:[%s0 + $0x66c] sm:$0xf]
    %v563 = vld [vmem:[%s0 + $0x670] sm:$0xf]
    %v564 = vld [vmem:[%s0 + $0x674] sm:$0xf]
    %v565 = vld [vmem:[%s0 + $0x678] sm:$0xf]
    %v566 = vld [vmem:[%s0 + $0x67c] sm:$0xf]
    %v567 = vld [vmem:[%s0 + $0x680] sm:$0xf]
    %v568 = vld [vmem:[%s0 + $0x684] sm:$0xf]
    %v569 = vld [vmem:[%s0 + $0x688] sm:$0xf]
    %v570 = vld [vmem:[%s0 + $0x68c] sm:$0xf]
    %v571 = vld [vmem:[%s0 + $0x690] sm:$0xf]
    %v572 = vld [vmem:[%s0 + $0x694] sm:$0xf]
    %v573 = vld [vmem:[%s0 + $0x698] sm:$0xf]
    %v574 = vld [vmem:[%s0 + $0x69c] sm:$0xf]
    %v575 = vld [vmem:[%s0 + $0x6a0] sm:$0xf]
    %v576 = vld [vmem:[%s0 + $0x6a4] sm:$0xf]
    %v577 = vld [vmem:[%s0 + $0x6a8] sm:$0xf]
    %v578 = vld [vmem:[%s0 + $0x6ac] sm:$0xf]
    %v579 = vld [vmem:[%s0 + $0x6b0] sm:$0xf]
    %v580 = vld [vmem:[%s0 + $0x6b4] sm:$0xf]
    %v581 = vld [vmem:[%s0 + $0x6b8] sm:$0xf]
    %v582 = vld [vmem:[%s0 + $0x6bc] sm:$0xf]
    %v583 = vld [vmem:[%s0 + $0x6c0] sm:$0xf]
    %v584 = vld [vmem:[%s0 + $0x6c4] sm:$0xf]
    %v585 = vld [vmem:[%s0 + $0x6c8] sm:$0xf]
    %v586 = vld [vmem:[%s0 + $0x6cc] sm:$0xf]
    %v587 = vld [vmem:[%s0 + $0x6d0] sm:$0xf]
    %v588 = vld [vmem:[%s0 + $0x6d4] sm:$0xf]
    %v589 = vld [vmem:[%s0 + $0x6d8] sm:$0xf]
    %v590 = vld [vmem:[%s0 + $0x6dc] sm:$0xf]
    %v591 = vld [vmem:[%s0 + $0x6e0] sm:$0xf]
    %v592 = vld [vmem:[%s0 + $0x6e4] sm:$0xf]
    %v593 = vld [vmem:[%s0 + $0x6e8] sm:$0xf]
    %v594 = vld [vmem:[%s0 + $0x6ec] sm:$0xf]
    %v595 = vld [vmem:[%s0 + $0x6f0] sm:$0xf]
    %v596 = vld [vmem:[%s0 + $0x6f4] sm:$0xf]
    %v597 = vld [vmem:[%s0 + $0x6f8] sm:$0xf]
    %v598 = vld [vmem:[%s0 + $0x6fc] sm:$0xf]
    %v599 = vld [vmem:[%s0 + $0x700] sm:$0xf]
    %v600 = vld [vmem:[%s0 + $0x704] sm:$0xf]
    %v601 = vld [vmem:[%s0 + $0x708] sm:$0xf]
    %v602 = vld [vmem:[%s0 + $0x70c] sm:$0xf]
    %v603 = vld [vmem:[%s0 + $0x710] sm:$0xf]
    %v604 = vld [vmem:[%s0 + $0x714] sm:$0xf]
    %v605 = vld [vmem:[%s0 + $0x718] sm:$0xf]
    %v606 = vld [vmem:[%s0 + $0x71c] sm:$0xf]
    %v607 = vld [vmem:[%s0 + $0x720] sm:$0xf]
    %v608 = vld [vmem:[%s0 + $0x724] sm:$0xf]
    %v609 = vld [vmem:[%s0 + $0x728] sm:$0xf]
    %v610 = vld [vmem:[%s0 + $0x72c] sm:$0xf]
    %v611 = vld [vmem:[%s0 + $0x730] sm:$0xf]
    %v612 = vld [vmem:[%s0 + $0x734] sm:$0xf]
    %v613 = vld [vmem:[%s0 + $0x738] sm:$0xf]
    %v614 = vld [vmem:[%s0 + $0x73c] sm:$0xf]
    %v615 = vld [vmem:[%s0 + $0x740] sm:$0xf]
    %v616 = vld [vmem:[%s0 + $0x744] sm:$0xf]
    %v617 = vld [vmem:[%s0 + $0x748] sm:$0xf]
    %v618 = vld [vmem:[%s0 + $0x74c] sm:$0xf]
    %v619 = vld [vmem:[%s0 + $0x750] sm:$0xf]
    %v620 = vld [vmem:[%s0 + $0x754] sm:$0xf]
    %v621 = vld [vmem:[%s0 + $0x758] sm:$0xf]
    %v622 = vld [vmem:[%s0 + $0x75c] sm:$0xf]
    %v623 = vld [vmem:[%s0 + $0x760] sm:$0xf]
    %v624 = vld [vmem:[%s0 + $0x764] sm:$0xf]
    %v625 = vld [vmem:[%s0 + $0x768] sm:$0xf]
    %v626 = vld [vmem:[%s0 + $0x76c] sm:$0xf]
    %v627 = vld [vmem:[%s0 + $0x770] sm:$0xf]
    %v628 = vld [vmem:[%s0 + $0x774] sm:$0xf]
    %v629 = vld [vmem:[%s0 + $0x778] sm:$0xf]
    %v630 = vld [vmem:[%s0 + $0x77c] sm:$0xf]
    %v631 = vld [vmem:[%s0 + $0x780] sm:$0xf]
    %v632 = vld [vmem:[%s0 + $0x784] sm:$0xf]
    %v633 = vld [vmem:[%s0 + $0x788] sm:$0xf]
    %v634 = vld [vmem:[%s0 + $0x78c] sm:$0xf]
    %v635 = vld [vmem:[%s0 + $0x790] sm:$0xf]
    %v636 = vld [vmem:[%s0 + $0x794] sm:$0xf]
    %v637 = vld [vmem:[%s0 + $0x798] sm:$0xf]
    %v638 = vld [vmem:[%s0 + $0x79c] sm:$0xf]
    %v639 = vld [vmem:[%s0 + $0x7a0] sm:$0xf]
    %v640 = vld [vmem:[%s0 + $0x7a4] sm:$0xf]
    %v641 = vld [vmem:[%s0 + $0x7a8] sm:$0xf]
    %v642 = vld [vmem:[%s0 + $0x7ac] sm:$0xf]
    %v643 = vld [vmem:[%s0 + $0x7b0] sm:$0xf]
    %v644 = vld [vmem:[%s0 + $0x7b4] sm:$0xf]
    %v645 = vld [vmem:[%s0 + $0x7b8] sm:$0xf]
    %v646 = vld [vmem:[%s0 + $0x7bc] sm:$0xf]
    %v647 = vld [vmem:[%s0 + $0x7c0] sm:$0xf]
    %v648 = vld [vmem:[%s0 + $0x7c4] sm:$0xf]
    %v649 = vld [vmem:[%s0 + $0x7c8] sm:$0xf]
    %v650 = vld [vmem:[%s0 + $0x7cc] sm:$0xf]
    %v651 = vld [vmem:[%s0 + $0x7d0] sm:$0xf]
    %v652 = vld [vmem:[%s0 + $0x7d4] sm:$0xf]
    %v653 = vld [vmem:[%s0 + $0x7d8] sm:$0xf]
    %v654 = vld [vmem:[%s0 + $0x7dc] sm:$0xf]
    %v655 = vld [vmem:[%s0 + $0x7e0] sm:$0xf]
    %v656 = vld [vmem:[%s0 + $0x7e4] sm:$0xf]
    %v657 = vld [vmem:[%s0 + $0x7e8] sm:$0xf]
    %v658 = vld [vmem:[%s0 + $0x7ec] sm:$0xf]
    %v659 = vld [vmem:[%s0 + $0x7f0] sm:$0xf]
    %v660 = vld [vmem:[%s0 + $0x7f4] sm:$0xf]
    %v661 = vld [vmem:[%s0 + $0x7f8] sm:$0xf]
    %v662 = vld [vmem:[%s0 + $0x7fc] sm:$0xf]
    %v663 = vunpack.c.l.bf16 %v151
    %v664 = vunpack.c.l.bf16 %v152
    %v665 = vunpack.c.l.bf16 %v153
    %v666 = vunpack.c.l.bf16 %v154
    %v667 = vunpack.c.l.bf16 %v155
    %v668 = vunpack.c.l.bf16 %v156
    %v669 = vunpack.c.l.bf16 %v157
    %v670 = vunpack.c.l.bf16 %v158
    %v671 = vunpack.c.l.bf16 %v159
    %v672 = vunpack.c.l.bf16 %v160
    %v673 = vunpack.c.l.bf16 %v161
    %v674 = vunpack.c.l.bf16 %v162
    %v675 = vunpack.c.l.bf16 %v163
    %v676 = vunpack.c.l.bf16 %v164
    %v677 = vunpack.c.l.bf16 %v165
    %v678 = vunpack.c.l.bf16 %v166
    %v679 = vunpack.c.l.bf16 %v167
    %v680 = vunpack.c.l.bf16 %v168
    %v681 = vunpack.c.l.bf16 %v169
    %v682 = vunpack.c.l.bf16 %v170
    %v683 = vunpack.c.l.bf16 %v171
    %v684 = vunpack.c.l.bf16 %v172
    %v685 = vunpack.c.l.bf16 %v173
    %v686 = vunpack.c.l.bf16 %v174
    %v687 = vunpack.c.l.bf16 %v175
    %v688 = vunpack.c.l.bf16 %v176
    %v689 = vunpack.c.l.bf16 %v177
    %v690 = vunpack.c.l.bf16 %v178
    %v691 = vunpack.c.l.bf16 %v179
    %v692 = vunpack.c.l.bf16 %v180
    %v693 = vunpack.c.l.bf16 %v181
    %v694 = vunpack.c.l.bf16 %v182
    %v695 = vunpack.c.l.bf16 %v183
    %v696 = vunpack.c.l.bf16 %v184
    %v697 = vunpack.c.l.bf16 %v185
    %v698 = vunpack.c.l.bf16 %v186
    %v699 = vunpack.c.l.bf16 %v187
    %v700 = vunpack.c.l.bf16 %v188
    %v701 = vunpack.c.l.bf16 %v189
    %v702 = vunpack.c.l.bf16 %v190
    %v703 = vunpack.c.l.bf16 %v191
    %v704 = vunpack.c.l.bf16 %v192
    %v705 = vunpack.c.l.bf16 %v193
    %v706 = vunpack.c.l.bf16 %v194
    %v707 = vunpack.c.l.bf16 %v195
    %v708 = vunpack.c.l.bf16 %v196
    %v709 = vunpack.c.l.bf16 %v197
    %v710 = vunpack.c.l.bf16 %v198
    %v711 = vunpack.c.l.bf16 %v199
    %v712 = vunpack.c.l.bf16 %v200
    %v713 = vunpack.c.l.bf16 %v201
    %v714 = vunpack.c.l.bf16 %v202
    %v715 = vunpack.c.l.bf16 %v203
    %v716 = vunpack.c.l.bf16 %v204
    %v717 = vunpack.c.l.bf16 %v205
    %v718 = vunpack.c.l.bf16 %v206
    %v719 = vunpack.c.l.bf16 %v207
    %v720 = vunpack.c.l.bf16 %v208
    %v721 = vunpack.c.l.bf16 %v209
    %v722 = vunpack.c.l.bf16 %v210
    %v723 = vunpack.c.l.bf16 %v211
    %v724 = vunpack.c.l.bf16 %v212
    %v725 = vunpack.c.l.bf16 %v213
    %v726 = vunpack.c.l.bf16 %v214
    %v727 = vunpack.c.l.bf16 %v215
    %v728 = vunpack.c.l.bf16 %v216
    %v729 = vunpack.c.l.bf16 %v217
    %v730 = vunpack.c.l.bf16 %v218
    %v731 = vunpack.c.l.bf16 %v219
    %v732 = vunpack.c.l.bf16 %v220
    %v733 = vunpack.c.l.bf16 %v221
    %v734 = vunpack.c.l.bf16 %v222
    %v735 = vunpack.c.l.bf16 %v223
    %v736 = vunpack.c.l.bf16 %v224
    %v737 = vunpack.c.l.bf16 %v225
    %v738 = vunpack.c.l.bf16 %v226
    %v739 = vunpack.c.l.bf16 %v227
    %v740 = vunpack.c.l.bf16 %v228
    %v741 = vunpack.c.l.bf16 %v229
    %v742 = vunpack.c.l.bf16 %v230
    %v743 = vunpack.c.l.bf16 %v231
    %v744 = vunpack.c.l.bf16 %v232
    %v745 = vunpack.c.l.bf16 %v233
    %v746 = vunpack.c.l.bf16 %v234
    %v747 = vunpack.c.l.bf16 %v235
    %v748 = vunpack.c.l.bf16 %v236
    %v749 = vunpack.c.l.bf16 %v237
    %v750 = vunpack.c.l.bf16 %v238
    %v751 = vunpack.c.l.bf16 %v239
    %v752 = vunpack.c.l.bf16 %v240
    %v753 = vunpack.c.l.bf16 %v241
    %v754 = vunpack.c.l.bf16 %v242
    %v755 = vunpack.c.l.bf16 %v243
    %v756 = vunpack.c.l.bf16 %v244
    %v757 = vunpack.c.l.bf16 %v245
    %v758 = vunpack.c.l.bf16 %v246
    %v759 = vunpack.c.l.bf16 %v247
    %v760 = vunpack.c.l.bf16 %v248
    %v761 = vunpack.c.l.bf16 %v249
    %v762 = vunpack.c.l.bf16 %v250
    %v763 = vunpack.c.l.bf16 %v251
    %v764 = vunpack.c.l.bf16 %v252
    %v765 = vunpack.c.l.bf16 %v253
    %v766 = vunpack.c.l.bf16 %v254
    %v767 = vunpack.c.l.bf16 %v255
    %v768 = vunpack.c.l.bf16 %v256
    %v769 = vunpack.c.l.bf16 %v257
    %v770 = vunpack.c.l.bf16 %v258
    %v771 = vunpack.c.l.bf16 %v259
    %v772 = vunpack.c.l.bf16 %v260
    %v773 = vunpack.c.l.bf16 %v261
    %v774 = vunpack.c.l.bf16 %v262
    %v775 = vunpack.c.l.bf16 %v263
    %v776 = vunpack.c.l.bf16 %v264
    %v777 = vunpack.c.l.bf16 %v265
    %v778 = vunpack.c.l.bf16 %v266
    %v779 = vunpack.c.l.bf16 %v267
    %v780 = vunpack.c.l.bf16 %v268
    %v781 = vunpack.c.l.bf16 %v269
    %v782 = vunpack.c.l.bf16 %v270
    %v783 = vunpack.c.l.bf16 %v271
    %v784 = vunpack.c.l.bf16 %v272
    %v785 = vunpack.c.l.bf16 %v273
    %v786 = vunpack.c.l.bf16 %v274
    %v787 = vunpack.c.l.bf16 %v275
    %v788 = vunpack.c.l.bf16 %v276
    %v789 = vunpack.c.l.bf16 %v277
    %v790 = vunpack.c.l.bf16 %v278
    %v791 = vunpack.c.l.bf16 %v279
    %v792 = vunpack.c.l.bf16 %v280
    %v793 = vunpack.c.l.bf16 %v281
    %v794 = vunpack.c.l.bf16 %v282
    %v795 = vunpack.c.l.bf16 %v283
    %v796 = vunpack.c.l.bf16 %v284
    %v797 = vunpack.c.l.bf16 %v285
    %v798 = vunpack.c.l.bf16 %v286
    %v799 = vunpack.c.l.bf16 %v287
    %v800 = vunpack.c.l.bf16 %v288
    %v801 = vunpack.c.l.bf16 %v289
    %v802 = vunpack.c.l.bf16 %v290
    %v803 = vunpack.c.l.bf16 %v291
    %v804 = vunpack.c.l.bf16 %v292
    %v805 = vunpack.c.l.bf16 %v293
    %v806 = vunpack.c.l.bf16 %v294
    %v807 = vunpack.c.l.bf16 %v295
    %v808 = vunpack.c.l.bf16 %v296
    %v809 = vunpack.c.l.bf16 %v297
    %v810 = vunpack.c.l.bf16 %v298
    %v811 = vunpack.c.l.bf16 %v299
    %v812 = vunpack.c.l.bf16 %v300
    %v813 = vunpack.c.l.bf16 %v301
    %v814 = vunpack.c.l.bf16 %v302
    %v815 = vunpack.c.l.bf16 %v303
    %v816 = vunpack.c.l.bf16 %v304
    %v817 = vunpack.c.l.bf16 %v305
    %v818 = vunpack.c.l.bf16 %v306
    %v819 = vunpack.c.l.bf16 %v307
    %v820 = vunpack.c.l.bf16 %v308
    %v821 = vunpack.c.l.bf16 %v309
    %v822 = vunpack.c.l.bf16 %v310
    %v823 = vunpack.c.l.bf16 %v311
    %v824 = vunpack.c.l.bf16 %v312
    %v825 = vunpack.c.l.bf16 %v313
    %v826 = vunpack.c.l.bf16 %v314
    %v827 = vunpack.c.l.bf16 %v315
    %v828 = vunpack.c.l.bf16 %v316
    %v829 = vunpack.c.l.bf16 %v317
    %v830 = vunpack.c.l.bf16 %v318
    %v831 = vunpack.c.l.bf16 %v319
    %v832 = vunpack.c.l.bf16 %v320
    %v833 = vunpack.c.l.bf16 %v321
    %v834 = vunpack.c.l.bf16 %v322
    %v835 = vunpack.c.l.bf16 %v323
    %v836 = vunpack.c.l.bf16 %v324
    %v837 = vunpack.c.l.bf16 %v325
    %v838 = vunpack.c.l.bf16 %v326
    %v839 = vunpack.c.l.bf16 %v327
    %v840 = vunpack.c.l.bf16 %v328
    %v841 = vunpack.c.l.bf16 %v329
    %v842 = vunpack.c.l.bf16 %v330
    %v843 = vunpack.c.l.bf16 %v331
    %v844 = vunpack.c.l.bf16 %v332
    %v845 = vunpack.c.l.bf16 %v333
    %v846 = vunpack.c.l.bf16 %v334
    %v847 = vunpack.c.l.bf16 %v335
    %v848 = vunpack.c.l.bf16 %v336
    %v849 = vunpack.c.l.bf16 %v337
    %v850 = vunpack.c.l.bf16 %v338
    %v851 = vunpack.c.l.bf16 %v339
    %v852 = vunpack.c.l.bf16 %v340
    %v853 = vunpack.c.l.bf16 %v341
    %v854 = vunpack.c.l.bf16 %v342
    %v855 = vunpack.c.l.bf16 %v343
    %v856 = vunpack.c.l.bf16 %v344
    %v857 = vunpack.c.l.bf16 %v345
    %v858 = vunpack.c.l.bf16 %v346
    %v859 = vunpack.c.l.bf16 %v347
    %v860 = vunpack.c.l.bf16 %v348
    %v861 = vunpack.c.l.bf16 %v349
    %v862 = vunpack.c.l.bf16 %v350
    %v863 = vunpack.c.l.bf16 %v351
    %v864 = vunpack.c.l.bf16 %v352
    %v865 = vunpack.c.l.bf16 %v353
    %v866 = vunpack.c.l.bf16 %v354
    %v867 = vunpack.c.l.bf16 %v355
    %v868 = vunpack.c.l.bf16 %v356
    %v869 = vunpack.c.l.bf16 %v357
    %v870 = vunpack.c.l.bf16 %v358
    %v871 = vunpack.c.l.bf16 %v359
    %v872 = vunpack.c.l.bf16 %v360
    %v873 = vunpack.c.l.bf16 %v361
    %v874 = vunpack.c.l.bf16 %v362
    %v875 = vunpack.c.l.bf16 %v363
    %v876 = vunpack.c.l.bf16 %v364
    %v877 = vunpack.c.l.bf16 %v365
    %v878 = vunpack.c.l.bf16 %v366
    %v879 = vunpack.c.l.bf16 %v367
    %v880 = vunpack.c.l.bf16 %v368
    %v881 = vunpack.c.l.bf16 %v369
    %v882 = vunpack.c.l.bf16 %v370
    %v883 = vunpack.c.l.bf16 %v371
    %v884 = vunpack.c.l.bf16 %v372
    %v885 = vunpack.c.l.bf16 %v373
    %v886 = vunpack.c.l.bf16 %v374
    %v887 = vunpack.c.l.bf16 %v375
    %v888 = vunpack.c.l.bf16 %v376
    %v889 = vunpack.c.l.bf16 %v377
    %v890 = vunpack.c.l.bf16 %v378
    %v891 = vunpack.c.l.bf16 %v379
    %v892 = vunpack.c.l.bf16 %v380
    %v893 = vunpack.c.l.bf16 %v381
    %v894 = vunpack.c.l.bf16 %v382
    %v895 = vunpack.c.l.bf16 %v383
    %v896 = vunpack.c.l.bf16 %v384
    %v897 = vunpack.c.l.bf16 %v385
    %v898 = vunpack.c.l.bf16 %v386
    %v899 = vunpack.c.l.bf16 %v387
    %v900 = vunpack.c.l.bf16 %v388
    %v901 = vunpack.c.l.bf16 %v389
    %v902 = vunpack.c.l.bf16 %v390
    %v903 = vunpack.c.l.bf16 %v391
    %v904 = vunpack.c.l.bf16 %v392
    %v905 = vunpack.c.l.bf16 %v393
    %v906 = vunpack.c.l.bf16 %v394
    %v907 = vunpack.c.l.bf16 %v395
    %v908 = vunpack.c.l.bf16 %v396
    %v909 = vunpack.c.l.bf16 %v397
    %v910 = vunpack.c.l.bf16 %v398
    %v911 = vunpack.c.l.bf16 %v399
    %v912 = vunpack.c.l.bf16 %v400
    %v913 = vunpack.c.l.bf16 %v401
    %v914 = vunpack.c.l.bf16 %v402
    %v915 = vunpack.c.l.bf16 %v403
    %v916 = vunpack.c.l.bf16 %v404
    %v917 = vunpack.c.l.bf16 %v405
    %v918 = vunpack.c.l.bf16 %v406
    %v919 = vunpack.c.l.bf16 %v407
    %v920 = vunpack.c.l.bf16 %v408
    %v921 = vunpack.c.l.bf16 %v409
    %v922 = vunpack.c.l.bf16 %v410
    %v923 = vunpack.c.l.bf16 %v411
    %v924 = vunpack.c.l.bf16 %v412
    %v925 = vunpack.c.l.bf16 %v413
    %v926 = vunpack.c.l.bf16 %v414
    %v927 = vunpack.c.l.bf16 %v415
    %v928 = vunpack.c.l.bf16 %v416
    %v929 = vunpack.c.l.bf16 %v417
    %v930 = vunpack.c.l.bf16 %v418
    %v931 = vunpack.c.l.bf16 %v419
    %v932 = vunpack.c.l.bf16 %v420
    %v933 = vunpack.c.l.bf16 %v421
    %v934 = vunpack.c.l.bf16 %v422
    %v935 = vunpack.c.l.bf16 %v423
    %v936 = vunpack.c.l.bf16 %v424
    %v937 = vunpack.c.l.bf16 %v425
    %v938 = vunpack.c.l.bf16 %v426
    %v939 = vunpack.c.l.bf16 %v427
    %v940 = vunpack.c.l.bf16 %v428
    %v941 = vunpack.c.l.bf16 %v429
    %v942 = vunpack.c.l.bf16 %v430
    %v943 = vunpack.c.l.bf16 %v431
    %v944 = vunpack.c.l.bf16 %v432
    %v945 = vunpack.c.l.bf16 %v433
    %v946 = vunpack.c.l.bf16 %v434
    %v947 = vunpack.c.l.bf16 %v435
    %v948 = vunpack.c.l.bf16 %v436
    %v949 = vunpack.c.l.bf16 %v437
    %v950 = vunpack.c.l.bf16 %v438
    %v951 = vunpack.c.l.bf16 %v439
    %v952 = vunpack.c.l.bf16 %v440
    %v953 = vunpack.c.l.bf16 %v441
    %v954 = vunpack.c.l.bf16 %v442
    %v955 = vunpack.c.l.bf16 %v443
    %v956 = vunpack.c.l.bf16 %v444
    %v957 = vunpack.c.l.bf16 %v445
    %v958 = vunpack.c.l.bf16 %v446
    %v959 = vunpack.c.l.bf16 %v447
    %v960 = vunpack.c.l.bf16 %v448
    %v961 = vunpack.c.l.bf16 %v449
    %v962 = vunpack.c.l.bf16 %v450
    %v963 = vunpack.c.l.bf16 %v451
    %v964 = vunpack.c.l.bf16 %v452
    %v965 = vunpack.c.l.bf16 %v453
    %v966 = vunpack.c.l.bf16 %v454
    %v967 = vunpack.c.l.bf16 %v455
    %v968 = vunpack.c.l.bf16 %v456
    %v969 = vunpack.c.l.bf16 %v457
    %v970 = vunpack.c.l.bf16 %v458
    %v971 = vunpack.c.l.bf16 %v459
    %v972 = vunpack.c.l.bf16 %v460
    %v973 = vunpack.c.l.bf16 %v461
    %v974 = vunpack.c.l.bf16 %v462
    %v975 = vunpack.c.l.bf16 %v463
    %v976 = vunpack.c.l.bf16 %v464
    %v977 = vunpack.c.l.bf16 %v465
    %v978 = vunpack.c.l.bf16 %v466
    %v979 = vunpack.c.l.bf16 %v467
    %v980 = vunpack.c.l.bf16 %v468
    %v981 = vunpack.c.l.bf16 %v469
    %v982 = vunpack.c.l.bf16 %v470
    %v983 = vunpack.c.l.bf16 %v471
    %v984 = vunpack.c.l.bf16 %v472
    %v985 = vunpack.c.l.bf16 %v473
    %v986 = vunpack.c.l.bf16 %v474
    %v987 = vunpack.c.l.bf16 %v475
    %v988 = vunpack.c.l.bf16 %v476
    %v989 = vunpack.c.l.bf16 %v477
    %v990 = vunpack.c.l.bf16 %v478
    %v991 = vunpack.c.l.bf16 %v479
    %v992 = vunpack.c.l.bf16 %v480
    %v993 = vunpack.c.l.bf16 %v481
    %v994 = vunpack.c.l.bf16 %v482
    %v995 = vunpack.c.l.bf16 %v483
    %v996 = vunpack.c.l.bf16 %v484
    %v997 = vunpack.c.l.bf16 %v485
    %v998 = vunpack.c.l.bf16 %v486
    %v999 = vunpack.c.l.bf16 %v487
    %v1000 = vunpack.c.l.bf16 %v488
    %v1001 = vunpack.c.l.bf16 %v489
    %v1002 = vunpack.c.l.bf16 %v490
    %v1003 = vunpack.c.l.bf16 %v491
    %v1004 = vunpack.c.l.bf16 %v492
    %v1005 = vunpack.c.l.bf16 %v493
    %v1006 = vunpack.c.l.bf16 %v494
    %v1007 = vunpack.c.l.bf16 %v495
    %v1008 = vunpack.c.l.bf16 %v496
    %v1009 = vunpack.c.l.bf16 %v497
    %v1010 = vunpack.c.l.bf16 %v498
    %v1011 = vunpack.c.l.bf16 %v499
    %v1012 = vunpack.c.l.bf16 %v500
    %v1013 = vunpack.c.l.bf16 %v501
    %v1014 = vunpack.c.l.bf16 %v502
    %v1015 = vunpack.c.l.bf16 %v503
    %v1016 = vunpack.c.l.bf16 %v504
    %v1017 = vunpack.c.l.bf16 %v505
    %v1018 = vunpack.c.l.bf16 %v506
    %v1019 = vunpack.c.l.bf16 %v507
    %v1020 = vunpack.c.l.bf16 %v508
    %v1021 = vunpack.c.l.bf16 %v509
    %v1022 = vunpack.c.l.bf16 %v510
    %v1023 = vunpack.c.l.bf16 %v511
    %v1024 = vunpack.c.l.bf16 %v512
    %v1025 = vunpack.c.l.bf16 %v513
    %v1026 = vunpack.c.l.bf16 %v514
    %v1027 = vunpack.c.l.bf16 %v515
    %v1028 = vunpack.c.l.bf16 %v516
    %v1029 = vunpack.c.l.bf16 %v517
    %v1030 = vunpack.c.l.bf16 %v518
    %v1031 = vunpack.c.l.bf16 %v519
    %v1032 = vunpack.c.l.bf16 %v520
    %v1033 = vunpack.c.l.bf16 %v521
    %v1034 = vunpack.c.l.bf16 %v522
    %v1035 = vunpack.c.l.bf16 %v523
    %v1036 = vunpack.c.l.bf16 %v524
    %v1037 = vunpack.c.l.bf16 %v525
    %v1038 = vunpack.c.l.bf16 %v526
    %v1039 = vunpack.c.l.bf16 %v527
    %v1040 = vunpack.c.l.bf16 %v528
    %v1041 = vunpack.c.l.bf16 %v529
    %v1042 = vunpack.c.l.bf16 %v530
    %v1043 = vunpack.c.l.bf16 %v531
    %v1044 = vunpack.c.l.bf16 %v532
    %v1045 = vunpack.c.l.bf16 %v533
    %v1046 = vunpack.c.l.bf16 %v534
    %v1047 = vunpack.c.l.bf16 %v535
    %v1048 = vunpack.c.l.bf16 %v536
    %v1049 = vunpack.c.l.bf16 %v537
    %v1050 = vunpack.c.l.bf16 %v538
    %v1051 = vunpack.c.l.bf16 %v539
    %v1052 = vunpack.c.l.bf16 %v540
    %v1053 = vunpack.c.l.bf16 %v541
    %v1054 = vunpack.c.l.bf16 %v542
    %v1055 = vunpack.c.l.bf16 %v543
    %v1056 = vunpack.c.l.bf16 %v544
    %v1057 = vunpack.c.l.bf16 %v545
    %v1058 = vunpack.c.l.bf16 %v546
    %v1059 = vunpack.c.l.bf16 %v547
    %v1060 = vunpack.c.l.bf16 %v548
    %v1061 = vunpack.c.l.bf16 %v549
    %v1062 = vunpack.c.l.bf16 %v550
    %v1063 = vunpack.c.l.bf16 %v551
    %v1064 = vunpack.c.l.bf16 %v552
    %v1065 = vunpack.c.l.bf16 %v553
    %v1066 = vunpack.c.l.bf16 %v554
    %v1067 = vunpack.c.l.bf16 %v555
    %v1068 = vunpack.c.l.bf16 %v556
    %v1069 = vunpack.c.l.bf16 %v557
    %v1070 = vunpack.c.l.bf16 %v558
    %v1071 = vunpack.c.l.bf16 %v559
    %v1072 = vunpack.c.l.bf16 %v560
    %v1073 = vunpack.c.l.bf16 %v561
    %v1074 = vunpack.c.l.bf16 %v562
    %v1075 = vunpack.c.l.bf16 %v563
    %v1076 = vunpack.c.l.bf16 %v564
    %v1077 = vunpack.c.l.bf16 %v565
    %v1078 = vunpack.c.l.bf16 %v566
    %v1079 = vunpack.c.l.bf16 %v567
    %v1080 = vunpack.c.l.bf16 %v568
    %v1081 = vunpack.c.l.bf16 %v569
    %v1082 = vunpack.c.l.bf16 %v570
    %v1083 = vunpack.c.l.bf16 %v571
    %v1084 = vunpack.c.l.bf16 %v572
    %v1085 = vunpack.c.l.bf16 %v573
    %v1086 = vunpack.c.l.bf16 %v574
    %v1087 = vunpack.c.l.bf16 %v575
    %v1088 = vunpack.c.l.bf16 %v576
    %v1089 = vunpack.c.l.bf16 %v577
    %v1090 = vunpack.c.l.bf16 %v578
    %v1091 = vunpack.c.l.bf16 %v579
    %v1092 = vunpack.c.l.bf16 %v580
    %v1093 = vunpack.c.l.bf16 %v581
    %v1094 = vunpack.c.l.bf16 %v582
    %v1095 = vunpack.c.l.bf16 %v583
    %v1096 = vunpack.c.l.bf16 %v584
    %v1097 = vunpack.c.l.bf16 %v585
    %v1098 = vunpack.c.l.bf16 %v586
    %v1099 = vunpack.c.l.bf16 %v587
    %v1100 = vunpack.c.l.bf16 %v588
    %v1101 = vunpack.c.l.bf16 %v589
    %v1102 = vunpack.c.l.bf16 %v590
    %v1103 = vunpack.c.l.bf16 %v591
    %v1104 = vunpack.c.l.bf16 %v592
    %v1105 = vunpack.c.l.bf16 %v593
    %v1106 = vunpack.c.l.bf16 %v594
    %v1107 = vunpack.c.l.bf16 %v595
    %v1108 = vunpack.c.l.bf16 %v596
    %v1109 = vunpack.c.l.bf16 %v597
    %v1110 = vunpack.c.l.bf16 %v598
    %v1111 = vunpack.c.l.bf16 %v599
    %v1112 = vunpack.c.l.bf16 %v600
    %v1113 = vunpack.c.l.bf16 %v601
    %v1114 = vunpack.c.l.bf16 %v602
    %v1115 = vunpack.c.l.bf16 %v603
    %v1116 = vunpack.c.l.bf16 %v604
    %v1117 = vunpack.c.l.bf16 %v605
    %v1118 = vunpack.c.l.bf16 %v606
    %v1119 = vunpack.c.l.bf16 %v607
    %v1120 = vunpack.c.l.bf16 %v608
    %v1121 = vunpack.c.l.bf16 %v609
    %v1122 = vunpack.c.l.bf16 %v610
    %v1123 = vunpack.c.l.bf16 %v611
    %v1124 = vunpack.c.l.bf16 %v612
    %v1125 = vunpack.c.l.bf16 %v613
    %v1126 = vunpack.c.l.bf16 %v614
    %v1127 = vunpack.c.l.bf16 %v615
    %v1128 = vunpack.c.l.bf16 %v616
    %v1129 = vunpack.c.l.bf16 %v617
    %v1130 = vunpack.c.l.bf16 %v618
    %v1131 = vunpack.c.l.bf16 %v619
    %v1132 = vunpack.c.l.bf16 %v620
    %v1133 = vunpack.c.l.bf16 %v621
    %v1134 = vunpack.c.l.bf16 %v622
    %v1135 = vunpack.c.l.bf16 %v623
    %v1136 = vunpack.c.l.bf16 %v624
    %v1137 = vunpack.c.l.bf16 %v625
    %v1138 = vunpack.c.l.bf16 %v626
    %v1139 = vunpack.c.l.bf16 %v627
    %v1140 = vunpack.c.l.bf16 %v628
    %v1141 = vunpack.c.l.bf16 %v629
    %v1142 = vunpack.c.l.bf16 %v630
    %v1143 = vunpack.c.l.bf16 %v631
    %v1144 = vunpack.c.l.bf16 %v632
    %v1145 = vunpack.c.l.bf16 %v633
    %v1146 = vunpack.c.l.bf16 %v634
    %v1147 = vunpack.c.l.bf16 %v635
    %v1148 = vunpack.c.l.bf16 %v636
    %v1149 = vunpack.c.l.bf16 %v637
    %v1150 = vunpack.c.l.bf16 %v638
    %v1151 = vunpack.c.l.bf16 %v639
    %v1152 = vunpack.c.l.bf16 %v640
    %v1153 = vunpack.c.l.bf16 %v641
    %v1154 = vunpack.c.l.bf16 %v642
    %v1155 = vunpack.c.l.bf16 %v643
    %v1156 = vunpack.c.l.bf16 %v644
    %v1157 = vunpack.c.l.bf16 %v645
    %v1158 = vunpack.c.l.bf16 %v646
    %v1159 = vunpack.c.l.bf16 %v647
    %v1160 = vunpack.c.l.bf16 %v648
    %v1161 = vunpack.c.l.bf16 %v649
    %v1162 = vunpack.c.l.bf16 %v650
    %v1163 = vunpack.c.l.bf16 %v651
    %v1164 = vunpack.c.l.bf16 %v652
    %v1165 = vunpack.c.l.bf16 %v653
    %v1166 = vunpack.c.l.bf16 %v654
    %v1167 = vunpack.c.l.bf16 %v655
    %v1168 = vunpack.c.l.bf16 %v656
    %v1169 = vunpack.c.l.bf16 %v657
    %v1170 = vunpack.c.l.bf16 %v658
    %v1171 = vunpack.c.l.bf16 %v659
    %v1172 = vunpack.c.l.bf16 %v660
    %v1173 = vunpack.c.l.bf16 %v661
    %v1174 = vunpack.c.l.bf16 %v662
    %vm1175 = vcmask 400384
    %v1176 = vsel %vm1175, %v663, 0.0
    %1177 = vadd.xlane.f32.xlu0 %v1176
    %v1178 = vpop.xlane.xlu0 %1177
    %v1179 = vsel %vm1175, %v664, 0.0
    %1180 = vadd.xlane.f32.xlu0 %v1179
    %v1181 = vpop.xlane.xlu0 %1180
    %v1182 = vsel %vm1175, %v665, 0.0
    %1183 = vadd.xlane.f32.xlu0 %v1182
    %v1184 = vpop.xlane.xlu0 %1183
    %v1185 = vsel %vm1175, %v666, 0.0
    %1186 = vadd.xlane.f32.xlu0 %v1185
    %v1187 = vpop.xlane.xlu0 %1186
    %v1188 = vsel %vm1175, %v667, 0.0
    %1189 = vadd.xlane.f32.xlu0 %v1188
    %v1190 = vpop.xlane.xlu0 %1189
    %v1191 = vsel %vm1175, %v668, 0.0
    %1192 = vadd.xlane.f32.xlu0 %v1191
    %v1193 = vpop.xlane.xlu0 %1192
    %v1194 = vsel %vm1175, %v669, 0.0
    %1195 = vadd.xlane.f32.xlu0 %v1194
    %v1196 = vpop.xlane.xlu0 %1195
    %v1197 = vsel %vm1175, %v670, 0.0
    %1198 = vadd.xlane.f32.xlu0 %v1197
    %v1199 = vpop.xlane.xlu0 %1198
    %v1200 = vsel %vm1175, %v671, 0.0
    %1201 = vadd.xlane.f32.xlu0 %v1200
    %v1202 = vpop.xlane.xlu0 %1201
    %v1203 = vsel %vm1175, %v672, 0.0
    %1204 = vadd.xlane.f32.xlu0 %v1203
    %v1205 = vpop.xlane.xlu0 %1204
    %v1206 = vsel %vm1175, %v673, 0.0
    %1207 = vadd.xlane.f32.xlu0 %v1206
    %v1208 = vpop.xlane.xlu0 %1207
    %v1209 = vsel %vm1175, %v674, 0.0
    %1210 = vadd.xlane.f32.xlu0 %v1209
    %v1211 = vpop.xlane.xlu0 %1210
    %v1212 = vsel %vm1175, %v675, 0.0
    %1213 = vadd.xlane.f32.xlu0 %v1212
    %v1214 = vpop.xlane.xlu0 %1213
    %v1215 = vsel %vm1175, %v676, 0.0
    %1216 = vadd.xlane.f32.xlu0 %v1215
    %v1217 = vpop.xlane.xlu0 %1216
    %v1218 = vsel %vm1175, %v677, 0.0
    %1219 = vadd.xlane.f32.xlu0 %v1218
    %v1220 = vpop.xlane.xlu0 %1219
    %v1221 = vsel %vm1175, %v678, 0.0
    %1222 = vadd.xlane.f32.xlu0 %v1221
    %v1223 = vpop.xlane.xlu0 %1222
    %v1224 = vsel %vm1175, %v679, 0.0
    %1225 = vadd.xlane.f32.xlu0 %v1224
    %v1226 = vpop.xlane.xlu0 %1225
    %v1227 = vsel %vm1175, %v680, 0.0
    %1228 = vadd.xlane.f32.xlu0 %v1227
    %v1229 = vpop.xlane.xlu0 %1228
    %v1230 = vsel %vm1175, %v681, 0.0
    %1231 = vadd.xlane.f32.xlu0 %v1230
    %v1232 = vpop.xlane.xlu0 %1231
    %v1233 = vsel %vm1175, %v682, 0.0
    %1234 = vadd.xlane.f32.xlu0 %v1233
    %v1235 = vpop.xlane.xlu0 %1234
    %v1236 = vsel %vm1175, %v683, 0.0
    %1237 = vadd.xlane.f32.xlu0 %v1236
    %v1238 = vpop.xlane.xlu0 %1237
    %v1239 = vsel %vm1175, %v684, 0.0
    %1240 = vadd.xlane.f32.xlu0 %v1239
    %v1241 = vpop.xlane.xlu0 %1240
    %v1242 = vsel %vm1175, %v685, 0.0
    %1243 = vadd.xlane.f32.xlu0 %v1242
    %v1244 = vpop.xlane.xlu0 %1243
    %v1245 = vsel %vm1175, %v686, 0.0
    %1246 = vadd.xlane.f32.xlu0 %v1245
    %v1247 = vpop.xlane.xlu0 %1246
    %v1248 = vsel %vm1175, %v687, 0.0
    %1249 = vadd.xlane.f32.xlu0 %v1248
    %v1250 = vpop.xlane.xlu0 %1249
    %v1251 = vsel %vm1175, %v688, 0.0
    %1252 = vadd.xlane.f32.xlu0 %v1251
    %v1253 = vpop.xlane.xlu0 %1252
    %v1254 = vsel %vm1175, %v689, 0.0
    %1255 = vadd.xlane.f32.xlu0 %v1254
    %v1256 = vpop.xlane.xlu0 %1255
    %v1257 = vsel %vm1175, %v690, 0.0
    %1258 = vadd.xlane.f32.xlu0 %v1257
    %v1259 = vpop.xlane.xlu0 %1258
    %v1260 = vsel %vm1175, %v691, 0.0
    %1261 = vadd.xlane.f32.xlu0 %v1260
    %v1262 = vpop.xlane.xlu0 %1261
    %v1263 = vsel %vm1175, %v692, 0.0
    %1264 = vadd.xlane.f32.xlu0 %v1263
    %v1265 = vpop.xlane.xlu0 %1264
    %v1266 = vsel %vm1175, %v693, 0.0
    %1267 = vadd.xlane.f32.xlu0 %v1266
    %v1268 = vpop.xlane.xlu0 %1267
    %v1269 = vsel %vm1175, %v694, 0.0
    %1270 = vadd.xlane.f32.xlu0 %v1269
    %v1271 = vpop.xlane.xlu0 %1270
    %v1272 = vsel %vm1175, %v695, 0.0
    %1273 = vadd.xlane.f32.xlu0 %v1272
    %v1274 = vpop.xlane.xlu0 %1273
    %v1275 = vsel %vm1175, %v696, 0.0
    %1276 = vadd.xlane.f32.xlu0 %v1275
    %v1277 = vpop.xlane.xlu0 %1276
    %v1278 = vsel %vm1175, %v697, 0.0
    %1279 = vadd.xlane.f32.xlu0 %v1278
    %v1280 = vpop.xlane.xlu0 %1279
    %v1281 = vsel %vm1175, %v698, 0.0
    %1282 = vadd.xlane.f32.xlu0 %v1281
    %v1283 = vpop.xlane.xlu0 %1282
    %v1284 = vsel %vm1175, %v699, 0.0
    %1285 = vadd.xlane.f32.xlu0 %v1284
    %v1286 = vpop.xlane.xlu0 %1285
    %v1287 = vsel %vm1175, %v700, 0.0
    %1288 = vadd.xlane.f32.xlu0 %v1287
    %v1289 = vpop.xlane.xlu0 %1288
    %v1290 = vsel %vm1175, %v701, 0.0
    %1291 = vadd.xlane.f32.xlu0 %v1290
    %v1292 = vpop.xlane.xlu0 %1291
    %v1293 = vsel %vm1175, %v702, 0.0
    %1294 = vadd.xlane.f32.xlu0 %v1293
    %v1295 = vpop.xlane.xlu0 %1294
    %v1296 = vsel %vm1175, %v703, 0.0
    %1297 = vadd.xlane.f32.xlu0 %v1296
    %v1298 = vpop.xlane.xlu0 %1297
    %v1299 = vsel %vm1175, %v704, 0.0
    %1300 = vadd.xlane.f32.xlu0 %v1299
    %v1301 = vpop.xlane.xlu0 %1300
    %v1302 = vsel %vm1175, %v705, 0.0
    %1303 = vadd.xlane.f32.xlu0 %v1302
    %v1304 = vpop.xlane.xlu0 %1303
    %v1305 = vsel %vm1175, %v706, 0.0
    %1306 = vadd.xlane.f32.xlu0 %v1305
    %v1307 = vpop.xlane.xlu0 %1306
    %v1308 = vsel %vm1175, %v707, 0.0
    %1309 = vadd.xlane.f32.xlu0 %v1308
    %v1310 = vpop.xlane.xlu0 %1309
    %v1311 = vsel %vm1175, %v708, 0.0
    %1312 = vadd.xlane.f32.xlu0 %v1311
    %v1313 = vpop.xlane.xlu0 %1312
    %v1314 = vsel %vm1175, %v709, 0.0
    %1315 = vadd.xlane.f32.xlu0 %v1314
    %v1316 = vpop.xlane.xlu0 %1315
    %v1317 = vsel %vm1175, %v710, 0.0
    %1318 = vadd.xlane.f32.xlu0 %v1317
    %v1319 = vpop.xlane.xlu0 %1318
    %v1320 = vsel %vm1175, %v711, 0.0
    %1321 = vadd.xlane.f32.xlu0 %v1320
    %v1322 = vpop.xlane.xlu0 %1321
    %v1323 = vsel %vm1175, %v712, 0.0
    %1324 = vadd.xlane.f32.xlu0 %v1323
    %v1325 = vpop.xlane.xlu0 %1324
    %v1326 = vsel %vm1175, %v713, 0.0
    %1327 = vadd.xlane.f32.xlu0 %v1326
    %v1328 = vpop.xlane.xlu0 %1327
    %v1329 = vsel %vm1175, %v714, 0.0
    %1330 = vadd.xlane.f32.xlu0 %v1329
    %v1331 = vpop.xlane.xlu0 %1330
    %v1332 = vsel %vm1175, %v715, 0.0
    %1333 = vadd.xlane.f32.xlu0 %v1332
    %v1334 = vpop.xlane.xlu0 %1333
    %v1335 = vsel %vm1175, %v716, 0.0
    %1336 = vadd.xlane.f32.xlu0 %v1335
    %v1337 = vpop.xlane.xlu0 %1336
    %v1338 = vsel %vm1175, %v717, 0.0
    %1339 = vadd.xlane.f32.xlu0 %v1338
    %v1340 = vpop.xlane.xlu0 %1339
    %v1341 = vsel %vm1175, %v718, 0.0
    %1342 = vadd.xlane.f32.xlu0 %v1341
    %v1343 = vpop.xlane.xlu0 %1342
    %v1344 = vsel %vm1175, %v719, 0.0
    %1345 = vadd.xlane.f32.xlu0 %v1344
    %v1346 = vpop.xlane.xlu0 %1345
    %v1347 = vsel %vm1175, %v720, 0.0
    %1348 = vadd.xlane.f32.xlu0 %v1347
    %v1349 = vpop.xlane.xlu0 %1348
    %v1350 = vsel %vm1175, %v721, 0.0
    %1351 = vadd.xlane.f32.xlu0 %v1350
    %v1352 = vpop.xlane.xlu0 %1351
    %v1353 = vsel %vm1175, %v722, 0.0
    %1354 = vadd.xlane.f32.xlu0 %v1353
    %v1355 = vpop.xlane.xlu0 %1354
    %v1356 = vsel %vm1175, %v723, 0.0
    %1357 = vadd.xlane.f32.xlu0 %v1356
    %v1358 = vpop.xlane.xlu0 %1357
    %v1359 = vsel %vm1175, %v724, 0.0
    %1360 = vadd.xlane.f32.xlu0 %v1359
    %v1361 = vpop.xlane.xlu0 %1360
    %v1362 = vsel %vm1175, %v725, 0.0
    %1363 = vadd.xlane.f32.xlu0 %v1362
    %v1364 = vpop.xlane.xlu0 %1363
    %v1365 = vsel %vm1175, %v726, 0.0
    %1366 = vadd.xlane.f32.xlu0 %v1365
    %v1367 = vpop.xlane.xlu0 %1366
    %v1368 = vsel %vm1175, %v727, 0.0
    %1369 = vadd.xlane.f32.xlu0 %v1368
    %v1370 = vpop.xlane.xlu0 %1369
    %v1371 = vsel %vm1175, %v728, 0.0
    %1372 = vadd.xlane.f32.xlu0 %v1371
    %v1373 = vpop.xlane.xlu0 %1372
    %v1374 = vsel %vm1175, %v729, 0.0
    %1375 = vadd.xlane.f32.xlu0 %v1374
    %v1376 = vpop.xlane.xlu0 %1375
    %v1377 = vsel %vm1175, %v730, 0.0
    %1378 = vadd.xlane.f32.xlu0 %v1377
    %v1379 = vpop.xlane.xlu0 %1378
    %v1380 = vsel %vm1175, %v731, 0.0
    %1381 = vadd.xlane.f32.xlu0 %v1380
    %v1382 = vpop.xlane.xlu0 %1381
    %v1383 = vsel %vm1175, %v732, 0.0
    %1384 = vadd.xlane.f32.xlu0 %v1383
    %v1385 = vpop.xlane.xlu0 %1384
    %v1386 = vsel %vm1175, %v733, 0.0
    %1387 = vadd.xlane.f32.xlu0 %v1386
    %v1388 = vpop.xlane.xlu0 %1387
    %v1389 = vsel %vm1175, %v734, 0.0
    %1390 = vadd.xlane.f32.xlu0 %v1389
    %v1391 = vpop.xlane.xlu0 %1390
    %v1392 = vsel %vm1175, %v735, 0.0
    %1393 = vadd.xlane.f32.xlu0 %v1392
    %v1394 = vpop.xlane.xlu0 %1393
    %v1395 = vsel %vm1175, %v736, 0.0
    %1396 = vadd.xlane.f32.xlu0 %v1395
    %v1397 = vpop.xlane.xlu0 %1396
    %v1398 = vsel %vm1175, %v737, 0.0
    %1399 = vadd.xlane.f32.xlu0 %v1398
    %v1400 = vpop.xlane.xlu0 %1399
    %v1401 = vsel %vm1175, %v738, 0.0
    %1402 = vadd.xlane.f32.xlu0 %v1401
    %v1403 = vpop.xlane.xlu0 %1402
    %v1404 = vsel %vm1175, %v739, 0.0
    %1405 = vadd.xlane.f32.xlu0 %v1404
    %v1406 = vpop.xlane.xlu0 %1405
    %v1407 = vsel %vm1175, %v740, 0.0
    %1408 = vadd.xlane.f32.xlu0 %v1407
    %v1409 = vpop.xlane.xlu0 %1408
    %v1410 = vsel %vm1175, %v741, 0.0
    %1411 = vadd.xlane.f32.xlu0 %v1410
    %v1412 = vpop.xlane.xlu0 %1411
    %v1413 = vsel %vm1175, %v742, 0.0
    %1414 = vadd.xlane.f32.xlu0 %v1413
    %v1415 = vpop.xlane.xlu0 %1414
    %v1416 = vsel %vm1175, %v743, 0.0
    %1417 = vadd.xlane.f32.xlu0 %v1416
    %v1418 = vpop.xlane.xlu0 %1417
    %v1419 = vsel %vm1175, %v744, 0.0
    %1420 = vadd.xlane.f32.xlu0 %v1419
    %v1421 = vpop.xlane.xlu0 %1420
    %v1422 = vsel %vm1175, %v745, 0.0
    %1423 = vadd.xlane.f32.xlu0 %v1422
    %v1424 = vpop.xlane.xlu0 %1423
    %v1425 = vsel %vm1175, %v746, 0.0
    %1426 = vadd.xlane.f32.xlu0 %v1425
    %v1427 = vpop.xlane.xlu0 %1426
    %v1428 = vsel %vm1175, %v747, 0.0
    %1429 = vadd.xlane.f32.xlu0 %v1428
    %v1430 = vpop.xlane.xlu0 %1429
    %v1431 = vsel %vm1175, %v748, 0.0
    %1432 = vadd.xlane.f32.xlu0 %v1431
    %v1433 = vpop.xlane.xlu0 %1432
    %v1434 = vsel %vm1175, %v749, 0.0
    %1435 = vadd.xlane.f32.xlu0 %v1434
    %v1436 = vpop.xlane.xlu0 %1435
    %v1437 = vsel %vm1175, %v750, 0.0
    %1438 = vadd.xlane.f32.xlu0 %v1437
    %v1439 = vpop.xlane.xlu0 %1438
    %v1440 = vsel %vm1175, %v751, 0.0
    %1441 = vadd.xlane.f32.xlu0 %v1440
    %v1442 = vpop.xlane.xlu0 %1441
    %v1443 = vsel %vm1175, %v752, 0.0
    %1444 = vadd.xlane.f32.xlu0 %v1443
    %v1445 = vpop.xlane.xlu0 %1444
    %v1446 = vsel %vm1175, %v753, 0.0
    %1447 = vadd.xlane.f32.xlu0 %v1446
    %v1448 = vpop.xlane.xlu0 %1447
    %v1449 = vsel %vm1175, %v754, 0.0
    %1450 = vadd.xlane.f32.xlu0 %v1449
    %v1451 = vpop.xlane.xlu0 %1450
    %v1452 = vsel %vm1175, %v755, 0.0
    %1453 = vadd.xlane.f32.xlu0 %v1452
    %v1454 = vpop.xlane.xlu0 %1453
    %v1455 = vsel %vm1175, %v756, 0.0
    %1456 = vadd.xlane.f32.xlu0 %v1455
    %v1457 = vpop.xlane.xlu0 %1456
    %v1458 = vsel %vm1175, %v757, 0.0
    %1459 = vadd.xlane.f32.xlu0 %v1458
    %v1460 = vpop.xlane.xlu0 %1459
    %v1461 = vsel %vm1175, %v758, 0.0
    %1462 = vadd.xlane.f32.xlu0 %v1461
    %v1463 = vpop.xlane.xlu0 %1462
    %v1464 = vsel %vm1175, %v759, 0.0
    %1465 = vadd.xlane.f32.xlu0 %v1464
    %v1466 = vpop.xlane.xlu0 %1465
    %v1467 = vsel %vm1175, %v760, 0.0
    %1468 = vadd.xlane.f32.xlu0 %v1467
    %v1469 = vpop.xlane.xlu0 %1468
    %v1470 = vsel %vm1175, %v761, 0.0
    %1471 = vadd.xlane.f32.xlu0 %v1470
    %v1472 = vpop.xlane.xlu0 %1471
    %v1473 = vsel %vm1175, %v762, 0.0
    %1474 = vadd.xlane.f32.xlu0 %v1473
    %v1475 = vpop.xlane.xlu0 %1474
    %v1476 = vsel %vm1175, %v763, 0.0
    %1477 = vadd.xlane.f32.xlu0 %v1476
    %v1478 = vpop.xlane.xlu0 %1477
    %v1479 = vsel %vm1175, %v764, 0.0
    %1480 = vadd.xlane.f32.xlu0 %v1479
    %v1481 = vpop.xlane.xlu0 %1480
    %v1482 = vsel %vm1175, %v765, 0.0
    %1483 = vadd.xlane.f32.xlu0 %v1482
    %v1484 = vpop.xlane.xlu0 %1483
    %v1485 = vsel %vm1175, %v766, 0.0
    %1486 = vadd.xlane.f32.xlu0 %v1485
    %v1487 = vpop.xlane.xlu0 %1486
    %v1488 = vsel %vm1175, %v767, 0.0
    %1489 = vadd.xlane.f32.xlu0 %v1488
    %v1490 = vpop.xlane.xlu0 %1489
    %v1491 = vsel %vm1175, %v768, 0.0
    %1492 = vadd.xlane.f32.xlu0 %v1491
    %v1493 = vpop.xlane.xlu0 %1492
    %v1494 = vsel %vm1175, %v769, 0.0
    %1495 = vadd.xlane.f32.xlu0 %v1494
    %v1496 = vpop.xlane.xlu0 %1495
    %v1497 = vsel %vm1175, %v770, 0.0
    %1498 = vadd.xlane.f32.xlu0 %v1497
    %v1499 = vpop.xlane.xlu0 %1498
    %v1500 = vsel %vm1175, %v771, 0.0
    %1501 = vadd.xlane.f32.xlu0 %v1500
    %v1502 = vpop.xlane.xlu0 %1501
    %v1503 = vsel %vm1175, %v772, 0.0
    %1504 = vadd.xlane.f32.xlu0 %v1503
    %v1505 = vpop.xlane.xlu0 %1504
    %v1506 = vsel %vm1175, %v773, 0.0
    %1507 = vadd.xlane.f32.xlu0 %v1506
    %v1508 = vpop.xlane.xlu0 %1507
    %v1509 = vsel %vm1175, %v774, 0.0
    %1510 = vadd.xlane.f32.xlu0 %v1509
    %v1511 = vpop.xlane.xlu0 %1510
    %v1512 = vsel %vm1175, %v775, 0.0
    %1513 = vadd.xlane.f32.xlu0 %v1512
    %v1514 = vpop.xlane.xlu0 %1513
    %v1515 = vsel %vm1175, %v776, 0.0
    %1516 = vadd.xlane.f32.xlu0 %v1515
    %v1517 = vpop.xlane.xlu0 %1516
    %v1518 = vsel %vm1175, %v777, 0.0
    %1519 = vadd.xlane.f32.xlu0 %v1518
    %v1520 = vpop.xlane.xlu0 %1519
    %v1521 = vsel %vm1175, %v778, 0.0
    %1522 = vadd.xlane.f32.xlu0 %v1521
    %v1523 = vpop.xlane.xlu0 %1522
    %v1524 = vsel %vm1175, %v779, 0.0
    %1525 = vadd.xlane.f32.xlu0 %v1524
    %v1526 = vpop.xlane.xlu0 %1525
    %v1527 = vsel %vm1175, %v780, 0.0
    %1528 = vadd.xlane.f32.xlu0 %v1527
    %v1529 = vpop.xlane.xlu0 %1528
    %v1530 = vsel %vm1175, %v781, 0.0
    %1531 = vadd.xlane.f32.xlu0 %v1530
    %v1532 = vpop.xlane.xlu0 %1531
    %v1533 = vsel %vm1175, %v782, 0.0
    %1534 = vadd.xlane.f32.xlu0 %v1533
    %v1535 = vpop.xlane.xlu0 %1534
    %v1536 = vsel %vm1175, %v783, 0.0
    %1537 = vadd.xlane.f32.xlu0 %v1536
    %v1538 = vpop.xlane.xlu0 %1537
    %v1539 = vsel %vm1175, %v784, 0.0
    %1540 = vadd.xlane.f32.xlu0 %v1539
    %v1541 = vpop.xlane.xlu0 %1540
    %v1542 = vsel %vm1175, %v785, 0.0
    %1543 = vadd.xlane.f32.xlu0 %v1542
    %v1544 = vpop.xlane.xlu0 %1543
    %v1545 = vsel %vm1175, %v786, 0.0
    %1546 = vadd.xlane.f32.xlu0 %v1545
    %v1547 = vpop.xlane.xlu0 %1546
    %v1548 = vsel %vm1175, %v787, 0.0
    %1549 = vadd.xlane.f32.xlu0 %v1548
    %v1550 = vpop.xlane.xlu0 %1549
    %v1551 = vsel %vm1175, %v788, 0.0
    %1552 = vadd.xlane.f32.xlu0 %v1551
    %v1553 = vpop.xlane.xlu0 %1552
    %v1554 = vsel %vm1175, %v789, 0.0
    %1555 = vadd.xlane.f32.xlu0 %v1554
    %v1556 = vpop.xlane.xlu0 %1555
    %v1557 = vsel %vm1175, %v790, 0.0
    %1558 = vadd.xlane.f32.xlu0 %v1557
    %v1559 = vpop.xlane.xlu0 %1558
    %v1560 = vsel %vm1175, %v791, 0.0
    %1561 = vadd.xlane.f32.xlu0 %v1560
    %v1562 = vpop.xlane.xlu0 %1561
    %v1563 = vsel %vm1175, %v792, 0.0
    %1564 = vadd.xlane.f32.xlu0 %v1563
    %v1565 = vpop.xlane.xlu0 %1564
    %v1566 = vsel %vm1175, %v793, 0.0
    %1567 = vadd.xlane.f32.xlu0 %v1566
    %v1568 = vpop.xlane.xlu0 %1567
    %v1569 = vsel %vm1175, %v794, 0.0
    %1570 = vadd.xlane.f32.xlu0 %v1569
    %v1571 = vpop.xlane.xlu0 %1570
    %v1572 = vsel %vm1175, %v795, 0.0
    %1573 = vadd.xlane.f32.xlu0 %v1572
    %v1574 = vpop.xlane.xlu0 %1573
    %v1575 = vsel %vm1175, %v796, 0.0
    %1576 = vadd.xlane.f32.xlu0 %v1575
    %v1577 = vpop.xlane.xlu0 %1576
    %v1578 = vsel %vm1175, %v797, 0.0
    %1579 = vadd.xlane.f32.xlu0 %v1578
    %v1580 = vpop.xlane.xlu0 %1579
    %v1581 = vsel %vm1175, %v798, 0.0
    %1582 = vadd.xlane.f32.xlu0 %v1581
    %v1583 = vpop.xlane.xlu0 %1582
    %v1584 = vsel %vm1175, %v799, 0.0
    %1585 = vadd.xlane.f32.xlu0 %v1584
    %v1586 = vpop.xlane.xlu0 %1585
    %v1587 = vsel %vm1175, %v800, 0.0
    %1588 = vadd.xlane.f32.xlu0 %v1587
    %v1589 = vpop.xlane.xlu0 %1588
    %v1590 = vsel %vm1175, %v801, 0.0
    %1591 = vadd.xlane.f32.xlu0 %v1590
    %v1592 = vpop.xlane.xlu0 %1591
    %v1593 = vsel %vm1175, %v802, 0.0
    %1594 = vadd.xlane.f32.xlu0 %v1593
    %v1595 = vpop.xlane.xlu0 %1594
    %v1596 = vsel %vm1175, %v803, 0.0
    %1597 = vadd.xlane.f32.xlu0 %v1596
    %v1598 = vpop.xlane.xlu0 %1597
    %v1599 = vsel %vm1175, %v804, 0.0
    %1600 = vadd.xlane.f32.xlu0 %v1599
    %v1601 = vpop.xlane.xlu0 %1600
    %v1602 = vsel %vm1175, %v805, 0.0
    %1603 = vadd.xlane.f32.xlu0 %v1602
    %v1604 = vpop.xlane.xlu0 %1603
    %v1605 = vsel %vm1175, %v806, 0.0
    %1606 = vadd.xlane.f32.xlu0 %v1605
    %v1607 = vpop.xlane.xlu0 %1606
    %v1608 = vsel %vm1175, %v807, 0.0
    %1609 = vadd.xlane.f32.xlu0 %v1608
    %v1610 = vpop.xlane.xlu0 %1609
    %v1611 = vsel %vm1175, %v808, 0.0
    %1612 = vadd.xlane.f32.xlu0 %v1611
    %v1613 = vpop.xlane.xlu0 %1612
    %v1614 = vsel %vm1175, %v809, 0.0
    %1615 = vadd.xlane.f32.xlu0 %v1614
    %v1616 = vpop.xlane.xlu0 %1615
    %v1617 = vsel %vm1175, %v810, 0.0
    %1618 = vadd.xlane.f32.xlu0 %v1617
    %v1619 = vpop.xlane.xlu0 %1618
    %v1620 = vsel %vm1175, %v811, 0.0
    %1621 = vadd.xlane.f32.xlu0 %v1620
    %v1622 = vpop.xlane.xlu0 %1621
    %v1623 = vsel %vm1175, %v812, 0.0
    %1624 = vadd.xlane.f32.xlu0 %v1623
    %v1625 = vpop.xlane.xlu0 %1624
    %v1626 = vsel %vm1175, %v813, 0.0
    %1627 = vadd.xlane.f32.xlu0 %v1626
    %v1628 = vpop.xlane.xlu0 %1627
    %v1629 = vsel %vm1175, %v814, 0.0
    %1630 = vadd.xlane.f32.xlu0 %v1629
    %v1631 = vpop.xlane.xlu0 %1630
    %v1632 = vsel %vm1175, %v815, 0.0
    %1633 = vadd.xlane.f32.xlu0 %v1632
    %v1634 = vpop.xlane.xlu0 %1633
    %v1635 = vsel %vm1175, %v816, 0.0
    %1636 = vadd.xlane.f32.xlu0 %v1635
    %v1637 = vpop.xlane.xlu0 %1636
    %v1638 = vsel %vm1175, %v817, 0.0
    %1639 = vadd.xlane.f32.xlu0 %v1638
    %v1640 = vpop.xlane.xlu0 %1639
    %v1641 = vsel %vm1175, %v818, 0.0
    %1642 = vadd.xlane.f32.xlu0 %v1641
    %v1643 = vpop.xlane.xlu0 %1642
    %v1644 = vsel %vm1175, %v819, 0.0
    %1645 = vadd.xlane.f32.xlu0 %v1644
    %v1646 = vpop.xlane.xlu0 %1645
    %v1647 = vsel %vm1175, %v820, 0.0
    %1648 = vadd.xlane.f32.xlu0 %v1647
    %v1649 = vpop.xlane.xlu0 %1648
    %v1650 = vsel %vm1175, %v821, 0.0
    %1651 = vadd.xlane.f32.xlu0 %v1650
    %v1652 = vpop.xlane.xlu0 %1651
    %v1653 = vsel %vm1175, %v822, 0.0
    %1654 = vadd.xlane.f32.xlu0 %v1653
    %v1655 = vpop.xlane.xlu0 %1654
    %v1656 = vsel %vm1175, %v823, 0.0
    %1657 = vadd.xlane.f32.xlu0 %v1656
    %v1658 = vpop.xlane.xlu0 %1657
    %v1659 = vsel %vm1175, %v824, 0.0
    %1660 = vadd.xlane.f32.xlu0 %v1659
    %v1661 = vpop.xlane.xlu0 %1660
    %v1662 = vsel %vm1175, %v825, 0.0
    %1663 = vadd.xlane.f32.xlu0 %v1662
    %v1664 = vpop.xlane.xlu0 %1663
    %v1665 = vsel %vm1175, %v826, 0.0
    %1666 = vadd.xlane.f32.xlu0 %v1665
    %v1667 = vpop.xlane.xlu0 %1666
    %v1668 = vsel %vm1175, %v827, 0.0
    %1669 = vadd.xlane.f32.xlu0 %v1668
    %v1670 = vpop.xlane.xlu0 %1669
    %v1671 = vsel %vm1175, %v828, 0.0
    %1672 = vadd.xlane.f32.xlu0 %v1671
    %v1673 = vpop.xlane.xlu0 %1672
    %v1674 = vsel %vm1175, %v829, 0.0
    %1675 = vadd.xlane.f32.xlu0 %v1674
    %v1676 = vpop.xlane.xlu0 %1675
    %v1677 = vsel %vm1175, %v830, 0.0
    %1678 = vadd.xlane.f32.xlu0 %v1677
    %v1679 = vpop.xlane.xlu0 %1678
    %v1680 = vsel %vm1175, %v831, 0.0
    %1681 = vadd.xlane.f32.xlu0 %v1680
    %v1682 = vpop.xlane.xlu0 %1681
    %v1683 = vsel %vm1175, %v832, 0.0
    %1684 = vadd.xlane.f32.xlu0 %v1683
    %v1685 = vpop.xlane.xlu0 %1684
    %v1686 = vsel %vm1175, %v833, 0.0
    %1687 = vadd.xlane.f32.xlu0 %v1686
    %v1688 = vpop.xlane.xlu0 %1687
    %v1689 = vsel %vm1175, %v834, 0.0
    %1690 = vadd.xlane.f32.xlu0 %v1689
    %v1691 = vpop.xlane.xlu0 %1690
    %v1692 = vsel %vm1175, %v835, 0.0
    %1693 = vadd.xlane.f32.xlu0 %v1692
    %v1694 = vpop.xlane.xlu0 %1693
    %v1695 = vsel %vm1175, %v836, 0.0
    %1696 = vadd.xlane.f32.xlu0 %v1695
    %v1697 = vpop.xlane.xlu0 %1696
    %v1698 = vsel %vm1175, %v837, 0.0
    %1699 = vadd.xlane.f32.xlu0 %v1698
    %v1700 = vpop.xlane.xlu0 %1699
    %v1701 = vsel %vm1175, %v838, 0.0
    %1702 = vadd.xlane.f32.xlu0 %v1701
    %v1703 = vpop.xlane.xlu0 %1702
    %v1704 = vsel %vm1175, %v839, 0.0
    %1705 = vadd.xlane.f32.xlu0 %v1704
    %v1706 = vpop.xlane.xlu0 %1705
    %v1707 = vsel %vm1175, %v840, 0.0
    %1708 = vadd.xlane.f32.xlu0 %v1707
    %v1709 = vpop.xlane.xlu0 %1708
    %v1710 = vsel %vm1175, %v841, 0.0
    %1711 = vadd.xlane.f32.xlu0 %v1710
    %v1712 = vpop.xlane.xlu0 %1711
    %v1713 = vsel %vm1175, %v842, 0.0
    %1714 = vadd.xlane.f32.xlu0 %v1713
    %v1715 = vpop.xlane.xlu0 %1714
    %v1716 = vsel %vm1175, %v843, 0.0
    %1717 = vadd.xlane.f32.xlu0 %v1716
    %v1718 = vpop.xlane.xlu0 %1717
    %v1719 = vsel %vm1175, %v844, 0.0
    %1720 = vadd.xlane.f32.xlu0 %v1719
    %v1721 = vpop.xlane.xlu0 %1720
    %v1722 = vsel %vm1175, %v845, 0.0
    %1723 = vadd.xlane.f32.xlu0 %v1722
    %v1724 = vpop.xlane.xlu0 %1723
    %v1725 = vsel %vm1175, %v846, 0.0
    %1726 = vadd.xlane.f32.xlu0 %v1725
    %v1727 = vpop.xlane.xlu0 %1726
    %v1728 = vsel %vm1175, %v847, 0.0
    %1729 = vadd.xlane.f32.xlu0 %v1728
    %v1730 = vpop.xlane.xlu0 %1729
    %v1731 = vsel %vm1175, %v848, 0.0
    %1732 = vadd.xlane.f32.xlu0 %v1731
    %v1733 = vpop.xlane.xlu0 %1732
    %v1734 = vsel %vm1175, %v849, 0.0
    %1735 = vadd.xlane.f32.xlu0 %v1734
    %v1736 = vpop.xlane.xlu0 %1735
    %v1737 = vsel %vm1175, %v850, 0.0
    %1738 = vadd.xlane.f32.xlu0 %v1737
    %v1739 = vpop.xlane.xlu0 %1738
    %v1740 = vsel %vm1175, %v851, 0.0
    %1741 = vadd.xlane.f32.xlu0 %v1740
    %v1742 = vpop.xlane.xlu0 %1741
    %v1743 = vsel %vm1175, %v852, 0.0
    %1744 = vadd.xlane.f32.xlu0 %v1743
    %v1745 = vpop.xlane.xlu0 %1744
    %v1746 = vsel %vm1175, %v853, 0.0
    %1747 = vadd.xlane.f32.xlu0 %v1746
    %v1748 = vpop.xlane.xlu0 %1747
    %v1749 = vsel %vm1175, %v854, 0.0
    %1750 = vadd.xlane.f32.xlu0 %v1749
    %v1751 = vpop.xlane.xlu0 %1750
    %v1752 = vsel %vm1175, %v855, 0.0
    %1753 = vadd.xlane.f32.xlu0 %v1752
    %v1754 = vpop.xlane.xlu0 %1753
    %v1755 = vsel %vm1175, %v856, 0.0
    %1756 = vadd.xlane.f32.xlu0 %v1755
    %v1757 = vpop.xlane.xlu0 %1756
    %v1758 = vsel %vm1175, %v857, 0.0
    %1759 = vadd.xlane.f32.xlu0 %v1758
    %v1760 = vpop.xlane.xlu0 %1759
    %v1761 = vsel %vm1175, %v858, 0.0
    %1762 = vadd.xlane.f32.xlu0 %v1761
    %v1763 = vpop.xlane.xlu0 %1762
    %v1764 = vsel %vm1175, %v859, 0.0
    %1765 = vadd.xlane.f32.xlu0 %v1764
    %v1766 = vpop.xlane.xlu0 %1765
    %v1767 = vsel %vm1175, %v860, 0.0
    %1768 = vadd.xlane.f32.xlu0 %v1767
    %v1769 = vpop.xlane.xlu0 %1768
    %v1770 = vsel %vm1175, %v861, 0.0
    %1771 = vadd.xlane.f32.xlu0 %v1770
    %v1772 = vpop.xlane.xlu0 %1771
    %v1773 = vsel %vm1175, %v862, 0.0
    %1774 = vadd.xlane.f32.xlu0 %v1773
    %v1775 = vpop.xlane.xlu0 %1774
    %v1776 = vsel %vm1175, %v863, 0.0
    %1777 = vadd.xlane.f32.xlu0 %v1776
    %v1778 = vpop.xlane.xlu0 %1777
    %v1779 = vsel %vm1175, %v864, 0.0
    %1780 = vadd.xlane.f32.xlu0 %v1779
    %v1781 = vpop.xlane.xlu0 %1780
    %v1782 = vsel %vm1175, %v865, 0.0
    %1783 = vadd.xlane.f32.xlu0 %v1782
    %v1784 = vpop.xlane.xlu0 %1783
    %v1785 = vsel %vm1175, %v866, 0.0
    %1786 = vadd.xlane.f32.xlu0 %v1785
    %v1787 = vpop.xlane.xlu0 %1786
    %v1788 = vsel %vm1175, %v867, 0.0
    %1789 = vadd.xlane.f32.xlu0 %v1788
    %v1790 = vpop.xlane.xlu0 %1789
    %v1791 = vsel %vm1175, %v868, 0.0
    %1792 = vadd.xlane.f32.xlu0 %v1791
    %v1793 = vpop.xlane.xlu0 %1792
    %v1794 = vsel %vm1175, %v869, 0.0
    %1795 = vadd.xlane.f32.xlu0 %v1794
    %v1796 = vpop.xlane.xlu0 %1795
    %v1797 = vsel %vm1175, %v870, 0.0
    %1798 = vadd.xlane.f32.xlu0 %v1797
    %v1799 = vpop.xlane.xlu0 %1798
    %v1800 = vsel %vm1175, %v871, 0.0
    %1801 = vadd.xlane.f32.xlu0 %v1800
    %v1802 = vpop.xlane.xlu0 %1801
    %v1803 = vsel %vm1175, %v872, 0.0
    %1804 = vadd.xlane.f32.xlu0 %v1803
    %v1805 = vpop.xlane.xlu0 %1804
    %v1806 = vsel %vm1175, %v873, 0.0
    %1807 = vadd.xlane.f32.xlu0 %v1806
    %v1808 = vpop.xlane.xlu0 %1807
    %v1809 = vsel %vm1175, %v874, 0.0
    %1810 = vadd.xlane.f32.xlu0 %v1809
    %v1811 = vpop.xlane.xlu0 %1810
    %v1812 = vsel %vm1175, %v875, 0.0
    %1813 = vadd.xlane.f32.xlu0 %v1812
    %v1814 = vpop.xlane.xlu0 %1813
    %v1815 = vsel %vm1175, %v876, 0.0
    %1816 = vadd.xlane.f32.xlu0 %v1815
    %v1817 = vpop.xlane.xlu0 %1816
    %v1818 = vsel %vm1175, %v877, 0.0
    %1819 = vadd.xlane.f32.xlu0 %v1818
    %v1820 = vpop.xlane.xlu0 %1819
    %v1821 = vsel %vm1175, %v878, 0.0
    %1822 = vadd.xlane.f32.xlu0 %v1821
    %v1823 = vpop.xlane.xlu0 %1822
    %v1824 = vsel %vm1175, %v879, 0.0
    %1825 = vadd.xlane.f32.xlu0 %v1824
    %v1826 = vpop.xlane.xlu0 %1825
    %v1827 = vsel %vm1175, %v880, 0.0
    %1828 = vadd.xlane.f32.xlu0 %v1827
    %v1829 = vpop.xlane.xlu0 %1828
    %v1830 = vsel %vm1175, %v881, 0.0
    %1831 = vadd.xlane.f32.xlu0 %v1830
    %v1832 = vpop.xlane.xlu0 %1831
    %v1833 = vsel %vm1175, %v882, 0.0
    %1834 = vadd.xlane.f32.xlu0 %v1833
    %v1835 = vpop.xlane.xlu0 %1834
    %v1836 = vsel %vm1175, %v883, 0.0
    %1837 = vadd.xlane.f32.xlu0 %v1836
    %v1838 = vpop.xlane.xlu0 %1837
    %v1839 = vsel %vm1175, %v884, 0.0
    %1840 = vadd.xlane.f32.xlu0 %v1839
    %v1841 = vpop.xlane.xlu0 %1840
    %v1842 = vsel %vm1175, %v885, 0.0
    %1843 = vadd.xlane.f32.xlu0 %v1842
    %v1844 = vpop.xlane.xlu0 %1843
    %v1845 = vsel %vm1175, %v886, 0.0
    %1846 = vadd.xlane.f32.xlu0 %v1845
    %v1847 = vpop.xlane.xlu0 %1846
    %v1848 = vsel %vm1175, %v887, 0.0
    %1849 = vadd.xlane.f32.xlu0 %v1848
    %v1850 = vpop.xlane.xlu0 %1849
    %v1851 = vsel %vm1175, %v888, 0.0
    %1852 = vadd.xlane.f32.xlu0 %v1851
    %v1853 = vpop.xlane.xlu0 %1852
    %v1854 = vsel %vm1175, %v889, 0.0
    %1855 = vadd.xlane.f32.xlu0 %v1854
    %v1856 = vpop.xlane.xlu0 %1855
    %v1857 = vsel %vm1175, %v890, 0.0
    %1858 = vadd.xlane.f32.xlu0 %v1857
    %v1859 = vpop.xlane.xlu0 %1858
    %v1860 = vsel %vm1175, %v891, 0.0
    %1861 = vadd.xlane.f32.xlu0 %v1860
    %v1862 = vpop.xlane.xlu0 %1861
    %v1863 = vsel %vm1175, %v892, 0.0
    %1864 = vadd.xlane.f32.xlu0 %v1863
    %v1865 = vpop.xlane.xlu0 %1864
    %v1866 = vsel %vm1175, %v893, 0.0
    %1867 = vadd.xlane.f32.xlu0 %v1866
    %v1868 = vpop.xlane.xlu0 %1867
    %v1869 = vsel %vm1175, %v894, 0.0
    %1870 = vadd.xlane.f32.xlu0 %v1869
    %v1871 = vpop.xlane.xlu0 %1870
    %v1872 = vsel %vm1175, %v895, 0.0
    %1873 = vadd.xlane.f32.xlu0 %v1872
    %v1874 = vpop.xlane.xlu0 %1873
    %v1875 = vsel %vm1175, %v896, 0.0
    %1876 = vadd.xlane.f32.xlu0 %v1875
    %v1877 = vpop.xlane.xlu0 %1876
    %v1878 = vsel %vm1175, %v897, 0.0
    %1879 = vadd.xlane.f32.xlu0 %v1878
    %v1880 = vpop.xlane.xlu0 %1879
    %v1881 = vsel %vm1175, %v898, 0.0
    %1882 = vadd.xlane.f32.xlu0 %v1881
    %v1883 = vpop.xlane.xlu0 %1882
    %v1884 = vsel %vm1175, %v899, 0.0
    %1885 = vadd.xlane.f32.xlu0 %v1884
    %v1886 = vpop.xlane.xlu0 %1885
    %v1887 = vsel %vm1175, %v900, 0.0
    %1888 = vadd.xlane.f32.xlu0 %v1887
    %v1889 = vpop.xlane.xlu0 %1888
    %v1890 = vsel %vm1175, %v901, 0.0
    %1891 = vadd.xlane.f32.xlu0 %v1890
    %v1892 = vpop.xlane.xlu0 %1891
    %v1893 = vsel %vm1175, %v902, 0.0
    %1894 = vadd.xlane.f32.xlu0 %v1893
    %v1895 = vpop.xlane.xlu0 %1894
    %v1896 = vsel %vm1175, %v903, 0.0
    %1897 = vadd.xlane.f32.xlu0 %v1896
    %v1898 = vpop.xlane.xlu0 %1897
    %v1899 = vsel %vm1175, %v904, 0.0
    %1900 = vadd.xlane.f32.xlu0 %v1899
    %v1901 = vpop.xlane.xlu0 %1900
    %v1902 = vsel %vm1175, %v905, 0.0
    %1903 = vadd.xlane.f32.xlu0 %v1902
    %v1904 = vpop.xlane.xlu0 %1903
    %v1905 = vsel %vm1175, %v906, 0.0
    %1906 = vadd.xlane.f32.xlu0 %v1905
    %v1907 = vpop.xlane.xlu0 %1906
    %v1908 = vsel %vm1175, %v907, 0.0
    %1909 = vadd.xlane.f32.xlu0 %v1908
    %v1910 = vpop.xlane.xlu0 %1909
    %v1911 = vsel %vm1175, %v908, 0.0
    %1912 = vadd.xlane.f32.xlu0 %v1911
    %v1913 = vpop.xlane.xlu0 %1912
    %v1914 = vsel %vm1175, %v909, 0.0
    %1915 = vadd.xlane.f32.xlu0 %v1914
    %v1916 = vpop.xlane.xlu0 %1915
    %v1917 = vsel %vm1175, %v910, 0.0
    %1918 = vadd.xlane.f32.xlu0 %v1917
    %v1919 = vpop.xlane.xlu0 %1918
    %v1920 = vsel %vm1175, %v911, 0.0
    %1921 = vadd.xlane.f32.xlu0 %v1920
    %v1922 = vpop.xlane.xlu0 %1921
    %v1923 = vsel %vm1175, %v912, 0.0
    %1924 = vadd.xlane.f32.xlu0 %v1923
    %v1925 = vpop.xlane.xlu0 %1924
    %v1926 = vsel %vm1175, %v913, 0.0
    %1927 = vadd.xlane.f32.xlu0 %v1926
    %v1928 = vpop.xlane.xlu0 %1927
    %v1929 = vsel %vm1175, %v914, 0.0
    %1930 = vadd.xlane.f32.xlu0 %v1929
    %v1931 = vpop.xlane.xlu0 %1930
    %v1932 = vsel %vm1175, %v915, 0.0
    %1933 = vadd.xlane.f32.xlu0 %v1932
    %v1934 = vpop.xlane.xlu0 %1933
    %v1935 = vsel %vm1175, %v916, 0.0
    %1936 = vadd.xlane.f32.xlu0 %v1935
    %v1937 = vpop.xlane.xlu0 %1936
    %v1938 = vsel %vm1175, %v917, 0.0
    %1939 = vadd.xlane.f32.xlu0 %v1938
    %v1940 = vpop.xlane.xlu0 %1939
    %v1941 = vsel %vm1175, %v918, 0.0
    %1942 = vadd.xlane.f32.xlu0 %v1941
    %v1943 = vpop.xlane.xlu0 %1942
    %v1944 = vsel %vm1175, %v919, 0.0
    %1945 = vadd.xlane.f32.xlu0 %v1944
    %v1946 = vpop.xlane.xlu0 %1945
    %v1947 = vsel %vm1175, %v920, 0.0
    %1948 = vadd.xlane.f32.xlu0 %v1947
    %v1949 = vpop.xlane.xlu0 %1948
    %v1950 = vsel %vm1175, %v921, 0.0
    %1951 = vadd.xlane.f32.xlu0 %v1950
    %v1952 = vpop.xlane.xlu0 %1951
    %v1953 = vsel %vm1175, %v922, 0.0
    %1954 = vadd.xlane.f32.xlu0 %v1953
    %v1955 = vpop.xlane.xlu0 %1954
    %v1956 = vsel %vm1175, %v923, 0.0
    %1957 = vadd.xlane.f32.xlu0 %v1956
    %v1958 = vpop.xlane.xlu0 %1957
    %v1959 = vsel %vm1175, %v924, 0.0
    %1960 = vadd.xlane.f32.xlu0 %v1959
    %v1961 = vpop.xlane.xlu0 %1960
    %v1962 = vsel %vm1175, %v925, 0.0
    %1963 = vadd.xlane.f32.xlu0 %v1962
    %v1964 = vpop.xlane.xlu0 %1963
    %v1965 = vsel %vm1175, %v926, 0.0
    %1966 = vadd.xlane.f32.xlu0 %v1965
    %v1967 = vpop.xlane.xlu0 %1966
    %v1968 = vsel %vm1175, %v927, 0.0
    %1969 = vadd.xlane.f32.xlu0 %v1968
    %v1970 = vpop.xlane.xlu0 %1969
    %v1971 = vsel %vm1175, %v928, 0.0
    %1972 = vadd.xlane.f32.xlu0 %v1971
    %v1973 = vpop.xlane.xlu0 %1972
    %v1974 = vsel %vm1175, %v929, 0.0
    %1975 = vadd.xlane.f32.xlu0 %v1974
    %v1976 = vpop.xlane.xlu0 %1975
    %v1977 = vsel %vm1175, %v930, 0.0
    %1978 = vadd.xlane.f32.xlu0 %v1977
    %v1979 = vpop.xlane.xlu0 %1978
    %v1980 = vsel %vm1175, %v931, 0.0
    %1981 = vadd.xlane.f32.xlu0 %v1980
    %v1982 = vpop.xlane.xlu0 %1981
    %v1983 = vsel %vm1175, %v932, 0.0
    %1984 = vadd.xlane.f32.xlu0 %v1983
    %v1985 = vpop.xlane.xlu0 %1984
    %v1986 = vsel %vm1175, %v933, 0.0
    %1987 = vadd.xlane.f32.xlu0 %v1986
    %v1988 = vpop.xlane.xlu0 %1987
    %v1989 = vsel %vm1175, %v934, 0.0
    %1990 = vadd.xlane.f32.xlu0 %v1989
    %v1991 = vpop.xlane.xlu0 %1990
    %v1992 = vsel %vm1175, %v935, 0.0
    %1993 = vadd.xlane.f32.xlu0 %v1992
    %v1994 = vpop.xlane.xlu0 %1993
    %v1995 = vsel %vm1175, %v936, 0.0
    %1996 = vadd.xlane.f32.xlu0 %v1995
    %v1997 = vpop.xlane.xlu0 %1996
    %v1998 = vsel %vm1175, %v937, 0.0
    %1999 = vadd.xlane.f32.xlu0 %v1998
    %v2000 = vpop.xlane.xlu0 %1999
    %v2001 = vsel %vm1175, %v938, 0.0
    %2002 = vadd.xlane.f32.xlu0 %v2001
    %v2003 = vpop.xlane.xlu0 %2002
    %v2004 = vsel %vm1175, %v939, 0.0
    %2005 = vadd.xlane.f32.xlu0 %v2004
    %v2006 = vpop.xlane.xlu0 %2005
    %v2007 = vsel %vm1175, %v940, 0.0
    %2008 = vadd.xlane.f32.xlu0 %v2007
    %v2009 = vpop.xlane.xlu0 %2008
    %v2010 = vsel %vm1175, %v941, 0.0
    %2011 = vadd.xlane.f32.xlu0 %v2010
    %v2012 = vpop.xlane.xlu0 %2011
    %v2013 = vsel %vm1175, %v942, 0.0
    %2014 = vadd.xlane.f32.xlu0 %v2013
    %v2015 = vpop.xlane.xlu0 %2014
    %v2016 = vsel %vm1175, %v943, 0.0
    %2017 = vadd.xlane.f32.xlu0 %v2016
    %v2018 = vpop.xlane.xlu0 %2017
    %v2019 = vsel %vm1175, %v944, 0.0
    %2020 = vadd.xlane.f32.xlu0 %v2019
    %v2021 = vpop.xlane.xlu0 %2020
    %v2022 = vsel %vm1175, %v945, 0.0
    %2023 = vadd.xlane.f32.xlu0 %v2022
    %v2024 = vpop.xlane.xlu0 %2023
    %v2025 = vsel %vm1175, %v946, 0.0
    %2026 = vadd.xlane.f32.xlu0 %v2025
    %v2027 = vpop.xlane.xlu0 %2026
    %v2028 = vsel %vm1175, %v947, 0.0
    %2029 = vadd.xlane.f32.xlu0 %v2028
    %v2030 = vpop.xlane.xlu0 %2029
    %v2031 = vsel %vm1175, %v948, 0.0
    %2032 = vadd.xlane.f32.xlu0 %v2031
    %v2033 = vpop.xlane.xlu0 %2032
    %v2034 = vsel %vm1175, %v949, 0.0
    %2035 = vadd.xlane.f32.xlu0 %v2034
    %v2036 = vpop.xlane.xlu0 %2035
    %v2037 = vsel %vm1175, %v950, 0.0
    %2038 = vadd.xlane.f32.xlu0 %v2037
    %v2039 = vpop.xlane.xlu0 %2038
    %v2040 = vsel %vm1175, %v951, 0.0
    %2041 = vadd.xlane.f32.xlu0 %v2040
    %v2042 = vpop.xlane.xlu0 %2041
    %v2043 = vsel %vm1175, %v952, 0.0
    %2044 = vadd.xlane.f32.xlu0 %v2043
    %v2045 = vpop.xlane.xlu0 %2044
    %v2046 = vsel %vm1175, %v953, 0.0
    %2047 = vadd.xlane.f32.xlu0 %v2046
    %v2048 = vpop.xlane.xlu0 %2047
    %v2049 = vsel %vm1175, %v954, 0.0
    %2050 = vadd.xlane.f32.xlu0 %v2049
    %v2051 = vpop.xlane.xlu0 %2050
    %v2052 = vsel %vm1175, %v955, 0.0
    %2053 = vadd.xlane.f32.xlu0 %v2052
    %v2054 = vpop.xlane.xlu0 %2053
    %v2055 = vsel %vm1175, %v956, 0.0
    %2056 = vadd.xlane.f32.xlu0 %v2055
    %v2057 = vpop.xlane.xlu0 %2056
    %v2058 = vsel %vm1175, %v957, 0.0
    %2059 = vadd.xlane.f32.xlu0 %v2058
    %v2060 = vpop.xlane.xlu0 %2059
    %v2061 = vsel %vm1175, %v958, 0.0
    %2062 = vadd.xlane.f32.xlu0 %v2061
    %v2063 = vpop.xlane.xlu0 %2062
    %v2064 = vsel %vm1175, %v959, 0.0
    %2065 = vadd.xlane.f32.xlu0 %v2064
    %v2066 = vpop.xlane.xlu0 %2065
    %v2067 = vsel %vm1175, %v960, 0.0
    %2068 = vadd.xlane.f32.xlu0 %v2067
    %v2069 = vpop.xlane.xlu0 %2068
    %v2070 = vsel %vm1175, %v961, 0.0
    %2071 = vadd.xlane.f32.xlu0 %v2070
    %v2072 = vpop.xlane.xlu0 %2071
    %v2073 = vsel %vm1175, %v962, 0.0
    %2074 = vadd.xlane.f32.xlu0 %v2073
    %v2075 = vpop.xlane.xlu0 %2074
    %v2076 = vsel %vm1175, %v963, 0.0
    %2077 = vadd.xlane.f32.xlu0 %v2076
    %v2078 = vpop.xlane.xlu0 %2077
    %v2079 = vsel %vm1175, %v964, 0.0
    %2080 = vadd.xlane.f32.xlu0 %v2079
    %v2081 = vpop.xlane.xlu0 %2080
    %v2082 = vsel %vm1175, %v965, 0.0
    %2083 = vadd.xlane.f32.xlu0 %v2082
    %v2084 = vpop.xlane.xlu0 %2083
    %v2085 = vsel %vm1175, %v966, 0.0
    %2086 = vadd.xlane.f32.xlu0 %v2085
    %v2087 = vpop.xlane.xlu0 %2086
    %v2088 = vsel %vm1175, %v967, 0.0
    %2089 = vadd.xlane.f32.xlu0 %v2088
    %v2090 = vpop.xlane.xlu0 %2089
    %v2091 = vsel %vm1175, %v968, 0.0
    %2092 = vadd.xlane.f32.xlu0 %v2091
    %v2093 = vpop.xlane.xlu0 %2092
    %v2094 = vsel %vm1175, %v969, 0.0
    %2095 = vadd.xlane.f32.xlu0 %v2094
    %v2096 = vpop.xlane.xlu0 %2095
    %v2097 = vsel %vm1175, %v970, 0.0
    %2098 = vadd.xlane.f32.xlu0 %v2097
    %v2099 = vpop.xlane.xlu0 %2098
    %v2100 = vsel %vm1175, %v971, 0.0
    %2101 = vadd.xlane.f32.xlu0 %v2100
    %v2102 = vpop.xlane.xlu0 %2101
    %v2103 = vsel %vm1175, %v972, 0.0
    %2104 = vadd.xlane.f32.xlu0 %v2103
    %v2105 = vpop.xlane.xlu0 %2104
    %v2106 = vsel %vm1175, %v973, 0.0
    %2107 = vadd.xlane.f32.xlu0 %v2106
    %v2108 = vpop.xlane.xlu0 %2107
    %v2109 = vsel %vm1175, %v974, 0.0
    %2110 = vadd.xlane.f32.xlu0 %v2109
    %v2111 = vpop.xlane.xlu0 %2110
    %v2112 = vsel %vm1175, %v975, 0.0
    %2113 = vadd.xlane.f32.xlu0 %v2112
    %v2114 = vpop.xlane.xlu0 %2113
    %v2115 = vsel %vm1175, %v976, 0.0
    %2116 = vadd.xlane.f32.xlu0 %v2115
    %v2117 = vpop.xlane.xlu0 %2116
    %v2118 = vsel %vm1175, %v977, 0.0
    %2119 = vadd.xlane.f32.xlu0 %v2118
    %v2120 = vpop.xlane.xlu0 %2119
    %v2121 = vsel %vm1175, %v978, 0.0
    %2122 = vadd.xlane.f32.xlu0 %v2121
    %v2123 = vpop.xlane.xlu0 %2122
    %v2124 = vsel %vm1175, %v979, 0.0
    %2125 = vadd.xlane.f32.xlu0 %v2124
    %v2126 = vpop.xlane.xlu0 %2125
    %v2127 = vsel %vm1175, %v980, 0.0
    %2128 = vadd.xlane.f32.xlu0 %v2127
    %v2129 = vpop.xlane.xlu0 %2128
    %v2130 = vsel %vm1175, %v981, 0.0
    %2131 = vadd.xlane.f32.xlu0 %v2130
    %v2132 = vpop.xlane.xlu0 %2131
    %v2133 = vsel %vm1175, %v982, 0.0
    %2134 = vadd.xlane.f32.xlu0 %v2133
    %v2135 = vpop.xlane.xlu0 %2134
    %v2136 = vsel %vm1175, %v983, 0.0
    %2137 = vadd.xlane.f32.xlu0 %v2136
    %v2138 = vpop.xlane.xlu0 %2137
    %v2139 = vsel %vm1175, %v984, 0.0
    %2140 = vadd.xlane.f32.xlu0 %v2139
    %v2141 = vpop.xlane.xlu0 %2140
    %v2142 = vsel %vm1175, %v985, 0.0
    %2143 = vadd.xlane.f32.xlu0 %v2142
    %v2144 = vpop.xlane.xlu0 %2143
    %v2145 = vsel %vm1175, %v986, 0.0
    %2146 = vadd.xlane.f32.xlu0 %v2145
    %v2147 = vpop.xlane.xlu0 %2146
    %v2148 = vsel %vm1175, %v987, 0.0
    %2149 = vadd.xlane.f32.xlu0 %v2148
    %v2150 = vpop.xlane.xlu0 %2149
    %v2151 = vsel %vm1175, %v988, 0.0
    %2152 = vadd.xlane.f32.xlu0 %v2151
    %v2153 = vpop.xlane.xlu0 %2152
    %v2154 = vsel %vm1175, %v989, 0.0
    %2155 = vadd.xlane.f32.xlu0 %v2154
    %v2156 = vpop.xlane.xlu0 %2155
    %v2157 = vsel %vm1175, %v990, 0.0
    %2158 = vadd.xlane.f32.xlu0 %v2157
    %v2159 = vpop.xlane.xlu0 %2158
    %v2160 = vsel %vm1175, %v991, 0.0
    %2161 = vadd.xlane.f32.xlu0 %v2160
    %v2162 = vpop.xlane.xlu0 %2161
    %v2163 = vsel %vm1175, %v992, 0.0
    %2164 = vadd.xlane.f32.xlu0 %v2163
    %v2165 = vpop.xlane.xlu0 %2164
    %v2166 = vsel %vm1175, %v993, 0.0
    %2167 = vadd.xlane.f32.xlu0 %v2166
    %v2168 = vpop.xlane.xlu0 %2167
    %v2169 = vsel %vm1175, %v994, 0.0
    %2170 = vadd.xlane.f32.xlu0 %v2169
    %v2171 = vpop.xlane.xlu0 %2170
    %v2172 = vsel %vm1175, %v995, 0.0
    %2173 = vadd.xlane.f32.xlu0 %v2172
    %v2174 = vpop.xlane.xlu0 %2173
    %v2175 = vsel %vm1175, %v996, 0.0
    %2176 = vadd.xlane.f32.xlu0 %v2175
    %v2177 = vpop.xlane.xlu0 %2176
    %v2178 = vsel %vm1175, %v997, 0.0
    %2179 = vadd.xlane.f32.xlu0 %v2178
    %v2180 = vpop.xlane.xlu0 %2179
    %v2181 = vsel %vm1175, %v998, 0.0
    %2182 = vadd.xlane.f32.xlu0 %v2181
    %v2183 = vpop.xlane.xlu0 %2182
    %v2184 = vsel %vm1175, %v999, 0.0
    %2185 = vadd.xlane.f32.xlu0 %v2184
    %v2186 = vpop.xlane.xlu0 %2185
    %v2187 = vsel %vm1175, %v1000, 0.0
    %2188 = vadd.xlane.f32.xlu0 %v2187
    %v2189 = vpop.xlane.xlu0 %2188
    %v2190 = vsel %vm1175, %v1001, 0.0
    %2191 = vadd.xlane.f32.xlu0 %v2190
    %v2192 = vpop.xlane.xlu0 %2191
    %v2193 = vsel %vm1175, %v1002, 0.0
    %2194 = vadd.xlane.f32.xlu0 %v2193
    %v2195 = vpop.xlane.xlu0 %2194
    %v2196 = vsel %vm1175, %v1003, 0.0
    %2197 = vadd.xlane.f32.xlu0 %v2196
    %v2198 = vpop.xlane.xlu0 %2197
    %v2199 = vsel %vm1175, %v1004, 0.0
    %2200 = vadd.xlane.f32.xlu0 %v2199
    %v2201 = vpop.xlane.xlu0 %2200
    %v2202 = vsel %vm1175, %v1005, 0.0
    %2203 = vadd.xlane.f32.xlu0 %v2202
    %v2204 = vpop.xlane.xlu0 %2203
    %v2205 = vsel %vm1175, %v1006, 0.0
    %2206 = vadd.xlane.f32.xlu0 %v2205
    %v2207 = vpop.xlane.xlu0 %2206
    %v2208 = vsel %vm1175, %v1007, 0.0
    %2209 = vadd.xlane.f32.xlu0 %v2208
    %v2210 = vpop.xlane.xlu0 %2209
    %v2211 = vsel %vm1175, %v1008, 0.0
    %2212 = vadd.xlane.f32.xlu0 %v2211
    %v2213 = vpop.xlane.xlu0 %2212
    %v2214 = vsel %vm1175, %v1009, 0.0
    %2215 = vadd.xlane.f32.xlu0 %v2214
    %v2216 = vpop.xlane.xlu0 %2215
    %v2217 = vsel %vm1175, %v1010, 0.0
    %2218 = vadd.xlane.f32.xlu0 %v2217
    %v2219 = vpop.xlane.xlu0 %2218
    %v2220 = vsel %vm1175, %v1011, 0.0
    %2221 = vadd.xlane.f32.xlu0 %v2220
    %v2222 = vpop.xlane.xlu0 %2221
    %v2223 = vsel %vm1175, %v1012, 0.0
    %2224 = vadd.xlane.f32.xlu0 %v2223
    %v2225 = vpop.xlane.xlu0 %2224
    %v2226 = vsel %vm1175, %v1013, 0.0
    %2227 = vadd.xlane.f32.xlu0 %v2226
    %v2228 = vpop.xlane.xlu0 %2227
    %v2229 = vsel %vm1175, %v1014, 0.0
    %2230 = vadd.xlane.f32.xlu0 %v2229
    %v2231 = vpop.xlane.xlu0 %2230
    %v2232 = vsel %vm1175, %v1015, 0.0
    %2233 = vadd.xlane.f32.xlu0 %v2232
    %v2234 = vpop.xlane.xlu0 %2233
    %v2235 = vsel %vm1175, %v1016, 0.0
    %2236 = vadd.xlane.f32.xlu0 %v2235
    %v2237 = vpop.xlane.xlu0 %2236
    %v2238 = vsel %vm1175, %v1017, 0.0
    %2239 = vadd.xlane.f32.xlu0 %v2238
    %v2240 = vpop.xlane.xlu0 %2239
    %v2241 = vsel %vm1175, %v1018, 0.0
    %2242 = vadd.xlane.f32.xlu0 %v2241
    %v2243 = vpop.xlane.xlu0 %2242
    %v2244 = vsel %vm1175, %v1019, 0.0
    %2245 = vadd.xlane.f32.xlu0 %v2244
    %v2246 = vpop.xlane.xlu0 %2245
    %v2247 = vsel %vm1175, %v1020, 0.0
    %2248 = vadd.xlane.f32.xlu0 %v2247
    %v2249 = vpop.xlane.xlu0 %2248
    %v2250 = vsel %vm1175, %v1021, 0.0
    %2251 = vadd.xlane.f32.xlu0 %v2250
    %v2252 = vpop.xlane.xlu0 %2251
    %v2253 = vsel %vm1175, %v1022, 0.0
    %2254 = vadd.xlane.f32.xlu0 %v2253
    %v2255 = vpop.xlane.xlu0 %2254
    %v2256 = vsel %vm1175, %v1023, 0.0
    %2257 = vadd.xlane.f32.xlu0 %v2256
    %v2258 = vpop.xlane.xlu0 %2257
    %v2259 = vsel %vm1175, %v1024, 0.0
    %2260 = vadd.xlane.f32.xlu0 %v2259
    %v2261 = vpop.xlane.xlu0 %2260
    %v2262 = vsel %vm1175, %v1025, 0.0
    %2263 = vadd.xlane.f32.xlu0 %v2262
    %v2264 = vpop.xlane.xlu0 %2263
    %v2265 = vsel %vm1175, %v1026, 0.0
    %2266 = vadd.xlane.f32.xlu0 %v2265
    %v2267 = vpop.xlane.xlu0 %2266
    %v2268 = vsel %vm1175, %v1027, 0.0
    %2269 = vadd.xlane.f32.xlu0 %v2268
    %v2270 = vpop.xlane.xlu0 %2269
    %v2271 = vsel %vm1175, %v1028, 0.0
    %2272 = vadd.xlane.f32.xlu0 %v2271
    %v2273 = vpop.xlane.xlu0 %2272
    %v2274 = vsel %vm1175, %v1029, 0.0
    %2275 = vadd.xlane.f32.xlu0 %v2274
    %v2276 = vpop.xlane.xlu0 %2275
    %v2277 = vsel %vm1175, %v1030, 0.0
    %2278 = vadd.xlane.f32.xlu0 %v2277
    %v2279 = vpop.xlane.xlu0 %2278
    %v2280 = vsel %vm1175, %v1031, 0.0
    %2281 = vadd.xlane.f32.xlu0 %v2280
    %v2282 = vpop.xlane.xlu0 %2281
    %v2283 = vsel %vm1175, %v1032, 0.0
    %2284 = vadd.xlane.f32.xlu0 %v2283
    %v2285 = vpop.xlane.xlu0 %2284
    %v2286 = vsel %vm1175, %v1033, 0.0
    %2287 = vadd.xlane.f32.xlu0 %v2286
    %v2288 = vpop.xlane.xlu0 %2287
    %v2289 = vsel %vm1175, %v1034, 0.0
    %2290 = vadd.xlane.f32.xlu0 %v2289
    %v2291 = vpop.xlane.xlu0 %2290
    %v2292 = vsel %vm1175, %v1035, 0.0
    %2293 = vadd.xlane.f32.xlu0 %v2292
    %v2294 = vpop.xlane.xlu0 %2293
    %v2295 = vsel %vm1175, %v1036, 0.0
    %2296 = vadd.xlane.f32.xlu0 %v2295
    %v2297 = vpop.xlane.xlu0 %2296
    %v2298 = vsel %vm1175, %v1037, 0.0
    %2299 = vadd.xlane.f32.xlu0 %v2298
    %v2300 = vpop.xlane.xlu0 %2299
    %v2301 = vsel %vm1175, %v1038, 0.0
    %2302 = vadd.xlane.f32.xlu0 %v2301
    %v2303 = vpop.xlane.xlu0 %2302
    %v2304 = vsel %vm1175, %v1039, 0.0
    %2305 = vadd.xlane.f32.xlu0 %v2304
    %v2306 = vpop.xlane.xlu0 %2305
    %v2307 = vsel %vm1175, %v1040, 0.0
    %2308 = vadd.xlane.f32.xlu0 %v2307
    %v2309 = vpop.xlane.xlu0 %2308
    %v2310 = vsel %vm1175, %v1041, 0.0
    %2311 = vadd.xlane.f32.xlu0 %v2310
    %v2312 = vpop.xlane.xlu0 %2311
    %v2313 = vsel %vm1175, %v1042, 0.0
    %2314 = vadd.xlane.f32.xlu0 %v2313
    %v2315 = vpop.xlane.xlu0 %2314
    %v2316 = vsel %vm1175, %v1043, 0.0
    %2317 = vadd.xlane.f32.xlu0 %v2316
    %v2318 = vpop.xlane.xlu0 %2317
    %v2319 = vsel %vm1175, %v1044, 0.0
    %2320 = vadd.xlane.f32.xlu0 %v2319
    %v2321 = vpop.xlane.xlu0 %2320
    %v2322 = vsel %vm1175, %v1045, 0.0
    %2323 = vadd.xlane.f32.xlu0 %v2322
    %v2324 = vpop.xlane.xlu0 %2323
    %v2325 = vsel %vm1175, %v1046, 0.0
    %2326 = vadd.xlane.f32.xlu0 %v2325
    %v2327 = vpop.xlane.xlu0 %2326
    %v2328 = vsel %vm1175, %v1047, 0.0
    %2329 = vadd.xlane.f32.xlu0 %v2328
    %v2330 = vpop.xlane.xlu0 %2329
    %v2331 = vsel %vm1175, %v1048, 0.0
    %2332 = vadd.xlane.f32.xlu0 %v2331
    %v2333 = vpop.xlane.xlu0 %2332
    %v2334 = vsel %vm1175, %v1049, 0.0
    %2335 = vadd.xlane.f32.xlu0 %v2334
    %v2336 = vpop.xlane.xlu0 %2335
    %v2337 = vsel %vm1175, %v1050, 0.0
    %2338 = vadd.xlane.f32.xlu0 %v2337
    %v2339 = vpop.xlane.xlu0 %2338
    %v2340 = vsel %vm1175, %v1051, 0.0
    %2341 = vadd.xlane.f32.xlu0 %v2340
    %v2342 = vpop.xlane.xlu0 %2341
    %v2343 = vsel %vm1175, %v1052, 0.0
    %2344 = vadd.xlane.f32.xlu0 %v2343
    %v2345 = vpop.xlane.xlu0 %2344
    %v2346 = vsel %vm1175, %v1053, 0.0
    %2347 = vadd.xlane.f32.xlu0 %v2346
    %v2348 = vpop.xlane.xlu0 %2347
    %v2349 = vsel %vm1175, %v1054, 0.0
    %2350 = vadd.xlane.f32.xlu0 %v2349
    %v2351 = vpop.xlane.xlu0 %2350
    %v2352 = vsel %vm1175, %v1055, 0.0
    %2353 = vadd.xlane.f32.xlu0 %v2352
    %v2354 = vpop.xlane.xlu0 %2353
    %v2355 = vsel %vm1175, %v1056, 0.0
    %2356 = vadd.xlane.f32.xlu0 %v2355
    %v2357 = vpop.xlane.xlu0 %2356
    %v2358 = vsel %vm1175, %v1057, 0.0
    %2359 = vadd.xlane.f32.xlu0 %v2358
    %v2360 = vpop.xlane.xlu0 %2359
    %v2361 = vsel %vm1175, %v1058, 0.0
    %2362 = vadd.xlane.f32.xlu0 %v2361
    %v2363 = vpop.xlane.xlu0 %2362
    %v2364 = vsel %vm1175, %v1059, 0.0
    %2365 = vadd.xlane.f32.xlu0 %v2364
    %v2366 = vpop.xlane.xlu0 %2365
    %v2367 = vsel %vm1175, %v1060, 0.0
    %2368 = vadd.xlane.f32.xlu0 %v2367
    %v2369 = vpop.xlane.xlu0 %2368
    %v2370 = vsel %vm1175, %v1061, 0.0
    %2371 = vadd.xlane.f32.xlu0 %v2370
    %v2372 = vpop.xlane.xlu0 %2371
    %v2373 = vsel %vm1175, %v1062, 0.0
    %2374 = vadd.xlane.f32.xlu0 %v2373
    %v2375 = vpop.xlane.xlu0 %2374
    %v2376 = vsel %vm1175, %v1063, 0.0
    %2377 = vadd.xlane.f32.xlu0 %v2376
    %v2378 = vpop.xlane.xlu0 %2377
    %v2379 = vsel %vm1175, %v1064, 0.0
    %2380 = vadd.xlane.f32.xlu0 %v2379
    %v2381 = vpop.xlane.xlu0 %2380
    %v2382 = vsel %vm1175, %v1065, 0.0
    %2383 = vadd.xlane.f32.xlu0 %v2382
    %v2384 = vpop.xlane.xlu0 %2383
    %v2385 = vsel %vm1175, %v1066, 0.0
    %2386 = vadd.xlane.f32.xlu0 %v2385
    %v2387 = vpop.xlane.xlu0 %2386
    %v2388 = vsel %vm1175, %v1067, 0.0
    %2389 = vadd.xlane.f32.xlu0 %v2388
    %v2390 = vpop.xlane.xlu0 %2389
    %v2391 = vsel %vm1175, %v1068, 0.0
    %2392 = vadd.xlane.f32.xlu0 %v2391
    %v2393 = vpop.xlane.xlu0 %2392
    %v2394 = vsel %vm1175, %v1069, 0.0
    %2395 = vadd.xlane.f32.xlu0 %v2394
    %v2396 = vpop.xlane.xlu0 %2395
    %v2397 = vsel %vm1175, %v1070, 0.0
    %2398 = vadd.xlane.f32.xlu0 %v2397
    %v2399 = vpop.xlane.xlu0 %2398
    %v2400 = vsel %vm1175, %v1071, 0.0
    %2401 = vadd.xlane.f32.xlu0 %v2400
    %v2402 = vpop.xlane.xlu0 %2401
    %v2403 = vsel %vm1175, %v1072, 0.0
    %2404 = vadd.xlane.f32.xlu0 %v2403
    %v2405 = vpop.xlane.xlu0 %2404
    %v2406 = vsel %vm1175, %v1073, 0.0
    %2407 = vadd.xlane.f32.xlu0 %v2406
    %v2408 = vpop.xlane.xlu0 %2407
    %v2409 = vsel %vm1175, %v1074, 0.0
    %2410 = vadd.xlane.f32.xlu0 %v2409
    %v2411 = vpop.xlane.xlu0 %2410
    %v2412 = vsel %vm1175, %v1075, 0.0
    %2413 = vadd.xlane.f32.xlu0 %v2412
    %v2414 = vpop.xlane.xlu0 %2413
    %v2415 = vsel %vm1175, %v1076, 0.0
    %2416 = vadd.xlane.f32.xlu0 %v2415
    %v2417 = vpop.xlane.xlu0 %2416
    %v2418 = vsel %vm1175, %v1077, 0.0
    %2419 = vadd.xlane.f32.xlu0 %v2418
    %v2420 = vpop.xlane.xlu0 %2419
    %v2421 = vsel %vm1175, %v1078, 0.0
    %2422 = vadd.xlane.f32.xlu0 %v2421
    %v2423 = vpop.xlane.xlu0 %2422
    %v2424 = vsel %vm1175, %v1079, 0.0
    %2425 = vadd.xlane.f32.xlu0 %v2424
    %v2426 = vpop.xlane.xlu0 %2425
    %v2427 = vsel %vm1175, %v1080, 0.0
    %2428 = vadd.xlane.f32.xlu0 %v2427
    %v2429 = vpop.xlane.xlu0 %2428
    %v2430 = vsel %vm1175, %v1081, 0.0
    %2431 = vadd.xlane.f32.xlu0 %v2430
    %v2432 = vpop.xlane.xlu0 %2431
    %v2433 = vsel %vm1175, %v1082, 0.0
    %2434 = vadd.xlane.f32.xlu0 %v2433
    %v2435 = vpop.xlane.xlu0 %2434
    %v2436 = vsel %vm1175, %v1083, 0.0
    %2437 = vadd.xlane.f32.xlu0 %v2436
    %v2438 = vpop.xlane.xlu0 %2437
    %v2439 = vsel %vm1175, %v1084, 0.0
    %2440 = vadd.xlane.f32.xlu0 %v2439
    %v2441 = vpop.xlane.xlu0 %2440
    %v2442 = vsel %vm1175, %v1085, 0.0
    %2443 = vadd.xlane.f32.xlu0 %v2442
    %v2444 = vpop.xlane.xlu0 %2443
    %v2445 = vsel %vm1175, %v1086, 0.0
    %2446 = vadd.xlane.f32.xlu0 %v2445
    %v2447 = vpop.xlane.xlu0 %2446
    %v2448 = vsel %vm1175, %v1087, 0.0
    %2449 = vadd.xlane.f32.xlu0 %v2448
    %v2450 = vpop.xlane.xlu0 %2449
    %v2451 = vsel %vm1175, %v1088, 0.0
    %2452 = vadd.xlane.f32.xlu0 %v2451
    %v2453 = vpop.xlane.xlu0 %2452
    %v2454 = vsel %vm1175, %v1089, 0.0
    %2455 = vadd.xlane.f32.xlu0 %v2454
    %v2456 = vpop.xlane.xlu0 %2455
    %v2457 = vsel %vm1175, %v1090, 0.0
    %2458 = vadd.xlane.f32.xlu0 %v2457
    %v2459 = vpop.xlane.xlu0 %2458
    %v2460 = vsel %vm1175, %v1091, 0.0
    %2461 = vadd.xlane.f32.xlu0 %v2460
    %v2462 = vpop.xlane.xlu0 %2461
    %v2463 = vsel %vm1175, %v1092, 0.0
    %2464 = vadd.xlane.f32.xlu0 %v2463
    %v2465 = vpop.xlane.xlu0 %2464
    %v2466 = vsel %vm1175, %v1093, 0.0
    %2467 = vadd.xlane.f32.xlu0 %v2466
    %v2468 = vpop.xlane.xlu0 %2467
    %v2469 = vsel %vm1175, %v1094, 0.0
    %2470 = vadd.xlane.f32.xlu0 %v2469
    %v2471 = vpop.xlane.xlu0 %2470
    %v2472 = vsel %vm1175, %v1095, 0.0
    %2473 = vadd.xlane.f32.xlu0 %v2472
    %v2474 = vpop.xlane.xlu0 %2473
    %v2475 = vsel %vm1175, %v1096, 0.0
    %2476 = vadd.xlane.f32.xlu0 %v2475
    %v2477 = vpop.xlane.xlu0 %2476
    %v2478 = vsel %vm1175, %v1097, 0.0
    %2479 = vadd.xlane.f32.xlu0 %v2478
    %v2480 = vpop.xlane.xlu0 %2479
    %v2481 = vsel %vm1175, %v1098, 0.0
    %2482 = vadd.xlane.f32.xlu0 %v2481
    %v2483 = vpop.xlane.xlu0 %2482
    %v2484 = vsel %vm1175, %v1099, 0.0
    %2485 = vadd.xlane.f32.xlu0 %v2484
    %v2486 = vpop.xlane.xlu0 %2485
    %v2487 = vsel %vm1175, %v1100, 0.0
    %2488 = vadd.xlane.f32.xlu0 %v2487
    %v2489 = vpop.xlane.xlu0 %2488
    %v2490 = vsel %vm1175, %v1101, 0.0
    %2491 = vadd.xlane.f32.xlu0 %v2490
    %v2492 = vpop.xlane.xlu0 %2491
    %v2493 = vsel %vm1175, %v1102, 0.0
    %2494 = vadd.xlane.f32.xlu0 %v2493
    %v2495 = vpop.xlane.xlu0 %2494
    %v2496 = vsel %vm1175, %v1103, 0.0
    %2497 = vadd.xlane.f32.xlu0 %v2496
    %v2498 = vpop.xlane.xlu0 %2497
    %v2499 = vsel %vm1175, %v1104, 0.0
    %2500 = vadd.xlane.f32.xlu0 %v2499
    %v2501 = vpop.xlane.xlu0 %2500
    %v2502 = vsel %vm1175, %v1105, 0.0
    %2503 = vadd.xlane.f32.xlu0 %v2502
    %v2504 = vpop.xlane.xlu0 %2503
    %v2505 = vsel %vm1175, %v1106, 0.0
    %2506 = vadd.xlane.f32.xlu0 %v2505
    %v2507 = vpop.xlane.xlu0 %2506
    %v2508 = vsel %vm1175, %v1107, 0.0
    %2509 = vadd.xlane.f32.xlu0 %v2508
    %v2510 = vpop.xlane.xlu0 %2509
    %v2511 = vsel %vm1175, %v1108, 0.0
    %2512 = vadd.xlane.f32.xlu0 %v2511
    %v2513 = vpop.xlane.xlu0 %2512
    %v2514 = vsel %vm1175, %v1109, 0.0
    %2515 = vadd.xlane.f32.xlu0 %v2514
    %v2516 = vpop.xlane.xlu0 %2515
    %v2517 = vsel %vm1175, %v1110, 0.0
    %2518 = vadd.xlane.f32.xlu0 %v2517
    %v2519 = vpop.xlane.xlu0 %2518
    %v2520 = vsel %vm1175, %v1111, 0.0
    %2521 = vadd.xlane.f32.xlu0 %v2520
    %v2522 = vpop.xlane.xlu0 %2521
    %v2523 = vsel %vm1175, %v1112, 0.0
    %2524 = vadd.xlane.f32.xlu0 %v2523
    %v2525 = vpop.xlane.xlu0 %2524
    %v2526 = vsel %vm1175, %v1113, 0.0
    %2527 = vadd.xlane.f32.xlu0 %v2526
    %v2528 = vpop.xlane.xlu0 %2527
    %v2529 = vsel %vm1175, %v1114, 0.0
    %2530 = vadd.xlane.f32.xlu0 %v2529
    %v2531 = vpop.xlane.xlu0 %2530
    %v2532 = vsel %vm1175, %v1115, 0.0
    %2533 = vadd.xlane.f32.xlu0 %v2532
    %v2534 = vpop.xlane.xlu0 %2533
    %v2535 = vsel %vm1175, %v1116, 0.0
    %2536 = vadd.xlane.f32.xlu0 %v2535
    %v2537 = vpop.xlane.xlu0 %2536
    %v2538 = vsel %vm1175, %v1117, 0.0
    %2539 = vadd.xlane.f32.xlu0 %v2538
    %v2540 = vpop.xlane.xlu0 %2539
    %v2541 = vsel %vm1175, %v1118, 0.0
    %2542 = vadd.xlane.f32.xlu0 %v2541
    %v2543 = vpop.xlane.xlu0 %2542
    %v2544 = vsel %vm1175, %v1119, 0.0
    %2545 = vadd.xlane.f32.xlu0 %v2544
    %v2546 = vpop.xlane.xlu0 %2545
    %v2547 = vsel %vm1175, %v1120, 0.0
    %2548 = vadd.xlane.f32.xlu0 %v2547
    %v2549 = vpop.xlane.xlu0 %2548
    %v2550 = vsel %vm1175, %v1121, 0.0
    %2551 = vadd.xlane.f32.xlu0 %v2550
    %v2552 = vpop.xlane.xlu0 %2551
    %v2553 = vsel %vm1175, %v1122, 0.0
    %2554 = vadd.xlane.f32.xlu0 %v2553
    %v2555 = vpop.xlane.xlu0 %2554
    %v2556 = vsel %vm1175, %v1123, 0.0
    %2557 = vadd.xlane.f32.xlu0 %v2556
    %v2558 = vpop.xlane.xlu0 %2557
    %v2559 = vsel %vm1175, %v1124, 0.0
    %2560 = vadd.xlane.f32.xlu0 %v2559
    %v2561 = vpop.xlane.xlu0 %2560
    %v2562 = vsel %vm1175, %v1125, 0.0
    %2563 = vadd.xlane.f32.xlu0 %v2562
    %v2564 = vpop.xlane.xlu0 %2563
    %v2565 = vsel %vm1175, %v1126, 0.0
    %2566 = vadd.xlane.f32.xlu0 %v2565
    %v2567 = vpop.xlane.xlu0 %2566
    %v2568 = vsel %vm1175, %v1127, 0.0
    %2569 = vadd.xlane.f32.xlu0 %v2568
    %v2570 = vpop.xlane.xlu0 %2569
    %v2571 = vsel %vm1175, %v1128, 0.0
    %2572 = vadd.xlane.f32.xlu0 %v2571
    %v2573 = vpop.xlane.xlu0 %2572
    %v2574 = vsel %vm1175, %v1129, 0.0
    %2575 = vadd.xlane.f32.xlu0 %v2574
    %v2576 = vpop.xlane.xlu0 %2575
    %v2577 = vsel %vm1175, %v1130, 0.0
    %2578 = vadd.xlane.f32.xlu0 %v2577
    %v2579 = vpop.xlane.xlu0 %2578
    %v2580 = vsel %vm1175, %v1131, 0.0
    %2581 = vadd.xlane.f32.xlu0 %v2580
    %v2582 = vpop.xlane.xlu0 %2581
    %v2583 = vsel %vm1175, %v1132, 0.0
    %2584 = vadd.xlane.f32.xlu0 %v2583
    %v2585 = vpop.xlane.xlu0 %2584
    %v2586 = vsel %vm1175, %v1133, 0.0
    %2587 = vadd.xlane.f32.xlu0 %v2586
    %v2588 = vpop.xlane.xlu0 %2587
    %v2589 = vsel %vm1175, %v1134, 0.0
    %2590 = vadd.xlane.f32.xlu0 %v2589
    %v2591 = vpop.xlane.xlu0 %2590
    %v2592 = vsel %vm1175, %v1135, 0.0
    %2593 = vadd.xlane.f32.xlu0 %v2592
    %v2594 = vpop.xlane.xlu0 %2593
    %v2595 = vsel %vm1175, %v1136, 0.0
    %2596 = vadd.xlane.f32.xlu0 %v2595
    %v2597 = vpop.xlane.xlu0 %2596
    %v2598 = vsel %vm1175, %v1137, 0.0
    %2599 = vadd.xlane.f32.xlu0 %v2598
    %v2600 = vpop.xlane.xlu0 %2599
    %v2601 = vsel %vm1175, %v1138, 0.0
    %2602 = vadd.xlane.f32.xlu0 %v2601
    %v2603 = vpop.xlane.xlu0 %2602
    %v2604 = vsel %vm1175, %v1139, 0.0
    %2605 = vadd.xlane.f32.xlu0 %v2604
    %v2606 = vpop.xlane.xlu0 %2605
    %v2607 = vsel %vm1175, %v1140, 0.0
    %2608 = vadd.xlane.f32.xlu0 %v2607
    %v2609 = vpop.xlane.xlu0 %2608
    %v2610 = vsel %vm1175, %v1141, 0.0
    %2611 = vadd.xlane.f32.xlu0 %v2610
    %v2612 = vpop.xlane.xlu0 %2611
    %v2613 = vsel %vm1175, %v1142, 0.0
    %2614 = vadd.xlane.f32.xlu0 %v2613
    %v2615 = vpop.xlane.xlu0 %2614
    %v2616 = vsel %vm1175, %v1143, 0.0
    %2617 = vadd.xlane.f32.xlu0 %v2616
    %v2618 = vpop.xlane.xlu0 %2617
    %v2619 = vsel %vm1175, %v1144, 0.0
    %2620 = vadd.xlane.f32.xlu0 %v2619
    %v2621 = vpop.xlane.xlu0 %2620
    %v2622 = vsel %vm1175, %v1145, 0.0
    %2623 = vadd.xlane.f32.xlu0 %v2622
    %v2624 = vpop.xlane.xlu0 %2623
    %v2625 = vsel %vm1175, %v1146, 0.0
    %2626 = vadd.xlane.f32.xlu0 %v2625
    %v2627 = vpop.xlane.xlu0 %2626
    %v2628 = vsel %vm1175, %v1147, 0.0
    %2629 = vadd.xlane.f32.xlu0 %v2628
    %v2630 = vpop.xlane.xlu0 %2629
    %v2631 = vsel %vm1175, %v1148, 0.0
    %2632 = vadd.xlane.f32.xlu0 %v2631
    %v2633 = vpop.xlane.xlu0 %2632
    %v2634 = vsel %vm1175, %v1149, 0.0
    %2635 = vadd.xlane.f32.xlu0 %v2634
    %v2636 = vpop.xlane.xlu0 %2635
    %v2637 = vsel %vm1175, %v1150, 0.0
    %2638 = vadd.xlane.f32.xlu0 %v2637
    %v2639 = vpop.xlane.xlu0 %2638
    %v2640 = vsel %vm1175, %v1151, 0.0
    %2641 = vadd.xlane.f32.xlu0 %v2640
    %v2642 = vpop.xlane.xlu0 %2641
    %v2643 = vsel %vm1175, %v1152, 0.0
    %2644 = vadd.xlane.f32.xlu0 %v2643
    %v2645 = vpop.xlane.xlu0 %2644
    %v2646 = vsel %vm1175, %v1153, 0.0
    %2647 = vadd.xlane.f32.xlu0 %v2646
    %v2648 = vpop.xlane.xlu0 %2647
    %v2649 = vsel %vm1175, %v1154, 0.0
    %2650 = vadd.xlane.f32.xlu0 %v2649
    %v2651 = vpop.xlane.xlu0 %2650
    %v2652 = vsel %vm1175, %v1155, 0.0
    %2653 = vadd.xlane.f32.xlu0 %v2652
    %v2654 = vpop.xlane.xlu0 %2653
    %v2655 = vsel %vm1175, %v1156, 0.0
    %2656 = vadd.xlane.f32.xlu0 %v2655
    %v2657 = vpop.xlane.xlu0 %2656
    %v2658 = vsel %vm1175, %v1157, 0.0
    %2659 = vadd.xlane.f32.xlu0 %v2658
    %v2660 = vpop.xlane.xlu0 %2659
    %v2661 = vsel %vm1175, %v1158, 0.0
    %2662 = vadd.xlane.f32.xlu0 %v2661
    %v2663 = vpop.xlane.xlu0 %2662
    %v2664 = vsel %vm1175, %v1159, 0.0
    %2665 = vadd.xlane.f32.xlu0 %v2664
    %v2666 = vpop.xlane.xlu0 %2665
    %v2667 = vsel %vm1175, %v1160, 0.0
    %2668 = vadd.xlane.f32.xlu0 %v2667
    %v2669 = vpop.xlane.xlu0 %2668
    %v2670 = vsel %vm1175, %v1161, 0.0
    %2671 = vadd.xlane.f32.xlu0 %v2670
    %v2672 = vpop.xlane.xlu0 %2671
    %v2673 = vsel %vm1175, %v1162, 0.0
    %2674 = vadd.xlane.f32.xlu0 %v2673
    %v2675 = vpop.xlane.xlu0 %2674
    %v2676 = vsel %vm1175, %v1163, 0.0
    %2677 = vadd.xlane.f32.xlu0 %v2676
    %v2678 = vpop.xlane.xlu0 %2677
    %v2679 = vsel %vm1175, %v1164, 0.0
    %2680 = vadd.xlane.f32.xlu0 %v2679
    %v2681 = vpop.xlane.xlu0 %2680
    %v2682 = vsel %vm1175, %v1165, 0.0
    %2683 = vadd.xlane.f32.xlu0 %v2682
    %v2684 = vpop.xlane.xlu0 %2683
    %v2685 = vsel %vm1175, %v1166, 0.0
    %2686 = vadd.xlane.f32.xlu0 %v2685
    %v2687 = vpop.xlane.xlu0 %2686
    %v2688 = vsel %vm1175, %v1167, 0.0
    %2689 = vadd.xlane.f32.xlu0 %v2688
    %v2690 = vpop.xlane.xlu0 %2689
    %v2691 = vsel %vm1175, %v1168, 0.0
    %2692 = vadd.xlane.f32.xlu0 %v2691
    %v2693 = vpop.xlane.xlu0 %2692
    %v2694 = vsel %vm1175, %v1169, 0.0
    %2695 = vadd.xlane.f32.xlu0 %v2694
    %v2696 = vpop.xlane.xlu0 %2695
    %v2697 = vsel %vm1175, %v1170, 0.0
    %2698 = vadd.xlane.f32.xlu0 %v2697
    %v2699 = vpop.xlane.xlu0 %2698
    %v2700 = vsel %vm1175, %v1171, 0.0
    %2701 = vadd.xlane.f32.xlu0 %v2700
    %v2702 = vpop.xlane.xlu0 %2701
    %v2703 = vsel %vm1175, %v1172, 0.0
    %2704 = vadd.xlane.f32.xlu0 %v2703
    %v2705 = vpop.xlane.xlu0 %2704
    %v2706 = vsel %vm1175, %v1173, 0.0
    %2707 = vadd.xlane.f32.xlu0 %v2706
    %v2708 = vpop.xlane.xlu0 %2707
    %v2709 = vsel %vm1175, %v1174, 0.0
    %2710 = vadd.xlane.f32.xlu0 %v2709
    %v2711 = vpop.xlane.xlu0 %2710
    %v2712 = vmul.f32 %v1178, 0.020408163
    %v2713 = vmul.f32 %v1181, 0.020408163
    %v2714 = vmul.f32 %v1184, 0.020408163
    %v2715 = vmul.f32 %v1187, 0.020408163
    %v2716 = vmul.f32 %v1190, 0.020408163
    %v2717 = vmul.f32 %v1193, 0.020408163
    %v2718 = vmul.f32 %v1196, 0.020408163
    %v2719 = vmul.f32 %v1199, 0.020408163
    %v2720 = vmul.f32 %v1202, 0.020408163
    %v2721 = vmul.f32 %v1205, 0.020408163
    %v2722 = vmul.f32 %v1208, 0.020408163
    %v2723 = vmul.f32 %v1211, 0.020408163
    %v2724 = vmul.f32 %v1214, 0.020408163
    %v2725 = vmul.f32 %v1217, 0.020408163
    %v2726 = vmul.f32 %v1220, 0.020408163
    %v2727 = vmul.f32 %v1223, 0.020408163
    %v2728 = vmul.f32 %v1226, 0.020408163
    %v2729 = vmul.f32 %v1229, 0.020408163
    %v2730 = vmul.f32 %v1232, 0.020408163
    %v2731 = vmul.f32 %v1235, 0.020408163
    %v2732 = vmul.f32 %v1238, 0.020408163
    %v2733 = vmul.f32 %v1241, 0.020408163
    %v2734 = vmul.f32 %v1244, 0.020408163
    %v2735 = vmul.f32 %v1247, 0.020408163
    %v2736 = vmul.f32 %v1250, 0.020408163
    %v2737 = vmul.f32 %v1253, 0.020408163
    %v2738 = vmul.f32 %v1256, 0.020408163
    %v2739 = vmul.f32 %v1259, 0.020408163
    %v2740 = vmul.f32 %v1262, 0.020408163
    %v2741 = vmul.f32 %v1265, 0.020408163
    %v2742 = vmul.f32 %v1268, 0.020408163
    %v2743 = vmul.f32 %v1271, 0.020408163
    %v2744 = vmul.f32 %v1274, 0.020408163
    %v2745 = vmul.f32 %v1277, 0.020408163
    %v2746 = vmul.f32 %v1280, 0.020408163
    %v2747 = vmul.f32 %v1283, 0.020408163
    %v2748 = vmul.f32 %v1286, 0.020408163
    %v2749 = vmul.f32 %v1289, 0.020408163
    %v2750 = vmul.f32 %v1292, 0.020408163
    %v2751 = vmul.f32 %v1295, 0.020408163
    %v2752 = vmul.f32 %v1298, 0.020408163
    %v2753 = vmul.f32 %v1301, 0.020408163
    %v2754 = vmul.f32 %v1304, 0.020408163
    %v2755 = vmul.f32 %v1307, 0.020408163
    %v2756 = vmul.f32 %v1310, 0.020408163
    %v2757 = vmul.f32 %v1313, 0.020408163
    %v2758 = vmul.f32 %v1316, 0.020408163
    %v2759 = vmul.f32 %v1319, 0.020408163
    %v2760 = vmul.f32 %v1322, 0.020408163
    %v2761 = vmul.f32 %v1325, 0.020408163
    %v2762 = vmul.f32 %v1328, 0.020408163
    %v2763 = vmul.f32 %v1331, 0.020408163
    %v2764 = vmul.f32 %v1334, 0.020408163
    %v2765 = vmul.f32 %v1337, 0.020408163
    %v2766 = vmul.f32 %v1340, 0.020408163
    %v2767 = vmul.f32 %v1343, 0.020408163
    %v2768 = vmul.f32 %v1346, 0.020408163
    %v2769 = vmul.f32 %v1349, 0.020408163
    %v2770 = vmul.f32 %v1352, 0.020408163
    %v2771 = vmul.f32 %v1355, 0.020408163
    %v2772 = vmul.f32 %v1358, 0.020408163
    %v2773 = vmul.f32 %v1361, 0.020408163
    %v2774 = vmul.f32 %v1364, 0.020408163
    %v2775 = vmul.f32 %v1367, 0.020408163
    %v2776 = vmul.f32 %v1370, 0.020408163
    %v2777 = vmul.f32 %v1373, 0.020408163
    %v2778 = vmul.f32 %v1376, 0.020408163
    %v2779 = vmul.f32 %v1379, 0.020408163
    %v2780 = vmul.f32 %v1382, 0.020408163
    %v2781 = vmul.f32 %v1385, 0.020408163
    %v2782 = vmul.f32 %v1388, 0.020408163
    %v2783 = vmul.f32 %v1391, 0.020408163
    %v2784 = vmul.f32 %v1394, 0.020408163
    %v2785 = vmul.f32 %v1397, 0.020408163
    %v2786 = vmul.f32 %v1400, 0.020408163
    %v2787 = vmul.f32 %v1403, 0.020408163
    %v2788 = vmul.f32 %v1406, 0.020408163
    %v2789 = vmul.f32 %v1409, 0.020408163
    %v2790 = vmul.f32 %v1412, 0.020408163
    %v2791 = vmul.f32 %v1415, 0.020408163
    %v2792 = vmul.f32 %v1418, 0.020408163
    %v2793 = vmul.f32 %v1421, 0.020408163
    %v2794 = vmul.f32 %v1424, 0.020408163
    %v2795 = vmul.f32 %v1427, 0.020408163
    %v2796 = vmul.f32 %v1430, 0.020408163
    %v2797 = vmul.f32 %v1433, 0.020408163
    %v2798 = vmul.f32 %v1436, 0.020408163
    %v2799 = vmul.f32 %v1439, 0.020408163
    %v2800 = vmul.f32 %v1442, 0.020408163
    %v2801 = vmul.f32 %v1445, 0.020408163
    %v2802 = vmul.f32 %v1448, 0.020408163
    %v2803 = vmul.f32 %v1451, 0.020408163
    %v2804 = vmul.f32 %v1454, 0.020408163
    %v2805 = vmul.f32 %v1457, 0.020408163
    %v2806 = vmul.f32 %v1460, 0.020408163
    %v2807 = vmul.f32 %v1463, 0.020408163
    %v2808 = vmul.f32 %v1466, 0.020408163
    %v2809 = vmul.f32 %v1469, 0.020408163
    %v2810 = vmul.f32 %v1472, 0.020408163
    %v2811 = vmul.f32 %v1475, 0.020408163
    %v2812 = vmul.f32 %v1478, 0.020408163
    %v2813 = vmul.f32 %v1481, 0.020408163
    %v2814 = vmul.f32 %v1484, 0.020408163
    %v2815 = vmul.f32 %v1487, 0.020408163
    %v2816 = vmul.f32 %v1490, 0.020408163
    %v2817 = vmul.f32 %v1493, 0.020408163
    %v2818 = vmul.f32 %v1496, 0.020408163
    %v2819 = vmul.f32 %v1499, 0.020408163
    %v2820 = vmul.f32 %v1502, 0.020408163
    %v2821 = vmul.f32 %v1505, 0.020408163
    %v2822 = vmul.f32 %v1508, 0.020408163
    %v2823 = vmul.f32 %v1511, 0.020408163
    %v2824 = vmul.f32 %v1514, 0.020408163
    %v2825 = vmul.f32 %v1517, 0.020408163
    %v2826 = vmul.f32 %v1520, 0.020408163
    %v2827 = vmul.f32 %v1523, 0.020408163
    %v2828 = vmul.f32 %v1526, 0.020408163
    %v2829 = vmul.f32 %v1529, 0.020408163
    %v2830 = vmul.f32 %v1532, 0.020408163
    %v2831 = vmul.f32 %v1535, 0.020408163
    %v2832 = vmul.f32 %v1538, 0.020408163
    %v2833 = vmul.f32 %v1541, 0.020408163
    %v2834 = vmul.f32 %v1544, 0.020408163
    %v2835 = vmul.f32 %v1547, 0.020408163
    %v2836 = vmul.f32 %v1550, 0.020408163
    %v2837 = vmul.f32 %v1553, 0.020408163
    %v2838 = vmul.f32 %v1556, 0.020408163
    %v2839 = vmul.f32 %v1559, 0.020408163
    %v2840 = vmul.f32 %v1562, 0.020408163
    %v2841 = vmul.f32 %v1565, 0.020408163
    %v2842 = vmul.f32 %v1568, 0.020408163
    %v2843 = vmul.f32 %v1571, 0.020408163
    %v2844 = vmul.f32 %v1574, 0.020408163
    %v2845 = vmul.f32 %v1577, 0.020408163
    %v2846 = vmul.f32 %v1580, 0.020408163
    %v2847 = vmul.f32 %v1583, 0.020408163
    %v2848 = vmul.f32 %v1586, 0.020408163
    %v2849 = vmul.f32 %v1589, 0.020408163
    %v2850 = vmul.f32 %v1592, 0.020408163
    %v2851 = vmul.f32 %v1595, 0.020408163
    %v2852 = vmul.f32 %v1598, 0.020408163
    %v2853 = vmul.f32 %v1601, 0.020408163
    %v2854 = vmul.f32 %v1604, 0.020408163
    %v2855 = vmul.f32 %v1607, 0.020408163
    %v2856 = vmul.f32 %v1610, 0.020408163
    %v2857 = vmul.f32 %v1613, 0.020408163
    %v2858 = vmul.f32 %v1616, 0.020408163
    %v2859 = vmul.f32 %v1619, 0.020408163
    %v2860 = vmul.f32 %v1622, 0.020408163
    %v2861 = vmul.f32 %v1625, 0.020408163
    %v2862 = vmul.f32 %v1628, 0.020408163
    %v2863 = vmul.f32 %v1631, 0.020408163
    %v2864 = vmul.f32 %v1634, 0.020408163
    %v2865 = vmul.f32 %v1637, 0.020408163
    %v2866 = vmul.f32 %v1640, 0.020408163
    %v2867 = vmul.f32 %v1643, 0.020408163
    %v2868 = vmul.f32 %v1646, 0.020408163
    %v2869 = vmul.f32 %v1649, 0.020408163
    %v2870 = vmul.f32 %v1652, 0.020408163
    %v2871 = vmul.f32 %v1655, 0.020408163
    %v2872 = vmul.f32 %v1658, 0.020408163
    %v2873 = vmul.f32 %v1661, 0.020408163
    %v2874 = vmul.f32 %v1664, 0.020408163
    %v2875 = vmul.f32 %v1667, 0.020408163
    %v2876 = vmul.f32 %v1670, 0.020408163
    %v2877 = vmul.f32 %v1673, 0.020408163
    %v2878 = vmul.f32 %v1676, 0.020408163
    %v2879 = vmul.f32 %v1679, 0.020408163
    %v2880 = vmul.f32 %v1682, 0.020408163
    %v2881 = vmul.f32 %v1685, 0.020408163
    %v2882 = vmul.f32 %v1688, 0.020408163
    %v2883 = vmul.f32 %v1691, 0.020408163
    %v2884 = vmul.f32 %v1694, 0.020408163
    %v2885 = vmul.f32 %v1697, 0.020408163
    %v2886 = vmul.f32 %v1700, 0.020408163
    %v2887 = vmul.f32 %v1703, 0.020408163
    %v2888 = vmul.f32 %v1706, 0.020408163
    %v2889 = vmul.f32 %v1709, 0.020408163
    %v2890 = vmul.f32 %v1712, 0.020408163
    %v2891 = vmul.f32 %v1715, 0.020408163
    %v2892 = vmul.f32 %v1718, 0.020408163
    %v2893 = vmul.f32 %v1721, 0.020408163
    %v2894 = vmul.f32 %v1724, 0.020408163
    %v2895 = vmul.f32 %v1727, 0.020408163
    %v2896 = vmul.f32 %v1730, 0.020408163
    %v2897 = vmul.f32 %v1733, 0.020408163
    %v2898 = vmul.f32 %v1736, 0.020408163
    %v2899 = vmul.f32 %v1739, 0.020408163
    %v2900 = vmul.f32 %v1742, 0.020408163
    %v2901 = vmul.f32 %v1745, 0.020408163
    %v2902 = vmul.f32 %v1748, 0.020408163
    %v2903 = vmul.f32 %v1751, 0.020408163
    %v2904 = vmul.f32 %v1754, 0.020408163
    %v2905 = vmul.f32 %v1757, 0.020408163
    %v2906 = vmul.f32 %v1760, 0.020408163
    %v2907 = vmul.f32 %v1763, 0.020408163
    %v2908 = vmul.f32 %v1766, 0.020408163
    %v2909 = vmul.f32 %v1769, 0.020408163
    %v2910 = vmul.f32 %v1772, 0.020408163
    %v2911 = vmul.f32 %v1775, 0.020408163
    %v2912 = vmul.f32 %v1778, 0.020408163
    %v2913 = vmul.f32 %v1781, 0.020408163
    %v2914 = vmul.f32 %v1784, 0.020408163
    %v2915 = vmul.f32 %v1787, 0.020408163
    %v2916 = vmul.f32 %v1790, 0.020408163
    %v2917 = vmul.f32 %v1793, 0.020408163
    %v2918 = vmul.f32 %v1796, 0.020408163
    %v2919 = vmul.f32 %v1799, 0.020408163
    %v2920 = vmul.f32 %v1802, 0.020408163
    %v2921 = vmul.f32 %v1805, 0.020408163
    %v2922 = vmul.f32 %v1808, 0.020408163
    %v2923 = vmul.f32 %v1811, 0.020408163
    %v2924 = vmul.f32 %v1814, 0.020408163
    %v2925 = vmul.f32 %v1817, 0.020408163
    %v2926 = vmul.f32 %v1820, 0.020408163
    %v2927 = vmul.f32 %v1823, 0.020408163
    %v2928 = vmul.f32 %v1826, 0.020408163
    %v2929 = vmul.f32 %v1829, 0.020408163
    %v2930 = vmul.f32 %v1832, 0.020408163
    %v2931 = vmul.f32 %v1835, 0.020408163
    %v2932 = vmul.f32 %v1838, 0.020408163
    %v2933 = vmul.f32 %v1841, 0.020408163
    %v2934 = vmul.f32 %v1844, 0.020408163
    %v2935 = vmul.f32 %v1847, 0.020408163
    %v2936 = vmul.f32 %v1850, 0.020408163
    %v2937 = vmul.f32 %v1853, 0.020408163
    %v2938 = vmul.f32 %v1856, 0.020408163
    %v2939 = vmul.f32 %v1859, 0.020408163
    %v2940 = vmul.f32 %v1862, 0.020408163
    %v2941 = vmul.f32 %v1865, 0.020408163
    %v2942 = vmul.f32 %v1868, 0.020408163
    %v2943 = vmul.f32 %v1871, 0.020408163
    %v2944 = vmul.f32 %v1874, 0.020408163
    %v2945 = vmul.f32 %v1877, 0.020408163
    %v2946 = vmul.f32 %v1880, 0.020408163
    %v2947 = vmul.f32 %v1883, 0.020408163
    %v2948 = vmul.f32 %v1886, 0.020408163
    %v2949 = vmul.f32 %v1889, 0.020408163
    %v2950 = vmul.f32 %v1892, 0.020408163
    %v2951 = vmul.f32 %v1895, 0.020408163
    %v2952 = vmul.f32 %v1898, 0.020408163
    %v2953 = vmul.f32 %v1901, 0.020408163
    %v2954 = vmul.f32 %v1904, 0.020408163
    %v2955 = vmul.f32 %v1907, 0.020408163
    %v2956 = vmul.f32 %v1910, 0.020408163
    %v2957 = vmul.f32 %v1913, 0.020408163
    %v2958 = vmul.f32 %v1916, 0.020408163
    %v2959 = vmul.f32 %v1919, 0.020408163
    %v2960 = vmul.f32 %v1922, 0.020408163
    %v2961 = vmul.f32 %v1925, 0.020408163
    %v2962 = vmul.f32 %v1928, 0.020408163
    %v2963 = vmul.f32 %v1931, 0.020408163
    %v2964 = vmul.f32 %v1934, 0.020408163
    %v2965 = vmul.f32 %v1937, 0.020408163
    %v2966 = vmul.f32 %v1940, 0.020408163
    %v2967 = vmul.f32 %v1943, 0.020408163
    %v2968 = vmul.f32 %v1946, 0.020408163
    %v2969 = vmul.f32 %v1949, 0.020408163
    %v2970 = vmul.f32 %v1952, 0.020408163
    %v2971 = vmul.f32 %v1955, 0.020408163
    %v2972 = vmul.f32 %v1958, 0.020408163
    %v2973 = vmul.f32 %v1961, 0.020408163
    %v2974 = vmul.f32 %v1964, 0.020408163
    %v2975 = vmul.f32 %v1967, 0.020408163
    %v2976 = vmul.f32 %v1970, 0.020408163
    %v2977 = vmul.f32 %v1973, 0.020408163
    %v2978 = vmul.f32 %v1976, 0.020408163
    %v2979 = vmul.f32 %v1979, 0.020408163
    %v2980 = vmul.f32 %v1982, 0.020408163
    %v2981 = vmul.f32 %v1985, 0.020408163
    %v2982 = vmul.f32 %v1988, 0.020408163
    %v2983 = vmul.f32 %v1991, 0.020408163
    %v2984 = vmul.f32 %v1994, 0.020408163
    %v2985 = vmul.f32 %v1997, 0.020408163
    %v2986 = vmul.f32 %v2000, 0.020408163
    %v2987 = vmul.f32 %v2003, 0.020408163
    %v2988 = vmul.f32 %v2006, 0.020408163
    %v2989 = vmul.f32 %v2009, 0.020408163
    %v2990 = vmul.f32 %v2012, 0.020408163
    %v2991 = vmul.f32 %v2015, 0.020408163
    %v2992 = vmul.f32 %v2018, 0.020408163
    %v2993 = vmul.f32 %v2021, 0.020408163
    %v2994 = vmul.f32 %v2024, 0.020408163
    %v2995 = vmul.f32 %v2027, 0.020408163
    %v2996 = vmul.f32 %v2030, 0.020408163
    %v2997 = vmul.f32 %v2033, 0.020408163
    %v2998 = vmul.f32 %v2036, 0.020408163
    %v2999 = vmul.f32 %v2039, 0.020408163
    %v3000 = vmul.f32 %v2042, 0.020408163
    %v3001 = vmul.f32 %v2045, 0.020408163
    %v3002 = vmul.f32 %v2048, 0.020408163
    %v3003 = vmul.f32 %v2051, 0.020408163
    %v3004 = vmul.f32 %v2054, 0.020408163
    %v3005 = vmul.f32 %v2057, 0.020408163
    %v3006 = vmul.f32 %v2060, 0.020408163
    %v3007 = vmul.f32 %v2063, 0.020408163
    %v3008 = vmul.f32 %v2066, 0.020408163
    %v3009 = vmul.f32 %v2069, 0.020408163
    %v3010 = vmul.f32 %v2072, 0.020408163
    %v3011 = vmul.f32 %v2075, 0.020408163
    %v3012 = vmul.f32 %v2078, 0.020408163
    %v3013 = vmul.f32 %v2081, 0.020408163
    %v3014 = vmul.f32 %v2084, 0.020408163
    %v3015 = vmul.f32 %v2087, 0.020408163
    %v3016 = vmul.f32 %v2090, 0.020408163
    %v3017 = vmul.f32 %v2093, 0.020408163
    %v3018 = vmul.f32 %v2096, 0.020408163
    %v3019 = vmul.f32 %v2099, 0.020408163
    %v3020 = vmul.f32 %v2102, 0.020408163
    %v3021 = vmul.f32 %v2105, 0.020408163
    %v3022 = vmul.f32 %v2108, 0.020408163
    %v3023 = vmul.f32 %v2111, 0.020408163
    %v3024 = vmul.f32 %v2114, 0.020408163
    %v3025 = vmul.f32 %v2117, 0.020408163
    %v3026 = vmul.f32 %v2120, 0.020408163
    %v3027 = vmul.f32 %v2123, 0.020408163
    %v3028 = vmul.f32 %v2126, 0.020408163
    %v3029 = vmul.f32 %v2129, 0.020408163
    %v3030 = vmul.f32 %v2132, 0.020408163
    %v3031 = vmul.f32 %v2135, 0.020408163
    %v3032 = vmul.f32 %v2138, 0.020408163
    %v3033 = vmul.f32 %v2141, 0.020408163
    %v3034 = vmul.f32 %v2144, 0.020408163
    %v3035 = vmul.f32 %v2147, 0.020408163
    %v3036 = vmul.f32 %v2150, 0.020408163
    %v3037 = vmul.f32 %v2153, 0.020408163
    %v3038 = vmul.f32 %v2156, 0.020408163
    %v3039 = vmul.f32 %v2159, 0.020408163
    %v3040 = vmul.f32 %v2162, 0.020408163
    %v3041 = vmul.f32 %v2165, 0.020408163
    %v3042 = vmul.f32 %v2168, 0.020408163
    %v3043 = vmul.f32 %v2171, 0.020408163
    %v3044 = vmul.f32 %v2174, 0.020408163
    %v3045 = vmul.f32 %v2177, 0.020408163
    %v3046 = vmul.f32 %v2180, 0.020408163
    %v3047 = vmul.f32 %v2183, 0.020408163
    %v3048 = vmul.f32 %v2186, 0.020408163
    %v3049 = vmul.f32 %v2189, 0.020408163
    %v3050 = vmul.f32 %v2192, 0.020408163
    %v3051 = vmul.f32 %v2195, 0.020408163
    %v3052 = vmul.f32 %v2198, 0.020408163
    %v3053 = vmul.f32 %v2201, 0.020408163
    %v3054 = vmul.f32 %v2204, 0.020408163
    %v3055 = vmul.f32 %v2207, 0.020408163
    %v3056 = vmul.f32 %v2210, 0.020408163
    %v3057 = vmul.f32 %v2213, 0.020408163
    %v3058 = vmul.f32 %v2216, 0.020408163
    %v3059 = vmul.f32 %v2219, 0.020408163
    %v3060 = vmul.f32 %v2222, 0.020408163
    %v3061 = vmul.f32 %v2225, 0.020408163
    %v3062 = vmul.f32 %v2228, 0.020408163
    %v3063 = vmul.f32 %v2231, 0.020408163
    %v3064 = vmul.f32 %v2234, 0.020408163
    %v3065 = vmul.f32 %v2237, 0.020408163
    %v3066 = vmul.f32 %v2240, 0.020408163
    %v3067 = vmul.f32 %v2243, 0.020408163
    %v3068 = vmul.f32 %v2246, 0.020408163
    %v3069 = vmul.f32 %v2249, 0.020408163
    %v3070 = vmul.f32 %v2252, 0.020408163
    %v3071 = vmul.f32 %v2255, 0.020408163
    %v3072 = vmul.f32 %v2258, 0.020408163
    %v3073 = vmul.f32 %v2261, 0.020408163
    %v3074 = vmul.f32 %v2264, 0.020408163
    %v3075 = vmul.f32 %v2267, 0.020408163
    %v3076 = vmul.f32 %v2270, 0.020408163
    %v3077 = vmul.f32 %v2273, 0.020408163
    %v3078 = vmul.f32 %v2276, 0.020408163
    %v3079 = vmul.f32 %v2279, 0.020408163
    %v3080 = vmul.f32 %v2282, 0.020408163
    %v3081 = vmul.f32 %v2285, 0.020408163
    %v3082 = vmul.f32 %v2288, 0.020408163
    %v3083 = vmul.f32 %v2291, 0.020408163
    %v3084 = vmul.f32 %v2294, 0.020408163
    %v3085 = vmul.f32 %v2297, 0.020408163
    %v3086 = vmul.f32 %v2300, 0.020408163
    %v3087 = vmul.f32 %v2303, 0.020408163
    %v3088 = vmul.f32 %v2306, 0.020408163
    %v3089 = vmul.f32 %v2309, 0.020408163
    %v3090 = vmul.f32 %v2312, 0.020408163
    %v3091 = vmul.f32 %v2315, 0.020408163
    %v3092 = vmul.f32 %v2318, 0.020408163
    %v3093 = vmul.f32 %v2321, 0.020408163
    %v3094 = vmul.f32 %v2324, 0.020408163
    %v3095 = vmul.f32 %v2327, 0.020408163
    %v3096 = vmul.f32 %v2330, 0.020408163
    %v3097 = vmul.f32 %v2333, 0.020408163
    %v3098 = vmul.f32 %v2336, 0.020408163
    %v3099 = vmul.f32 %v2339, 0.020408163
    %v3100 = vmul.f32 %v2342, 0.020408163
    %v3101 = vmul.f32 %v2345, 0.020408163
    %v3102 = vmul.f32 %v2348, 0.020408163
    %v3103 = vmul.f32 %v2351, 0.020408163
    %v3104 = vmul.f32 %v2354, 0.020408163
    %v3105 = vmul.f32 %v2357, 0.020408163
    %v3106 = vmul.f32 %v2360, 0.020408163
    %v3107 = vmul.f32 %v2363, 0.020408163
    %v3108 = vmul.f32 %v2366, 0.020408163
    %v3109 = vmul.f32 %v2369, 0.020408163
    %v3110 = vmul.f32 %v2372, 0.020408163
    %v3111 = vmul.f32 %v2375, 0.020408163
    %v3112 = vmul.f32 %v2378, 0.020408163
    %v3113 = vmul.f32 %v2381, 0.020408163
    %v3114 = vmul.f32 %v2384, 0.020408163
    %v3115 = vmul.f32 %v2387, 0.020408163
    %v3116 = vmul.f32 %v2390, 0.020408163
    %v3117 = vmul.f32 %v2393, 0.020408163
    %v3118 = vmul.f32 %v2396, 0.020408163
    %v3119 = vmul.f32 %v2399, 0.020408163
    %v3120 = vmul.f32 %v2402, 0.020408163
    %v3121 = vmul.f32 %v2405, 0.020408163
    %v3122 = vmul.f32 %v2408, 0.020408163
    %v3123 = vmul.f32 %v2411, 0.020408163
    %v3124 = vmul.f32 %v2414, 0.020408163
    %v3125 = vmul.f32 %v2417, 0.020408163
    %v3126 = vmul.f32 %v2420, 0.020408163
    %v3127 = vmul.f32 %v2423, 0.020408163
    %v3128 = vmul.f32 %v2426, 0.020408163
    %v3129 = vmul.f32 %v2429, 0.020408163
    %v3130 = vmul.f32 %v2432, 0.020408163
    %v3131 = vmul.f32 %v2435, 0.020408163
    %v3132 = vmul.f32 %v2438, 0.020408163
    %v3133 = vmul.f32 %v2441, 0.020408163
    %v3134 = vmul.f32 %v2444, 0.020408163
    %v3135 = vmul.f32 %v2447, 0.020408163
    %v3136 = vmul.f32 %v2450, 0.020408163
    %v3137 = vmul.f32 %v2453, 0.020408163
    %v3138 = vmul.f32 %v2456, 0.020408163
    %v3139 = vmul.f32 %v2459, 0.020408163
    %v3140 = vmul.f32 %v2462, 0.020408163
    %v3141 = vmul.f32 %v2465, 0.020408163
    %v3142 = vmul.f32 %v2468, 0.020408163
    %v3143 = vmul.f32 %v2471, 0.020408163
    %v3144 = vmul.f32 %v2474, 0.020408163
    %v3145 = vmul.f32 %v2477, 0.020408163
    %v3146 = vmul.f32 %v2480, 0.020408163
    %v3147 = vmul.f32 %v2483, 0.020408163
    %v3148 = vmul.f32 %v2486, 0.020408163
    %v3149 = vmul.f32 %v2489, 0.020408163
    %v3150 = vmul.f32 %v2492, 0.020408163
    %v3151 = vmul.f32 %v2495, 0.020408163
    %v3152 = vmul.f32 %v2498, 0.020408163
    %v3153 = vmul.f32 %v2501, 0.020408163
    %v3154 = vmul.f32 %v2504, 0.020408163
    %v3155 = vmul.f32 %v2507, 0.020408163
    %v3156 = vmul.f32 %v2510, 0.020408163
    %v3157 = vmul.f32 %v2513, 0.020408163
    %v3158 = vmul.f32 %v2516, 0.020408163
    %v3159 = vmul.f32 %v2519, 0.020408163
    %v3160 = vmul.f32 %v2522, 0.020408163
    %v3161 = vmul.f32 %v2525, 0.020408163
    %v3162 = vmul.f32 %v2528, 0.020408163
    %v3163 = vmul.f32 %v2531, 0.020408163
    %v3164 = vmul.f32 %v2534, 0.020408163
    %v3165 = vmul.f32 %v2537, 0.020408163
    %v3166 = vmul.f32 %v2540, 0.020408163
    %v3167 = vmul.f32 %v2543, 0.020408163
    %v3168 = vmul.f32 %v2546, 0.020408163
    %v3169 = vmul.f32 %v2549, 0.020408163
    %v3170 = vmul.f32 %v2552, 0.020408163
    %v3171 = vmul.f32 %v2555, 0.020408163
    %v3172 = vmul.f32 %v2558, 0.020408163
    %v3173 = vmul.f32 %v2561, 0.020408163
    %v3174 = vmul.f32 %v2564, 0.020408163
    %v3175 = vmul.f32 %v2567, 0.020408163
    %v3176 = vmul.f32 %v2570, 0.020408163
    %v3177 = vmul.f32 %v2573, 0.020408163
    %v3178 = vmul.f32 %v2576, 0.020408163
    %v3179 = vmul.f32 %v2579, 0.020408163
    %v3180 = vmul.f32 %v2582, 0.020408163
    %v3181 = vmul.f32 %v2585, 0.020408163
    %v3182 = vmul.f32 %v2588, 0.020408163
    %v3183 = vmul.f32 %v2591, 0.020408163
    %v3184 = vmul.f32 %v2594, 0.020408163
    %v3185 = vmul.f32 %v2597, 0.020408163
    %v3186 = vmul.f32 %v2600, 0.020408163
    %v3187 = vmul.f32 %v2603, 0.020408163
    %v3188 = vmul.f32 %v2606, 0.020408163
    %v3189 = vmul.f32 %v2609, 0.020408163
    %v3190 = vmul.f32 %v2612, 0.020408163
    %v3191 = vmul.f32 %v2615, 0.020408163
    %v3192 = vmul.f32 %v2618, 0.020408163
    %v3193 = vmul.f32 %v2621, 0.020408163
    %v3194 = vmul.f32 %v2624, 0.020408163
    %v3195 = vmul.f32 %v2627, 0.020408163
    %v3196 = vmul.f32 %v2630, 0.020408163
    %v3197 = vmul.f32 %v2633, 0.020408163
    %v3198 = vmul.f32 %v2636, 0.020408163
    %v3199 = vmul.f32 %v2639, 0.020408163
    %v3200 = vmul.f32 %v2642, 0.020408163
    %v3201 = vmul.f32 %v2645, 0.020408163
    %v3202 = vmul.f32 %v2648, 0.020408163
    %v3203 = vmul.f32 %v2651, 0.020408163
    %v3204 = vmul.f32 %v2654, 0.020408163
    %v3205 = vmul.f32 %v2657, 0.020408163
    %v3206 = vmul.f32 %v2660, 0.020408163
    %v3207 = vmul.f32 %v2663, 0.020408163
    %v3208 = vmul.f32 %v2666, 0.020408163
    %v3209 = vmul.f32 %v2669, 0.020408163
    %v3210 = vmul.f32 %v2672, 0.020408163
    %v3211 = vmul.f32 %v2675, 0.020408163
    %v3212 = vmul.f32 %v2678, 0.020408163
    %v3213 = vmul.f32 %v2681, 0.020408163
    %v3214 = vmul.f32 %v2684, 0.020408163
    %v3215 = vmul.f32 %v2687, 0.020408163
    %v3216 = vmul.f32 %v2690, 0.020408163
    %v3217 = vmul.f32 %v2693, 0.020408163
    %v3218 = vmul.f32 %v2696, 0.020408163
    %v3219 = vmul.f32 %v2699, 0.020408163
    %v3220 = vmul.f32 %v2702, 0.020408163
    %v3221 = vmul.f32 %v2705, 0.020408163
    %v3222 = vmul.f32 %v2708, 0.020408163
    %v3223 = vmul.f32 %v2711, 0.020408163
    %v3224 = vld [vmem:[#allocation2] sm:$0xff]
    %v3225 = vld [vmem:[#allocation3] sm:$0xff]
    %v3226 = vld [vmem:[#allocation3 + $0x8] sm:$0xff]
    %v3227 = vld [vmem:[#allocation3 + $0x10] sm:$0xff]
    %v3228 = vld [vmem:[#allocation3 + $0x18] sm:$0xff]
    %v3229 = vld [vmem:[#allocation3 + $0x20] sm:$0xff]
    %v3230 = vld [vmem:[#allocation3 + $0x28] sm:$0xff]
    %v3231 = vld [vmem:[#allocation3 + $0x30] sm:$0xff]
    %v3232 = vld [vmem:[#allocation3 + $0x38] sm:$0xff]
    %v3233 = vld [vmem:[#allocation3 + $0x40] sm:$0xff]
    %v3234 = vld [vmem:[#allocation3 + $0x48] sm:$0xff]
    %v3235 = vld [vmem:[#allocation3 + $0x50] sm:$0xff]
    %v3236 = vld [vmem:[#allocation3 + $0x58] sm:$0xff]
    %v3237 = vld [vmem:[#allocation3 + $0x60] sm:$0xff]
    %v3238 = vld [vmem:[#allocation3 + $0x68] sm:$0xff]
    %v3239 = vld [vmem:[#allocation3 + $0x70] sm:$0xff]
    %v3240 = vld [vmem:[#allocation3 + $0x78] sm:$0xff]
    %v3241 = vld [vmem:[#allocation3 + $0x80] sm:$0xff]
    %v3242 = vld [vmem:[#allocation3 + $0x88] sm:$0xff]
    %v3243 = vld [vmem:[#allocation3 + $0x90] sm:$0xff]
    %v3244 = vld [vmem:[#allocation3 + $0x98] sm:$0xff]
    %v3245 = vld [vmem:[#allocation3 + $0xa0] sm:$0xff]
    %v3246 = vld [vmem:[#allocation3 + $0xa8] sm:$0xff]
    %v3247 = vld [vmem:[#allocation3 + $0xb0] sm:$0xff]
    %v3248 = vld [vmem:[#allocation3 + $0xb8] sm:$0xff]
    %v3249 = vld [vmem:[#allocation3 + $0xc0] sm:$0xff]
    %v3250 = vld [vmem:[#allocation3 + $0xc8] sm:$0xff]
    %v3251 = vld [vmem:[#allocation3 + $0xd0] sm:$0xff]
    %v3252 = vld [vmem:[#allocation3 + $0xd8] sm:$0xff]
    %v3253 = vld [vmem:[#allocation3 + $0xe0] sm:$0xff]
    %v3254 = vld [vmem:[#allocation3 + $0xe8] sm:$0xff]
    %v3255 = vld [vmem:[#allocation3 + $0xf0] sm:$0xff]
    %v3256 = vld [vmem:[#allocation3 + $0xf8] sm:$0xff]
    %v3257 = vld [vmem:[#allocation3 + $0x100] sm:$0xff]
    %v3258 = vld [vmem:[#allocation3 + $0x108] sm:$0xff]
    %v3259 = vld [vmem:[#allocation3 + $0x110] sm:$0xff]
    %v3260 = vld [vmem:[#allocation3 + $0x118] sm:$0xff]
    %v3261 = vld [vmem:[#allocation3 + $0x120] sm:$0xff]
    %v3262 = vld [vmem:[#allocation3 + $0x128] sm:$0xff]
    %v3263 = vld [vmem:[#allocation3 + $0x130] sm:$0xff]
    %v3264 = vld [vmem:[#allocation3 + $0x138] sm:$0xff]
    %v3265 = vld [vmem:[#allocation3 + $0x140] sm:$0xff]
    %v3266 = vld [vmem:[#allocation3 + $0x148] sm:$0xff]
    %v3267 = vld [vmem:[#allocation3 + $0x150] sm:$0xff]
    %v3268 = vld [vmem:[#allocation3 + $0x158] sm:$0xff]
    %v3269 = vld [vmem:[#allocation3 + $0x160] sm:$0xff]
    %v3270 = vld [vmem:[#allocation3 + $0x168] sm:$0xff]
    %v3271 = vld [vmem:[#allocation3 + $0x170] sm:$0xff]
    %v3272 = vld [vmem:[#allocation3 + $0x178] sm:$0xff]
    %v3273 = vld [vmem:[#allocation3 + $0x180] sm:$0xff]
    %v3274 = vld [vmem:[#allocation3 + $0x188] sm:$0xff]
    %v3275 = vld [vmem:[#allocation3 + $0x190] sm:$0xff]
    %v3276 = vld [vmem:[#allocation3 + $0x198] sm:$0xff]
    %v3277 = vld [vmem:[#allocation3 + $0x1a0] sm:$0xff]
    %v3278 = vld [vmem:[#allocation3 + $0x1a8] sm:$0xff]
    %v3279 = vld [vmem:[#allocation3 + $0x1b0] sm:$0xff]
    %v3280 = vld [vmem:[#allocation3 + $0x1b8] sm:$0xff]
    %v3281 = vld [vmem:[#allocation3 + $0x1c0] sm:$0xff]
    %v3282 = vld [vmem:[#allocation3 + $0x1c8] sm:$0xff]
    %v3283 = vld [vmem:[#allocation3 + $0x1d0] sm:$0xff]
    %v3284 = vld [vmem:[#allocation3 + $0x1d8] sm:$0xff]
    %v3285 = vld [vmem:[#allocation3 + $0x1e0] sm:$0xff]
    %v3286 = vld [vmem:[#allocation3 + $0x1e8] sm:$0xff]
    %v3287 = vld [vmem:[#allocation3 + $0x1f0] sm:$0xff]
    %v3288 = vld [vmem:[#allocation3 + $0x1f8] sm:$0xff]
    %v3289 = vld [vmem:[#allocation3 + $0x200] sm:$0xff]
    %v3290 = vld [vmem:[#allocation3 + $0x208] sm:$0xff]
    %v3291 = vld [vmem:[#allocation3 + $0x210] sm:$0xff]
    %v3292 = vld [vmem:[#allocation3 + $0x218] sm:$0xff]
    %v3293 = vld [vmem:[#allocation3 + $0x220] sm:$0xff]
    %v3294 = vld [vmem:[#allocation3 + $0x228] sm:$0xff]
    %v3295 = vld [vmem:[#allocation3 + $0x230] sm:$0xff]
    %v3296 = vld [vmem:[#allocation3 + $0x238] sm:$0xff]
    %v3297 = vld [vmem:[#allocation3 + $0x240] sm:$0xff]
    %v3298 = vld [vmem:[#allocation3 + $0x248] sm:$0xff]
    %v3299 = vld [vmem:[#allocation3 + $0x250] sm:$0xff]
    %v3300 = vld [vmem:[#allocation3 + $0x258] sm:$0xff]
    %v3301 = vld [vmem:[#allocation3 + $0x260] sm:$0xff]
    %v3302 = vld [vmem:[#allocation3 + $0x268] sm:$0xff]
    %v3303 = vld [vmem:[#allocation3 + $0x270] sm:$0xff]
    %v3304 = vld [vmem:[#allocation3 + $0x278] sm:$0xff]
    %v3305 = vld [vmem:[#allocation3 + $0x280] sm:$0xff]
    %v3306 = vld [vmem:[#allocation3 + $0x288] sm:$0xff]
    %v3307 = vld [vmem:[#allocation3 + $0x290] sm:$0xff]
    %v3308 = vld [vmem:[#allocation3 + $0x298] sm:$0xff]
    %v3309 = vld [vmem:[#allocation3 + $0x2a0] sm:$0xff]
    %v3310 = vld [vmem:[#allocation3 + $0x2a8] sm:$0xff]
    %v3311 = vld [vmem:[#allocation3 + $0x2b0] sm:$0xff]
    %v3312 = vld [vmem:[#allocation3 + $0x2b8] sm:$0xff]
    %v3313 = vld [vmem:[#allocation3 + $0x2c0] sm:$0xff]
    %v3314 = vld [vmem:[#allocation3 + $0x2c8] sm:$0xff]
    %v3315 = vld [vmem:[#allocation3 + $0x2d0] sm:$0xff]
    %v3316 = vld [vmem:[#allocation3 + $0x2d8] sm:$0xff]
    %v3317 = vld [vmem:[#allocation3 + $0x2e0] sm:$0xff]
    %v3318 = vld [vmem:[#allocation3 + $0x2e8] sm:$0xff]
    %v3319 = vld [vmem:[#allocation3 + $0x2f0] sm:$0xff]
    %v3320 = vld [vmem:[#allocation3 + $0x2f8] sm:$0xff]
    %v3321 = vld [vmem:[#allocation3 + $0x300] sm:$0xff]
    %v3322 = vld [vmem:[#allocation3 + $0x308] sm:$0xff]
    %v3323 = vld [vmem:[#allocation3 + $0x310] sm:$0xff]
    %v3324 = vld [vmem:[#allocation3 + $0x318] sm:$0xff]
    %v3325 = vld [vmem:[#allocation3 + $0x320] sm:$0xff]
    %v3326 = vld [vmem:[#allocation3 + $0x328] sm:$0xff]
    %v3327 = vld [vmem:[#allocation3 + $0x330] sm:$0xff]
    %v3328 = vld [vmem:[#allocation3 + $0x338] sm:$0xff]
    %v3329 = vld [vmem:[#allocation3 + $0x340] sm:$0xff]
    %v3330 = vld [vmem:[#allocation3 + $0x348] sm:$0xff]
    %v3331 = vld [vmem:[#allocation3 + $0x350] sm:$0xff]
    %v3332 = vld [vmem:[#allocation3 + $0x358] sm:$0xff]
    %v3333 = vld [vmem:[#allocation3 + $0x360] sm:$0xff]
    %v3334 = vld [vmem:[#allocation3 + $0x368] sm:$0xff]
    %v3335 = vld [vmem:[#allocation3 + $0x370] sm:$0xff]
    %v3336 = vld [vmem:[#allocation3 + $0x378] sm:$0xff]
    %v3337 = vld [vmem:[#allocation3 + $0x380] sm:$0xff]
    %v3338 = vld [vmem:[#allocation3 + $0x388] sm:$0xff]
    %v3339 = vld [vmem:[#allocation3 + $0x390] sm:$0xff]
    %v3340 = vld [vmem:[#allocation3 + $0x398] sm:$0xff]
    %v3341 = vld [vmem:[#allocation3 + $0x3a0] sm:$0xff]
    %v3342 = vld [vmem:[#allocation3 + $0x3a8] sm:$0xff]
    %v3343 = vld [vmem:[#allocation3 + $0x3b0] sm:$0xff]
    %v3344 = vld [vmem:[#allocation3 + $0x3b8] sm:$0xff]
    %v3345 = vld [vmem:[#allocation3 + $0x3c0] sm:$0xff]
    %v3346 = vld [vmem:[#allocation3 + $0x3c8] sm:$0xff]
    %v3347 = vld [vmem:[#allocation3 + $0x3d0] sm:$0xff]
    %v3348 = vld [vmem:[#allocation3 + $0x3d8] sm:$0xff]
    %v3349 = vld [vmem:[#allocation3 + $0x3e0] sm:$0xff]
    %v3350 = vld [vmem:[#allocation3 + $0x3e8] sm:$0xff]
    %v3351 = vld [vmem:[#allocation3 + $0x3f0] sm:$0xff]
    %v3352 = vld [vmem:[#allocation3 + $0x3f8] sm:$0xff]
    %v3353 = vld [vmem:[#allocation3 + $0x400] sm:$0xff]
    %v3354 = vld [vmem:[#allocation3 + $0x408] sm:$0xff]
    %v3355 = vld [vmem:[#allocation3 + $0x410] sm:$0xff]
    %v3356 = vld [vmem:[#allocation3 + $0x418] sm:$0xff]
    %v3357 = vld [vmem:[#allocation3 + $0x420] sm:$0xff]
    %v3358 = vld [vmem:[#allocation3 + $0x428] sm:$0xff]
    %v3359 = vld [vmem:[#allocation3 + $0x430] sm:$0xff]
    %v3360 = vld [vmem:[#allocation3 + $0x438] sm:$0xff]
    %v3361 = vld [vmem:[#allocation3 + $0x440] sm:$0xff]
    %v3362 = vld [vmem:[#allocation3 + $0x448] sm:$0xff]
    %v3363 = vld [vmem:[#allocation3 + $0x450] sm:$0xff]
    %v3364 = vld [vmem:[#allocation3 + $0x458] sm:$0xff]
    %v3365 = vld [vmem:[#allocation3 + $0x460] sm:$0xff]
    %v3366 = vld [vmem:[#allocation3 + $0x468] sm:$0xff]
    %v3367 = vld [vmem:[#allocation3 + $0x470] sm:$0xff]
    %v3368 = vld [vmem:[#allocation3 + $0x478] sm:$0xff]
    %v3369 = vld [vmem:[#allocation3 + $0x480] sm:$0xff]
    %v3370 = vld [vmem:[#allocation3 + $0x488] sm:$0xff]
    %v3371 = vld [vmem:[#allocation3 + $0x490] sm:$0xff]
    %v3372 = vld [vmem:[#allocation3 + $0x498] sm:$0xff]
    %v3373 = vld [vmem:[#allocation3 + $0x4a0] sm:$0xff]
    %v3374 = vld [vmem:[#allocation3 + $0x4a8] sm:$0xff]
    %v3375 = vld [vmem:[#allocation3 + $0x4b0] sm:$0xff]
    %v3376 = vld [vmem:[#allocation3 + $0x4b8] sm:$0xff]
    %v3377 = vld [vmem:[#allocation3 + $0x4c0] sm:$0xff]
    %v3378 = vld [vmem:[#allocation3 + $0x4c8] sm:$0xff]
    %v3379 = vld [vmem:[#allocation3 + $0x4d0] sm:$0xff]
    %v3380 = vld [vmem:[#allocation3 + $0x4d8] sm:$0xff]
    %v3381 = vld [vmem:[#allocation3 + $0x4e0] sm:$0xff]
    %v3382 = vld [vmem:[#allocation3 + $0x4e8] sm:$0xff]
    %v3383 = vld [vmem:[#allocation3 + $0x4f0] sm:$0xff]
    %v3384 = vld [vmem:[#allocation3 + $0x4f8] sm:$0xff]
    %v3385 = vld [vmem:[#allocation3 + $0x500] sm:$0xff]
    %v3386 = vld [vmem:[#allocation3 + $0x508] sm:$0xff]
    %v3387 = vld [vmem:[#allocation3 + $0x510] sm:$0xff]
    %v3388 = vld [vmem:[#allocation3 + $0x518] sm:$0xff]
    %v3389 = vld [vmem:[#allocation3 + $0x520] sm:$0xff]
    %v3390 = vld [vmem:[#allocation3 + $0x528] sm:$0xff]
    %v3391 = vld [vmem:[#allocation3 + $0x530] sm:$0xff]
    %v3392 = vld [vmem:[#allocation3 + $0x538] sm:$0xff]
    %v3393 = vld [vmem:[#allocation3 + $0x540] sm:$0xff]
    %v3394 = vld [vmem:[#allocation3 + $0x548] sm:$0xff]
    %v3395 = vld [vmem:[#allocation3 + $0x550] sm:$0xff]
    %v3396 = vld [vmem:[#allocation3 + $0x558] sm:$0xff]
    %v3397 = vld [vmem:[#allocation3 + $0x560] sm:$0xff]
    %v3398 = vld [vmem:[#allocation3 + $0x568] sm:$0xff]
    %v3399 = vld [vmem:[#allocation3 + $0x570] sm:$0xff]
    %v3400 = vld [vmem:[#allocation3 + $0x578] sm:$0xff]
    %v3401 = vld [vmem:[#allocation3 + $0x580] sm:$0xff]
    %v3402 = vld [vmem:[#allocation3 + $0x588] sm:$0xff]
    %v3403 = vld [vmem:[#allocation3 + $0x590] sm:$0xff]
    %v3404 = vld [vmem:[#allocation3 + $0x598] sm:$0xff]
    %v3405 = vld [vmem:[#allocation3 + $0x5a0] sm:$0xff]
    %v3406 = vld [vmem:[#allocation3 + $0x5a8] sm:$0xff]
    %v3407 = vld [vmem:[#allocation3 + $0x5b0] sm:$0xff]
    %v3408 = vld [vmem:[#allocation3 + $0x5b8] sm:$0xff]
    %v3409 = vld [vmem:[#allocation3 + $0x5c0] sm:$0xff]
    %v3410 = vld [vmem:[#allocation3 + $0x5c8] sm:$0xff]
    %v3411 = vld [vmem:[#allocation3 + $0x5d0] sm:$0xff]
    %v3412 = vld [vmem:[#allocation3 + $0x5d8] sm:$0xff]
    %v3413 = vld [vmem:[#allocation3 + $0x5e0] sm:$0xff]
    %v3414 = vld [vmem:[#allocation3 + $0x5e8] sm:$0xff]
    %v3415 = vld [vmem:[#allocation3 + $0x5f0] sm:$0xff]
    %v3416 = vld [vmem:[#allocation3 + $0x5f8] sm:$0xff]
    %v3417 = vld [vmem:[#allocation3 + $0x600] sm:$0xff]
    %v3418 = vld [vmem:[#allocation3 + $0x608] sm:$0xff]
    %v3419 = vld [vmem:[#allocation3 + $0x610] sm:$0xff]
    %v3420 = vld [vmem:[#allocation3 + $0x618] sm:$0xff]
    %v3421 = vld [vmem:[#allocation3 + $0x620] sm:$0xff]
    %v3422 = vld [vmem:[#allocation3 + $0x628] sm:$0xff]
    %v3423 = vld [vmem:[#allocation3 + $0x630] sm:$0xff]
    %v3424 = vld [vmem:[#allocation3 + $0x638] sm:$0xff]
    %v3425 = vld [vmem:[#allocation3 + $0x640] sm:$0xff]
    %v3426 = vld [vmem:[#allocation3 + $0x648] sm:$0xff]
    %v3427 = vld [vmem:[#allocation3 + $0x650] sm:$0xff]
    %v3428 = vld [vmem:[#allocation3 + $0x658] sm:$0xff]
    %v3429 = vld [vmem:[#allocation3 + $0x660] sm:$0xff]
    %v3430 = vld [vmem:[#allocation3 + $0x668] sm:$0xff]
    %v3431 = vld [vmem:[#allocation3 + $0x670] sm:$0xff]
    %v3432 = vld [vmem:[#allocation3 + $0x678] sm:$0xff]
    %v3433 = vld [vmem:[#allocation3 + $0x680] sm:$0xff]
    %v3434 = vld [vmem:[#allocation3 + $0x688] sm:$0xff]
    %v3435 = vld [vmem:[#allocation3 + $0x690] sm:$0xff]
    %v3436 = vld [vmem:[#allocation3 + $0x698] sm:$0xff]
    %v3437 = vld [vmem:[#allocation3 + $0x6a0] sm:$0xff]
    %v3438 = vld [vmem:[#allocation3 + $0x6a8] sm:$0xff]
    %v3439 = vld [vmem:[#allocation3 + $0x6b0] sm:$0xff]
    %v3440 = vld [vmem:[#allocation3 + $0x6b8] sm:$0xff]
    %v3441 = vld [vmem:[#allocation3 + $0x6c0] sm:$0xff]
    %v3442 = vld [vmem:[#allocation3 + $0x6c8] sm:$0xff]
    %v3443 = vld [vmem:[#allocation3 + $0x6d0] sm:$0xff]
    %v3444 = vld [vmem:[#allocation3 + $0x6d8] sm:$0xff]
    %v3445 = vld [vmem:[#allocation3 + $0x6e0] sm:$0xff]
    %v3446 = vld [vmem:[#allocation3 + $0x6e8] sm:$0xff]
    %v3447 = vld [vmem:[#allocation3 + $0x6f0] sm:$0xff]
    %v3448 = vld [vmem:[#allocation3 + $0x6f8] sm:$0xff]
    %v3449 = vld [vmem:[#allocation3 + $0x700] sm:$0xff]
    %v3450 = vld [vmem:[#allocation3 + $0x708] sm:$0xff]
    %v3451 = vld [vmem:[#allocation3 + $0x710] sm:$0xff]
    %v3452 = vld [vmem:[#allocation3 + $0x718] sm:$0xff]
    %v3453 = vld [vmem:[#allocation3 + $0x720] sm:$0xff]
    %v3454 = vld [vmem:[#allocation3 + $0x728] sm:$0xff]
    %v3455 = vld [vmem:[#allocation3 + $0x730] sm:$0xff]
    %v3456 = vld [vmem:[#allocation3 + $0x738] sm:$0xff]
    %v3457 = vld [vmem:[#allocation3 + $0x740] sm:$0xff]
    %v3458 = vld [vmem:[#allocation3 + $0x748] sm:$0xff]
    %v3459 = vld [vmem:[#allocation3 + $0x750] sm:$0xff]
    %v3460 = vld [vmem:[#allocation3 + $0x758] sm:$0xff]
    %v3461 = vld [vmem:[#allocation3 + $0x760] sm:$0xff]
    %v3462 = vld [vmem:[#allocation3 + $0x768] sm:$0xff]
    %v3463 = vld [vmem:[#allocation3 + $0x770] sm:$0xff]
    %v3464 = vld [vmem:[#allocation3 + $0x778] sm:$0xff]
    %v3465 = vld [vmem:[#allocation3 + $0x780] sm:$0xff]
    %v3466 = vld [vmem:[#allocation3 + $0x788] sm:$0xff]
    %v3467 = vld [vmem:[#allocation3 + $0x790] sm:$0xff]
    %v3468 = vld [vmem:[#allocation3 + $0x798] sm:$0xff]
    %v3469 = vld [vmem:[#allocation3 + $0x7a0] sm:$0xff]
    %v3470 = vld [vmem:[#allocation3 + $0x7a8] sm:$0xff]
    %v3471 = vld [vmem:[#allocation3 + $0x7b0] sm:$0xff]
    %v3472 = vld [vmem:[#allocation3 + $0x7b8] sm:$0xff]
    %v3473 = vld [vmem:[#allocation3 + $0x7c0] sm:$0xff]
    %v3474 = vld [vmem:[#allocation3 + $0x7c8] sm:$0xff]
    %v3475 = vld [vmem:[#allocation3 + $0x7d0] sm:$0xff]
    %v3476 = vld [vmem:[#allocation3 + $0x7d8] sm:$0xff]
    %v3477 = vld [vmem:[#allocation3 + $0x7e0] sm:$0xff]
    %v3478 = vld [vmem:[#allocation3 + $0x7e8] sm:$0xff]
    %v3479 = vld [vmem:[#allocation3 + $0x7f0] sm:$0xff]
    %v3480 = vld [vmem:[#allocation3 + $0x7f8] sm:$0xff]
    %v3481 = vld [vmem:[#allocation3 + $0x800] sm:$0xff]
    %v3482 = vld [vmem:[#allocation3 + $0x808] sm:$0xff]
    %v3483 = vld [vmem:[#allocation3 + $0x810] sm:$0xff]
    %v3484 = vld [vmem:[#allocation3 + $0x818] sm:$0xff]
    %v3485 = vld [vmem:[#allocation3 + $0x820] sm:$0xff]
    %v3486 = vld [vmem:[#allocation3 + $0x828] sm:$0xff]
    %v3487 = vld [vmem:[#allocation3 + $0x830] sm:$0xff]
    %v3488 = vld [vmem:[#allocation3 + $0x838] sm:$0xff]
    %v3489 = vld [vmem:[#allocation3 + $0x840] sm:$0xff]
    %v3490 = vld [vmem:[#allocation3 + $0x848] sm:$0xff]
    %v3491 = vld [vmem:[#allocation3 + $0x850] sm:$0xff]
    %v3492 = vld [vmem:[#allocation3 + $0x858] sm:$0xff]
    %v3493 = vld [vmem:[#allocation3 + $0x860] sm:$0xff]
    %v3494 = vld [vmem:[#allocation3 + $0x868] sm:$0xff]
    %v3495 = vld [vmem:[#allocation3 + $0x870] sm:$0xff]
    %v3496 = vld [vmem:[#allocation3 + $0x878] sm:$0xff]
    %v3497 = vld [vmem:[#allocation3 + $0x880] sm:$0xff]
    %v3498 = vld [vmem:[#allocation3 + $0x888] sm:$0xff]
    %v3499 = vld [vmem:[#allocation3 + $0x890] sm:$0xff]
    %v3500 = vld [vmem:[#allocation3 + $0x898] sm:$0xff]
    %v3501 = vld [vmem:[#allocation3 + $0x8a0] sm:$0xff]
    %v3502 = vld [vmem:[#allocation3 + $0x8a8] sm:$0xff]
    %v3503 = vld [vmem:[#allocation3 + $0x8b0] sm:$0xff]
    %v3504 = vld [vmem:[#allocation3 + $0x8b8] sm:$0xff]
    %v3505 = vld [vmem:[#allocation3 + $0x8c0] sm:$0xff]
    %v3506 = vld [vmem:[#allocation3 + $0x8c8] sm:$0xff]
    %v3507 = vld [vmem:[#allocation3 + $0x8d0] sm:$0xff]
    %v3508 = vld [vmem:[#allocation3 + $0x8d8] sm:$0xff]
    %v3509 = vld [vmem:[#allocation3 + $0x8e0] sm:$0xff]
    %v3510 = vld [vmem:[#allocation3 + $0x8e8] sm:$0xff]
    %v3511 = vld [vmem:[#allocation3 + $0x8f0] sm:$0xff]
    %v3512 = vld [vmem:[#allocation3 + $0x8f8] sm:$0xff]
    %v3513 = vld [vmem:[#allocation3 + $0x900] sm:$0xff]
    %v3514 = vld [vmem:[#allocation3 + $0x908] sm:$0xff]
    %v3515 = vld [vmem:[#allocation3 + $0x910] sm:$0xff]
    %v3516 = vld [vmem:[#allocation3 + $0x918] sm:$0xff]
    %v3517 = vld [vmem:[#allocation3 + $0x920] sm:$0xff]
    %v3518 = vld [vmem:[#allocation3 + $0x928] sm:$0xff]
    %v3519 = vld [vmem:[#allocation3 + $0x930] sm:$0xff]
    %v3520 = vld [vmem:[#allocation3 + $0x938] sm:$0xff]
    %v3521 = vld [vmem:[#allocation3 + $0x940] sm:$0xff]
    %v3522 = vld [vmem:[#allocation3 + $0x948] sm:$0xff]
    %v3523 = vld [vmem:[#allocation3 + $0x950] sm:$0xff]
    %v3524 = vld [vmem:[#allocation3 + $0x958] sm:$0xff]
    %v3525 = vld [vmem:[#allocation3 + $0x960] sm:$0xff]
    %v3526 = vld [vmem:[#allocation3 + $0x968] sm:$0xff]
    %v3527 = vld [vmem:[#allocation3 + $0x970] sm:$0xff]
    %v3528 = vld [vmem:[#allocation3 + $0x978] sm:$0xff]
    %v3529 = vld [vmem:[#allocation3 + $0x980] sm:$0xff]
    %v3530 = vld [vmem:[#allocation3 + $0x988] sm:$0xff]
    %v3531 = vld [vmem:[#allocation3 + $0x990] sm:$0xff]
    %v3532 = vld [vmem:[#allocation3 + $0x998] sm:$0xff]
    %v3533 = vld [vmem:[#allocation3 + $0x9a0] sm:$0xff]
    %v3534 = vld [vmem:[#allocation3 + $0x9a8] sm:$0xff]
    %v3535 = vld [vmem:[#allocation3 + $0x9b0] sm:$0xff]
    %v3536 = vld [vmem:[#allocation3 + $0x9b8] sm:$0xff]
    %v3537 = vld [vmem:[#allocation3 + $0x9c0] sm:$0xff]
    %v3538 = vld [vmem:[#allocation3 + $0x9c8] sm:$0xff]
    %v3539 = vld [vmem:[#allocation3 + $0x9d0] sm:$0xff]
    %v3540 = vld [vmem:[#allocation3 + $0x9d8] sm:$0xff]
    %v3541 = vld [vmem:[#allocation3 + $0x9e0] sm:$0xff]
    %v3542 = vld [vmem:[#allocation3 + $0x9e8] sm:$0xff]
    %v3543 = vld [vmem:[#allocation3 + $0x9f0] sm:$0xff]
    %v3544 = vld [vmem:[#allocation3 + $0x9f8] sm:$0xff]
    %v3545 = vld [vmem:[#allocation3 + $0xa00] sm:$0xff]
    %v3546 = vld [vmem:[#allocation3 + $0xa08] sm:$0xff]
    %v3547 = vld [vmem:[#allocation3 + $0xa10] sm:$0xff]
    %v3548 = vld [vmem:[#allocation3 + $0xa18] sm:$0xff]
    %v3549 = vld [vmem:[#allocation3 + $0xa20] sm:$0xff]
    %v3550 = vld [vmem:[#allocation3 + $0xa28] sm:$0xff]
    %v3551 = vld [vmem:[#allocation3 + $0xa30] sm:$0xff]
    %v3552 = vld [vmem:[#allocation3 + $0xa38] sm:$0xff]
    %v3553 = vld [vmem:[#allocation3 + $0xa40] sm:$0xff]
    %v3554 = vld [vmem:[#allocation3 + $0xa48] sm:$0xff]
    %v3555 = vld [vmem:[#allocation3 + $0xa50] sm:$0xff]
    %v3556 = vld [vmem:[#allocation3 + $0xa58] sm:$0xff]
    %v3557 = vld [vmem:[#allocation3 + $0xa60] sm:$0xff]
    %v3558 = vld [vmem:[#allocation3 + $0xa68] sm:$0xff]
    %v3559 = vld [vmem:[#allocation3 + $0xa70] sm:$0xff]
    %v3560 = vld [vmem:[#allocation3 + $0xa78] sm:$0xff]
    %v3561 = vld [vmem:[#allocation3 + $0xa80] sm:$0xff]
    %v3562 = vld [vmem:[#allocation3 + $0xa88] sm:$0xff]
    %v3563 = vld [vmem:[#allocation3 + $0xa90] sm:$0xff]
    %v3564 = vld [vmem:[#allocation3 + $0xa98] sm:$0xff]
    %v3565 = vld [vmem:[#allocation3 + $0xaa0] sm:$0xff]
    %v3566 = vld [vmem:[#allocation3 + $0xaa8] sm:$0xff]
    %v3567 = vld [vmem:[#allocation3 + $0xab0] sm:$0xff]
    %v3568 = vld [vmem:[#allocation3 + $0xab8] sm:$0xff]
    %v3569 = vld [vmem:[#allocation3 + $0xac0] sm:$0xff]
    %v3570 = vld [vmem:[#allocation3 + $0xac8] sm:$0xff]
    %v3571 = vld [vmem:[#allocation3 + $0xad0] sm:$0xff]
    %v3572 = vld [vmem:[#allocation3 + $0xad8] sm:$0xff]
    %v3573 = vld [vmem:[#allocation3 + $0xae0] sm:$0xff]
    %v3574 = vld [vmem:[#allocation3 + $0xae8] sm:$0xff]
    %v3575 = vld [vmem:[#allocation3 + $0xaf0] sm:$0xff]
    %v3576 = vld [vmem:[#allocation3 + $0xaf8] sm:$0xff]
    %v3577 = vld [vmem:[#allocation3 + $0xb00] sm:$0xff]
    %v3578 = vld [vmem:[#allocation3 + $0xb08] sm:$0xff]
    %v3579 = vld [vmem:[#allocation3 + $0xb10] sm:$0xff]
    %v3580 = vld [vmem:[#allocation3 + $0xb18] sm:$0xff]
    %v3581 = vld [vmem:[#allocation3 + $0xb20] sm:$0xff]
    %v3582 = vld [vmem:[#allocation3 + $0xb28] sm:$0xff]
    %v3583 = vld [vmem:[#allocation3 + $0xb30] sm:$0xff]
    %v3584 = vld [vmem:[#allocation3 + $0xb38] sm:$0xff]
    %v3585 = vld [vmem:[#allocation3 + $0xb40] sm:$0xff]
    %v3586 = vld [vmem:[#allocation3 + $0xb48] sm:$0xff]
    %v3587 = vld [vmem:[#allocation3 + $0xb50] sm:$0xff]
    %v3588 = vld [vmem:[#allocation3 + $0xb58] sm:$0xff]
    %v3589 = vld [vmem:[#allocation3 + $0xb60] sm:$0xff]
    %v3590 = vld [vmem:[#allocation3 + $0xb68] sm:$0xff]
    %v3591 = vld [vmem:[#allocation3 + $0xb70] sm:$0xff]
    %v3592 = vld [vmem:[#allocation3 + $0xb78] sm:$0xff]
    %v3593 = vld [vmem:[#allocation3 + $0xb80] sm:$0xff]
    %v3594 = vld [vmem:[#allocation3 + $0xb88] sm:$0xff]
    %v3595 = vld [vmem:[#allocation3 + $0xb90] sm:$0xff]
    %v3596 = vld [vmem:[#allocation3 + $0xb98] sm:$0xff]
    %v3597 = vld [vmem:[#allocation3 + $0xba0] sm:$0xff]
    %v3598 = vld [vmem:[#allocation3 + $0xba8] sm:$0xff]
    %v3599 = vld [vmem:[#allocation3 + $0xbb0] sm:$0xff]
    %v3600 = vld [vmem:[#allocation3 + $0xbb8] sm:$0xff]
    %v3601 = vld [vmem:[#allocation3 + $0xbc0] sm:$0xff]
    %v3602 = vld [vmem:[#allocation3 + $0xbc8] sm:$0xff]
    %v3603 = vld [vmem:[#allocation3 + $0xbd0] sm:$0xff]
    %v3604 = vld [vmem:[#allocation3 + $0xbd8] sm:$0xff]
    %v3605 = vld [vmem:[#allocation3 + $0xbe0] sm:$0xff]
    %v3606 = vld [vmem:[#allocation3 + $0xbe8] sm:$0xff]
    %v3607 = vld [vmem:[#allocation3 + $0xbf0] sm:$0xff]
    %v3608 = vld [vmem:[#allocation3 + $0xbf8] sm:$0xff]
    %v3609 = vld [vmem:[#allocation3 + $0xc00] sm:$0xff]
    %v3610 = vld [vmem:[#allocation3 + $0xc08] sm:$0xff]
    %v3611 = vld [vmem:[#allocation3 + $0xc10] sm:$0xff]
    %v3612 = vld [vmem:[#allocation3 + $0xc18] sm:$0xff]
    %v3613 = vld [vmem:[#allocation3 + $0xc20] sm:$0xff]
    %v3614 = vld [vmem:[#allocation3 + $0xc28] sm:$0xff]
    %v3615 = vld [vmem:[#allocation3 + $0xc30] sm:$0xff]
    %v3616 = vld [vmem:[#allocation3 + $0xc38] sm:$0xff]
    %v3617 = vld [vmem:[#allocation3 + $0xc40] sm:$0xff]
    %v3618 = vld [vmem:[#allocation3 + $0xc48] sm:$0xff]
    %v3619 = vld [vmem:[#allocation3 + $0xc50] sm:$0xff]
    %v3620 = vld [vmem:[#allocation3 + $0xc58] sm:$0xff]
    %v3621 = vld [vmem:[#allocation3 + $0xc60] sm:$0xff]
    %v3622 = vld [vmem:[#allocation3 + $0xc68] sm:$0xff]
    %v3623 = vld [vmem:[#allocation3 + $0xc70] sm:$0xff]
    %v3624 = vld [vmem:[#allocation3 + $0xc78] sm:$0xff]
    %v3625 = vld [vmem:[#allocation3 + $0xc80] sm:$0xff]
    %v3626 = vld [vmem:[#allocation3 + $0xc88] sm:$0xff]
    %v3627 = vld [vmem:[#allocation3 + $0xc90] sm:$0xff]
    %v3628 = vld [vmem:[#allocation3 + $0xc98] sm:$0xff]
    %v3629 = vld [vmem:[#allocation3 + $0xca0] sm:$0xff]
    %v3630 = vld [vmem:[#allocation3 + $0xca8] sm:$0xff]
    %v3631 = vld [vmem:[#allocation3 + $0xcb0] sm:$0xff]
    %v3632 = vld [vmem:[#allocation3 + $0xcb8] sm:$0xff]
    %v3633 = vld [vmem:[#allocation3 + $0xcc0] sm:$0xff]
    %v3634 = vld [vmem:[#allocation3 + $0xcc8] sm:$0xff]
    %v3635 = vld [vmem:[#allocation3 + $0xcd0] sm:$0xff]
    %v3636 = vld [vmem:[#allocation3 + $0xcd8] sm:$0xff]
    %v3637 = vld [vmem:[#allocation3 + $0xce0] sm:$0xff]
    %v3638 = vld [vmem:[#allocation3 + $0xce8] sm:$0xff]
    %v3639 = vld [vmem:[#allocation3 + $0xcf0] sm:$0xff]
    %v3640 = vld [vmem:[#allocation3 + $0xcf8] sm:$0xff]
    %v3641 = vld [vmem:[#allocation3 + $0xd00] sm:$0xff]
    %v3642 = vld [vmem:[#allocation3 + $0xd08] sm:$0xff]
    %v3643 = vld [vmem:[#allocation3 + $0xd10] sm:$0xff]
    %v3644 = vld [vmem:[#allocation3 + $0xd18] sm:$0xff]
    %v3645 = vld [vmem:[#allocation3 + $0xd20] sm:$0xff]
    %v3646 = vld [vmem:[#allocation3 + $0xd28] sm:$0xff]
    %v3647 = vld [vmem:[#allocation3 + $0xd30] sm:$0xff]
    %v3648 = vld [vmem:[#allocation3 + $0xd38] sm:$0xff]
    %v3649 = vld [vmem:[#allocation3 + $0xd40] sm:$0xff]
    %v3650 = vld [vmem:[#allocation3 + $0xd48] sm:$0xff]
    %v3651 = vld [vmem:[#allocation3 + $0xd50] sm:$0xff]
    %v3652 = vld [vmem:[#allocation3 + $0xd58] sm:$0xff]
    %v3653 = vld [vmem:[#allocation3 + $0xd60] sm:$0xff]
    %v3654 = vld [vmem:[#allocation3 + $0xd68] sm:$0xff]
    %v3655 = vld [vmem:[#allocation3 + $0xd70] sm:$0xff]
    %v3656 = vld [vmem:[#allocation3 + $0xd78] sm:$0xff]
    %v3657 = vld [vmem:[#allocation3 + $0xd80] sm:$0xff]
    %v3658 = vld [vmem:[#allocation3 + $0xd88] sm:$0xff]
    %v3659 = vld [vmem:[#allocation3 + $0xd90] sm:$0xff]
    %v3660 = vld [vmem:[#allocation3 + $0xd98] sm:$0xff]
    %v3661 = vld [vmem:[#allocation3 + $0xda0] sm:$0xff]
    %v3662 = vld [vmem:[#allocation3 + $0xda8] sm:$0xff]
    %v3663 = vld [vmem:[#allocation3 + $0xdb0] sm:$0xff]
    %v3664 = vld [vmem:[#allocation3 + $0xdb8] sm:$0xff]
    %v3665 = vld [vmem:[#allocation3 + $0xdc0] sm:$0xff]
    %v3666 = vld [vmem:[#allocation3 + $0xdc8] sm:$0xff]
    %v3667 = vld [vmem:[#allocation3 + $0xdd0] sm:$0xff]
    %v3668 = vld [vmem:[#allocation3 + $0xdd8] sm:$0xff]
    %v3669 = vld [vmem:[#allocation3 + $0xde0] sm:$0xff]
    %v3670 = vld [vmem:[#allocation3 + $0xde8] sm:$0xff]
    %v3671 = vld [vmem:[#allocation3 + $0xdf0] sm:$0xff]
    %v3672 = vld [vmem:[#allocation3 + $0xdf8] sm:$0xff]
    %v3673 = vld [vmem:[#allocation3 + $0xe00] sm:$0xff]
    %v3674 = vld [vmem:[#allocation3 + $0xe08] sm:$0xff]
    %v3675 = vld [vmem:[#allocation3 + $0xe10] sm:$0xff]
    %v3676 = vld [vmem:[#allocation3 + $0xe18] sm:$0xff]
    %v3677 = vld [vmem:[#allocation3 + $0xe20] sm:$0xff]
    %v3678 = vld [vmem:[#allocation3 + $0xe28] sm:$0xff]
    %v3679 = vld [vmem:[#allocation3 + $0xe30] sm:$0xff]
    %v3680 = vld [vmem:[#allocation3 + $0xe38] sm:$0xff]
    %v3681 = vld [vmem:[#allocation3 + $0xe40] sm:$0xff]
    %v3682 = vld [vmem:[#allocation3 + $0xe48] sm:$0xff]
    %v3683 = vld [vmem:[#allocation3 + $0xe50] sm:$0xff]
    %v3684 = vld [vmem:[#allocation3 + $0xe58] sm:$0xff]
    %v3685 = vld [vmem:[#allocation3 + $0xe60] sm:$0xff]
    %v3686 = vld [vmem:[#allocation3 + $0xe68] sm:$0xff]
    %v3687 = vld [vmem:[#allocation3 + $0xe70] sm:$0xff]
    %v3688 = vld [vmem:[#allocation3 + $0xe78] sm:$0xff]
    %v3689 = vld [vmem:[#allocation3 + $0xe80] sm:$0xff]
    %v3690 = vld [vmem:[#allocation3 + $0xe88] sm:$0xff]
    %v3691 = vld [vmem:[#allocation3 + $0xe90] sm:$0xff]
    %v3692 = vld [vmem:[#allocation3 + $0xe98] sm:$0xff]
    %v3693 = vld [vmem:[#allocation3 + $0xea0] sm:$0xff]
    %v3694 = vld [vmem:[#allocation3 + $0xea8] sm:$0xff]
    %v3695 = vld [vmem:[#allocation3 + $0xeb0] sm:$0xff]
    %v3696 = vld [vmem:[#allocation3 + $0xeb8] sm:$0xff]
    %v3697 = vld [vmem:[#allocation3 + $0xec0] sm:$0xff]
    %v3698 = vld [vmem:[#allocation3 + $0xec8] sm:$0xff]
    %v3699 = vld [vmem:[#allocation3 + $0xed0] sm:$0xff]
    %v3700 = vld [vmem:[#allocation3 + $0xed8] sm:$0xff]
    %v3701 = vld [vmem:[#allocation3 + $0xee0] sm:$0xff]
    %v3702 = vld [vmem:[#allocation3 + $0xee8] sm:$0xff]
    %v3703 = vld [vmem:[#allocation3 + $0xef0] sm:$0xff]
    %v3704 = vld [vmem:[#allocation3 + $0xef8] sm:$0xff]
    %v3705 = vld [vmem:[#allocation3 + $0xf00] sm:$0xff]
    %v3706 = vld [vmem:[#allocation3 + $0xf08] sm:$0xff]
    %v3707 = vld [vmem:[#allocation3 + $0xf10] sm:$0xff]
    %v3708 = vld [vmem:[#allocation3 + $0xf18] sm:$0xff]
    %v3709 = vld [vmem:[#allocation3 + $0xf20] sm:$0xff]
    %v3710 = vld [vmem:[#allocation3 + $0xf28] sm:$0xff]
    %v3711 = vld [vmem:[#allocation3 + $0xf30] sm:$0xff]
    %v3712 = vld [vmem:[#allocation3 + $0xf38] sm:$0xff]
    %v3713 = vld [vmem:[#allocation3 + $0xf40] sm:$0xff]
    %v3714 = vld [vmem:[#allocation3 + $0xf48] sm:$0xff]
    %v3715 = vld [vmem:[#allocation3 + $0xf50] sm:$0xff]
    %v3716 = vld [vmem:[#allocation3 + $0xf58] sm:$0xff]
    %v3717 = vld [vmem:[#allocation3 + $0xf60] sm:$0xff]
    %v3718 = vld [vmem:[#allocation3 + $0xf68] sm:$0xff]
    %v3719 = vld [vmem:[#allocation3 + $0xf70] sm:$0xff]
    %v3720 = vld [vmem:[#allocation3 + $0xf78] sm:$0xff]
    %v3721 = vld [vmem:[#allocation3 + $0xf80] sm:$0xff]
    %v3722 = vld [vmem:[#allocation3 + $0xf88] sm:$0xff]
    %v3723 = vld [vmem:[#allocation3 + $0xf90] sm:$0xff]
    %v3724 = vld [vmem:[#allocation3 + $0xf98] sm:$0xff]
    %v3725 = vld [vmem:[#allocation3 + $0xfa0] sm:$0xff]
    %v3726 = vld [vmem:[#allocation3 + $0xfa8] sm:$0xff]
    %v3727 = vld [vmem:[#allocation3 + $0xfb0] sm:$0xff]
    %v3728 = vld [vmem:[#allocation3 + $0xfb8] sm:$0xff]
    %v3729 = vld [vmem:[#allocation3 + $0xfc0] sm:$0xff]
    %v3730 = vld [vmem:[#allocation3 + $0xfc8] sm:$0xff]
    %v3731 = vld [vmem:[#allocation3 + $0xfd0] sm:$0xff]
    %v3732 = vld [vmem:[#allocation3 + $0xfd8] sm:$0xff]
    %v3733 = vld [vmem:[#allocation3 + $0xfe0] sm:$0xff]
    %v3734 = vld [vmem:[#allocation3 + $0xfe8] sm:$0xff]
    %v3735 = vld [vmem:[#allocation3 + $0xff0] sm:$0xff]
    %v3736 = vld [vmem:[#allocation3 + $0xff8] sm:$0xff]
    %v3737 = vunpack.c.l.bf16 %v3225
    %v3738 = vunpack.c.h.bf16 %v3225
    %v3739 = vunpack.c.l.bf16 %v3226
    %v3740 = vunpack.c.h.bf16 %v3226
    %v3741 = vunpack.c.l.bf16 %v3227
    %v3742 = vunpack.c.h.bf16 %v3227
    %v3743 = vunpack.c.l.bf16 %v3228
    %v3744 = vunpack.c.h.bf16 %v3228
    %v3745 = vunpack.c.l.bf16 %v3229
    %v3746 = vunpack.c.h.bf16 %v3229
    %v3747 = vunpack.c.l.bf16 %v3230
    %v3748 = vunpack.c.h.bf16 %v3230
    %v3749 = vunpack.c.l.bf16 %v3231
    %v3750 = vunpack.c.h.bf16 %v3231
    %v3751 = vunpack.c.l.bf16 %v3232
    %v3752 = vunpack.c.h.bf16 %v3232
    %v3753 = vunpack.c.l.bf16 %v3233
    %v3754 = vunpack.c.h.bf16 %v3233
    %v3755 = vunpack.c.l.bf16 %v3234
    %v3756 = vunpack.c.h.bf16 %v3234
    %v3757 = vunpack.c.l.bf16 %v3235
    %v3758 = vunpack.c.h.bf16 %v3235
    %v3759 = vunpack.c.l.bf16 %v3236
    %v3760 = vunpack.c.h.bf16 %v3236
    %v3761 = vunpack.c.l.bf16 %v3237
    %v3762 = vunpack.c.h.bf16 %v3237
    %v3763 = vunpack.c.l.bf16 %v3238
    %v3764 = vunpack.c.h.bf16 %v3238
    %v3765 = vunpack.c.l.bf16 %v3239
    %v3766 = vunpack.c.h.bf16 %v3239
    %v3767 = vunpack.c.l.bf16 %v3240
    %v3768 = vunpack.c.h.bf16 %v3240
    %v3769 = vunpack.c.l.bf16 %v3241
    %v3770 = vunpack.c.h.bf16 %v3241
    %v3771 = vunpack.c.l.bf16 %v3242
    %v3772 = vunpack.c.h.bf16 %v3242
    %v3773 = vunpack.c.l.bf16 %v3243
    %v3774 = vunpack.c.h.bf16 %v3243
    %v3775 = vunpack.c.l.bf16 %v3244
    %v3776 = vunpack.c.h.bf16 %v3244
    %v3777 = vunpack.c.l.bf16 %v3245
    %v3778 = vunpack.c.h.bf16 %v3245
    %v3779 = vunpack.c.l.bf16 %v3246
    %v3780 = vunpack.c.h.bf16 %v3246
    %v3781 = vunpack.c.l.bf16 %v3247
    %v3782 = vunpack.c.h.bf16 %v3247
    %v3783 = vunpack.c.l.bf16 %v3248
    %v3784 = vunpack.c.h.bf16 %v3248
    %v3785 = vunpack.c.l.bf16 %v3249
    %v3786 = vunpack.c.h.bf16 %v3249
    %v3787 = vunpack.c.l.bf16 %v3250
    %v3788 = vunpack.c.h.bf16 %v3250
    %v3789 = vunpack.c.l.bf16 %v3251
    %v3790 = vunpack.c.h.bf16 %v3251
    %v3791 = vunpack.c.l.bf16 %v3252
    %v3792 = vunpack.c.h.bf16 %v3252
    %v3793 = vunpack.c.l.bf16 %v3253
    %v3794 = vunpack.c.h.bf16 %v3253
    %v3795 = vunpack.c.l.bf16 %v3254
    %v3796 = vunpack.c.h.bf16 %v3254
    %v3797 = vunpack.c.l.bf16 %v3255
    %v3798 = vunpack.c.h.bf16 %v3255
    %v3799 = vunpack.c.l.bf16 %v3256
    %v3800 = vunpack.c.h.bf16 %v3256
    %v3801 = vunpack.c.l.bf16 %v3257
    %v3802 = vunpack.c.h.bf16 %v3257
    %v3803 = vunpack.c.l.bf16 %v3258
    %v3804 = vunpack.c.h.bf16 %v3258
    %v3805 = vunpack.c.l.bf16 %v3259
    %v3806 = vunpack.c.h.bf16 %v3259
    %v3807 = vunpack.c.l.bf16 %v3260
    %v3808 = vunpack.c.h.bf16 %v3260
    %v3809 = vunpack.c.l.bf16 %v3261
    %v3810 = vunpack.c.h.bf16 %v3261
    %v3811 = vunpack.c.l.bf16 %v3262
    %v3812 = vunpack.c.h.bf16 %v3262
    %v3813 = vunpack.c.l.bf16 %v3263
    %v3814 = vunpack.c.h.bf16 %v3263
    %v3815 = vunpack.c.l.bf16 %v3264
    %v3816 = vunpack.c.h.bf16 %v3264
    %v3817 = vunpack.c.l.bf16 %v3265
    %v3818 = vunpack.c.h.bf16 %v3265
    %v3819 = vunpack.c.l.bf16 %v3266
    %v3820 = vunpack.c.h.bf16 %v3266
    %v3821 = vunpack.c.l.bf16 %v3267
    %v3822 = vunpack.c.h.bf16 %v3267
    %v3823 = vunpack.c.l.bf16 %v3268
    %v3824 = vunpack.c.h.bf16 %v3268
    %v3825 = vunpack.c.l.bf16 %v3269
    %v3826 = vunpack.c.h.bf16 %v3269
    %v3827 = vunpack.c.l.bf16 %v3270
    %v3828 = vunpack.c.h.bf16 %v3270
    %v3829 = vunpack.c.l.bf16 %v3271
    %v3830 = vunpack.c.h.bf16 %v3271
    %v3831 = vunpack.c.l.bf16 %v3272
    %v3832 = vunpack.c.h.bf16 %v3272
    %v3833 = vunpack.c.l.bf16 %v3273
    %v3834 = vunpack.c.h.bf16 %v3273
    %v3835 = vunpack.c.l.bf16 %v3274
    %v3836 = vunpack.c.h.bf16 %v3274
    %v3837 = vunpack.c.l.bf16 %v3275
    %v3838 = vunpack.c.h.bf16 %v3275
    %v3839 = vunpack.c.l.bf16 %v3276
    %v3840 = vunpack.c.h.bf16 %v3276
    %v3841 = vunpack.c.l.bf16 %v3277
    %v3842 = vunpack.c.h.bf16 %v3277
    %v3843 = vunpack.c.l.bf16 %v3278
    %v3844 = vunpack.c.h.bf16 %v3278
    %v3845 = vunpack.c.l.bf16 %v3279
    %v3846 = vunpack.c.h.bf16 %v3279
    %v3847 = vunpack.c.l.bf16 %v3280
    %v3848 = vunpack.c.h.bf16 %v3280
    %v3849 = vunpack.c.l.bf16 %v3281
    %v3850 = vunpack.c.h.bf16 %v3281
    %v3851 = vunpack.c.l.bf16 %v3282
    %v3852 = vunpack.c.h.bf16 %v3282
    %v3853 = vunpack.c.l.bf16 %v3283
    %v3854 = vunpack.c.h.bf16 %v3283
    %v3855 = vunpack.c.l.bf16 %v3284
    %v3856 = vunpack.c.h.bf16 %v3284
    %v3857 = vunpack.c.l.bf16 %v3285
    %v3858 = vunpack.c.h.bf16 %v3285
    %v3859 = vunpack.c.l.bf16 %v3286
    %v3860 = vunpack.c.h.bf16 %v3286
    %v3861 = vunpack.c.l.bf16 %v3287
    %v3862 = vunpack.c.h.bf16 %v3287
    %v3863 = vunpack.c.l.bf16 %v3288
    %v3864 = vunpack.c.h.bf16 %v3288
    %v3865 = vunpack.c.l.bf16 %v3289
    %v3866 = vunpack.c.h.bf16 %v3289
    %v3867 = vunpack.c.l.bf16 %v3290
    %v3868 = vunpack.c.h.bf16 %v3290
    %v3869 = vunpack.c.l.bf16 %v3291
    %v3870 = vunpack.c.h.bf16 %v3291
    %v3871 = vunpack.c.l.bf16 %v3292
    %v3872 = vunpack.c.h.bf16 %v3292
    %v3873 = vunpack.c.l.bf16 %v3293
    %v3874 = vunpack.c.h.bf16 %v3293
    %v3875 = vunpack.c.l.bf16 %v3294
    %v3876 = vunpack.c.h.bf16 %v3294
    %v3877 = vunpack.c.l.bf16 %v3295
    %v3878 = vunpack.c.h.bf16 %v3295
    %v3879 = vunpack.c.l.bf16 %v3296
    %v3880 = vunpack.c.h.bf16 %v3296
    %v3881 = vunpack.c.l.bf16 %v3297
    %v3882 = vunpack.c.h.bf16 %v3297
    %v3883 = vunpack.c.l.bf16 %v3298
    %v3884 = vunpack.c.h.bf16 %v3298
    %v3885 = vunpack.c.l.bf16 %v3299
    %v3886 = vunpack.c.h.bf16 %v3299
    %v3887 = vunpack.c.l.bf16 %v3300
    %v3888 = vunpack.c.h.bf16 %v3300
    %v3889 = vunpack.c.l.bf16 %v3301
    %v3890 = vunpack.c.h.bf16 %v3301
    %v3891 = vunpack.c.l.bf16 %v3302
    %v3892 = vunpack.c.h.bf16 %v3302
    %v3893 = vunpack.c.l.bf16 %v3303
    %v3894 = vunpack.c.h.bf16 %v3303
    %v3895 = vunpack.c.l.bf16 %v3304
    %v3896 = vunpack.c.h.bf16 %v3304
    %v3897 = vunpack.c.l.bf16 %v3305
    %v3898 = vunpack.c.h.bf16 %v3305
    %v3899 = vunpack.c.l.bf16 %v3306
    %v3900 = vunpack.c.h.bf16 %v3306
    %v3901 = vunpack.c.l.bf16 %v3307
    %v3902 = vunpack.c.h.bf16 %v3307
    %v3903 = vunpack.c.l.bf16 %v3308
    %v3904 = vunpack.c.h.bf16 %v3308
    %v3905 = vunpack.c.l.bf16 %v3309
    %v3906 = vunpack.c.h.bf16 %v3309
    %v3907 = vunpack.c.l.bf16 %v3310
    %v3908 = vunpack.c.h.bf16 %v3310
    %v3909 = vunpack.c.l.bf16 %v3311
    %v3910 = vunpack.c.h.bf16 %v3311
    %v3911 = vunpack.c.l.bf16 %v3312
    %v3912 = vunpack.c.h.bf16 %v3312
    %v3913 = vunpack.c.l.bf16 %v3313
    %v3914 = vunpack.c.h.bf16 %v3313
    %v3915 = vunpack.c.l.bf16 %v3314
    %v3916 = vunpack.c.h.bf16 %v3314
    %v3917 = vunpack.c.l.bf16 %v3315
    %v3918 = vunpack.c.h.bf16 %v3315
    %v3919 = vunpack.c.l.bf16 %v3316
    %v3920 = vunpack.c.h.bf16 %v3316
    %v3921 = vunpack.c.l.bf16 %v3317
    %v3922 = vunpack.c.h.bf16 %v3317
    %v3923 = vunpack.c.l.bf16 %v3318
    %v3924 = vunpack.c.h.bf16 %v3318
    %v3925 = vunpack.c.l.bf16 %v3319
    %v3926 = vunpack.c.h.bf16 %v3319
    %v3927 = vunpack.c.l.bf16 %v3320
    %v3928 = vunpack.c.h.bf16 %v3320
    %v3929 = vunpack.c.l.bf16 %v3321
    %v3930 = vunpack.c.h.bf16 %v3321
    %v3931 = vunpack.c.l.bf16 %v3322
    %v3932 = vunpack.c.h.bf16 %v3322
    %v3933 = vunpack.c.l.bf16 %v3323
    %v3934 = vunpack.c.h.bf16 %v3323
    %v3935 = vunpack.c.l.bf16 %v3324
    %v3936 = vunpack.c.h.bf16 %v3324
    %v3937 = vunpack.c.l.bf16 %v3325
    %v3938 = vunpack.c.h.bf16 %v3325
    %v3939 = vunpack.c.l.bf16 %v3326
    %v3940 = vunpack.c.h.bf16 %v3326
    %v3941 = vunpack.c.l.bf16 %v3327
    %v3942 = vunpack.c.h.bf16 %v3327
    %v3943 = vunpack.c.l.bf16 %v3328
    %v3944 = vunpack.c.h.bf16 %v3328
    %v3945 = vunpack.c.l.bf16 %v3329
    %v3946 = vunpack.c.h.bf16 %v3329
    %v3947 = vunpack.c.l.bf16 %v3330
    %v3948 = vunpack.c.h.bf16 %v3330
    %v3949 = vunpack.c.l.bf16 %v3331
    %v3950 = vunpack.c.h.bf16 %v3331
    %v3951 = vunpack.c.l.bf16 %v3332
    %v3952 = vunpack.c.h.bf16 %v3332
    %v3953 = vunpack.c.l.bf16 %v3333
    %v3954 = vunpack.c.h.bf16 %v3333
    %v3955 = vunpack.c.l.bf16 %v3334
    %v3956 = vunpack.c.h.bf16 %v3334
    %v3957 = vunpack.c.l.bf16 %v3335
    %v3958 = vunpack.c.h.bf16 %v3335
    %v3959 = vunpack.c.l.bf16 %v3336
    %v3960 = vunpack.c.h.bf16 %v3336
    %v3961 = vunpack.c.l.bf16 %v3337
    %v3962 = vunpack.c.h.bf16 %v3337
    %v3963 = vunpack.c.l.bf16 %v3338
    %v3964 = vunpack.c.h.bf16 %v3338
    %v3965 = vunpack.c.l.bf16 %v3339
    %v3966 = vunpack.c.h.bf16 %v3339
    %v3967 = vunpack.c.l.bf16 %v3340
    %v3968 = vunpack.c.h.bf16 %v3340
    %v3969 = vunpack.c.l.bf16 %v3341
    %v3970 = vunpack.c.h.bf16 %v3341
    %v3971 = vunpack.c.l.bf16 %v3342
    %v3972 = vunpack.c.h.bf16 %v3342
    %v3973 = vunpack.c.l.bf16 %v3343
    %v3974 = vunpack.c.h.bf16 %v3343
    %v3975 = vunpack.c.l.bf16 %v3344
    %v3976 = vunpack.c.h.bf16 %v3344
    %v3977 = vunpack.c.l.bf16 %v3345
    %v3978 = vunpack.c.h.bf16 %v3345
    %v3979 = vunpack.c.l.bf16 %v3346
    %v3980 = vunpack.c.h.bf16 %v3346
    %v3981 = vunpack.c.l.bf16 %v3347
    %v3982 = vunpack.c.h.bf16 %v3347
    %v3983 = vunpack.c.l.bf16 %v3348
    %v3984 = vunpack.c.h.bf16 %v3348
    %v3985 = vunpack.c.l.bf16 %v3349
    %v3986 = vunpack.c.h.bf16 %v3349
    %v3987 = vunpack.c.l.bf16 %v3350
    %v3988 = vunpack.c.h.bf16 %v3350
    %v3989 = vunpack.c.l.bf16 %v3351
    %v3990 = vunpack.c.h.bf16 %v3351
    %v3991 = vunpack.c.l.bf16 %v3352
    %v3992 = vunpack.c.h.bf16 %v3352
    %v3993 = vunpack.c.l.bf16 %v3353
    %v3994 = vunpack.c.h.bf16 %v3353
    %v3995 = vunpack.c.l.bf16 %v3354
    %v3996 = vunpack.c.h.bf16 %v3354
    %v3997 = vunpack.c.l.bf16 %v3355
    %v3998 = vunpack.c.h.bf16 %v3355
    %v3999 = vunpack.c.l.bf16 %v3356
    %v4000 = vunpack.c.h.bf16 %v3356
    %v4001 = vunpack.c.l.bf16 %v3357
    %v4002 = vunpack.c.h.bf16 %v3357
    %v4003 = vunpack.c.l.bf16 %v3358
    %v4004 = vunpack.c.h.bf16 %v3358
    %v4005 = vunpack.c.l.bf16 %v3359
    %v4006 = vunpack.c.h.bf16 %v3359
    %v4007 = vunpack.c.l.bf16 %v3360
    %v4008 = vunpack.c.h.bf16 %v3360
    %v4009 = vunpack.c.l.bf16 %v3361
    %v4010 = vunpack.c.h.bf16 %v3361
    %v4011 = vunpack.c.l.bf16 %v3362
    %v4012 = vunpack.c.h.bf16 %v3362
    %v4013 = vunpack.c.l.bf16 %v3363
    %v4014 = vunpack.c.h.bf16 %v3363
    %v4015 = vunpack.c.l.bf16 %v3364
    %v4016 = vunpack.c.h.bf16 %v3364
    %v4017 = vunpack.c.l.bf16 %v3365
    %v4018 = vunpack.c.h.bf16 %v3365
    %v4019 = vunpack.c.l.bf16 %v3366
    %v4020 = vunpack.c.h.bf16 %v3366
    %v4021 = vunpack.c.l.bf16 %v3367
    %v4022 = vunpack.c.h.bf16 %v3367
    %v4023 = vunpack.c.l.bf16 %v3368
    %v4024 = vunpack.c.h.bf16 %v3368
    %v4025 = vunpack.c.l.bf16 %v3369
    %v4026 = vunpack.c.h.bf16 %v3369
    %v4027 = vunpack.c.l.bf16 %v3370
    %v4028 = vunpack.c.h.bf16 %v3370
    %v4029 = vunpack.c.l.bf16 %v3371
    %v4030 = vunpack.c.h.bf16 %v3371
    %v4031 = vunpack.c.l.bf16 %v3372
    %v4032 = vunpack.c.h.bf16 %v3372
    %v4033 = vunpack.c.l.bf16 %v3373
    %v4034 = vunpack.c.h.bf16 %v3373
    %v4035 = vunpack.c.l.bf16 %v3374
    %v4036 = vunpack.c.h.bf16 %v3374
    %v4037 = vunpack.c.l.bf16 %v3375
    %v4038 = vunpack.c.h.bf16 %v3375
    %v4039 = vunpack.c.l.bf16 %v3376
    %v4040 = vunpack.c.h.bf16 %v3376
    %v4041 = vunpack.c.l.bf16 %v3377
    %v4042 = vunpack.c.h.bf16 %v3377
    %v4043 = vunpack.c.l.bf16 %v3378
    %v4044 = vunpack.c.h.bf16 %v3378
    %v4045 = vunpack.c.l.bf16 %v3379
    %v4046 = vunpack.c.h.bf16 %v3379
    %v4047 = vunpack.c.l.bf16 %v3380
    %v4048 = vunpack.c.h.bf16 %v3380
    %v4049 = vunpack.c.l.bf16 %v3381
    %v4050 = vunpack.c.h.bf16 %v3381
    %v4051 = vunpack.c.l.bf16 %v3382
    %v4052 = vunpack.c.h.bf16 %v3382
    %v4053 = vunpack.c.l.bf16 %v3383
    %v4054 = vunpack.c.h.bf16 %v3383
    %v4055 = vunpack.c.l.bf16 %v3384
    %v4056 = vunpack.c.h.bf16 %v3384
    %v4057 = vunpack.c.l.bf16 %v3385
    %v4058 = vunpack.c.h.bf16 %v3385
    %v4059 = vunpack.c.l.bf16 %v3386
    %v4060 = vunpack.c.h.bf16 %v3386
    %v4061 = vunpack.c.l.bf16 %v3387
    %v4062 = vunpack.c.h.bf16 %v3387
    %v4063 = vunpack.c.l.bf16 %v3388
    %v4064 = vunpack.c.h.bf16 %v3388
    %v4065 = vunpack.c.l.bf16 %v3389
    %v4066 = vunpack.c.h.bf16 %v3389
    %v4067 = vunpack.c.l.bf16 %v3390
    %v4068 = vunpack.c.h.bf16 %v3390
    %v4069 = vunpack.c.l.bf16 %v3391
    %v4070 = vunpack.c.h.bf16 %v3391
    %v4071 = vunpack.c.l.bf16 %v3392
    %v4072 = vunpack.c.h.bf16 %v3392
    %v4073 = vunpack.c.l.bf16 %v3393
    %v4074 = vunpack.c.h.bf16 %v3393
    %v4075 = vunpack.c.l.bf16 %v3394
    %v4076 = vunpack.c.h.bf16 %v3394
    %v4077 = vunpack.c.l.bf16 %v3395
    %v4078 = vunpack.c.h.bf16 %v3395
    %v4079 = vunpack.c.l.bf16 %v3396
    %v4080 = vunpack.c.h.bf16 %v3396
    %v4081 = vunpack.c.l.bf16 %v3397
    %v4082 = vunpack.c.h.bf16 %v3397
    %v4083 = vunpack.c.l.bf16 %v3398
    %v4084 = vunpack.c.h.bf16 %v3398
    %v4085 = vunpack.c.l.bf16 %v3399
    %v4086 = vunpack.c.h.bf16 %v3399
    %v4087 = vunpack.c.l.bf16 %v3400
    %v4088 = vunpack.c.h.bf16 %v3400
    %v4089 = vunpack.c.l.bf16 %v3401
    %v4090 = vunpack.c.h.bf16 %v3401
    %v4091 = vunpack.c.l.bf16 %v3402
    %v4092 = vunpack.c.h.bf16 %v3402
    %v4093 = vunpack.c.l.bf16 %v3403
    %v4094 = vunpack.c.h.bf16 %v3403
    %v4095 = vunpack.c.l.bf16 %v3404
    %v4096 = vunpack.c.h.bf16 %v3404
    %v4097 = vunpack.c.l.bf16 %v3405
    %v4098 = vunpack.c.h.bf16 %v3405
    %v4099 = vunpack.c.l.bf16 %v3406
    %v4100 = vunpack.c.h.bf16 %v3406
    %v4101 = vunpack.c.l.bf16 %v3407
    %v4102 = vunpack.c.h.bf16 %v3407
    %v4103 = vunpack.c.l.bf16 %v3408
    %v4104 = vunpack.c.h.bf16 %v3408
    %v4105 = vunpack.c.l.bf16 %v3409
    %v4106 = vunpack.c.h.bf16 %v3409
    %v4107 = vunpack.c.l.bf16 %v3410
    %v4108 = vunpack.c.h.bf16 %v3410
    %v4109 = vunpack.c.l.bf16 %v3411
    %v4110 = vunpack.c.h.bf16 %v3411
    %v4111 = vunpack.c.l.bf16 %v3412
    %v4112 = vunpack.c.h.bf16 %v3412
    %v4113 = vunpack.c.l.bf16 %v3413
    %v4114 = vunpack.c.h.bf16 %v3413
    %v4115 = vunpack.c.l.bf16 %v3414
    %v4116 = vunpack.c.h.bf16 %v3414
    %v4117 = vunpack.c.l.bf16 %v3415
    %v4118 = vunpack.c.h.bf16 %v3415
    %v4119 = vunpack.c.l.bf16 %v3416
    %v4120 = vunpack.c.h.bf16 %v3416
    %v4121 = vunpack.c.l.bf16 %v3417
    %v4122 = vunpack.c.h.bf16 %v3417
    %v4123 = vunpack.c.l.bf16 %v3418
    %v4124 = vunpack.c.h.bf16 %v3418
    %v4125 = vunpack.c.l.bf16 %v3419
    %v4126 = vunpack.c.h.bf16 %v3419
    %v4127 = vunpack.c.l.bf16 %v3420
    %v4128 = vunpack.c.h.bf16 %v3420
    %v4129 = vunpack.c.l.bf16 %v3421
    %v4130 = vunpack.c.h.bf16 %v3421
    %v4131 = vunpack.c.l.bf16 %v3422
    %v4132 = vunpack.c.h.bf16 %v3422
    %v4133 = vunpack.c.l.bf16 %v3423
    %v4134 = vunpack.c.h.bf16 %v3423
    %v4135 = vunpack.c.l.bf16 %v3424
    %v4136 = vunpack.c.h.bf16 %v3424
    %v4137 = vunpack.c.l.bf16 %v3425
    %v4138 = vunpack.c.h.bf16 %v3425
    %v4139 = vunpack.c.l.bf16 %v3426
    %v4140 = vunpack.c.h.bf16 %v3426
    %v4141 = vunpack.c.l.bf16 %v3427
    %v4142 = vunpack.c.h.bf16 %v3427
    %v4143 = vunpack.c.l.bf16 %v3428
    %v4144 = vunpack.c.h.bf16 %v3428
    %v4145 = vunpack.c.l.bf16 %v3429
    %v4146 = vunpack.c.h.bf16 %v3429
    %v4147 = vunpack.c.l.bf16 %v3430
    %v4148 = vunpack.c.h.bf16 %v3430
    %v4149 = vunpack.c.l.bf16 %v3431
    %v4150 = vunpack.c.h.bf16 %v3431
    %v4151 = vunpack.c.l.bf16 %v3432
    %v4152 = vunpack.c.h.bf16 %v3432
    %v4153 = vunpack.c.l.bf16 %v3433
    %v4154 = vunpack.c.h.bf16 %v3433
    %v4155 = vunpack.c.l.bf16 %v3434
    %v4156 = vunpack.c.h.bf16 %v3434
    %v4157 = vunpack.c.l.bf16 %v3435
    %v4158 = vunpack.c.h.bf16 %v3435
    %v4159 = vunpack.c.l.bf16 %v3436
    %v4160 = vunpack.c.h.bf16 %v3436
    %v4161 = vunpack.c.l.bf16 %v3437
    %v4162 = vunpack.c.h.bf16 %v3437
    %v4163 = vunpack.c.l.bf16 %v3438
    %v4164 = vunpack.c.h.bf16 %v3438
    %v4165 = vunpack.c.l.bf16 %v3439
    %v4166 = vunpack.c.h.bf16 %v3439
    %v4167 = vunpack.c.l.bf16 %v3440
    %v4168 = vunpack.c.h.bf16 %v3440
    %v4169 = vunpack.c.l.bf16 %v3441
    %v4170 = vunpack.c.h.bf16 %v3441
    %v4171 = vunpack.c.l.bf16 %v3442
    %v4172 = vunpack.c.h.bf16 %v3442
    %v4173 = vunpack.c.l.bf16 %v3443
    %v4174 = vunpack.c.h.bf16 %v3443
    %v4175 = vunpack.c.l.bf16 %v3444
    %v4176 = vunpack.c.h.bf16 %v3444
    %v4177 = vunpack.c.l.bf16 %v3445
    %v4178 = vunpack.c.h.bf16 %v3445
    %v4179 = vunpack.c.l.bf16 %v3446
    %v4180 = vunpack.c.h.bf16 %v3446
    %v4181 = vunpack.c.l.bf16 %v3447
    %v4182 = vunpack.c.h.bf16 %v3447
    %v4183 = vunpack.c.l.bf16 %v3448
    %v4184 = vunpack.c.h.bf16 %v3448
    %v4185 = vunpack.c.l.bf16 %v3449
    %v4186 = vunpack.c.h.bf16 %v3449
    %v4187 = vunpack.c.l.bf16 %v3450
    %v4188 = vunpack.c.h.bf16 %v3450
    %v4189 = vunpack.c.l.bf16 %v3451
    %v4190 = vunpack.c.h.bf16 %v3451
    %v4191 = vunpack.c.l.bf16 %v3452
    %v4192 = vunpack.c.h.bf16 %v3452
    %v4193 = vunpack.c.l.bf16 %v3453
    %v4194 = vunpack.c.h.bf16 %v3453
    %v4195 = vunpack.c.l.bf16 %v3454
    %v4196 = vunpack.c.h.bf16 %v3454
    %v4197 = vunpack.c.l.bf16 %v3455
    %v4198 = vunpack.c.h.bf16 %v3455
    %v4199 = vunpack.c.l.bf16 %v3456
    %v4200 = vunpack.c.h.bf16 %v3456
    %v4201 = vunpack.c.l.bf16 %v3457
    %v4202 = vunpack.c.h.bf16 %v3457
    %v4203 = vunpack.c.l.bf16 %v3458
    %v4204 = vunpack.c.h.bf16 %v3458
    %v4205 = vunpack.c.l.bf16 %v3459
    %v4206 = vunpack.c.h.bf16 %v3459
    %v4207 = vunpack.c.l.bf16 %v3460
    %v4208 = vunpack.c.h.bf16 %v3460
    %v4209 = vunpack.c.l.bf16 %v3461
    %v4210 = vunpack.c.h.bf16 %v3461
    %v4211 = vunpack.c.l.bf16 %v3462
    %v4212 = vunpack.c.h.bf16 %v3462
    %v4213 = vunpack.c.l.bf16 %v3463
    %v4214 = vunpack.c.h.bf16 %v3463
    %v4215 = vunpack.c.l.bf16 %v3464
    %v4216 = vunpack.c.h.bf16 %v3464
    %v4217 = vunpack.c.l.bf16 %v3465
    %v4218 = vunpack.c.h.bf16 %v3465
    %v4219 = vunpack.c.l.bf16 %v3466
    %v4220 = vunpack.c.h.bf16 %v3466
    %v4221 = vunpack.c.l.bf16 %v3467
    %v4222 = vunpack.c.h.bf16 %v3467
    %v4223 = vunpack.c.l.bf16 %v3468
    %v4224 = vunpack.c.h.bf16 %v3468
    %v4225 = vunpack.c.l.bf16 %v3469
    %v4226 = vunpack.c.h.bf16 %v3469
    %v4227 = vunpack.c.l.bf16 %v3470
    %v4228 = vunpack.c.h.bf16 %v3470
    %v4229 = vunpack.c.l.bf16 %v3471
    %v4230 = vunpack.c.h.bf16 %v3471
    %v4231 = vunpack.c.l.bf16 %v3472
    %v4232 = vunpack.c.h.bf16 %v3472
    %v4233 = vunpack.c.l.bf16 %v3473
    %v4234 = vunpack.c.h.bf16 %v3473
    %v4235 = vunpack.c.l.bf16 %v3474
    %v4236 = vunpack.c.h.bf16 %v3474
    %v4237 = vunpack.c.l.bf16 %v3475
    %v4238 = vunpack.c.h.bf16 %v3475
    %v4239 = vunpack.c.l.bf16 %v3476
    %v4240 = vunpack.c.h.bf16 %v3476
    %v4241 = vunpack.c.l.bf16 %v3477
    %v4242 = vunpack.c.h.bf16 %v3477
    %v4243 = vunpack.c.l.bf16 %v3478
    %v4244 = vunpack.c.h.bf16 %v3478
    %v4245 = vunpack.c.l.bf16 %v3479
    %v4246 = vunpack.c.h.bf16 %v3479
    %v4247 = vunpack.c.l.bf16 %v3480
    %v4248 = vunpack.c.h.bf16 %v3480
    %v4249 = vunpack.c.l.bf16 %v3481
    %v4250 = vunpack.c.h.bf16 %v3481
    %v4251 = vunpack.c.l.bf16 %v3482
    %v4252 = vunpack.c.h.bf16 %v3482
    %v4253 = vunpack.c.l.bf16 %v3483
    %v4254 = vunpack.c.h.bf16 %v3483
    %v4255 = vunpack.c.l.bf16 %v3484
    %v4256 = vunpack.c.h.bf16 %v3484
    %v4257 = vunpack.c.l.bf16 %v3485
    %v4258 = vunpack.c.h.bf16 %v3485
    %v4259 = vunpack.c.l.bf16 %v3486
    %v4260 = vunpack.c.h.bf16 %v3486
    %v4261 = vunpack.c.l.bf16 %v3487
    %v4262 = vunpack.c.h.bf16 %v3487
    %v4263 = vunpack.c.l.bf16 %v3488
    %v4264 = vunpack.c.h.bf16 %v3488
    %v4265 = vunpack.c.l.bf16 %v3489
    %v4266 = vunpack.c.h.bf16 %v3489
    %v4267 = vunpack.c.l.bf16 %v3490
    %v4268 = vunpack.c.h.bf16 %v3490
    %v4269 = vunpack.c.l.bf16 %v3491
    %v4270 = vunpack.c.h.bf16 %v3491
    %v4271 = vunpack.c.l.bf16 %v3492
    %v4272 = vunpack.c.h.bf16 %v3492
    %v4273 = vunpack.c.l.bf16 %v3493
    %v4274 = vunpack.c.h.bf16 %v3493
    %v4275 = vunpack.c.l.bf16 %v3494
    %v4276 = vunpack.c.h.bf16 %v3494
    %v4277 = vunpack.c.l.bf16 %v3495
    %v4278 = vunpack.c.h.bf16 %v3495
    %v4279 = vunpack.c.l.bf16 %v3496
    %v4280 = vunpack.c.h.bf16 %v3496
    %v4281 = vunpack.c.l.bf16 %v3497
    %v4282 = vunpack.c.h.bf16 %v3497
    %v4283 = vunpack.c.l.bf16 %v3498
    %v4284 = vunpack.c.h.bf16 %v3498
    %v4285 = vunpack.c.l.bf16 %v3499
    %v4286 = vunpack.c.h.bf16 %v3499
    %v4287 = vunpack.c.l.bf16 %v3500
    %v4288 = vunpack.c.h.bf16 %v3500
    %v4289 = vunpack.c.l.bf16 %v3501
    %v4290 = vunpack.c.h.bf16 %v3501
    %v4291 = vunpack.c.l.bf16 %v3502
    %v4292 = vunpack.c.h.bf16 %v3502
    %v4293 = vunpack.c.l.bf16 %v3503
    %v4294 = vunpack.c.h.bf16 %v3503
    %v4295 = vunpack.c.l.bf16 %v3504
    %v4296 = vunpack.c.h.bf16 %v3504
    %v4297 = vunpack.c.l.bf16 %v3505
    %v4298 = vunpack.c.h.bf16 %v3505
    %v4299 = vunpack.c.l.bf16 %v3506
    %v4300 = vunpack.c.h.bf16 %v3506
    %v4301 = vunpack.c.l.bf16 %v3507
    %v4302 = vunpack.c.h.bf16 %v3507
    %v4303 = vunpack.c.l.bf16 %v3508
    %v4304 = vunpack.c.h.bf16 %v3508
    %v4305 = vunpack.c.l.bf16 %v3509
    %v4306 = vunpack.c.h.bf16 %v3509
    %v4307 = vunpack.c.l.bf16 %v3510
    %v4308 = vunpack.c.h.bf16 %v3510
    %v4309 = vunpack.c.l.bf16 %v3511
    %v4310 = vunpack.c.h.bf16 %v3511
    %v4311 = vunpack.c.l.bf16 %v3512
    %v4312 = vunpack.c.h.bf16 %v3512
    %v4313 = vunpack.c.l.bf16 %v3513
    %v4314 = vunpack.c.h.bf16 %v3513
    %v4315 = vunpack.c.l.bf16 %v3514
    %v4316 = vunpack.c.h.bf16 %v3514
    %v4317 = vunpack.c.l.bf16 %v3515
    %v4318 = vunpack.c.h.bf16 %v3515
    %v4319 = vunpack.c.l.bf16 %v3516
    %v4320 = vunpack.c.h.bf16 %v3516
    %v4321 = vunpack.c.l.bf16 %v3517
    %v4322 = vunpack.c.h.bf16 %v3517
    %v4323 = vunpack.c.l.bf16 %v3518
    %v4324 = vunpack.c.h.bf16 %v3518
    %v4325 = vunpack.c.l.bf16 %v3519
    %v4326 = vunpack.c.h.bf16 %v3519
    %v4327 = vunpack.c.l.bf16 %v3520
    %v4328 = vunpack.c.h.bf16 %v3520
    %v4329 = vunpack.c.l.bf16 %v3521
    %v4330 = vunpack.c.h.bf16 %v3521
    %v4331 = vunpack.c.l.bf16 %v3522
    %v4332 = vunpack.c.h.bf16 %v3522
    %v4333 = vunpack.c.l.bf16 %v3523
    %v4334 = vunpack.c.h.bf16 %v3523
    %v4335 = vunpack.c.l.bf16 %v3524
    %v4336 = vunpack.c.h.bf16 %v3524
    %v4337 = vunpack.c.l.bf16 %v3525
    %v4338 = vunpack.c.h.bf16 %v3525
    %v4339 = vunpack.c.l.bf16 %v3526
    %v4340 = vunpack.c.h.bf16 %v3526
    %v4341 = vunpack.c.l.bf16 %v3527
    %v4342 = vunpack.c.h.bf16 %v3527
    %v4343 = vunpack.c.l.bf16 %v3528
    %v4344 = vunpack.c.h.bf16 %v3528
    %v4345 = vunpack.c.l.bf16 %v3529
    %v4346 = vunpack.c.h.bf16 %v3529
    %v4347 = vunpack.c.l.bf16 %v3530
    %v4348 = vunpack.c.h.bf16 %v3530
    %v4349 = vunpack.c.l.bf16 %v3531
    %v4350 = vunpack.c.h.bf16 %v3531
    %v4351 = vunpack.c.l.bf16 %v3532
    %v4352 = vunpack.c.h.bf16 %v3532
    %v4353 = vunpack.c.l.bf16 %v3533
    %v4354 = vunpack.c.h.bf16 %v3533
    %v4355 = vunpack.c.l.bf16 %v3534
    %v4356 = vunpack.c.h.bf16 %v3534
    %v4357 = vunpack.c.l.bf16 %v3535
    %v4358 = vunpack.c.h.bf16 %v3535
    %v4359 = vunpack.c.l.bf16 %v3536
    %v4360 = vunpack.c.h.bf16 %v3536
    %v4361 = vunpack.c.l.bf16 %v3537
    %v4362 = vunpack.c.h.bf16 %v3537
    %v4363 = vunpack.c.l.bf16 %v3538
    %v4364 = vunpack.c.h.bf16 %v3538
    %v4365 = vunpack.c.l.bf16 %v3539
    %v4366 = vunpack.c.h.bf16 %v3539
    %v4367 = vunpack.c.l.bf16 %v3540
    %v4368 = vunpack.c.h.bf16 %v3540
    %v4369 = vunpack.c.l.bf16 %v3541
    %v4370 = vunpack.c.h.bf16 %v3541
    %v4371 = vunpack.c.l.bf16 %v3542
    %v4372 = vunpack.c.h.bf16 %v3542
    %v4373 = vunpack.c.l.bf16 %v3543
    %v4374 = vunpack.c.h.bf16 %v3543
    %v4375 = vunpack.c.l.bf16 %v3544
    %v4376 = vunpack.c.h.bf16 %v3544
    %v4377 = vunpack.c.l.bf16 %v3545
    %v4378 = vunpack.c.h.bf16 %v3545
    %v4379 = vunpack.c.l.bf16 %v3546
    %v4380 = vunpack.c.h.bf16 %v3546
    %v4381 = vunpack.c.l.bf16 %v3547
    %v4382 = vunpack.c.h.bf16 %v3547
    %v4383 = vunpack.c.l.bf16 %v3548
    %v4384 = vunpack.c.h.bf16 %v3548
    %v4385 = vunpack.c.l.bf16 %v3549
    %v4386 = vunpack.c.h.bf16 %v3549
    %v4387 = vunpack.c.l.bf16 %v3550
    %v4388 = vunpack.c.h.bf16 %v3550
    %v4389 = vunpack.c.l.bf16 %v3551
    %v4390 = vunpack.c.h.bf16 %v3551
    %v4391 = vunpack.c.l.bf16 %v3552
    %v4392 = vunpack.c.h.bf16 %v3552
    %v4393 = vunpack.c.l.bf16 %v3553
    %v4394 = vunpack.c.h.bf16 %v3553
    %v4395 = vunpack.c.l.bf16 %v3554
    %v4396 = vunpack.c.h.bf16 %v3554
    %v4397 = vunpack.c.l.bf16 %v3555
    %v4398 = vunpack.c.h.bf16 %v3555
    %v4399 = vunpack.c.l.bf16 %v3556
    %v4400 = vunpack.c.h.bf16 %v3556
    %v4401 = vunpack.c.l.bf16 %v3557
    %v4402 = vunpack.c.h.bf16 %v3557
    %v4403 = vunpack.c.l.bf16 %v3558
    %v4404 = vunpack.c.h.bf16 %v3558
    %v4405 = vunpack.c.l.bf16 %v3559
    %v4406 = vunpack.c.h.bf16 %v3559
    %v4407 = vunpack.c.l.bf16 %v3560
    %v4408 = vunpack.c.h.bf16 %v3560
    %v4409 = vunpack.c.l.bf16 %v3561
    %v4410 = vunpack.c.h.bf16 %v3561
    %v4411 = vunpack.c.l.bf16 %v3562
    %v4412 = vunpack.c.h.bf16 %v3562
    %v4413 = vunpack.c.l.bf16 %v3563
    %v4414 = vunpack.c.h.bf16 %v3563
    %v4415 = vunpack.c.l.bf16 %v3564
    %v4416 = vunpack.c.h.bf16 %v3564
    %v4417 = vunpack.c.l.bf16 %v3565
    %v4418 = vunpack.c.h.bf16 %v3565
    %v4419 = vunpack.c.l.bf16 %v3566
    %v4420 = vunpack.c.h.bf16 %v3566
    %v4421 = vunpack.c.l.bf16 %v3567
    %v4422 = vunpack.c.h.bf16 %v3567
    %v4423 = vunpack.c.l.bf16 %v3568
    %v4424 = vunpack.c.h.bf16 %v3568
    %v4425 = vunpack.c.l.bf16 %v3569
    %v4426 = vunpack.c.h.bf16 %v3569
    %v4427 = vunpack.c.l.bf16 %v3570
    %v4428 = vunpack.c.h.bf16 %v3570
    %v4429 = vunpack.c.l.bf16 %v3571
    %v4430 = vunpack.c.h.bf16 %v3571
    %v4431 = vunpack.c.l.bf16 %v3572
    %v4432 = vunpack.c.h.bf16 %v3572
    %v4433 = vunpack.c.l.bf16 %v3573
    %v4434 = vunpack.c.h.bf16 %v3573
    %v4435 = vunpack.c.l.bf16 %v3574
    %v4436 = vunpack.c.h.bf16 %v3574
    %v4437 = vunpack.c.l.bf16 %v3575
    %v4438 = vunpack.c.h.bf16 %v3575
    %v4439 = vunpack.c.l.bf16 %v3576
    %v4440 = vunpack.c.h.bf16 %v3576
    %v4441 = vunpack.c.l.bf16 %v3577
    %v4442 = vunpack.c.h.bf16 %v3577
    %v4443 = vunpack.c.l.bf16 %v3578
    %v4444 = vunpack.c.h.bf16 %v3578
    %v4445 = vunpack.c.l.bf16 %v3579
    %v4446 = vunpack.c.h.bf16 %v3579
    %v4447 = vunpack.c.l.bf16 %v3580
    %v4448 = vunpack.c.h.bf16 %v3580
    %v4449 = vunpack.c.l.bf16 %v3581
    %v4450 = vunpack.c.h.bf16 %v3581
    %v4451 = vunpack.c.l.bf16 %v3582
    %v4452 = vunpack.c.h.bf16 %v3582
    %v4453 = vunpack.c.l.bf16 %v3583
    %v4454 = vunpack.c.h.bf16 %v3583
    %v4455 = vunpack.c.l.bf16 %v3584
    %v4456 = vunpack.c.h.bf16 %v3584
    %v4457 = vunpack.c.l.bf16 %v3585
    %v4458 = vunpack.c.h.bf16 %v3585
    %v4459 = vunpack.c.l.bf16 %v3586
    %v4460 = vunpack.c.h.bf16 %v3586
    %v4461 = vunpack.c.l.bf16 %v3587
    %v4462 = vunpack.c.h.bf16 %v3587
    %v4463 = vunpack.c.l.bf16 %v3588
    %v4464 = vunpack.c.h.bf16 %v3588
    %v4465 = vunpack.c.l.bf16 %v3589
    %v4466 = vunpack.c.h.bf16 %v3589
    %v4467 = vunpack.c.l.bf16 %v3590
    %v4468 = vunpack.c.h.bf16 %v3590
    %v4469 = vunpack.c.l.bf16 %v3591
    %v4470 = vunpack.c.h.bf16 %v3591
    %v4471 = vunpack.c.l.bf16 %v3592
    %v4472 = vunpack.c.h.bf16 %v3592
    %v4473 = vunpack.c.l.bf16 %v3593
    %v4474 = vunpack.c.h.bf16 %v3593
    %v4475 = vunpack.c.l.bf16 %v3594
    %v4476 = vunpack.c.h.bf16 %v3594
    %v4477 = vunpack.c.l.bf16 %v3595
    %v4478 = vunpack.c.h.bf16 %v3595
    %v4479 = vunpack.c.l.bf16 %v3596
    %v4480 = vunpack.c.h.bf16 %v3596
    %v4481 = vunpack.c.l.bf16 %v3597
    %v4482 = vunpack.c.h.bf16 %v3597
    %v4483 = vunpack.c.l.bf16 %v3598
    %v4484 = vunpack.c.h.bf16 %v3598
    %v4485 = vunpack.c.l.bf16 %v3599
    %v4486 = vunpack.c.h.bf16 %v3599
    %v4487 = vunpack.c.l.bf16 %v3600
    %v4488 = vunpack.c.h.bf16 %v3600
    %v4489 = vunpack.c.l.bf16 %v3601
    %v4490 = vunpack.c.h.bf16 %v3601
    %v4491 = vunpack.c.l.bf16 %v3602
    %v4492 = vunpack.c.h.bf16 %v3602
    %v4493 = vunpack.c.l.bf16 %v3603
    %v4494 = vunpack.c.h.bf16 %v3603
    %v4495 = vunpack.c.l.bf16 %v3604
    %v4496 = vunpack.c.h.bf16 %v3604
    %v4497 = vunpack.c.l.bf16 %v3605
    %v4498 = vunpack.c.h.bf16 %v3605
    %v4499 = vunpack.c.l.bf16 %v3606
    %v4500 = vunpack.c.h.bf16 %v3606
    %v4501 = vunpack.c.l.bf16 %v3607
    %v4502 = vunpack.c.h.bf16 %v3607
    %v4503 = vunpack.c.l.bf16 %v3608
    %v4504 = vunpack.c.h.bf16 %v3608
    %v4505 = vunpack.c.l.bf16 %v3609
    %v4506 = vunpack.c.h.bf16 %v3609
    %v4507 = vunpack.c.l.bf16 %v3610
    %v4508 = vunpack.c.h.bf16 %v3610
    %v4509 = vunpack.c.l.bf16 %v3611
    %v4510 = vunpack.c.h.bf16 %v3611
    %v4511 = vunpack.c.l.bf16 %v3612
    %v4512 = vunpack.c.h.bf16 %v3612
    %v4513 = vunpack.c.l.bf16 %v3613
    %v4514 = vunpack.c.h.bf16 %v3613
    %v4515 = vunpack.c.l.bf16 %v3614
    %v4516 = vunpack.c.h.bf16 %v3614
    %v4517 = vunpack.c.l.bf16 %v3615
    %v4518 = vunpack.c.h.bf16 %v3615
    %v4519 = vunpack.c.l.bf16 %v3616
    %v4520 = vunpack.c.h.bf16 %v3616
    %v4521 = vunpack.c.l.bf16 %v3617
    %v4522 = vunpack.c.h.bf16 %v3617
    %v4523 = vunpack.c.l.bf16 %v3618
    %v4524 = vunpack.c.h.bf16 %v3618
    %v4525 = vunpack.c.l.bf16 %v3619
    %v4526 = vunpack.c.h.bf16 %v3619
    %v4527 = vunpack.c.l.bf16 %v3620
    %v4528 = vunpack.c.h.bf16 %v3620
    %v4529 = vunpack.c.l.bf16 %v3621
    %v4530 = vunpack.c.h.bf16 %v3621
    %v4531 = vunpack.c.l.bf16 %v3622
    %v4532 = vunpack.c.h.bf16 %v3622
    %v4533 = vunpack.c.l.bf16 %v3623
    %v4534 = vunpack.c.h.bf16 %v3623
    %v4535 = vunpack.c.l.bf16 %v3624
    %v4536 = vunpack.c.h.bf16 %v3624
    %v4537 = vunpack.c.l.bf16 %v3625
    %v4538 = vunpack.c.h.bf16 %v3625
    %v4539 = vunpack.c.l.bf16 %v3626
    %v4540 = vunpack.c.h.bf16 %v3626
    %v4541 = vunpack.c.l.bf16 %v3627
    %v4542 = vunpack.c.h.bf16 %v3627
    %v4543 = vunpack.c.l.bf16 %v3628
    %v4544 = vunpack.c.h.bf16 %v3628
    %v4545 = vunpack.c.l.bf16 %v3629
    %v4546 = vunpack.c.h.bf16 %v3629
    %v4547 = vunpack.c.l.bf16 %v3630
    %v4548 = vunpack.c.h.bf16 %v3630
    %v4549 = vunpack.c.l.bf16 %v3631
    %v4550 = vunpack.c.h.bf16 %v3631
    %v4551 = vunpack.c.l.bf16 %v3632
    %v4552 = vunpack.c.h.bf16 %v3632
    %v4553 = vunpack.c.l.bf16 %v3633
    %v4554 = vunpack.c.h.bf16 %v3633
    %v4555 = vunpack.c.l.bf16 %v3634
    %v4556 = vunpack.c.h.bf16 %v3634
    %v4557 = vunpack.c.l.bf16 %v3635
    %v4558 = vunpack.c.h.bf16 %v3635
    %v4559 = vunpack.c.l.bf16 %v3636
    %v4560 = vunpack.c.h.bf16 %v3636
    %v4561 = vunpack.c.l.bf16 %v3637
    %v4562 = vunpack.c.h.bf16 %v3637
    %v4563 = vunpack.c.l.bf16 %v3638
    %v4564 = vunpack.c.h.bf16 %v3638
    %v4565 = vunpack.c.l.bf16 %v3639
    %v4566 = vunpack.c.h.bf16 %v3639
    %v4567 = vunpack.c.l.bf16 %v3640
    %v4568 = vunpack.c.h.bf16 %v3640
    %v4569 = vunpack.c.l.bf16 %v3641
    %v4570 = vunpack.c.h.bf16 %v3641
    %v4571 = vunpack.c.l.bf16 %v3642
    %v4572 = vunpack.c.h.bf16 %v3642
    %v4573 = vunpack.c.l.bf16 %v3643
    %v4574 = vunpack.c.h.bf16 %v3643
    %v4575 = vunpack.c.l.bf16 %v3644
    %v4576 = vunpack.c.h.bf16 %v3644
    %v4577 = vunpack.c.l.bf16 %v3645
    %v4578 = vunpack.c.h.bf16 %v3645
    %v4579 = vunpack.c.l.bf16 %v3646
    %v4580 = vunpack.c.h.bf16 %v3646
    %v4581 = vunpack.c.l.bf16 %v3647
    %v4582 = vunpack.c.h.bf16 %v3647
    %v4583 = vunpack.c.l.bf16 %v3648
    %v4584 = vunpack.c.h.bf16 %v3648
    %v4585 = vunpack.c.l.bf16 %v3649
    %v4586 = vunpack.c.h.bf16 %v3649
    %v4587 = vunpack.c.l.bf16 %v3650
    %v4588 = vunpack.c.h.bf16 %v3650
    %v4589 = vunpack.c.l.bf16 %v3651
    %v4590 = vunpack.c.h.bf16 %v3651
    %v4591 = vunpack.c.l.bf16 %v3652
    %v4592 = vunpack.c.h.bf16 %v3652
    %v4593 = vunpack.c.l.bf16 %v3653
    %v4594 = vunpack.c.h.bf16 %v3653
    %v4595 = vunpack.c.l.bf16 %v3654
    %v4596 = vunpack.c.h.bf16 %v3654
    %v4597 = vunpack.c.l.bf16 %v3655
    %v4598 = vunpack.c.h.bf16 %v3655
    %v4599 = vunpack.c.l.bf16 %v3656
    %v4600 = vunpack.c.h.bf16 %v3656
    %v4601 = vunpack.c.l.bf16 %v3657
    %v4602 = vunpack.c.h.bf16 %v3657
    %v4603 = vunpack.c.l.bf16 %v3658
    %v4604 = vunpack.c.h.bf16 %v3658
    %v4605 = vunpack.c.l.bf16 %v3659
    %v4606 = vunpack.c.h.bf16 %v3659
    %v4607 = vunpack.c.l.bf16 %v3660
    %v4608 = vunpack.c.h.bf16 %v3660
    %v4609 = vunpack.c.l.bf16 %v3661
    %v4610 = vunpack.c.h.bf16 %v3661
    %v4611 = vunpack.c.l.bf16 %v3662
    %v4612 = vunpack.c.h.bf16 %v3662
    %v4613 = vunpack.c.l.bf16 %v3663
    %v4614 = vunpack.c.h.bf16 %v3663
    %v4615 = vunpack.c.l.bf16 %v3664
    %v4616 = vunpack.c.h.bf16 %v3664
    %v4617 = vunpack.c.l.bf16 %v3665
    %v4618 = vunpack.c.h.bf16 %v3665
    %v4619 = vunpack.c.l.bf16 %v3666
    %v4620 = vunpack.c.h.bf16 %v3666
    %v4621 = vunpack.c.l.bf16 %v3667
    %v4622 = vunpack.c.h.bf16 %v3667
    %v4623 = vunpack.c.l.bf16 %v3668
    %v4624 = vunpack.c.h.bf16 %v3668
    %v4625 = vunpack.c.l.bf16 %v3669
    %v4626 = vunpack.c.h.bf16 %v3669
    %v4627 = vunpack.c.l.bf16 %v3670
    %v4628 = vunpack.c.h.bf16 %v3670
    %v4629 = vunpack.c.l.bf16 %v3671
    %v4630 = vunpack.c.h.bf16 %v3671
    %v4631 = vunpack.c.l.bf16 %v3672
    %v4632 = vunpack.c.h.bf16 %v3672
    %v4633 = vunpack.c.l.bf16 %v3673
    %v4634 = vunpack.c.h.bf16 %v3673
    %v4635 = vunpack.c.l.bf16 %v3674
    %v4636 = vunpack.c.h.bf16 %v3674
    %v4637 = vunpack.c.l.bf16 %v3675
    %v4638 = vunpack.c.h.bf16 %v3675
    %v4639 = vunpack.c.l.bf16 %v3676
    %v4640 = vunpack.c.h.bf16 %v3676
    %v4641 = vunpack.c.l.bf16 %v3677
    %v4642 = vunpack.c.h.bf16 %v3677
    %v4643 = vunpack.c.l.bf16 %v3678
    %v4644 = vunpack.c.h.bf16 %v3678
    %v4645 = vunpack.c.l.bf16 %v3679
    %v4646 = vunpack.c.h.bf16 %v3679
    %v4647 = vunpack.c.l.bf16 %v3680
    %v4648 = vunpack.c.h.bf16 %v3680
    %v4649 = vunpack.c.l.bf16 %v3681
    %v4650 = vunpack.c.h.bf16 %v3681
    %v4651 = vunpack.c.l.bf16 %v3682
    %v4652 = vunpack.c.h.bf16 %v3682
    %v4653 = vunpack.c.l.bf16 %v3683
    %v4654 = vunpack.c.h.bf16 %v3683
    %v4655 = vunpack.c.l.bf16 %v3684
    %v4656 = vunpack.c.h.bf16 %v3684
    %v4657 = vunpack.c.l.bf16 %v3685
    %v4658 = vunpack.c.h.bf16 %v3685
    %v4659 = vunpack.c.l.bf16 %v3686
    %v4660 = vunpack.c.h.bf16 %v3686
    %v4661 = vunpack.c.l.bf16 %v3687
    %v4662 = vunpack.c.h.bf16 %v3687
    %v4663 = vunpack.c.l.bf16 %v3688
    %v4664 = vunpack.c.h.bf16 %v3688
    %v4665 = vunpack.c.l.bf16 %v3689
    %v4666 = vunpack.c.h.bf16 %v3689
    %v4667 = vunpack.c.l.bf16 %v3690
    %v4668 = vunpack.c.h.bf16 %v3690
    %v4669 = vunpack.c.l.bf16 %v3691
    %v4670 = vunpack.c.h.bf16 %v3691
    %v4671 = vunpack.c.l.bf16 %v3692
    %v4672 = vunpack.c.h.bf16 %v3692
    %v4673 = vunpack.c.l.bf16 %v3693
    %v4674 = vunpack.c.h.bf16 %v3693
    %v4675 = vunpack.c.l.bf16 %v3694
    %v4676 = vunpack.c.h.bf16 %v3694
    %v4677 = vunpack.c.l.bf16 %v3695
    %v4678 = vunpack.c.h.bf16 %v3695
    %v4679 = vunpack.c.l.bf16 %v3696
    %v4680 = vunpack.c.h.bf16 %v3696
    %v4681 = vunpack.c.l.bf16 %v3697
    %v4682 = vunpack.c.h.bf16 %v3697
    %v4683 = vunpack.c.l.bf16 %v3698
    %v4684 = vunpack.c.h.bf16 %v3698
    %v4685 = vunpack.c.l.bf16 %v3699
    %v4686 = vunpack.c.h.bf16 %v3699
    %v4687 = vunpack.c.l.bf16 %v3700
    %v4688 = vunpack.c.h.bf16 %v3700
    %v4689 = vunpack.c.l.bf16 %v3701
    %v4690 = vunpack.c.h.bf16 %v3701
    %v4691 = vunpack.c.l.bf16 %v3702
    %v4692 = vunpack.c.h.bf16 %v3702
    %v4693 = vunpack.c.l.bf16 %v3703
    %v4694 = vunpack.c.h.bf16 %v3703
    %v4695 = vunpack.c.l.bf16 %v3704
    %v4696 = vunpack.c.h.bf16 %v3704
    %v4697 = vunpack.c.l.bf16 %v3705
    %v4698 = vunpack.c.h.bf16 %v3705
    %v4699 = vunpack.c.l.bf16 %v3706
    %v4700 = vunpack.c.h.bf16 %v3706
    %v4701 = vunpack.c.l.bf16 %v3707
    %v4702 = vunpack.c.h.bf16 %v3707
    %v4703 = vunpack.c.l.bf16 %v3708
    %v4704 = vunpack.c.h.bf16 %v3708
    %v4705 = vunpack.c.l.bf16 %v3709
    %v4706 = vunpack.c.h.bf16 %v3709
    %v4707 = vunpack.c.l.bf16 %v3710
    %v4708 = vunpack.c.h.bf16 %v3710
    %v4709 = vunpack.c.l.bf16 %v3711
    %v4710 = vunpack.c.h.bf16 %v3711
    %v4711 = vunpack.c.l.bf16 %v3712
    %v4712 = vunpack.c.h.bf16 %v3712
    %v4713 = vunpack.c.l.bf16 %v3713
    %v4714 = vunpack.c.h.bf16 %v3713
    %v4715 = vunpack.c.l.bf16 %v3714
    %v4716 = vunpack.c.h.bf16 %v3714
    %v4717 = vunpack.c.l.bf16 %v3715
    %v4718 = vunpack.c.h.bf16 %v3715
    %v4719 = vunpack.c.l.bf16 %v3716
    %v4720 = vunpack.c.h.bf16 %v3716
    %v4721 = vunpack.c.l.bf16 %v3717
    %v4722 = vunpack.c.h.bf16 %v3717
    %v4723 = vunpack.c.l.bf16 %v3718
    %v4724 = vunpack.c.h.bf16 %v3718
    %v4725 = vunpack.c.l.bf16 %v3719
    %v4726 = vunpack.c.h.bf16 %v3719
    %v4727 = vunpack.c.l.bf16 %v3720
    %v4728 = vunpack.c.h.bf16 %v3720
    %v4729 = vunpack.c.l.bf16 %v3721
    %v4730 = vunpack.c.h.bf16 %v3721
    %v4731 = vunpack.c.l.bf16 %v3722
    %v4732 = vunpack.c.h.bf16 %v3722
    %v4733 = vunpack.c.l.bf16 %v3723
    %v4734 = vunpack.c.h.bf16 %v3723
    %v4735 = vunpack.c.l.bf16 %v3724
    %v4736 = vunpack.c.h.bf16 %v3724
    %v4737 = vunpack.c.l.bf16 %v3725
    %v4738 = vunpack.c.h.bf16 %v3725
    %v4739 = vunpack.c.l.bf16 %v3726
    %v4740 = vunpack.c.h.bf16 %v3726
    %v4741 = vunpack.c.l.bf16 %v3727
    %v4742 = vunpack.c.h.bf16 %v3727
    %v4743 = vunpack.c.l.bf16 %v3728
    %v4744 = vunpack.c.h.bf16 %v3728
    %v4745 = vunpack.c.l.bf16 %v3729
    %v4746 = vunpack.c.h.bf16 %v3729
    %v4747 = vunpack.c.l.bf16 %v3730
    %v4748 = vunpack.c.h.bf16 %v3730
    %v4749 = vunpack.c.l.bf16 %v3731
    %v4750 = vunpack.c.h.bf16 %v3731
    %v4751 = vunpack.c.l.bf16 %v3732
    %v4752 = vunpack.c.h.bf16 %v3732
    %v4753 = vunpack.c.l.bf16 %v3733
    %v4754 = vunpack.c.h.bf16 %v3733
    %v4755 = vunpack.c.l.bf16 %v3734
    %v4756 = vunpack.c.h.bf16 %v3734
    %v4757 = vunpack.c.l.bf16 %v3735
    %v4758 = vunpack.c.h.bf16 %v3735
    %v4759 = vunpack.c.l.bf16 %v3736
    %v4760 = vunpack.c.h.bf16 %v3736
    %v5273 = vlaneseq
    %v5274 = vand.u32 %v5273, 127
    %v5275 = vperm.slane %v2712, %v5274
    %v5276 = vadd.s32 %v5274, 4294967288
    %v5277 = vperm.slane %v2713, %v5276
    %vm5278 = vcmask 130112
    %v5279 = vsel %vm5278, %v5277, %v5275
    %v5280 = vadd.s32 %v5274, 4294967280
    %v5281 = vperm.slane %v2714, %v5280
    %vm5282 = vcmask 195712
    %v5283 = vsel %vm5282, %v5281, %v5279
    %v5284 = vadd.s32 %v5274, 4294967272
    %v5285 = vperm.slane %v2715, %v5284
    %vm5286 = vcmask 261312
    %v5287 = vsel %vm5286, %v5285, %v5283
    %v5288 = vadd.s32 %v5274, 4294967264
    %v5289 = vperm.slane %v2716, %v5288
    %vm5290 = vcmask 326912
    %v5291 = vsel %vm5290, %v5289, %v5287
    %v5292 = vadd.s32 %v5274, 4294967256
    %v5293 = vperm.slane %v2717, %v5292
    %vm5294 = vcmask 392512
    %v5295 = vsel %vm5294, %v5293, %v5291
    %v5296 = vadd.s32 %v5274, 4294967248
    %v5297 = vperm.slane %v2718, %v5296
    %vm5298 = vcmask 458112
    %v5299 = vsel %vm5298, %v5297, %v5295
    %v5300 = vadd.s32 %v5274, 4294967240
    %v5301 = vperm.slane %v2719, %v5300
    %vm5302 = vcmask 523712
    %v5303 = vsel %vm5302, %v5301, %v5299
    %v5304 = vadd.s32 %v5274, 4294967232
    %v5305 = vperm.slane %v2720, %v5304
    %vm5306 = vcmask 589312
    %v5307 = vsel %vm5306, %v5305, %v5303
    %v5308 = vadd.s32 %v5274, 4294967224
    %v5309 = vperm.slane %v2721, %v5308
    %vm5310 = vcmask 654912
    %v5311 = vsel %vm5310, %v5309, %v5307
    %v5312 = vadd.s32 %v5274, 4294967216
    %v5313 = vperm.slane %v2722, %v5312
    %vm5314 = vcmask 720512
    %v5315 = vsel %vm5314, %v5313, %v5311
    %v5316 = vadd.s32 %v5274, 4294967208
    %v5317 = vperm.slane %v2723, %v5316
    %vm5318 = vcmask 786112
    %v5319 = vsel %vm5318, %v5317, %v5315
    %v5320 = vadd.s32 %v5274, 4294967200
    %v5321 = vperm.slane %v2724, %v5320
    %vm5322 = vcmask 851712
    %v5323 = vsel %vm5322, %v5321, %v5319
    %v5324 = vadd.s32 %v5274, 4294967192
    %v5325 = vperm.slane %v2725, %v5324
    %vm5326 = vcmask 917312
    %v5327 = vsel %vm5326, %v5325, %v5323
    %v5328 = vadd.s32 %v5274, 4294967184
    %v5329 = vperm.slane %v2726, %v5328
    %vm5330 = vcmask 982912
    %v5331 = vsel %vm5330, %v5329, %v5327
    %v5332 = vadd.s32 %v5274, 4294967176
    %v5333 = vperm.slane %v2727, %v5332
    %vm5334 = vcmask 1048512
    %v5335 = vsel %vm5334, %v5333, %v5331
    %v5336 = vperm.slane %v2728, %v5274
    %v5337 = vperm.slane %v2729, %v5276
    %v5338 = vsel %vm5278, %v5337, %v5336
    %v5339 = vperm.slane %v2730, %v5280
    %v5340 = vsel %vm5282, %v5339, %v5338
    %v5341 = vperm.slane %v2731, %v5284
    %v5342 = vsel %vm5286, %v5341, %v5340
    %v5343 = vperm.slane %v2732, %v5288
    %v5344 = vsel %vm5290, %v5343, %v5342
    %v5345 = vperm.slane %v2733, %v5292
    %v5346 = vsel %vm5294, %v5345, %v5344
    %v5347 = vperm.slane %v2734, %v5296
    %v5348 = vsel %vm5298, %v5347, %v5346
    %v5349 = vperm.slane %v2735, %v5300
    %v5350 = vsel %vm5302, %v5349, %v5348
    %v5351 = vperm.slane %v2736, %v5304
    %v5352 = vsel %vm5306, %v5351, %v5350
    %v5353 = vperm.slane %v2737, %v5308
    %v5354 = vsel %vm5310, %v5353, %v5352
    %v5355 = vperm.slane %v2738, %v5312
    %v5356 = vsel %vm5314, %v5355, %v5354
    %v5357 = vperm.slane %v2739, %v5316
    %v5358 = vsel %vm5318, %v5357, %v5356
    %v5359 = vperm.slane %v2740, %v5320
    %v5360 = vsel %vm5322, %v5359, %v5358
    %v5361 = vperm.slane %v2741, %v5324
    %v5362 = vsel %vm5326, %v5361, %v5360
    %v5363 = vperm.slane %v2742, %v5328
    %v5364 = vsel %vm5330, %v5363, %v5362
    %v5365 = vperm.slane %v2743, %v5332
    %v5366 = vsel %vm5334, %v5365, %v5364
    %v5367 = vperm.slane %v2744, %v5274
    %v5368 = vperm.slane %v2745, %v5276
    %v5369 = vsel %vm5278, %v5368, %v5367
    %v5370 = vperm.slane %v2746, %v5280
    %v5371 = vsel %vm5282, %v5370, %v5369
    %v5372 = vperm.slane %v2747, %v5284
    %v5373 = vsel %vm5286, %v5372, %v5371
    %v5374 = vperm.slane %v2748, %v5288
    %v5375 = vsel %vm5290, %v5374, %v5373
    %v5376 = vperm.slane %v2749, %v5292
    %v5377 = vsel %vm5294, %v5376, %v5375
    %v5378 = vperm.slane %v2750, %v5296
    %v5379 = vsel %vm5298, %v5378, %v5377
    %v5380 = vperm.slane %v2751, %v5300
    %v5381 = vsel %vm5302, %v5380, %v5379
    %v5382 = vperm.slane %v2752, %v5304
    %v5383 = vsel %vm5306, %v5382, %v5381
    %v5384 = vperm.slane %v2753, %v5308
    %v5385 = vsel %vm5310, %v5384, %v5383
    %v5386 = vperm.slane %v2754, %v5312
    %v5387 = vsel %vm5314, %v5386, %v5385
    %v5388 = vperm.slane %v2755, %v5316
    %v5389 = vsel %vm5318, %v5388, %v5387
    %v5390 = vperm.slane %v2756, %v5320
    %v5391 = vsel %vm5322, %v5390, %v5389
    %v5392 = vperm.slane %v2757, %v5324
    %v5393 = vsel %vm5326, %v5392, %v5391
    %v5394 = vperm.slane %v2758, %v5328
    %v5395 = vsel %vm5330, %v5394, %v5393
    %v5396 = vperm.slane %v2759, %v5332
    %v5397 = vsel %vm5334, %v5396, %v5395
    %v5398 = vperm.slane %v2760, %v5274
    %v5399 = vperm.slane %v2761, %v5276
    %v5400 = vsel %vm5278, %v5399, %v5398
    %v5401 = vperm.slane %v2762, %v5280
    %v5402 = vsel %vm5282, %v5401, %v5400
    %v5403 = vperm.slane %v2763, %v5284
    %v5404 = vsel %vm5286, %v5403, %v5402
    %v5405 = vperm.slane %v2764, %v5288
    %v5406 = vsel %vm5290, %v5405, %v5404
    %v5407 = vperm.slane %v2765, %v5292
    %v5408 = vsel %vm5294, %v5407, %v5406
    %v5409 = vperm.slane %v2766, %v5296
    %v5410 = vsel %vm5298, %v5409, %v5408
    %v5411 = vperm.slane %v2767, %v5300
    %v5412 = vsel %vm5302, %v5411, %v5410
    %v5413 = vperm.slane %v2768, %v5304
    %v5414 = vsel %vm5306, %v5413, %v5412
    %v5415 = vperm.slane %v2769, %v5308
    %v5416 = vsel %vm5310, %v5415, %v5414
    %v5417 = vperm.slane %v2770, %v5312
    %v5418 = vsel %vm5314, %v5417, %v5416
    %v5419 = vperm.slane %v2771, %v5316
    %v5420 = vsel %vm5318, %v5419, %v5418
    %v5421 = vperm.slane %v2772, %v5320
    %v5422 = vsel %vm5322, %v5421, %v5420
    %v5423 = vperm.slane %v2773, %v5324
    %v5424 = vsel %vm5326, %v5423, %v5422
    %v5425 = vperm.slane %v2774, %v5328
    %v5426 = vsel %vm5330, %v5425, %v5424
    %v5427 = vperm.slane %v2775, %v5332
    %v5428 = vsel %vm5334, %v5427, %v5426
    %v5429 = vperm.slane %v2776, %v5274
    %v5430 = vperm.slane %v2777, %v5276
    %v5431 = vsel %vm5278, %v5430, %v5429
    %v5432 = vperm.slane %v2778, %v5280
    %v5433 = vsel %vm5282, %v5432, %v5431
    %v5434 = vperm.slane %v2779, %v5284
    %v5435 = vsel %vm5286, %v5434, %v5433
    %v5436 = vperm.slane %v2780, %v5288
    %v5437 = vsel %vm5290, %v5436, %v5435
    %v5438 = vperm.slane %v2781, %v5292
    %v5439 = vsel %vm5294, %v5438, %v5437
    %v5440 = vperm.slane %v2782, %v5296
    %v5441 = vsel %vm5298, %v5440, %v5439
    %v5442 = vperm.slane %v2783, %v5300
    %v5443 = vsel %vm5302, %v5442, %v5441
    %v5444 = vperm.slane %v2784, %v5304
    %v5445 = vsel %vm5306, %v5444, %v5443
    %v5446 = vperm.slane %v2785, %v5308
    %v5447 = vsel %vm5310, %v5446, %v5445
    %v5448 = vperm.slane %v2786, %v5312
    %v5449 = vsel %vm5314, %v5448, %v5447
    %v5450 = vperm.slane %v2787, %v5316
    %v5451 = vsel %vm5318, %v5450, %v5449
    %v5452 = vperm.slane %v2788, %v5320
    %v5453 = vsel %vm5322, %v5452, %v5451
    %v5454 = vperm.slane %v2789, %v5324
    %v5455 = vsel %vm5326, %v5454, %v5453
    %v5456 = vperm.slane %v2790, %v5328
    %v5457 = vsel %vm5330, %v5456, %v5455
    %v5458 = vperm.slane %v2791, %v5332
    %v5459 = vsel %vm5334, %v5458, %v5457
    %v5460 = vperm.slane %v2792, %v5274
    %v5461 = vperm.slane %v2793, %v5276
    %v5462 = vsel %vm5278, %v5461, %v5460
    %v5463 = vperm.slane %v2794, %v5280
    %v5464 = vsel %vm5282, %v5463, %v5462
    %v5465 = vperm.slane %v2795, %v5284
    %v5466 = vsel %vm5286, %v5465, %v5464
    %v5467 = vperm.slane %v2796, %v5288
    %v5468 = vsel %vm5290, %v5467, %v5466
    %v5469 = vperm.slane %v2797, %v5292
    %v5470 = vsel %vm5294, %v5469, %v5468
    %v5471 = vperm.slane %v2798, %v5296
    %v5472 = vsel %vm5298, %v5471, %v5470
    %v5473 = vperm.slane %v2799, %v5300
    %v5474 = vsel %vm5302, %v5473, %v5472
    %v5475 = vperm.slane %v2800, %v5304
    %v5476 = vsel %vm5306, %v5475, %v5474
    %v5477 = vperm.slane %v2801, %v5308
    %v5478 = vsel %vm5310, %v5477, %v5476
    %v5479 = vperm.slane %v2802, %v5312
    %v5480 = vsel %vm5314, %v5479, %v5478
    %v5481 = vperm.slane %v2803, %v5316
    %v5482 = vsel %vm5318, %v5481, %v5480
    %v5483 = vperm.slane %v2804, %v5320
    %v5484 = vsel %vm5322, %v5483, %v5482
    %v5485 = vperm.slane %v2805, %v5324
    %v5486 = vsel %vm5326, %v5485, %v5484
    %v5487 = vperm.slane %v2806, %v5328
    %v5488 = vsel %vm5330, %v5487, %v5486
    %v5489 = vperm.slane %v2807, %v5332
    %v5490 = vsel %vm5334, %v5489, %v5488
    %v5491 = vperm.slane %v2808, %v5274
    %v5492 = vperm.slane %v2809, %v5276
    %v5493 = vsel %vm5278, %v5492, %v5491
    %v5494 = vperm.slane %v2810, %v5280
    %v5495 = vsel %vm5282, %v5494, %v5493
    %v5496 = vperm.slane %v2811, %v5284
    %v5497 = vsel %vm5286, %v5496, %v5495
    %v5498 = vperm.slane %v2812, %v5288
    %v5499 = vsel %vm5290, %v5498, %v5497
    %v5500 = vperm.slane %v2813, %v5292
    %v5501 = vsel %vm5294, %v5500, %v5499
    %v5502 = vperm.slane %v2814, %v5296
    %v5503 = vsel %vm5298, %v5502, %v5501
    %v5504 = vperm.slane %v2815, %v5300
    %v5505 = vsel %vm5302, %v5504, %v5503
    %v5506 = vperm.slane %v2816, %v5304
    %v5507 = vsel %vm5306, %v5506, %v5505
    %v5508 = vperm.slane %v2817, %v5308
    %v5509 = vsel %vm5310, %v5508, %v5507
    %v5510 = vperm.slane %v2818, %v5312
    %v5511 = vsel %vm5314, %v5510, %v5509
    %v5512 = vperm.slane %v2819, %v5316
    %v5513 = vsel %vm5318, %v5512, %v5511
    %v5514 = vperm.slane %v2820, %v5320
    %v5515 = vsel %vm5322, %v5514, %v5513
    %v5516 = vperm.slane %v2821, %v5324
    %v5517 = vsel %vm5326, %v5516, %v5515
    %v5518 = vperm.slane %v2822, %v5328
    %v5519 = vsel %vm5330, %v5518, %v5517
    %v5520 = vperm.slane %v2823, %v5332
    %v5521 = vsel %vm5334, %v5520, %v5519
    %v5522 = vperm.slane %v2824, %v5274
    %v5523 = vperm.slane %v2825, %v5276
    %v5524 = vsel %vm5278, %v5523, %v5522
    %v5525 = vperm.slane %v2826, %v5280
    %v5526 = vsel %vm5282, %v5525, %v5524
    %v5527 = vperm.slane %v2827, %v5284
    %v5528 = vsel %vm5286, %v5527, %v5526
    %v5529 = vperm.slane %v2828, %v5288
    %v5530 = vsel %vm5290, %v5529, %v5528
    %v5531 = vperm.slane %v2829, %v5292
    %v5532 = vsel %vm5294, %v5531, %v5530
    %v5533 = vperm.slane %v2830, %v5296
    %v5534 = vsel %vm5298, %v5533, %v5532
    %v5535 = vperm.slane %v2831, %v5300
    %v5536 = vsel %vm5302, %v5535, %v5534
    %v5537 = vperm.slane %v2832, %v5304
    %v5538 = vsel %vm5306, %v5537, %v5536
    %v5539 = vperm.slane %v2833, %v5308
    %v5540 = vsel %vm5310, %v5539, %v5538
    %v5541 = vperm.slane %v2834, %v5312
    %v5542 = vsel %vm5314, %v5541, %v5540
    %v5543 = vperm.slane %v2835, %v5316
    %v5544 = vsel %vm5318, %v5543, %v5542
    %v5545 = vperm.slane %v2836, %v5320
    %v5546 = vsel %vm5322, %v5545, %v5544
    %v5547 = vperm.slane %v2837, %v5324
    %v5548 = vsel %vm5326, %v5547, %v5546
    %v5549 = vperm.slane %v2838, %v5328
    %v5550 = vsel %vm5330, %v5549, %v5548
    %v5551 = vperm.slane %v2839, %v5332
    %v5552 = vsel %vm5334, %v5551, %v5550
    %v5553 = vperm.slane %v2840, %v5274
    %v5554 = vperm.slane %v2841, %v5276
    %v5555 = vsel %vm5278, %v5554, %v5553
    %v5556 = vperm.slane %v2842, %v5280
    %v5557 = vsel %vm5282, %v5556, %v5555
    %v5558 = vperm.slane %v2843, %v5284
    %v5559 = vsel %vm5286, %v5558, %v5557
    %v5560 = vperm.slane %v2844, %v5288
    %v5561 = vsel %vm5290, %v5560, %v5559
    %v5562 = vperm.slane %v2845, %v5292
    %v5563 = vsel %vm5294, %v5562, %v5561
    %v5564 = vperm.slane %v2846, %v5296
    %v5565 = vsel %vm5298, %v5564, %v5563
    %v5566 = vperm.slane %v2847, %v5300
    %v5567 = vsel %vm5302, %v5566, %v5565
    %v5568 = vperm.slane %v2848, %v5304
    %v5569 = vsel %vm5306, %v5568, %v5567
    %v5570 = vperm.slane %v2849, %v5308
    %v5571 = vsel %vm5310, %v5570, %v5569
    %v5572 = vperm.slane %v2850, %v5312
    %v5573 = vsel %vm5314, %v5572, %v5571
    %v5574 = vperm.slane %v2851, %v5316
    %v5575 = vsel %vm5318, %v5574, %v5573
    %v5576 = vperm.slane %v2852, %v5320
    %v5577 = vsel %vm5322, %v5576, %v5575
    %v5578 = vperm.slane %v2853, %v5324
    %v5579 = vsel %vm5326, %v5578, %v5577
    %v5580 = vperm.slane %v2854, %v5328
    %v5581 = vsel %vm5330, %v5580, %v5579
    %v5582 = vperm.slane %v2855, %v5332
    %v5583 = vsel %vm5334, %v5582, %v5581
    %v5584 = vperm.slane %v2856, %v5274
    %v5585 = vperm.slane %v2857, %v5276
    %v5586 = vsel %vm5278, %v5585, %v5584
    %v5587 = vperm.slane %v2858, %v5280
    %v5588 = vsel %vm5282, %v5587, %v5586
    %v5589 = vperm.slane %v2859, %v5284
    %v5590 = vsel %vm5286, %v5589, %v5588
    %v5591 = vperm.slane %v2860, %v5288
    %v5592 = vsel %vm5290, %v5591, %v5590
    %v5593 = vperm.slane %v2861, %v5292
    %v5594 = vsel %vm5294, %v5593, %v5592
    %v5595 = vperm.slane %v2862, %v5296
    %v5596 = vsel %vm5298, %v5595, %v5594
    %v5597 = vperm.slane %v2863, %v5300
    %v5598 = vsel %vm5302, %v5597, %v5596
    %v5599 = vperm.slane %v2864, %v5304
    %v5600 = vsel %vm5306, %v5599, %v5598
    %v5601 = vperm.slane %v2865, %v5308
    %v5602 = vsel %vm5310, %v5601, %v5600
    %v5603 = vperm.slane %v2866, %v5312
    %v5604 = vsel %vm5314, %v5603, %v5602
    %v5605 = vperm.slane %v2867, %v5316
    %v5606 = vsel %vm5318, %v5605, %v5604
    %v5607 = vperm.slane %v2868, %v5320
    %v5608 = vsel %vm5322, %v5607, %v5606
    %v5609 = vperm.slane %v2869, %v5324
    %v5610 = vsel %vm5326, %v5609, %v5608
    %v5611 = vperm.slane %v2870, %v5328
    %v5612 = vsel %vm5330, %v5611, %v5610
    %v5613 = vperm.slane %v2871, %v5332
    %v5614 = vsel %vm5334, %v5613, %v5612
    %v5615 = vperm.slane %v2872, %v5274
    %v5616 = vperm.slane %v2873, %v5276
    %v5617 = vsel %vm5278, %v5616, %v5615
    %v5618 = vperm.slane %v2874, %v5280
    %v5619 = vsel %vm5282, %v5618, %v5617
    %v5620 = vperm.slane %v2875, %v5284
    %v5621 = vsel %vm5286, %v5620, %v5619
    %v5622 = vperm.slane %v2876, %v5288
    %v5623 = vsel %vm5290, %v5622, %v5621
    %v5624 = vperm.slane %v2877, %v5292
    %v5625 = vsel %vm5294, %v5624, %v5623
    %v5626 = vperm.slane %v2878, %v5296
    %v5627 = vsel %vm5298, %v5626, %v5625
    %v5628 = vperm.slane %v2879, %v5300
    %v5629 = vsel %vm5302, %v5628, %v5627
    %v5630 = vperm.slane %v2880, %v5304
    %v5631 = vsel %vm5306, %v5630, %v5629
    %v5632 = vperm.slane %v2881, %v5308
    %v5633 = vsel %vm5310, %v5632, %v5631
    %v5634 = vperm.slane %v2882, %v5312
    %v5635 = vsel %vm5314, %v5634, %v5633
    %v5636 = vperm.slane %v2883, %v5316
    %v5637 = vsel %vm5318, %v5636, %v5635
    %v5638 = vperm.slane %v2884, %v5320
    %v5639 = vsel %vm5322, %v5638, %v5637
    %v5640 = vperm.slane %v2885, %v5324
    %v5641 = vsel %vm5326, %v5640, %v5639
    %v5642 = vperm.slane %v2886, %v5328
    %v5643 = vsel %vm5330, %v5642, %v5641
    %v5644 = vperm.slane %v2887, %v5332
    %v5645 = vsel %vm5334, %v5644, %v5643
    %v5646 = vperm.slane %v2888, %v5274
    %v5647 = vperm.slane %v2889, %v5276
    %v5648 = vsel %vm5278, %v5647, %v5646
    %v5649 = vperm.slane %v2890, %v5280
    %v5650 = vsel %vm5282, %v5649, %v5648
    %v5651 = vperm.slane %v2891, %v5284
    %v5652 = vsel %vm5286, %v5651, %v5650
    %v5653 = vperm.slane %v2892, %v5288
    %v5654 = vsel %vm5290, %v5653, %v5652
    %v5655 = vperm.slane %v2893, %v5292
    %v5656 = vsel %vm5294, %v5655, %v5654
    %v5657 = vperm.slane %v2894, %v5296
    %v5658 = vsel %vm5298, %v5657, %v5656
    %v5659 = vperm.slane %v2895, %v5300
    %v5660 = vsel %vm5302, %v5659, %v5658
    %v5661 = vperm.slane %v2896, %v5304
    %v5662 = vsel %vm5306, %v5661, %v5660
    %v5663 = vperm.slane %v2897, %v5308
    %v5664 = vsel %vm5310, %v5663, %v5662
    %v5665 = vperm.slane %v2898, %v5312
    %v5666 = vsel %vm5314, %v5665, %v5664
    %v5667 = vperm.slane %v2899, %v5316
    %v5668 = vsel %vm5318, %v5667, %v5666
    %v5669 = vperm.slane %v2900, %v5320
    %v5670 = vsel %vm5322, %v5669, %v5668
    %v5671 = vperm.slane %v2901, %v5324
    %v5672 = vsel %vm5326, %v5671, %v5670
    %v5673 = vperm.slane %v2902, %v5328
    %v5674 = vsel %vm5330, %v5673, %v5672
    %v5675 = vperm.slane %v2903, %v5332
    %v5676 = vsel %vm5334, %v5675, %v5674
    %v5677 = vperm.slane %v2904, %v5274
    %v5678 = vperm.slane %v2905, %v5276
    %v5679 = vsel %vm5278, %v5678, %v5677
    %v5680 = vperm.slane %v2906, %v5280
    %v5681 = vsel %vm5282, %v5680, %v5679
    %v5682 = vperm.slane %v2907, %v5284
    %v5683 = vsel %vm5286, %v5682, %v5681
    %v5684 = vperm.slane %v2908, %v5288
    %v5685 = vsel %vm5290, %v5684, %v5683
    %v5686 = vperm.slane %v2909, %v5292
    %v5687 = vsel %vm5294, %v5686, %v5685
    %v5688 = vperm.slane %v2910, %v5296
    %v5689 = vsel %vm5298, %v5688, %v5687
    %v5690 = vperm.slane %v2911, %v5300
    %v5691 = vsel %vm5302, %v5690, %v5689
    %v5692 = vperm.slane %v2912, %v5304
    %v5693 = vsel %vm5306, %v5692, %v5691
    %v5694 = vperm.slane %v2913, %v5308
    %v5695 = vsel %vm5310, %v5694, %v5693
    %v5696 = vperm.slane %v2914, %v5312
    %v5697 = vsel %vm5314, %v5696, %v5695
    %v5698 = vperm.slane %v2915, %v5316
    %v5699 = vsel %vm5318, %v5698, %v5697
    %v5700 = vperm.slane %v2916, %v5320
    %v5701 = vsel %vm5322, %v5700, %v5699
    %v5702 = vperm.slane %v2917, %v5324
    %v5703 = vsel %vm5326, %v5702, %v5701
    %v5704 = vperm.slane %v2918, %v5328
    %v5705 = vsel %vm5330, %v5704, %v5703
    %v5706 = vperm.slane %v2919, %v5332
    %v5707 = vsel %vm5334, %v5706, %v5705
    %v5708 = vperm.slane %v2920, %v5274
    %v5709 = vperm.slane %v2921, %v5276
    %v5710 = vsel %vm5278, %v5709, %v5708
    %v5711 = vperm.slane %v2922, %v5280
    %v5712 = vsel %vm5282, %v5711, %v5710
    %v5713 = vperm.slane %v2923, %v5284
    %v5714 = vsel %vm5286, %v5713, %v5712
    %v5715 = vperm.slane %v2924, %v5288
    %v5716 = vsel %vm5290, %v5715, %v5714
    %v5717 = vperm.slane %v2925, %v5292
    %v5718 = vsel %vm5294, %v5717, %v5716
    %v5719 = vperm.slane %v2926, %v5296
    %v5720 = vsel %vm5298, %v5719, %v5718
    %v5721 = vperm.slane %v2927, %v5300
    %v5722 = vsel %vm5302, %v5721, %v5720
    %v5723 = vperm.slane %v2928, %v5304
    %v5724 = vsel %vm5306, %v5723, %v5722
    %v5725 = vperm.slane %v2929, %v5308
    %v5726 = vsel %vm5310, %v5725, %v5724
    %v5727 = vperm.slane %v2930, %v5312
    %v5728 = vsel %vm5314, %v5727, %v5726
    %v5729 = vperm.slane %v2931, %v5316
    %v5730 = vsel %vm5318, %v5729, %v5728
    %v5731 = vperm.slane %v2932, %v5320
    %v5732 = vsel %vm5322, %v5731, %v5730
    %v5733 = vperm.slane %v2933, %v5324
    %v5734 = vsel %vm5326, %v5733, %v5732
    %v5735 = vperm.slane %v2934, %v5328
    %v5736 = vsel %vm5330, %v5735, %v5734
    %v5737 = vperm.slane %v2935, %v5332
    %v5738 = vsel %vm5334, %v5737, %v5736
    %v5739 = vperm.slane %v2936, %v5274
    %v5740 = vperm.slane %v2937, %v5276
    %v5741 = vsel %vm5278, %v5740, %v5739
    %v5742 = vperm.slane %v2938, %v5280
    %v5743 = vsel %vm5282, %v5742, %v5741
    %v5744 = vperm.slane %v2939, %v5284
    %v5745 = vsel %vm5286, %v5744, %v5743
    %v5746 = vperm.slane %v2940, %v5288
    %v5747 = vsel %vm5290, %v5746, %v5745
    %v5748 = vperm.slane %v2941, %v5292
    %v5749 = vsel %vm5294, %v5748, %v5747
    %v5750 = vperm.slane %v2942, %v5296
    %v5751 = vsel %vm5298, %v5750, %v5749
    %v5752 = vperm.slane %v2943, %v5300
    %v5753 = vsel %vm5302, %v5752, %v5751
    %v5754 = vperm.slane %v2944, %v5304
    %v5755 = vsel %vm5306, %v5754, %v5753
    %v5756 = vperm.slane %v2945, %v5308
    %v5757 = vsel %vm5310, %v5756, %v5755
    %v5758 = vperm.slane %v2946, %v5312
    %v5759 = vsel %vm5314, %v5758, %v5757
    %v5760 = vperm.slane %v2947, %v5316
    %v5761 = vsel %vm5318, %v5760, %v5759
    %v5762 = vperm.slane %v2948, %v5320
    %v5763 = vsel %vm5322, %v5762, %v5761
    %v5764 = vperm.slane %v2949, %v5324
    %v5765 = vsel %vm5326, %v5764, %v5763
    %v5766 = vperm.slane %v2950, %v5328
    %v5767 = vsel %vm5330, %v5766, %v5765
    %v5768 = vperm.slane %v2951, %v5332
    %v5769 = vsel %vm5334, %v5768, %v5767
    %v5770 = vperm.slane %v2952, %v5274
    %v5771 = vperm.slane %v2953, %v5276
    %v5772 = vsel %vm5278, %v5771, %v5770
    %v5773 = vperm.slane %v2954, %v5280
    %v5774 = vsel %vm5282, %v5773, %v5772
    %v5775 = vperm.slane %v2955, %v5284
    %v5776 = vsel %vm5286, %v5775, %v5774
    %v5777 = vperm.slane %v2956, %v5288
    %v5778 = vsel %vm5290, %v5777, %v5776
    %v5779 = vperm.slane %v2957, %v5292
    %v5780 = vsel %vm5294, %v5779, %v5778
    %v5781 = vperm.slane %v2958, %v5296
    %v5782 = vsel %vm5298, %v5781, %v5780
    %v5783 = vperm.slane %v2959, %v5300
    %v5784 = vsel %vm5302, %v5783, %v5782
    %v5785 = vperm.slane %v2960, %v5304
    %v5786 = vsel %vm5306, %v5785, %v5784
    %v5787 = vperm.slane %v2961, %v5308
    %v5788 = vsel %vm5310, %v5787, %v5786
    %v5789 = vperm.slane %v2962, %v5312
    %v5790 = vsel %vm5314, %v5789, %v5788
    %v5791 = vperm.slane %v2963, %v5316
    %v5792 = vsel %vm5318, %v5791, %v5790
    %v5793 = vperm.slane %v2964, %v5320
    %v5794 = vsel %vm5322, %v5793, %v5792
    %v5795 = vperm.slane %v2965, %v5324
    %v5796 = vsel %vm5326, %v5795, %v5794
    %v5797 = vperm.slane %v2966, %v5328
    %v5798 = vsel %vm5330, %v5797, %v5796
    %v5799 = vperm.slane %v2967, %v5332
    %v5800 = vsel %vm5334, %v5799, %v5798
    %v5801 = vperm.slane %v2968, %v5274
    %v5802 = vperm.slane %v2969, %v5276
    %v5803 = vsel %vm5278, %v5802, %v5801
    %v5804 = vperm.slane %v2970, %v5280
    %v5805 = vsel %vm5282, %v5804, %v5803
    %v5806 = vperm.slane %v2971, %v5284
    %v5807 = vsel %vm5286, %v5806, %v5805
    %v5808 = vperm.slane %v2972, %v5288
    %v5809 = vsel %vm5290, %v5808, %v5807
    %v5810 = vperm.slane %v2973, %v5292
    %v5811 = vsel %vm5294, %v5810, %v5809
    %v5812 = vperm.slane %v2974, %v5296
    %v5813 = vsel %vm5298, %v5812, %v5811
    %v5814 = vperm.slane %v2975, %v5300
    %v5815 = vsel %vm5302, %v5814, %v5813
    %v5816 = vperm.slane %v2976, %v5304
    %v5817 = vsel %vm5306, %v5816, %v5815
    %v5818 = vperm.slane %v2977, %v5308
    %v5819 = vsel %vm5310, %v5818, %v5817
    %v5820 = vperm.slane %v2978, %v5312
    %v5821 = vsel %vm5314, %v5820, %v5819
    %v5822 = vperm.slane %v2979, %v5316
    %v5823 = vsel %vm5318, %v5822, %v5821
    %v5824 = vperm.slane %v2980, %v5320
    %v5825 = vsel %vm5322, %v5824, %v5823
    %v5826 = vperm.slane %v2981, %v5324
    %v5827 = vsel %vm5326, %v5826, %v5825
    %v5828 = vperm.slane %v2982, %v5328
    %v5829 = vsel %vm5330, %v5828, %v5827
    %v5830 = vperm.slane %v2983, %v5332
    %v5831 = vsel %vm5334, %v5830, %v5829
    %v5832 = vperm.slane %v2984, %v5274
    %v5833 = vperm.slane %v2985, %v5276
    %v5834 = vsel %vm5278, %v5833, %v5832
    %v5835 = vperm.slane %v2986, %v5280
    %v5836 = vsel %vm5282, %v5835, %v5834
    %v5837 = vperm.slane %v2987, %v5284
    %v5838 = vsel %vm5286, %v5837, %v5836
    %v5839 = vperm.slane %v2988, %v5288
    %v5840 = vsel %vm5290, %v5839, %v5838
    %v5841 = vperm.slane %v2989, %v5292
    %v5842 = vsel %vm5294, %v5841, %v5840
    %v5843 = vperm.slane %v2990, %v5296
    %v5844 = vsel %vm5298, %v5843, %v5842
    %v5845 = vperm.slane %v2991, %v5300
    %v5846 = vsel %vm5302, %v5845, %v5844
    %v5847 = vperm.slane %v2992, %v5304
    %v5848 = vsel %vm5306, %v5847, %v5846
    %v5849 = vperm.slane %v2993, %v5308
    %v5850 = vsel %vm5310, %v5849, %v5848
    %v5851 = vperm.slane %v2994, %v5312
    %v5852 = vsel %vm5314, %v5851, %v5850
    %v5853 = vperm.slane %v2995, %v5316
    %v5854 = vsel %vm5318, %v5853, %v5852
    %v5855 = vperm.slane %v2996, %v5320
    %v5856 = vsel %vm5322, %v5855, %v5854
    %v5857 = vperm.slane %v2997, %v5324
    %v5858 = vsel %vm5326, %v5857, %v5856
    %v5859 = vperm.slane %v2998, %v5328
    %v5860 = vsel %vm5330, %v5859, %v5858
    %v5861 = vperm.slane %v2999, %v5332
    %v5862 = vsel %vm5334, %v5861, %v5860
    %v5863 = vperm.slane %v3000, %v5274
    %v5864 = vperm.slane %v3001, %v5276
    %v5865 = vsel %vm5278, %v5864, %v5863
    %v5866 = vperm.slane %v3002, %v5280
    %v5867 = vsel %vm5282, %v5866, %v5865
    %v5868 = vperm.slane %v3003, %v5284
    %v5869 = vsel %vm5286, %v5868, %v5867
    %v5870 = vperm.slane %v3004, %v5288
    %v5871 = vsel %vm5290, %v5870, %v5869
    %v5872 = vperm.slane %v3005, %v5292
    %v5873 = vsel %vm5294, %v5872, %v5871
    %v5874 = vperm.slane %v3006, %v5296
    %v5875 = vsel %vm5298, %v5874, %v5873
    %v5876 = vperm.slane %v3007, %v5300
    %v5877 = vsel %vm5302, %v5876, %v5875
    %v5878 = vperm.slane %v3008, %v5304
    %v5879 = vsel %vm5306, %v5878, %v5877
    %v5880 = vperm.slane %v3009, %v5308
    %v5881 = vsel %vm5310, %v5880, %v5879
    %v5882 = vperm.slane %v3010, %v5312
    %v5883 = vsel %vm5314, %v5882, %v5881
    %v5884 = vperm.slane %v3011, %v5316
    %v5885 = vsel %vm5318, %v5884, %v5883
    %v5886 = vperm.slane %v3012, %v5320
    %v5887 = vsel %vm5322, %v5886, %v5885
    %v5888 = vperm.slane %v3013, %v5324
    %v5889 = vsel %vm5326, %v5888, %v5887
    %v5890 = vperm.slane %v3014, %v5328
    %v5891 = vsel %vm5330, %v5890, %v5889
    %v5892 = vperm.slane %v3015, %v5332
    %v5893 = vsel %vm5334, %v5892, %v5891
    %v5894 = vperm.slane %v3016, %v5274
    %v5895 = vperm.slane %v3017, %v5276
    %v5896 = vsel %vm5278, %v5895, %v5894
    %v5897 = vperm.slane %v3018, %v5280
    %v5898 = vsel %vm5282, %v5897, %v5896
    %v5899 = vperm.slane %v3019, %v5284
    %v5900 = vsel %vm5286, %v5899, %v5898
    %v5901 = vperm.slane %v3020, %v5288
    %v5902 = vsel %vm5290, %v5901, %v5900
    %v5903 = vperm.slane %v3021, %v5292
    %v5904 = vsel %vm5294, %v5903, %v5902
    %v5905 = vperm.slane %v3022, %v5296
    %v5906 = vsel %vm5298, %v5905, %v5904
    %v5907 = vperm.slane %v3023, %v5300
    %v5908 = vsel %vm5302, %v5907, %v5906
    %v5909 = vperm.slane %v3024, %v5304
    %v5910 = vsel %vm5306, %v5909, %v5908
    %v5911 = vperm.slane %v3025, %v5308
    %v5912 = vsel %vm5310, %v5911, %v5910
    %v5913 = vperm.slane %v3026, %v5312
    %v5914 = vsel %vm5314, %v5913, %v5912
    %v5915 = vperm.slane %v3027, %v5316
    %v5916 = vsel %vm5318, %v5915, %v5914
    %v5917 = vperm.slane %v3028, %v5320
    %v5918 = vsel %vm5322, %v5917, %v5916
    %v5919 = vperm.slane %v3029, %v5324
    %v5920 = vsel %vm5326, %v5919, %v5918
    %v5921 = vperm.slane %v3030, %v5328
    %v5922 = vsel %vm5330, %v5921, %v5920
    %v5923 = vperm.slane %v3031, %v5332
    %v5924 = vsel %vm5334, %v5923, %v5922
    %v5925 = vperm.slane %v3032, %v5274
    %v5926 = vperm.slane %v3033, %v5276
    %v5927 = vsel %vm5278, %v5926, %v5925
    %v5928 = vperm.slane %v3034, %v5280
    %v5929 = vsel %vm5282, %v5928, %v5927
    %v5930 = vperm.slane %v3035, %v5284
    %v5931 = vsel %vm5286, %v5930, %v5929
    %v5932 = vperm.slane %v3036, %v5288
    %v5933 = vsel %vm5290, %v5932, %v5931
    %v5934 = vperm.slane %v3037, %v5292
    %v5935 = vsel %vm5294, %v5934, %v5933
    %v5936 = vperm.slane %v3038, %v5296
    %v5937 = vsel %vm5298, %v5936, %v5935
    %v5938 = vperm.slane %v3039, %v5300
    %v5939 = vsel %vm5302, %v5938, %v5937
    %v5940 = vperm.slane %v3040, %v5304
    %v5941 = vsel %vm5306, %v5940, %v5939
    %v5942 = vperm.slane %v3041, %v5308
    %v5943 = vsel %vm5310, %v5942, %v5941
    %v5944 = vperm.slane %v3042, %v5312
    %v5945 = vsel %vm5314, %v5944, %v5943
    %v5946 = vperm.slane %v3043, %v5316
    %v5947 = vsel %vm5318, %v5946, %v5945
    %v5948 = vperm.slane %v3044, %v5320
    %v5949 = vsel %vm5322, %v5948, %v5947
    %v5950 = vperm.slane %v3045, %v5324
    %v5951 = vsel %vm5326, %v5950, %v5949
    %v5952 = vperm.slane %v3046, %v5328
    %v5953 = vsel %vm5330, %v5952, %v5951
    %v5954 = vperm.slane %v3047, %v5332
    %v5955 = vsel %vm5334, %v5954, %v5953
    %v5956 = vperm.slane %v3048, %v5274
    %v5957 = vperm.slane %v3049, %v5276
    %v5958 = vsel %vm5278, %v5957, %v5956
    %v5959 = vperm.slane %v3050, %v5280
    %v5960 = vsel %vm5282, %v5959, %v5958
    %v5961 = vperm.slane %v3051, %v5284
    %v5962 = vsel %vm5286, %v5961, %v5960
    %v5963 = vperm.slane %v3052, %v5288
    %v5964 = vsel %vm5290, %v5963, %v5962
    %v5965 = vperm.slane %v3053, %v5292
    %v5966 = vsel %vm5294, %v5965, %v5964
    %v5967 = vperm.slane %v3054, %v5296
    %v5968 = vsel %vm5298, %v5967, %v5966
    %v5969 = vperm.slane %v3055, %v5300
    %v5970 = vsel %vm5302, %v5969, %v5968
    %v5971 = vperm.slane %v3056, %v5304
    %v5972 = vsel %vm5306, %v5971, %v5970
    %v5973 = vperm.slane %v3057, %v5308
    %v5974 = vsel %vm5310, %v5973, %v5972
    %v5975 = vperm.slane %v3058, %v5312
    %v5976 = vsel %vm5314, %v5975, %v5974
    %v5977 = vperm.slane %v3059, %v5316
    %v5978 = vsel %vm5318, %v5977, %v5976
    %v5979 = vperm.slane %v3060, %v5320
    %v5980 = vsel %vm5322, %v5979, %v5978
    %v5981 = vperm.slane %v3061, %v5324
    %v5982 = vsel %vm5326, %v5981, %v5980
    %v5983 = vperm.slane %v3062, %v5328
    %v5984 = vsel %vm5330, %v5983, %v5982
    %v5985 = vperm.slane %v3063, %v5332
    %v5986 = vsel %vm5334, %v5985, %v5984
    %v5987 = vperm.slane %v3064, %v5274
    %v5988 = vperm.slane %v3065, %v5276
    %v5989 = vsel %vm5278, %v5988, %v5987
    %v5990 = vperm.slane %v3066, %v5280
    %v5991 = vsel %vm5282, %v5990, %v5989
    %v5992 = vperm.slane %v3067, %v5284
    %v5993 = vsel %vm5286, %v5992, %v5991
    %v5994 = vperm.slane %v3068, %v5288
    %v5995 = vsel %vm5290, %v5994, %v5993
    %v5996 = vperm.slane %v3069, %v5292
    %v5997 = vsel %vm5294, %v5996, %v5995
    %v5998 = vperm.slane %v3070, %v5296
    %v5999 = vsel %vm5298, %v5998, %v5997
    %v6000 = vperm.slane %v3071, %v5300
    %v6001 = vsel %vm5302, %v6000, %v5999
    %v6002 = vperm.slane %v3072, %v5304
    %v6003 = vsel %vm5306, %v6002, %v6001
    %v6004 = vperm.slane %v3073, %v5308
    %v6005 = vsel %vm5310, %v6004, %v6003
    %v6006 = vperm.slane %v3074, %v5312
    %v6007 = vsel %vm5314, %v6006, %v6005
    %v6008 = vperm.slane %v3075, %v5316
    %v6009 = vsel %vm5318, %v6008, %v6007
    %v6010 = vperm.slane %v3076, %v5320
    %v6011 = vsel %vm5322, %v6010, %v6009
    %v6012 = vperm.slane %v3077, %v5324
    %v6013 = vsel %vm5326, %v6012, %v6011
    %v6014 = vperm.slane %v3078, %v5328
    %v6015 = vsel %vm5330, %v6014, %v6013
    %v6016 = vperm.slane %v3079, %v5332
    %v6017 = vsel %vm5334, %v6016, %v6015
    %v6018 = vperm.slane %v3080, %v5274
    %v6019 = vperm.slane %v3081, %v5276
    %v6020 = vsel %vm5278, %v6019, %v6018
    %v6021 = vperm.slane %v3082, %v5280
    %v6022 = vsel %vm5282, %v6021, %v6020
    %v6023 = vperm.slane %v3083, %v5284
    %v6024 = vsel %vm5286, %v6023, %v6022
    %v6025 = vperm.slane %v3084, %v5288
    %v6026 = vsel %vm5290, %v6025, %v6024
    %v6027 = vperm.slane %v3085, %v5292
    %v6028 = vsel %vm5294, %v6027, %v6026
    %v6029 = vperm.slane %v3086, %v5296
    %v6030 = vsel %vm5298, %v6029, %v6028
    %v6031 = vperm.slane %v3087, %v5300
    %v6032 = vsel %vm5302, %v6031, %v6030
    %v6033 = vperm.slane %v3088, %v5304
    %v6034 = vsel %vm5306, %v6033, %v6032
    %v6035 = vperm.slane %v3089, %v5308
    %v6036 = vsel %vm5310, %v6035, %v6034
    %v6037 = vperm.slane %v3090, %v5312
    %v6038 = vsel %vm5314, %v6037, %v6036
    %v6039 = vperm.slane %v3091, %v5316
    %v6040 = vsel %vm5318, %v6039, %v6038
    %v6041 = vperm.slane %v3092, %v5320
    %v6042 = vsel %vm5322, %v6041, %v6040
    %v6043 = vperm.slane %v3093, %v5324
    %v6044 = vsel %vm5326, %v6043, %v6042
    %v6045 = vperm.slane %v3094, %v5328
    %v6046 = vsel %vm5330, %v6045, %v6044
    %v6047 = vperm.slane %v3095, %v5332
    %v6048 = vsel %vm5334, %v6047, %v6046
    %v6049 = vperm.slane %v3096, %v5274
    %v6050 = vperm.slane %v3097, %v5276
    %v6051 = vsel %vm5278, %v6050, %v6049
    %v6052 = vperm.slane %v3098, %v5280
    %v6053 = vsel %vm5282, %v6052, %v6051
    %v6054 = vperm.slane %v3099, %v5284
    %v6055 = vsel %vm5286, %v6054, %v6053
    %v6056 = vperm.slane %v3100, %v5288
    %v6057 = vsel %vm5290, %v6056, %v6055
    %v6058 = vperm.slane %v3101, %v5292
    %v6059 = vsel %vm5294, %v6058, %v6057
    %v6060 = vperm.slane %v3102, %v5296
    %v6061 = vsel %vm5298, %v6060, %v6059
    %v6062 = vperm.slane %v3103, %v5300
    %v6063 = vsel %vm5302, %v6062, %v6061
    %v6064 = vperm.slane %v3104, %v5304
    %v6065 = vsel %vm5306, %v6064, %v6063
    %v6066 = vperm.slane %v3105, %v5308
    %v6067 = vsel %vm5310, %v6066, %v6065
    %v6068 = vperm.slane %v3106, %v5312
    %v6069 = vsel %vm5314, %v6068, %v6067
    %v6070 = vperm.slane %v3107, %v5316
    %v6071 = vsel %vm5318, %v6070, %v6069
    %v6072 = vperm.slane %v3108, %v5320
    %v6073 = vsel %vm5322, %v6072, %v6071
    %v6074 = vperm.slane %v3109, %v5324
    %v6075 = vsel %vm5326, %v6074, %v6073
    %v6076 = vperm.slane %v3110, %v5328
    %v6077 = vsel %vm5330, %v6076, %v6075
    %v6078 = vperm.slane %v3111, %v5332
    %v6079 = vsel %vm5334, %v6078, %v6077
    %v6080 = vperm.slane %v3112, %v5274
    %v6081 = vperm.slane %v3113, %v5276
    %v6082 = vsel %vm5278, %v6081, %v6080
    %v6083 = vperm.slane %v3114, %v5280
    %v6084 = vsel %vm5282, %v6083, %v6082
    %v6085 = vperm.slane %v3115, %v5284
    %v6086 = vsel %vm5286, %v6085, %v6084
    %v6087 = vperm.slane %v3116, %v5288
    %v6088 = vsel %vm5290, %v6087, %v6086
    %v6089 = vperm.slane %v3117, %v5292
    %v6090 = vsel %vm5294, %v6089, %v6088
    %v6091 = vperm.slane %v3118, %v5296
    %v6092 = vsel %vm5298, %v6091, %v6090
    %v6093 = vperm.slane %v3119, %v5300
    %v6094 = vsel %vm5302, %v6093, %v6092
    %v6095 = vperm.slane %v3120, %v5304
    %v6096 = vsel %vm5306, %v6095, %v6094
    %v6097 = vperm.slane %v3121, %v5308
    %v6098 = vsel %vm5310, %v6097, %v6096
    %v6099 = vperm.slane %v3122, %v5312
    %v6100 = vsel %vm5314, %v6099, %v6098
    %v6101 = vperm.slane %v3123, %v5316
    %v6102 = vsel %vm5318, %v6101, %v6100
    %v6103 = vperm.slane %v3124, %v5320
    %v6104 = vsel %vm5322, %v6103, %v6102
    %v6105 = vperm.slane %v3125, %v5324
    %v6106 = vsel %vm5326, %v6105, %v6104
    %v6107 = vperm.slane %v3126, %v5328
    %v6108 = vsel %vm5330, %v6107, %v6106
    %v6109 = vperm.slane %v3127, %v5332
    %v6110 = vsel %vm5334, %v6109, %v6108
    %v6111 = vperm.slane %v3128, %v5274
    %v6112 = vperm.slane %v3129, %v5276
    %v6113 = vsel %vm5278, %v6112, %v6111
    %v6114 = vperm.slane %v3130, %v5280
    %v6115 = vsel %vm5282, %v6114, %v6113
    %v6116 = vperm.slane %v3131, %v5284
    %v6117 = vsel %vm5286, %v6116, %v6115
    %v6118 = vperm.slane %v3132, %v5288
    %v6119 = vsel %vm5290, %v6118, %v6117
    %v6120 = vperm.slane %v3133, %v5292
    %v6121 = vsel %vm5294, %v6120, %v6119
    %v6122 = vperm.slane %v3134, %v5296
    %v6123 = vsel %vm5298, %v6122, %v6121
    %v6124 = vperm.slane %v3135, %v5300
    %v6125 = vsel %vm5302, %v6124, %v6123
    %v6126 = vperm.slane %v3136, %v5304
    %v6127 = vsel %vm5306, %v6126, %v6125
    %v6128 = vperm.slane %v3137, %v5308
    %v6129 = vsel %vm5310, %v6128, %v6127
    %v6130 = vperm.slane %v3138, %v5312
    %v6131 = vsel %vm5314, %v6130, %v6129
    %v6132 = vperm.slane %v3139, %v5316
    %v6133 = vsel %vm5318, %v6132, %v6131
    %v6134 = vperm.slane %v3140, %v5320
    %v6135 = vsel %vm5322, %v6134, %v6133
    %v6136 = vperm.slane %v3141, %v5324
    %v6137 = vsel %vm5326, %v6136, %v6135
    %v6138 = vperm.slane %v3142, %v5328
    %v6139 = vsel %vm5330, %v6138, %v6137
    %v6140 = vperm.slane %v3143, %v5332
    %v6141 = vsel %vm5334, %v6140, %v6139
    %v6142 = vperm.slane %v3144, %v5274
    %v6143 = vperm.slane %v3145, %v5276
    %v6144 = vsel %vm5278, %v6143, %v6142
    %v6145 = vperm.slane %v3146, %v5280
    %v6146 = vsel %vm5282, %v6145, %v6144
    %v6147 = vperm.slane %v3147, %v5284
    %v6148 = vsel %vm5286, %v6147, %v6146
    %v6149 = vperm.slane %v3148, %v5288
    %v6150 = vsel %vm5290, %v6149, %v6148
    %v6151 = vperm.slane %v3149, %v5292
    %v6152 = vsel %vm5294, %v6151, %v6150
    %v6153 = vperm.slane %v3150, %v5296
    %v6154 = vsel %vm5298, %v6153, %v6152
    %v6155 = vperm.slane %v3151, %v5300
    %v6156 = vsel %vm5302, %v6155, %v6154
    %v6157 = vperm.slane %v3152, %v5304
    %v6158 = vsel %vm5306, %v6157, %v6156
    %v6159 = vperm.slane %v3153, %v5308
    %v6160 = vsel %vm5310, %v6159, %v6158
    %v6161 = vperm.slane %v3154, %v5312
    %v6162 = vsel %vm5314, %v6161, %v6160
    %v6163 = vperm.slane %v3155, %v5316
    %v6164 = vsel %vm5318, %v6163, %v6162
    %v6165 = vperm.slane %v3156, %v5320
    %v6166 = vsel %vm5322, %v6165, %v6164
    %v6167 = vperm.slane %v3157, %v5324
    %v6168 = vsel %vm5326, %v6167, %v6166
    %v6169 = vperm.slane %v3158, %v5328
    %v6170 = vsel %vm5330, %v6169, %v6168
    %v6171 = vperm.slane %v3159, %v5332
    %v6172 = vsel %vm5334, %v6171, %v6170
    %v6173 = vperm.slane %v3160, %v5274
    %v6174 = vperm.slane %v3161, %v5276
    %v6175 = vsel %vm5278, %v6174, %v6173
    %v6176 = vperm.slane %v3162, %v5280
    %v6177 = vsel %vm5282, %v6176, %v6175
    %v6178 = vperm.slane %v3163, %v5284
    %v6179 = vsel %vm5286, %v6178, %v6177
    %v6180 = vperm.slane %v3164, %v5288
    %v6181 = vsel %vm5290, %v6180, %v6179
    %v6182 = vperm.slane %v3165, %v5292
    %v6183 = vsel %vm5294, %v6182, %v6181
    %v6184 = vperm.slane %v3166, %v5296
    %v6185 = vsel %vm5298, %v6184, %v6183
    %v6186 = vperm.slane %v3167, %v5300
    %v6187 = vsel %vm5302, %v6186, %v6185
    %v6188 = vperm.slane %v3168, %v5304
    %v6189 = vsel %vm5306, %v6188, %v6187
    %v6190 = vperm.slane %v3169, %v5308
    %v6191 = vsel %vm5310, %v6190, %v6189
    %v6192 = vperm.slane %v3170, %v5312
    %v6193 = vsel %vm5314, %v6192, %v6191
    %v6194 = vperm.slane %v3171, %v5316
    %v6195 = vsel %vm5318, %v6194, %v6193
    %v6196 = vperm.slane %v3172, %v5320
    %v6197 = vsel %vm5322, %v6196, %v6195
    %v6198 = vperm.slane %v3173, %v5324
    %v6199 = vsel %vm5326, %v6198, %v6197
    %v6200 = vperm.slane %v3174, %v5328
    %v6201 = vsel %vm5330, %v6200, %v6199
    %v6202 = vperm.slane %v3175, %v5332
    %v6203 = vsel %vm5334, %v6202, %v6201
    %v6204 = vperm.slane %v3176, %v5274
    %v6205 = vperm.slane %v3177, %v5276
    %v6206 = vsel %vm5278, %v6205, %v6204
    %v6207 = vperm.slane %v3178, %v5280
    %v6208 = vsel %vm5282, %v6207, %v6206
    %v6209 = vperm.slane %v3179, %v5284
    %v6210 = vsel %vm5286, %v6209, %v6208
    %v6211 = vperm.slane %v3180, %v5288
    %v6212 = vsel %vm5290, %v6211, %v6210
    %v6213 = vperm.slane %v3181, %v5292
    %v6214 = vsel %vm5294, %v6213, %v6212
    %v6215 = vperm.slane %v3182, %v5296
    %v6216 = vsel %vm5298, %v6215, %v6214
    %v6217 = vperm.slane %v3183, %v5300
    %v6218 = vsel %vm5302, %v6217, %v6216
    %v6219 = vperm.slane %v3184, %v5304
    %v6220 = vsel %vm5306, %v6219, %v6218
    %v6221 = vperm.slane %v3185, %v5308
    %v6222 = vsel %vm5310, %v6221, %v6220
    %v6223 = vperm.slane %v3186, %v5312
    %v6224 = vsel %vm5314, %v6223, %v6222
    %v6225 = vperm.slane %v3187, %v5316
    %v6226 = vsel %vm5318, %v6225, %v6224
    %v6227 = vperm.slane %v3188, %v5320
    %v6228 = vsel %vm5322, %v6227, %v6226
    %v6229 = vperm.slane %v3189, %v5324
    %v6230 = vsel %vm5326, %v6229, %v6228
    %v6231 = vperm.slane %v3190, %v5328
    %v6232 = vsel %vm5330, %v6231, %v6230
    %v6233 = vperm.slane %v3191, %v5332
    %v6234 = vsel %vm5334, %v6233, %v6232
    %v6235 = vperm.slane %v3192, %v5274
    %v6236 = vperm.slane %v3193, %v5276
    %v6237 = vsel %vm5278, %v6236, %v6235
    %v6238 = vperm.slane %v3194, %v5280
    %v6239 = vsel %vm5282, %v6238, %v6237
    %v6240 = vperm.slane %v3195, %v5284
    %v6241 = vsel %vm5286, %v6240, %v6239
    %v6242 = vperm.slane %v3196, %v5288
    %v6243 = vsel %vm5290, %v6242, %v6241
    %v6244 = vperm.slane %v3197, %v5292
    %v6245 = vsel %vm5294, %v6244, %v6243
    %v6246 = vperm.slane %v3198, %v5296
    %v6247 = vsel %vm5298, %v6246, %v6245
    %v6248 = vperm.slane %v3199, %v5300
    %v6249 = vsel %vm5302, %v6248, %v6247
    %v6250 = vperm.slane %v3200, %v5304
    %v6251 = vsel %vm5306, %v6250, %v6249
    %v6252 = vperm.slane %v3201, %v5308
    %v6253 = vsel %vm5310, %v6252, %v6251
    %v6254 = vperm.slane %v3202, %v5312
    %v6255 = vsel %vm5314, %v6254, %v6253
    %v6256 = vperm.slane %v3203, %v5316
    %v6257 = vsel %vm5318, %v6256, %v6255
    %v6258 = vperm.slane %v3204, %v5320
    %v6259 = vsel %vm5322, %v6258, %v6257
    %v6260 = vperm.slane %v3205, %v5324
    %v6261 = vsel %vm5326, %v6260, %v6259
    %v6262 = vperm.slane %v3206, %v5328
    %v6263 = vsel %vm5330, %v6262, %v6261
    %v6264 = vperm.slane %v3207, %v5332
    %v6265 = vsel %vm5334, %v6264, %v6263
    %v6266 = vperm.slane %v3208, %v5274
    %v6267 = vperm.slane %v3209, %v5276
    %v6268 = vsel %vm5278, %v6267, %v6266
    %v6269 = vperm.slane %v3210, %v5280
    %v6270 = vsel %vm5282, %v6269, %v6268
    %v6271 = vperm.slane %v3211, %v5284
    %v6272 = vsel %vm5286, %v6271, %v6270
    %v6273 = vperm.slane %v3212, %v5288
    %v6274 = vsel %vm5290, %v6273, %v6272
    %v6275 = vperm.slane %v3213, %v5292
    %v6276 = vsel %vm5294, %v6275, %v6274
    %v6277 = vperm.slane %v3214, %v5296
    %v6278 = vsel %vm5298, %v6277, %v6276
    %v6279 = vperm.slane %v3215, %v5300
    %v6280 = vsel %vm5302, %v6279, %v6278
    %v6281 = vperm.slane %v3216, %v5304
    %v6282 = vsel %vm5306, %v6281, %v6280
    %v6283 = vperm.slane %v3217, %v5308
    %v6284 = vsel %vm5310, %v6283, %v6282
    %v6285 = vperm.slane %v3218, %v5312
    %v6286 = vsel %vm5314, %v6285, %v6284
    %v6287 = vperm.slane %v3219, %v5316
    %v6288 = vsel %vm5318, %v6287, %v6286
    %v6289 = vperm.slane %v3220, %v5320
    %v6290 = vsel %vm5322, %v6289, %v6288
    %v6291 = vperm.slane %v3221, %v5324
    %v6292 = vsel %vm5326, %v6291, %v6290
    %v6293 = vperm.slane %v3222, %v5328
    %v6294 = vsel %vm5330, %v6293, %v6292
    %v6295 = vperm.slane %v3223, %v5332
    %v6296 = vsel %vm5334, %v6295, %v6294
    %vm6297 = vcmask 1041409
    %v6298 = vsel %vm6297, %v5831, %v5335
    %v6299 = vsel %vm6297, %v5862, %v5366
    %v6300 = vsel %vm6297, %v5893, %v5397
    %v6301 = vsel %vm6297, %v5924, %v5428
    %v6302 = vsel %vm6297, %v5955, %v5459
    %v6303 = vsel %vm6297, %v5986, %v5490
    %v6304 = vsel %vm6297, %v6017, %v5521
    %v6305 = vsel %vm6297, %v6048, %v5552
    %v6306 = vsel %vm6297, %v6079, %v5583
    %v6307 = vsel %vm6297, %v6110, %v5614
    %v6308 = vsel %vm6297, %v6141, %v5645
    %v6309 = vsel %vm6297, %v6172, %v5676
    %v6310 = vsel %vm6297, %v6203, %v5707
    %v6311 = vsel %vm6297, %v6234, %v5738
    %v6312 = vsel %vm6297, %v6265, %v5769
    %v6313 = vsel %vm6297, %v6296, %v5800
    %6330 = vmatpush.msra.mxu0 %v3797
    %6331 = vmatpush.msra.mxu0 %v3793
    %6332 = vmatpush.msra.mxu0 %v3789
    %6333 = vmatpush.msra.mxu0 %v3785
    %6334 = vmatpush.msra.mxu0 %v3781
    %6335 = vmatpush.msra.mxu0 %v3777
    %6336 = vmatpush.msra.mxu0 %v3773
    %6337 = vmatpush.msra.mxu0 %v3769
    %6338 = vmatpush.msra.mxu0 %v3765
    %6339 = vmatpush.msra.mxu0 %v3761
    %6340 = vmatpush.msra.mxu0 %v3757
    %6341 = vmatpush.msra.mxu0 %v3753
    %6342 = vmatpush.msra.mxu0 %v3749
    %6343 = vmatpush.msra.mxu0 %v3745
    %6344 = vmatpush.msra.mxu0 %v3741
    %6345 = vmatpush.msra.mxu0 %v3737
    %6346 = vmatmul.f32.gmra.mxu0 %v6298
    %v6347 = vpop.f32.mrf.mxu0
    %v6348 = vadd.f32 0.0, %v6347
    %6349 = vdwg.mxu0
    %6350 = vmatpush.msra.mxu0 %v3861
    %6351 = vmatpush.msra.mxu0 %v3857
    %6352 = vmatpush.msra.mxu0 %v3853
    %6353 = vmatpush.msra.mxu0 %v3849
    %6354 = vmatpush.msra.mxu0 %v3845
    %6355 = vmatpush.msra.mxu0 %v3841
    %6356 = vmatpush.msra.mxu0 %v3837
    %6357 = vmatpush.msra.mxu0 %v3833
    %6358 = vmatpush.msra.mxu0 %v3829
    %6359 = vmatpush.msra.mxu0 %v3825
    %6360 = vmatpush.msra.mxu0 %v3821
    %6361 = vmatpush.msra.mxu0 %v3817
    %6362 = vmatpush.msra.mxu0 %v3813
    %6363 = vmatpush.msra.mxu0 %v3809
    %6364 = vmatpush.msra.mxu0 %v3805
    %6365 = vmatpush.msra.mxu0 %v3801
    %6366 = vmatmul.f32.gmra.mxu0 %v6299
    %v6367 = vpop.f32.mrf.mxu0
    %v6368 = vadd.f32 %v6348, %v6367
    %6369 = vdwg.mxu0
    %6370 = vmatpush.msra.mxu0 %v3925
    %6371 = vmatpush.msra.mxu0 %v3921
    %6372 = vmatpush.msra.mxu0 %v3917
    %6373 = vmatpush.msra.mxu0 %v3913
    %6374 = vmatpush.msra.mxu0 %v3909
    %6375 = vmatpush.msra.mxu0 %v3905
    %6376 = vmatpush.msra.mxu0 %v3901
    %6377 = vmatpush.msra.mxu0 %v3897
    %6378 = vmatpush.msra.mxu0 %v3893
    %6379 = vmatpush.msra.mxu0 %v3889
    %6380 = vmatpush.msra.mxu0 %v3885
    %6381 = vmatpush.msra.mxu0 %v3881
    %6382 = vmatpush.msra.mxu0 %v3877
    %6383 = vmatpush.msra.mxu0 %v3873
    %6384 = vmatpush.msra.mxu0 %v3869
    %6385 = vmatpush.msra.mxu0 %v3865
    %6386 = vmatmul.f32.gmra.mxu0 %v6300
    %v6387 = vpop.f32.mrf.mxu0
    %v6388 = vadd.f32 %v6368, %v6387
    %6389 = vdwg.mxu0
    %6390 = vmatpush.msra.mxu0 %v3989
    %6391 = vmatpush.msra.mxu0 %v3985
    %6392 = vmatpush.msra.mxu0 %v3981
    %6393 = vmatpush.msra.mxu0 %v3977
    %6394 = vmatpush.msra.mxu0 %v3973
    %6395 = vmatpush.msra.mxu0 %v3969
    %6396 = vmatpush.msra.mxu0 %v3965
    %6397 = vmatpush.msra.mxu0 %v3961
    %6398 = vmatpush.msra.mxu0 %v3957
    %6399 = vmatpush.msra.mxu0 %v3953
    %6400 = vmatpush.msra.mxu0 %v3949
    %6401 = vmatpush.msra.mxu0 %v3945
    %6402 = vmatpush.msra.mxu0 %v3941
    %6403 = vmatpush.msra.mxu0 %v3937
    %6404 = vmatpush.msra.mxu0 %v3933
    %6405 = vmatpush.msra.mxu0 %v3929
    %6406 = vmatmul.f32.gmra.mxu0 %v6301
    %v6407 = vpop.f32.mrf.mxu0
    %v6408 = vadd.f32 %v6388, %v6407
    %6409 = vdwg.mxu0
    %6410 = vmatpush.msra.mxu0 %v4053
    %6411 = vmatpush.msra.mxu0 %v4049
    %6412 = vmatpush.msra.mxu0 %v4045
    %6413 = vmatpush.msra.mxu0 %v4041
    %6414 = vmatpush.msra.mxu0 %v4037
    %6415 = vmatpush.msra.mxu0 %v4033
    %6416 = vmatpush.msra.mxu0 %v4029
    %6417 = vmatpush.msra.mxu0 %v4025
    %6418 = vmatpush.msra.mxu0 %v4021
    %6419 = vmatpush.msra.mxu0 %v4017
    %6420 = vmatpush.msra.mxu0 %v4013
    %6421 = vmatpush.msra.mxu0 %v4009
    %6422 = vmatpush.msra.mxu0 %v4005
    %6423 = vmatpush.msra.mxu0 %v4001
    %6424 = vmatpush.msra.mxu0 %v3997
    %6425 = vmatpush.msra.mxu0 %v3993
    %6426 = vmatmul.f32.gmra.mxu0 %v6302
    %v6427 = vpop.f32.mrf.mxu0
    %v6428 = vadd.f32 %v6408, %v6427
    %6429 = vdwg.mxu0
    %6430 = vmatpush.msra.mxu0 %v4117
    %6431 = vmatpush.msra.mxu0 %v4113
    %6432 = vmatpush.msra.mxu0 %v4109
    %6433 = vmatpush.msra.mxu0 %v4105
    %6434 = vmatpush.msra.mxu0 %v4101
    %6435 = vmatpush.msra.mxu0 %v4097
    %6436 = vmatpush.msra.mxu0 %v4093
    %6437 = vmatpush.msra.mxu0 %v4089
    %6438 = vmatpush.msra.mxu0 %v4085
    %6439 = vmatpush.msra.mxu0 %v4081
    %6440 = vmatpush.msra.mxu0 %v4077
    %6441 = vmatpush.msra.mxu0 %v4073
    %6442 = vmatpush.msra.mxu0 %v4069
    %6443 = vmatpush.msra.mxu0 %v4065
    %6444 = vmatpush.msra.mxu0 %v4061
    %6445 = vmatpush.msra.mxu0 %v4057
    %6446 = vmatmul.f32.gmra.mxu0 %v6303
    %v6447 = vpop.f32.mrf.mxu0
    %v6448 = vadd.f32 %v6428, %v6447
    %6449 = vdwg.mxu0
    %6450 = vmatpush.msra.mxu0 %v4181
    %6451 = vmatpush.msra.mxu0 %v4177
    %6452 = vmatpush.msra.mxu0 %v4173
    %6453 = vmatpush.msra.mxu0 %v4169
    %6454 = vmatpush.msra.mxu0 %v4165
    %6455 = vmatpush.msra.mxu0 %v4161
    %6456 = vmatpush.msra.mxu0 %v4157
    %6457 = vmatpush.msra.mxu0 %v4153
    %6458 = vmatpush.msra.mxu0 %v4149
    %6459 = vmatpush.msra.mxu0 %v4145
    %6460 = vmatpush.msra.mxu0 %v4141
    %6461 = vmatpush.msra.mxu0 %v4137
    %6462 = vmatpush.msra.mxu0 %v4133
    %6463 = vmatpush.msra.mxu0 %v4129
    %6464 = vmatpush.msra.mxu0 %v4125
    %6465 = vmatpush.msra.mxu0 %v4121
    %6466 = vmatmul.f32.gmra.mxu0 %v6304
    %v6467 = vpop.f32.mrf.mxu0
    %v6468 = vadd.f32 %v6448, %v6467
    %6469 = vdwg.mxu0
    %6470 = vmatpush.msra.mxu0 %v4245
    %6471 = vmatpush.msra.mxu0 %v4241
    %6472 = vmatpush.msra.mxu0 %v4237
    %6473 = vmatpush.msra.mxu0 %v4233
    %6474 = vmatpush.msra.mxu0 %v4229
    %6475 = vmatpush.msra.mxu0 %v4225
    %6476 = vmatpush.msra.mxu0 %v4221
    %6477 = vmatpush.msra.mxu0 %v4217
    %6478 = vmatpush.msra.mxu0 %v4213
    %6479 = vmatpush.msra.mxu0 %v4209
    %6480 = vmatpush.msra.mxu0 %v4205
    %6481 = vmatpush.msra.mxu0 %v4201
    %6482 = vmatpush.msra.mxu0 %v4197
    %6483 = vmatpush.msra.mxu0 %v4193
    %6484 = vmatpush.msra.mxu0 %v4189
    %6485 = vmatpush.msra.mxu0 %v4185
    %6486 = vmatmul.f32.gmra.mxu0 %v6305
    %v6487 = vpop.f32.mrf.mxu0
    %v6488 = vadd.f32 %v6468, %v6487
    %6489 = vdwg.mxu0
    %6490 = vmatpush.msra.mxu0 %v4309
    %6491 = vmatpush.msra.mxu0 %v4305
    %6492 = vmatpush.msra.mxu0 %v4301
    %6493 = vmatpush.msra.mxu0 %v4297
    %6494 = vmatpush.msra.mxu0 %v4293
    %6495 = vmatpush.msra.mxu0 %v4289
    %6496 = vmatpush.msra.mxu0 %v4285
    %6497 = vmatpush.msra.mxu0 %v4281
    %6498 = vmatpush.msra.mxu0 %v4277
    %6499 = vmatpush.msra.mxu0 %v4273
    %6500 = vmatpush.msra.mxu0 %v4269
    %6501 = vmatpush.msra.mxu0 %v4265
    %6502 = vmatpush.msra.mxu0 %v4261
    %6503 = vmatpush.msra.mxu0 %v4257
    %6504 = vmatpush.msra.mxu0 %v4253
    %6505 = vmatpush.msra.mxu0 %v4249
    %6506 = vmatmul.f32.gmra.mxu0 %v6306
    %v6507 = vpop.f32.mrf.mxu0
    %v6508 = vadd.f32 %v6488, %v6507
    %6509 = vdwg.mxu0
    %6510 = vmatpush.msra.mxu0 %v4373
    %6511 = vmatpush.msra.mxu0 %v4369
    %6512 = vmatpush.msra.mxu0 %v4365
    %6513 = vmatpush.msra.mxu0 %v4361
    %6514 = vmatpush.msra.mxu0 %v4357
    %6515 = vmatpush.msra.mxu0 %v4353
    %6516 = vmatpush.msra.mxu0 %v4349
    %6517 = vmatpush.msra.mxu0 %v4345
    %6518 = vmatpush.msra.mxu0 %v4341
    %6519 = vmatpush.msra.mxu0 %v4337
    %6520 = vmatpush.msra.mxu0 %v4333
    %6521 = vmatpush.msra.mxu0 %v4329
    %6522 = vmatpush.msra.mxu0 %v4325
    %6523 = vmatpush.msra.mxu0 %v4321
    %6524 = vmatpush.msra.mxu0 %v4317
    %6525 = vmatpush.msra.mxu0 %v4313
    %6526 = vmatmul.f32.gmra.mxu0 %v6307
    %v6527 = vpop.f32.mrf.mxu0
    %v6528 = vadd.f32 %v6508, %v6527
    %6529 = vdwg.mxu0
    %6530 = vmatpush.msra.mxu0 %v4437
    %6531 = vmatpush.msra.mxu0 %v4433
    %6532 = vmatpush.msra.mxu0 %v4429
    %6533 = vmatpush.msra.mxu0 %v4425
    %6534 = vmatpush.msra.mxu0 %v4421
    %6535 = vmatpush.msra.mxu0 %v4417
    %6536 = vmatpush.msra.mxu0 %v4413
    %6537 = vmatpush.msra.mxu0 %v4409
    %6538 = vmatpush.msra.mxu0 %v4405
    %6539 = vmatpush.msra.mxu0 %v4401
    %6540 = vmatpush.msra.mxu0 %v4397
    %6541 = vmatpush.msra.mxu0 %v4393
    %6542 = vmatpush.msra.mxu0 %v4389
    %6543 = vmatpush.msra.mxu0 %v4385
    %6544 = vmatpush.msra.mxu0 %v4381
    %6545 = vmatpush.msra.mxu0 %v4377
    %6546 = vmatmul.f32.gmra.mxu0 %v6308
    %v6547 = vpop.f32.mrf.mxu0
    %v6548 = vadd.f32 %v6528, %v6547
    %6549 = vdwg.mxu0
    %6550 = vmatpush.msra.mxu0 %v4501
    %6551 = vmatpush.msra.mxu0 %v4497
    %6552 = vmatpush.msra.mxu0 %v4493
    %6553 = vmatpush.msra.mxu0 %v4489
    %6554 = vmatpush.msra.mxu0 %v4485
    %6555 = vmatpush.msra.mxu0 %v4481
    %6556 = vmatpush.msra.mxu0 %v4477
    %6557 = vmatpush.msra.mxu0 %v4473
    %6558 = vmatpush.msra.mxu0 %v4469
    %6559 = vmatpush.msra.mxu0 %v4465
    %6560 = vmatpush.msra.mxu0 %v4461
    %6561 = vmatpush.msra.mxu0 %v4457
    %6562 = vmatpush.msra.mxu0 %v4453
    %6563 = vmatpush.msra.mxu0 %v4449
    %6564 = vmatpush.msra.mxu0 %v4445
    %6565 = vmatpush.msra.mxu0 %v4441
    %6566 = vmatmul.f32.gmra.mxu0 %v6309
    %v6567 = vpop.f32.mrf.mxu0
    %v6568 = vadd.f32 %v6548, %v6567
    %6569 = vdwg.mxu0
    %6570 = vmatpush.msra.mxu0 %v4565
    %6571 = vmatpush.msra.mxu0 %v4561
    %6572 = vmatpush.msra.mxu0 %v4557
    %6573 = vmatpush.msra.mxu0 %v4553
    %6574 = vmatpush.msra.mxu0 %v4549
    %6575 = vmatpush.msra.mxu0 %v4545
    %6576 = vmatpush.msra.mxu0 %v4541
    %6577 = vmatpush.msra.mxu0 %v4537
    %6578 = vmatpush.msra.mxu0 %v4533
    %6579 = vmatpush.msra.mxu0 %v4529
    %6580 = vmatpush.msra.mxu0 %v4525
    %6581 = vmatpush.msra.mxu0 %v4521
    %6582 = vmatpush.msra.mxu0 %v4517
    %6583 = vmatpush.msra.mxu0 %v4513
    %6584 = vmatpush.msra.mxu0 %v4509
    %6585 = vmatpush.msra.mxu0 %v4505
    %6586 = vmatmul.f32.gmra.mxu0 %v6310
    %v6587 = vpop.f32.mrf.mxu0
    %v6588 = vadd.f32 %v6568, %v6587
    %6589 = vdwg.mxu0
    %6590 = vmatpush.msra.mxu0 %v4629
    %6591 = vmatpush.msra.mxu0 %v4625
    %6592 = vmatpush.msra.mxu0 %v4621
    %6593 = vmatpush.msra.mxu0 %v4617
    %6594 = vmatpush.msra.mxu0 %v4613
    %6595 = vmatpush.msra.mxu0 %v4609
    %6596 = vmatpush.msra.mxu0 %v4605
    %6597 = vmatpush.msra.mxu0 %v4601
    %6598 = vmatpush.msra.mxu0 %v4597
    %6599 = vmatpush.msra.mxu0 %v4593
    %6600 = vmatpush.msra.mxu0 %v4589
    %6601 = vmatpush.msra.mxu0 %v4585
    %6602 = vmatpush.msra.mxu0 %v4581
    %6603 = vmatpush.msra.mxu0 %v4577
    %6604 = vmatpush.msra.mxu0 %v4573
    %6605 = vmatpush.msra.mxu0 %v4569
    %6606 = vmatmul.f32.gmra.mxu0 %v6311
    %v6607 = vpop.f32.mrf.mxu0
    %v6608 = vadd.f32 %v6588, %v6607
    %6609 = vdwg.mxu0
    %6610 = vmatpush.msra.mxu0 %v4693
    %6611 = vmatpush.msra.mxu0 %v4689
    %6612 = vmatpush.msra.mxu0 %v4685
    %6613 = vmatpush.msra.mxu0 %v4681
    %6614 = vmatpush.msra.mxu0 %v4677
    %6615 = vmatpush.msra.mxu0 %v4673
    %6616 = vmatpush.msra.mxu0 %v4669
    %6617 = vmatpush.msra.mxu0 %v4665
    %6618 = vmatpush.msra.mxu0 %v4661
    %6619 = vmatpush.msra.mxu0 %v4657
    %6620 = vmatpush.msra.mxu0 %v4653
    %6621 = vmatpush.msra.mxu0 %v4649
    %6622 = vmatpush.msra.mxu0 %v4645
    %6623 = vmatpush.msra.mxu0 %v4641
    %6624 = vmatpush.msra.mxu0 %v4637
    %6625 = vmatpush.msra.mxu0 %v4633
    %6626 = vmatmul.f32.gmra.mxu0 %v6312
    %v6627 = vpop.f32.mrf.mxu0
    %v6628 = vadd.f32 %v6608, %v6627
    %6629 = vdwg.mxu0
    %6630 = vmatpush.msra.mxu0 %v4757
    %6631 = vmatpush.msra.mxu0 %v4753
    %6632 = vmatpush.msra.mxu0 %v4749
    %6633 = vmatpush.msra.mxu0 %v4745
    %6634 = vmatpush.msra.mxu0 %v4741
    %6635 = vmatpush.msra.mxu0 %v4737
    %6636 = vmatpush.msra.mxu0 %v4733
    %6637 = vmatpush.msra.mxu0 %v4729
    %6638 = vmatpush.msra.mxu0 %v4725
    %6639 = vmatpush.msra.mxu0 %v4721
    %6640 = vmatpush.msra.mxu0 %v4717
    %6641 = vmatpush.msra.mxu0 %v4713
    %6642 = vmatpush.msra.mxu0 %v4709
    %6643 = vmatpush.msra.mxu0 %v4705
    %6644 = vmatpush.msra.mxu0 %v4701
    %6645 = vmatpush.msra.mxu0 %v4697
    %6646 = vmatmul.f32.gmra.mxu0 %v6313
    %v6647 = vpop.f32.mrf.mxu0
    %v6648 = vadd.f32 %v6628, %v6647
    %6649 = vdwg.mxu0
    %6650 = vmatpush.msra.mxu0 %v3798
    %6651 = vmatpush.msra.mxu0 %v3794
    %6652 = vmatpush.msra.mxu0 %v3790
    %6653 = vmatpush.msra.mxu0 %v3786
    %6654 = vmatpush.msra.mxu0 %v3782
    %6655 = vmatpush.msra.mxu0 %v3778
    %6656 = vmatpush.msra.mxu0 %v3774
    %6657 = vmatpush.msra.mxu0 %v3770
    %6658 = vmatpush.msra.mxu0 %v3766
    %6659 = vmatpush.msra.mxu0 %v3762
    %6660 = vmatpush.msra.mxu0 %v3758
    %6661 = vmatpush.msra.mxu0 %v3754
    %6662 = vmatpush.msra.mxu0 %v3750
    %6663 = vmatpush.msra.mxu0 %v3746
    %6664 = vmatpush.msra.mxu0 %v3742
    %6665 = vmatpush.msra.mxu0 %v3738
    %6666 = vmatmul.f32.gmra.mxu0 %v6298
    %v6667 = vpop.f32.mrf.mxu0
    %v6668 = vadd.f32 0.0, %v6667
    %6669 = vdwg.mxu0
    %6670 = vmatpush.msra.mxu0 %v3862
    %6671 = vmatpush.msra.mxu0 %v3858
    %6672 = vmatpush.msra.mxu0 %v3854
    %6673 = vmatpush.msra.mxu0 %v3850
    %6674 = vmatpush.msra.mxu0 %v3846
    %6675 = vmatpush.msra.mxu0 %v3842
    %6676 = vmatpush.msra.mxu0 %v3838
    %6677 = vmatpush.msra.mxu0 %v3834
    %6678 = vmatpush.msra.mxu0 %v3830
    %6679 = vmatpush.msra.mxu0 %v3826
    %6680 = vmatpush.msra.mxu0 %v3822
    %6681 = vmatpush.msra.mxu0 %v3818
    %6682 = vmatpush.msra.mxu0 %v3814
    %6683 = vmatpush.msra.mxu0 %v3810
    %6684 = vmatpush.msra.mxu0 %v3806
    %6685 = vmatpush.msra.mxu0 %v3802
    %6686 = vmatmul.f32.gmra.mxu0 %v6299
    %v6687 = vpop.f32.mrf.mxu0
    %v6688 = vadd.f32 %v6668, %v6687
    %6689 = vdwg.mxu0
    %6690 = vmatpush.msra.mxu0 %v3926
    %6691 = vmatpush.msra.mxu0 %v3922
    %6692 = vmatpush.msra.mxu0 %v3918
    %6693 = vmatpush.msra.mxu0 %v3914
    %6694 = vmatpush.msra.mxu0 %v3910
    %6695 = vmatpush.msra.mxu0 %v3906
    %6696 = vmatpush.msra.mxu0 %v3902
    %6697 = vmatpush.msra.mxu0 %v3898
    %6698 = vmatpush.msra.mxu0 %v3894
    %6699 = vmatpush.msra.mxu0 %v3890
    %6700 = vmatpush.msra.mxu0 %v3886
    %6701 = vmatpush.msra.mxu0 %v3882
    %6702 = vmatpush.msra.mxu0 %v3878
    %6703 = vmatpush.msra.mxu0 %v3874
    %6704 = vmatpush.msra.mxu0 %v3870
    %6705 = vmatpush.msra.mxu0 %v3866
    %6706 = vmatmul.f32.gmra.mxu0 %v6300
    %v6707 = vpop.f32.mrf.mxu0
    %v6708 = vadd.f32 %v6688, %v6707
    %6709 = vdwg.mxu0
    %6710 = vmatpush.msra.mxu0 %v3990
    %6711 = vmatpush.msra.mxu0 %v3986
    %6712 = vmatpush.msra.mxu0 %v3982
    %6713 = vmatpush.msra.mxu0 %v3978
    %6714 = vmatpush.msra.mxu0 %v3974
    %6715 = vmatpush.msra.mxu0 %v3970
    %6716 = vmatpush.msra.mxu0 %v3966
    %6717 = vmatpush.msra.mxu0 %v3962
    %6718 = vmatpush.msra.mxu0 %v3958
    %6719 = vmatpush.msra.mxu0 %v3954
    %6720 = vmatpush.msra.mxu0 %v3950
    %6721 = vmatpush.msra.mxu0 %v3946
    %6722 = vmatpush.msra.mxu0 %v3942
    %6723 = vmatpush.msra.mxu0 %v3938
    %6724 = vmatpush.msra.mxu0 %v3934
    %6725 = vmatpush.msra.mxu0 %v3930
    %6726 = vmatmul.f32.gmra.mxu0 %v6301
    %v6727 = vpop.f32.mrf.mxu0
    %v6728 = vadd.f32 %v6708, %v6727
    %6729 = vdwg.mxu0
    %6730 = vmatpush.msra.mxu0 %v4054
    %6731 = vmatpush.msra.mxu0 %v4050
    %6732 = vmatpush.msra.mxu0 %v4046
    %6733 = vmatpush.msra.mxu0 %v4042
    %6734 = vmatpush.msra.mxu0 %v4038
    %6735 = vmatpush.msra.mxu0 %v4034
    %6736 = vmatpush.msra.mxu0 %v4030
    %6737 = vmatpush.msra.mxu0 %v4026
    %6738 = vmatpush.msra.mxu0 %v4022
    %6739 = vmatpush.msra.mxu0 %v4018
    %6740 = vmatpush.msra.mxu0 %v4014
    %6741 = vmatpush.msra.mxu0 %v4010
    %6742 = vmatpush.msra.mxu0 %v4006
    %6743 = vmatpush.msra.mxu0 %v4002
    %6744 = vmatpush.msra.mxu0 %v3998
    %6745 = vmatpush.msra.mxu0 %v3994
    %6746 = vmatmul.f32.gmra.mxu0 %v6302
    %v6747 = vpop.f32.mrf.mxu0
    %v6748 = vadd.f32 %v6728, %v6747
    %6749 = vdwg.mxu0
    %6750 = vmatpush.msra.mxu0 %v4118
    %6751 = vmatpush.msra.mxu0 %v4114
    %6752 = vmatpush.msra.mxu0 %v4110
    %6753 = vmatpush.msra.mxu0 %v4106
    %6754 = vmatpush.msra.mxu0 %v4102
    %6755 = vmatpush.msra.mxu0 %v4098
    %6756 = vmatpush.msra.mxu0 %v4094
    %6757 = vmatpush.msra.mxu0 %v4090
    %6758 = vmatpush.msra.mxu0 %v4086
    %6759 = vmatpush.msra.mxu0 %v4082
    %6760 = vmatpush.msra.mxu0 %v4078
    %6761 = vmatpush.msra.mxu0 %v4074
    %6762 = vmatpush.msra.mxu0 %v4070
    %6763 = vmatpush.msra.mxu0 %v4066
    %6764 = vmatpush.msra.mxu0 %v4062
    %6765 = vmatpush.msra.mxu0 %v4058
    %6766 = vmatmul.f32.gmra.mxu0 %v6303
    %v6767 = vpop.f32.mrf.mxu0
    %v6768 = vadd.f32 %v6748, %v6767
    %6769 = vdwg.mxu0
    %6770 = vmatpush.msra.mxu0 %v4182
    %6771 = vmatpush.msra.mxu0 %v4178
    %6772 = vmatpush.msra.mxu0 %v4174
    %6773 = vmatpush.msra.mxu0 %v4170
    %6774 = vmatpush.msra.mxu0 %v4166
    %6775 = vmatpush.msra.mxu0 %v4162
    %6776 = vmatpush.msra.mxu0 %v4158
    %6777 = vmatpush.msra.mxu0 %v4154
    %6778 = vmatpush.msra.mxu0 %v4150
    %6779 = vmatpush.msra.mxu0 %v4146
    %6780 = vmatpush.msra.mxu0 %v4142
    %6781 = vmatpush.msra.mxu0 %v4138
    %6782 = vmatpush.msra.mxu0 %v4134
    %6783 = vmatpush.msra.mxu0 %v4130
    %6784 = vmatpush.msra.mxu0 %v4126
    %6785 = vmatpush.msra.mxu0 %v4122
    %6786 = vmatmul.f32.gmra.mxu0 %v6304
    %v6787 = vpop.f32.mrf.mxu0
    %v6788 = vadd.f32 %v6768, %v6787
    %6789 = vdwg.mxu0
    %6790 = vmatpush.msra.mxu0 %v4246
    %6791 = vmatpush.msra.mxu0 %v4242
    %6792 = vmatpush.msra.mxu0 %v4238
    %6793 = vmatpush.msra.mxu0 %v4234
    %6794 = vmatpush.msra.mxu0 %v4230
    %6795 = vmatpush.msra.mxu0 %v4226
    %6796 = vmatpush.msra.mxu0 %v4222
    %6797 = vmatpush.msra.mxu0 %v4218
    %6798 = vmatpush.msra.mxu0 %v4214
    %6799 = vmatpush.msra.mxu0 %v4210
    %6800 = vmatpush.msra.mxu0 %v4206
    %6801 = vmatpush.msra.mxu0 %v4202
    %6802 = vmatpush.msra.mxu0 %v4198
    %6803 = vmatpush.msra.mxu0 %v4194
    %6804 = vmatpush.msra.mxu0 %v4190
    %6805 = vmatpush.msra.mxu0 %v4186
    %6806 = vmatmul.f32.gmra.mxu0 %v6305
    %v6807 = vpop.f32.mrf.mxu0
    %v6808 = vadd.f32 %v6788, %v6807
    %6809 = vdwg.mxu0
    %6810 = vmatpush.msra.mxu0 %v4310
    %6811 = vmatpush.msra.mxu0 %v4306
    %6812 = vmatpush.msra.mxu0 %v4302
    %6813 = vmatpush.msra.mxu0 %v4298
    %6814 = vmatpush.msra.mxu0 %v4294
    %6815 = vmatpush.msra.mxu0 %v4290
    %6816 = vmatpush.msra.mxu0 %v4286
    %6817 = vmatpush.msra.mxu0 %v4282
    %6818 = vmatpush.msra.mxu0 %v4278
    %6819 = vmatpush.msra.mxu0 %v4274
    %6820 = vmatpush.msra.mxu0 %v4270
    %6821 = vmatpush.msra.mxu0 %v4266
    %6822 = vmatpush.msra.mxu0 %v4262
    %6823 = vmatpush.msra.mxu0 %v4258
    %6824 = vmatpush.msra.mxu0 %v4254
    %6825 = vmatpush.msra.mxu0 %v4250
    %6826 = vmatmul.f32.gmra.mxu0 %v6306
    %v6827 = vpop.f32.mrf.mxu0
    %v6828 = vadd.f32 %v6808, %v6827
    %6829 = vdwg.mxu0
    %6830 = vmatpush.msra.mxu0 %v4374
    %6831 = vmatpush.msra.mxu0 %v4370
    %6832 = vmatpush.msra.mxu0 %v4366
    %6833 = vmatpush.msra.mxu0 %v4362
    %6834 = vmatpush.msra.mxu0 %v4358
    %6835 = vmatpush.msra.mxu0 %v4354
    %6836 = vmatpush.msra.mxu0 %v4350
    %6837 = vmatpush.msra.mxu0 %v4346
    %6838 = vmatpush.msra.mxu0 %v4342
    %6839 = vmatpush.msra.mxu0 %v4338
    %6840 = vmatpush.msra.mxu0 %v4334
    %6841 = vmatpush.msra.mxu0 %v4330
    %6842 = vmatpush.msra.mxu0 %v4326
    %6843 = vmatpush.msra.mxu0 %v4322
    %6844 = vmatpush.msra.mxu0 %v4318
    %6845 = vmatpush.msra.mxu0 %v4314
    %6846 = vmatmul.f32.gmra.mxu0 %v6307
    %v6847 = vpop.f32.mrf.mxu0
    %v6848 = vadd.f32 %v6828, %v6847
    %6849 = vdwg.mxu0
    %6850 = vmatpush.msra.mxu0 %v4438
    %6851 = vmatpush.msra.mxu0 %v4434
    %6852 = vmatpush.msra.mxu0 %v4430
    %6853 = vmatpush.msra.mxu0 %v4426
    %6854 = vmatpush.msra.mxu0 %v4422
    %6855 = vmatpush.msra.mxu0 %v4418
    %6856 = vmatpush.msra.mxu0 %v4414
    %6857 = vmatpush.msra.mxu0 %v4410
    %6858 = vmatpush.msra.mxu0 %v4406
    %6859 = vmatpush.msra.mxu0 %v4402
    %6860 = vmatpush.msra.mxu0 %v4398
    %6861 = vmatpush.msra.mxu0 %v4394
    %6862 = vmatpush.msra.mxu0 %v4390
    %6863 = vmatpush.msra.mxu0 %v4386
    %6864 = vmatpush.msra.mxu0 %v4382
    %6865 = vmatpush.msra.mxu0 %v4378
    %6866 = vmatmul.f32.gmra.mxu0 %v6308
    %v6867 = vpop.f32.mrf.mxu0
    %v6868 = vadd.f32 %v6848, %v6867
    %6869 = vdwg.mxu0
    %6870 = vmatpush.msra.mxu0 %v4502
    %6871 = vmatpush.msra.mxu0 %v4498
    %6872 = vmatpush.msra.mxu0 %v4494
    %6873 = vmatpush.msra.mxu0 %v4490
    %6874 = vmatpush.msra.mxu0 %v4486
    %6875 = vmatpush.msra.mxu0 %v4482
    %6876 = vmatpush.msra.mxu0 %v4478
    %6877 = vmatpush.msra.mxu0 %v4474
    %6878 = vmatpush.msra.mxu0 %v4470
    %6879 = vmatpush.msra.mxu0 %v4466
    %6880 = vmatpush.msra.mxu0 %v4462
    %6881 = vmatpush.msra.mxu0 %v4458
    %6882 = vmatpush.msra.mxu0 %v4454
    %6883 = vmatpush.msra.mxu0 %v4450
    %6884 = vmatpush.msra.mxu0 %v4446
    %6885 = vmatpush.msra.mxu0 %v4442
    %6886 = vmatmul.f32.gmra.mxu0 %v6309
    %v6887 = vpop.f32.mrf.mxu0
    %v6888 = vadd.f32 %v6868, %v6887
    %6889 = vdwg.mxu0
    %6890 = vmatpush.msra.mxu0 %v4566
    %6891 = vmatpush.msra.mxu0 %v4562
    %6892 = vmatpush.msra.mxu0 %v4558
    %6893 = vmatpush.msra.mxu0 %v4554
    %6894 = vmatpush.msra.mxu0 %v4550
    %6895 = vmatpush.msra.mxu0 %v4546
    %6896 = vmatpush.msra.mxu0 %v4542
    %6897 = vmatpush.msra.mxu0 %v4538
    %6898 = vmatpush.msra.mxu0 %v4534
    %6899 = vmatpush.msra.mxu0 %v4530
    %6900 = vmatpush.msra.mxu0 %v4526
    %6901 = vmatpush.msra.mxu0 %v4522
    %6902 = vmatpush.msra.mxu0 %v4518
    %6903 = vmatpush.msra.mxu0 %v4514
    %6904 = vmatpush.msra.mxu0 %v4510
    %6905 = vmatpush.msra.mxu0 %v4506
    %6906 = vmatmul.f32.gmra.mxu0 %v6310
    %v6907 = vpop.f32.mrf.mxu0
    %v6908 = vadd.f32 %v6888, %v6907
    %6909 = vdwg.mxu0
    %6910 = vmatpush.msra.mxu0 %v4630
    %6911 = vmatpush.msra.mxu0 %v4626
    %6912 = vmatpush.msra.mxu0 %v4622
    %6913 = vmatpush.msra.mxu0 %v4618
    %6914 = vmatpush.msra.mxu0 %v4614
    %6915 = vmatpush.msra.mxu0 %v4610
    %6916 = vmatpush.msra.mxu0 %v4606
    %6917 = vmatpush.msra.mxu0 %v4602
    %6918 = vmatpush.msra.mxu0 %v4598
    %6919 = vmatpush.msra.mxu0 %v4594
    %6920 = vmatpush.msra.mxu0 %v4590
    %6921 = vmatpush.msra.mxu0 %v4586
    %6922 = vmatpush.msra.mxu0 %v4582
    %6923 = vmatpush.msra.mxu0 %v4578
    %6924 = vmatpush.msra.mxu0 %v4574
    %6925 = vmatpush.msra.mxu0 %v4570
    %6926 = vmatmul.f32.gmra.mxu0 %v6311
    %v6927 = vpop.f32.mrf.mxu0
    %v6928 = vadd.f32 %v6908, %v6927
    %6929 = vdwg.mxu0
    %6930 = vmatpush.msra.mxu0 %v4694
    %6931 = vmatpush.msra.mxu0 %v4690
    %6932 = vmatpush.msra.mxu0 %v4686
    %6933 = vmatpush.msra.mxu0 %v4682
    %6934 = vmatpush.msra.mxu0 %v4678
    %6935 = vmatpush.msra.mxu0 %v4674
    %6936 = vmatpush.msra.mxu0 %v4670
    %6937 = vmatpush.msra.mxu0 %v4666
    %6938 = vmatpush.msra.mxu0 %v4662
    %6939 = vmatpush.msra.mxu0 %v4658
    %6940 = vmatpush.msra.mxu0 %v4654
    %6941 = vmatpush.msra.mxu0 %v4650
    %6942 = vmatpush.msra.mxu0 %v4646
    %6943 = vmatpush.msra.mxu0 %v4642
    %6944 = vmatpush.msra.mxu0 %v4638
    %6945 = vmatpush.msra.mxu0 %v4634
    %6946 = vmatmul.f32.gmra.mxu0 %v6312
    %v6947 = vpop.f32.mrf.mxu0
    %v6948 = vadd.f32 %v6928, %v6947
    %6949 = vdwg.mxu0
    %6950 = vmatpush.msra.mxu0 %v4758
    %6951 = vmatpush.msra.mxu0 %v4754
    %6952 = vmatpush.msra.mxu0 %v4750
    %6953 = vmatpush.msra.mxu0 %v4746
    %6954 = vmatpush.msra.mxu0 %v4742
    %6955 = vmatpush.msra.mxu0 %v4738
    %6956 = vmatpush.msra.mxu0 %v4734
    %6957 = vmatpush.msra.mxu0 %v4730
    %6958 = vmatpush.msra.mxu0 %v4726
    %6959 = vmatpush.msra.mxu0 %v4722
    %6960 = vmatpush.msra.mxu0 %v4718
    %6961 = vmatpush.msra.mxu0 %v4714
    %6962 = vmatpush.msra.mxu0 %v4710
    %6963 = vmatpush.msra.mxu0 %v4706
    %6964 = vmatpush.msra.mxu0 %v4702
    %6965 = vmatpush.msra.mxu0 %v4698
    %6966 = vmatmul.f32.gmra.mxu0 %v6313
    %v6967 = vpop.f32.mrf.mxu0
    %v6968 = vadd.f32 %v6948, %v6967
    %6969 = vdwg.mxu0
    %6970 = vmatpush.msra.mxu0 %v3799
    %6971 = vmatpush.msra.mxu0 %v3795
    %6972 = vmatpush.msra.mxu0 %v3791
    %6973 = vmatpush.msra.mxu0 %v3787
    %6974 = vmatpush.msra.mxu0 %v3783
    %6975 = vmatpush.msra.mxu0 %v3779
    %6976 = vmatpush.msra.mxu0 %v3775
    %6977 = vmatpush.msra.mxu0 %v3771
    %6978 = vmatpush.msra.mxu0 %v3767
    %6979 = vmatpush.msra.mxu0 %v3763
    %6980 = vmatpush.msra.mxu0 %v3759
    %6981 = vmatpush.msra.mxu0 %v3755
    %6982 = vmatpush.msra.mxu0 %v3751
    %6983 = vmatpush.msra.mxu0 %v3747
    %6984 = vmatpush.msra.mxu0 %v3743
    %6985 = vmatpush.msra.mxu0 %v3739
    %6986 = vmatmul.f32.gmra.mxu0 %v6298
    %v6987 = vpop.f32.mrf.mxu0
    %v6988 = vadd.f32 0.0, %v6987
    %6989 = vdwg.mxu0
    %6990 = vmatpush.msra.mxu0 %v3863
    %6991 = vmatpush.msra.mxu0 %v3859
    %6992 = vmatpush.msra.mxu0 %v3855
    %6993 = vmatpush.msra.mxu0 %v3851
    %6994 = vmatpush.msra.mxu0 %v3847
    %6995 = vmatpush.msra.mxu0 %v3843
    %6996 = vmatpush.msra.mxu0 %v3839
    %6997 = vmatpush.msra.mxu0 %v3835
    %6998 = vmatpush.msra.mxu0 %v3831
    %6999 = vmatpush.msra.mxu0 %v3827
    %7000 = vmatpush.msra.mxu0 %v3823
    %7001 = vmatpush.msra.mxu0 %v3819
    %7002 = vmatpush.msra.mxu0 %v3815
    %7003 = vmatpush.msra.mxu0 %v3811
    %7004 = vmatpush.msra.mxu0 %v3807
    %7005 = vmatpush.msra.mxu0 %v3803
    %7006 = vmatmul.f32.gmra.mxu0 %v6299
    %v7007 = vpop.f32.mrf.mxu0
    %v7008 = vadd.f32 %v6988, %v7007
    %7009 = vdwg.mxu0
    %7010 = vmatpush.msra.mxu0 %v3927
    %7011 = vmatpush.msra.mxu0 %v3923
    %7012 = vmatpush.msra.mxu0 %v3919
    %7013 = vmatpush.msra.mxu0 %v3915
    %7014 = vmatpush.msra.mxu0 %v3911
    %7015 = vmatpush.msra.mxu0 %v3907
    %7016 = vmatpush.msra.mxu0 %v3903
    %7017 = vmatpush.msra.mxu0 %v3899
    %7018 = vmatpush.msra.mxu0 %v3895
    %7019 = vmatpush.msra.mxu0 %v3891
    %7020 = vmatpush.msra.mxu0 %v3887
    %7021 = vmatpush.msra.mxu0 %v3883
    %7022 = vmatpush.msra.mxu0 %v3879
    %7023 = vmatpush.msra.mxu0 %v3875
    %7024 = vmatpush.msra.mxu0 %v3871
    %7025 = vmatpush.msra.mxu0 %v3867
    %7026 = vmatmul.f32.gmra.mxu0 %v6300
    %v7027 = vpop.f32.mrf.mxu0
    %v7028 = vadd.f32 %v7008, %v7027
    %7029 = vdwg.mxu0
    %7030 = vmatpush.msra.mxu0 %v3991
    %7031 = vmatpush.msra.mxu0 %v3987
    %7032 = vmatpush.msra.mxu0 %v3983
    %7033 = vmatpush.msra.mxu0 %v3979
    %7034 = vmatpush.msra.mxu0 %v3975
    %7035 = vmatpush.msra.mxu0 %v3971
    %7036 = vmatpush.msra.mxu0 %v3967
    %7037 = vmatpush.msra.mxu0 %v3963
    %7038 = vmatpush.msra.mxu0 %v3959
    %7039 = vmatpush.msra.mxu0 %v3955
    %7040 = vmatpush.msra.mxu0 %v3951
    %7041 = vmatpush.msra.mxu0 %v3947
    %7042 = vmatpush.msra.mxu0 %v3943
    %7043 = vmatpush.msra.mxu0 %v3939
    %7044 = vmatpush.msra.mxu0 %v3935
    %7045 = vmatpush.msra.mxu0 %v3931
    %7046 = vmatmul.f32.gmra.mxu0 %v6301
    %v7047 = vpop.f32.mrf.mxu0
    %v7048 = vadd.f32 %v7028, %v7047
    %7049 = vdwg.mxu0
    %7050 = vmatpush.msra.mxu0 %v4055
    %7051 = vmatpush.msra.mxu0 %v4051
    %7052 = vmatpush.msra.mxu0 %v4047
    %7053 = vmatpush.msra.mxu0 %v4043
    %7054 = vmatpush.msra.mxu0 %v4039
    %7055 = vmatpush.msra.mxu0 %v4035
    %7056 = vmatpush.msra.mxu0 %v4031
    %7057 = vmatpush.msra.mxu0 %v4027
    %7058 = vmatpush.msra.mxu0 %v4023
    %7059 = vmatpush.msra.mxu0 %v4019
    %7060 = vmatpush.msra.mxu0 %v4015
    %7061 = vmatpush.msra.mxu0 %v4011
    %7062 = vmatpush.msra.mxu0 %v4007
    %7063 = vmatpush.msra.mxu0 %v4003
    %7064 = vmatpush.msra.mxu0 %v3999
    %7065 = vmatpush.msra.mxu0 %v3995
    %7066 = vmatmul.f32.gmra.mxu0 %v6302
    %v7067 = vpop.f32.mrf.mxu0
    %v7068 = vadd.f32 %v7048, %v7067
    %7069 = vdwg.mxu0
    %7070 = vmatpush.msra.mxu0 %v4119
    %7071 = vmatpush.msra.mxu0 %v4115
    %7072 = vmatpush.msra.mxu0 %v4111
    %7073 = vmatpush.msra.mxu0 %v4107
    %7074 = vmatpush.msra.mxu0 %v4103
    %7075 = vmatpush.msra.mxu0 %v4099
    %7076 = vmatpush.msra.mxu0 %v4095
    %7077 = vmatpush.msra.mxu0 %v4091
    %7078 = vmatpush.msra.mxu0 %v4087
    %7079 = vmatpush.msra.mxu0 %v4083
    %7080 = vmatpush.msra.mxu0 %v4079
    %7081 = vmatpush.msra.mxu0 %v4075
    %7082 = vmatpush.msra.mxu0 %v4071
    %7083 = vmatpush.msra.mxu0 %v4067
    %7084 = vmatpush.msra.mxu0 %v4063
    %7085 = vmatpush.msra.mxu0 %v4059
    %7086 = vmatmul.f32.gmra.mxu0 %v6303
    %v7087 = vpop.f32.mrf.mxu0
    %v7088 = vadd.f32 %v7068, %v7087
    %7089 = vdwg.mxu0
    %7090 = vmatpush.msra.mxu0 %v4183
    %7091 = vmatpush.msra.mxu0 %v4179
    %7092 = vmatpush.msra.mxu0 %v4175
    %7093 = vmatpush.msra.mxu0 %v4171
    %7094 = vmatpush.msra.mxu0 %v4167
    %7095 = vmatpush.msra.mxu0 %v4163
    %7096 = vmatpush.msra.mxu0 %v4159
    %7097 = vmatpush.msra.mxu0 %v4155
    %7098 = vmatpush.msra.mxu0 %v4151
    %7099 = vmatpush.msra.mxu0 %v4147
    %7100 = vmatpush.msra.mxu0 %v4143
    %7101 = vmatpush.msra.mxu0 %v4139
    %7102 = vmatpush.msra.mxu0 %v4135
    %7103 = vmatpush.msra.mxu0 %v4131
    %7104 = vmatpush.msra.mxu0 %v4127
    %7105 = vmatpush.msra.mxu0 %v4123
    %7106 = vmatmul.f32.gmra.mxu0 %v6304
    %v7107 = vpop.f32.mrf.mxu0
    %v7108 = vadd.f32 %v7088, %v7107
    %7109 = vdwg.mxu0
    %7110 = vmatpush.msra.mxu0 %v4247
    %7111 = vmatpush.msra.mxu0 %v4243
    %7112 = vmatpush.msra.mxu0 %v4239
    %7113 = vmatpush.msra.mxu0 %v4235
    %7114 = vmatpush.msra.mxu0 %v4231
    %7115 = vmatpush.msra.mxu0 %v4227
    %7116 = vmatpush.msra.mxu0 %v4223
    %7117 = vmatpush.msra.mxu0 %v4219
    %7118 = vmatpush.msra.mxu0 %v4215
    %7119 = vmatpush.msra.mxu0 %v4211
    %7120 = vmatpush.msra.mxu0 %v4207
    %7121 = vmatpush.msra.mxu0 %v4203
    %7122 = vmatpush.msra.mxu0 %v4199
    %7123 = vmatpush.msra.mxu0 %v4195
    %7124 = vmatpush.msra.mxu0 %v4191
    %7125 = vmatpush.msra.mxu0 %v4187
    %7126 = vmatmul.f32.gmra.mxu0 %v6305
    %v7127 = vpop.f32.mrf.mxu0
    %v7128 = vadd.f32 %v7108, %v7127
    %7129 = vdwg.mxu0
    %7130 = vmatpush.msra.mxu0 %v4311
    %7131 = vmatpush.msra.mxu0 %v4307
    %7132 = vmatpush.msra.mxu0 %v4303
    %7133 = vmatpush.msra.mxu0 %v4299
    %7134 = vmatpush.msra.mxu0 %v4295
    %7135 = vmatpush.msra.mxu0 %v4291
    %7136 = vmatpush.msra.mxu0 %v4287
    %7137 = vmatpush.msra.mxu0 %v4283
    %7138 = vmatpush.msra.mxu0 %v4279
    %7139 = vmatpush.msra.mxu0 %v4275
    %7140 = vmatpush.msra.mxu0 %v4271
    %7141 = vmatpush.msra.mxu0 %v4267
    %7142 = vmatpush.msra.mxu0 %v4263
    %7143 = vmatpush.msra.mxu0 %v4259
    %7144 = vmatpush.msra.mxu0 %v4255
    %7145 = vmatpush.msra.mxu0 %v4251
    %7146 = vmatmul.f32.gmra.mxu0 %v6306
    %v7147 = vpop.f32.mrf.mxu0
    %v7148 = vadd.f32 %v7128, %v7147
    %7149 = vdwg.mxu0
    %7150 = vmatpush.msra.mxu0 %v4375
    %7151 = vmatpush.msra.mxu0 %v4371
    %7152 = vmatpush.msra.mxu0 %v4367
    %7153 = vmatpush.msra.mxu0 %v4363
    %7154 = vmatpush.msra.mxu0 %v4359
    %7155 = vmatpush.msra.mxu0 %v4355
    %7156 = vmatpush.msra.mxu0 %v4351
    %7157 = vmatpush.msra.mxu0 %v4347
    %7158 = vmatpush.msra.mxu0 %v4343
    %7159 = vmatpush.msra.mxu0 %v4339
    %7160 = vmatpush.msra.mxu0 %v4335
    %7161 = vmatpush.msra.mxu0 %v4331
    %7162 = vmatpush.msra.mxu0 %v4327
    %7163 = vmatpush.msra.mxu0 %v4323
    %7164 = vmatpush.msra.mxu0 %v4319
    %7165 = vmatpush.msra.mxu0 %v4315
    %7166 = vmatmul.f32.gmra.mxu0 %v6307
    %v7167 = vpop.f32.mrf.mxu0
    %v7168 = vadd.f32 %v7148, %v7167
    %7169 = vdwg.mxu0
    %7170 = vmatpush.msra.mxu0 %v4439
    %7171 = vmatpush.msra.mxu0 %v4435
    %7172 = vmatpush.msra.mxu0 %v4431
    %7173 = vmatpush.msra.mxu0 %v4427
    %7174 = vmatpush.msra.mxu0 %v4423
    %7175 = vmatpush.msra.mxu0 %v4419
    %7176 = vmatpush.msra.mxu0 %v4415
    %7177 = vmatpush.msra.mxu0 %v4411
    %7178 = vmatpush.msra.mxu0 %v4407
    %7179 = vmatpush.msra.mxu0 %v4403
    %7180 = vmatpush.msra.mxu0 %v4399
    %7181 = vmatpush.msra.mxu0 %v4395
    %7182 = vmatpush.msra.mxu0 %v4391
    %7183 = vmatpush.msra.mxu0 %v4387
    %7184 = vmatpush.msra.mxu0 %v4383
    %7185 = vmatpush.msra.mxu0 %v4379
    %7186 = vmatmul.f32.gmra.mxu0 %v6308
    %v7187 = vpop.f32.mrf.mxu0
    %v7188 = vadd.f32 %v7168, %v7187
    %7189 = vdwg.mxu0
    %7190 = vmatpush.msra.mxu0 %v4503
    %7191 = vmatpush.msra.mxu0 %v4499
    %7192 = vmatpush.msra.mxu0 %v4495
    %7193 = vmatpush.msra.mxu0 %v4491
    %7194 = vmatpush.msra.mxu0 %v4487
    %7195 = vmatpush.msra.mxu0 %v4483
    %7196 = vmatpush.msra.mxu0 %v4479
    %7197 = vmatpush.msra.mxu0 %v4475
    %7198 = vmatpush.msra.mxu0 %v4471
    %7199 = vmatpush.msra.mxu0 %v4467
    %7200 = vmatpush.msra.mxu0 %v4463
    %7201 = vmatpush.msra.mxu0 %v4459
    %7202 = vmatpush.msra.mxu0 %v4455
    %7203 = vmatpush.msra.mxu0 %v4451
    %7204 = vmatpush.msra.mxu0 %v4447
    %7205 = vmatpush.msra.mxu0 %v4443
    %7206 = vmatmul.f32.gmra.mxu0 %v6309
    %v7207 = vpop.f32.mrf.mxu0
    %v7208 = vadd.f32 %v7188, %v7207
    %7209 = vdwg.mxu0
    %7210 = vmatpush.msra.mxu0 %v4567
    %7211 = vmatpush.msra.mxu0 %v4563
    %7212 = vmatpush.msra.mxu0 %v4559
    %7213 = vmatpush.msra.mxu0 %v4555
    %7214 = vmatpush.msra.mxu0 %v4551
    %7215 = vmatpush.msra.mxu0 %v4547
    %7216 = vmatpush.msra.mxu0 %v4543
    %7217 = vmatpush.msra.mxu0 %v4539
    %7218 = vmatpush.msra.mxu0 %v4535
    %7219 = vmatpush.msra.mxu0 %v4531
    %7220 = vmatpush.msra.mxu0 %v4527
    %7221 = vmatpush.msra.mxu0 %v4523
    %7222 = vmatpush.msra.mxu0 %v4519
    %7223 = vmatpush.msra.mxu0 %v4515
    %7224 = vmatpush.msra.mxu0 %v4511
    %7225 = vmatpush.msra.mxu0 %v4507
    %7226 = vmatmul.f32.gmra.mxu0 %v6310
    %v7227 = vpop.f32.mrf.mxu0
    %v7228 = vadd.f32 %v7208, %v7227
    %7229 = vdwg.mxu0
    %7230 = vmatpush.msra.mxu0 %v4631
    %7231 = vmatpush.msra.mxu0 %v4627
    %7232 = vmatpush.msra.mxu0 %v4623
    %7233 = vmatpush.msra.mxu0 %v4619
    %7234 = vmatpush.msra.mxu0 %v4615
    %7235 = vmatpush.msra.mxu0 %v4611
    %7236 = vmatpush.msra.mxu0 %v4607
    %7237 = vmatpush.msra.mxu0 %v4603
    %7238 = vmatpush.msra.mxu0 %v4599
    %7239 = vmatpush.msra.mxu0 %v4595
    %7240 = vmatpush.msra.mxu0 %v4591
    %7241 = vmatpush.msra.mxu0 %v4587
    %7242 = vmatpush.msra.mxu0 %v4583
    %7243 = vmatpush.msra.mxu0 %v4579
    %7244 = vmatpush.msra.mxu0 %v4575
    %7245 = vmatpush.msra.mxu0 %v4571
    %7246 = vmatmul.f32.gmra.mxu0 %v6311
    %v7247 = vpop.f32.mrf.mxu0
    %v7248 = vadd.f32 %v7228, %v7247
    %7249 = vdwg.mxu0
    %7250 = vmatpush.msra.mxu0 %v4695
    %7251 = vmatpush.msra.mxu0 %v4691
    %7252 = vmatpush.msra.mxu0 %v4687
    %7253 = vmatpush.msra.mxu0 %v4683
    %7254 = vmatpush.msra.mxu0 %v4679
    %7255 = vmatpush.msra.mxu0 %v4675
    %7256 = vmatpush.msra.mxu0 %v4671
    %7257 = vmatpush.msra.mxu0 %v4667
    %7258 = vmatpush.msra.mxu0 %v4663
    %7259 = vmatpush.msra.mxu0 %v4659
    %7260 = vmatpush.msra.mxu0 %v4655
    %7261 = vmatpush.msra.mxu0 %v4651
    %7262 = vmatpush.msra.mxu0 %v4647
    %7263 = vmatpush.msra.mxu0 %v4643
    %7264 = vmatpush.msra.mxu0 %v4639
    %7265 = vmatpush.msra.mxu0 %v4635
    %7266 = vmatmul.f32.gmra.mxu0 %v6312
    %v7267 = vpop.f32.mrf.mxu0
    %v7268 = vadd.f32 %v7248, %v7267
    %7269 = vdwg.mxu0
    %7270 = vmatpush.msra.mxu0 %v4759
    %7271 = vmatpush.msra.mxu0 %v4755
    %7272 = vmatpush.msra.mxu0 %v4751
    %7273 = vmatpush.msra.mxu0 %v4747
    %7274 = vmatpush.msra.mxu0 %v4743
    %7275 = vmatpush.msra.mxu0 %v4739
    %7276 = vmatpush.msra.mxu0 %v4735
    %7277 = vmatpush.msra.mxu0 %v4731
    %7278 = vmatpush.msra.mxu0 %v4727
    %7279 = vmatpush.msra.mxu0 %v4723
    %7280 = vmatpush.msra.mxu0 %v4719
    %7281 = vmatpush.msra.mxu0 %v4715
    %7282 = vmatpush.msra.mxu0 %v4711
    %7283 = vmatpush.msra.mxu0 %v4707
    %7284 = vmatpush.msra.mxu0 %v4703
    %7285 = vmatpush.msra.mxu0 %v4699
    %7286 = vmatmul.f32.gmra.mxu0 %v6313
    %v7287 = vpop.f32.mrf.mxu0
    %v7288 = vadd.f32 %v7268, %v7287
    %7289 = vdwg.mxu0
    %7290 = vmatpush.msra.mxu0 %v3800
    %7291 = vmatpush.msra.mxu0 %v3796
    %7292 = vmatpush.msra.mxu0 %v3792
    %7293 = vmatpush.msra.mxu0 %v3788
    %7294 = vmatpush.msra.mxu0 %v3784
    %7295 = vmatpush.msra.mxu0 %v3780
    %7296 = vmatpush.msra.mxu0 %v3776
    %7297 = vmatpush.msra.mxu0 %v3772
    %7298 = vmatpush.msra.mxu0 %v3768
    %7299 = vmatpush.msra.mxu0 %v3764
    %7300 = vmatpush.msra.mxu0 %v3760
    %7301 = vmatpush.msra.mxu0 %v3756
    %7302 = vmatpush.msra.mxu0 %v3752
    %7303 = vmatpush.msra.mxu0 %v3748
    %7304 = vmatpush.msra.mxu0 %v3744
    %7305 = vmatpush.msra.mxu0 %v3740
    %7306 = vmatmul.f32.gmra.mxu0 %v6298
    %v7307 = vpop.f32.mrf.mxu0
    %v7308 = vadd.f32 0.0, %v7307
    %7309 = vdwg.mxu0
    %7310 = vmatpush.msra.mxu0 %v3864
    %7311 = vmatpush.msra.mxu0 %v3860
    %7312 = vmatpush.msra.mxu0 %v3856
    %7313 = vmatpush.msra.mxu0 %v3852
    %7314 = vmatpush.msra.mxu0 %v3848
    %7315 = vmatpush.msra.mxu0 %v3844
    %7316 = vmatpush.msra.mxu0 %v3840
    %7317 = vmatpush.msra.mxu0 %v3836
    %7318 = vmatpush.msra.mxu0 %v3832
    %7319 = vmatpush.msra.mxu0 %v3828
    %7320 = vmatpush.msra.mxu0 %v3824
    %7321 = vmatpush.msra.mxu0 %v3820
    %7322 = vmatpush.msra.mxu0 %v3816
    %7323 = vmatpush.msra.mxu0 %v3812
    %7324 = vmatpush.msra.mxu0 %v3808
    %7325 = vmatpush.msra.mxu0 %v3804
    %7326 = vmatmul.f32.gmra.mxu0 %v6299
    %v7327 = vpop.f32.mrf.mxu0
    %v7328 = vadd.f32 %v7308, %v7327
    %7329 = vdwg.mxu0
    %7330 = vmatpush.msra.mxu0 %v3928
    %7331 = vmatpush.msra.mxu0 %v3924
    %7332 = vmatpush.msra.mxu0 %v3920
    %7333 = vmatpush.msra.mxu0 %v3916
    %7334 = vmatpush.msra.mxu0 %v3912
    %7335 = vmatpush.msra.mxu0 %v3908
    %7336 = vmatpush.msra.mxu0 %v3904
    %7337 = vmatpush.msra.mxu0 %v3900
    %7338 = vmatpush.msra.mxu0 %v3896
    %7339 = vmatpush.msra.mxu0 %v3892
    %7340 = vmatpush.msra.mxu0 %v3888
    %7341 = vmatpush.msra.mxu0 %v3884
    %7342 = vmatpush.msra.mxu0 %v3880
    %7343 = vmatpush.msra.mxu0 %v3876
    %7344 = vmatpush.msra.mxu0 %v3872
    %7345 = vmatpush.msra.mxu0 %v3868
    %7346 = vmatmul.f32.gmra.mxu0 %v6300
    %v7347 = vpop.f32.mrf.mxu0
    %v7348 = vadd.f32 %v7328, %v7347
    %7349 = vdwg.mxu0
    %7350 = vmatpush.msra.mxu0 %v3992
    %7351 = vmatpush.msra.mxu0 %v3988
    %7352 = vmatpush.msra.mxu0 %v3984
    %7353 = vmatpush.msra.mxu0 %v3980
    %7354 = vmatpush.msra.mxu0 %v3976
    %7355 = vmatpush.msra.mxu0 %v3972
    %7356 = vmatpush.msra.mxu0 %v3968
    %7357 = vmatpush.msra.mxu0 %v3964
    %7358 = vmatpush.msra.mxu0 %v3960
    %7359 = vmatpush.msra.mxu0 %v3956
    %7360 = vmatpush.msra.mxu0 %v3952
    %7361 = vmatpush.msra.mxu0 %v3948
    %7362 = vmatpush.msra.mxu0 %v3944
    %7363 = vmatpush.msra.mxu0 %v3940
    %7364 = vmatpush.msra.mxu0 %v3936
    %7365 = vmatpush.msra.mxu0 %v3932
    %7366 = vmatmul.f32.gmra.mxu0 %v6301
    %v7367 = vpop.f32.mrf.mxu0
    %v7368 = vadd.f32 %v7348, %v7367
    %7369 = vdwg.mxu0
    %7370 = vmatpush.msra.mxu0 %v4056
    %7371 = vmatpush.msra.mxu0 %v4052
    %7372 = vmatpush.msra.mxu0 %v4048
    %7373 = vmatpush.msra.mxu0 %v4044
    %7374 = vmatpush.msra.mxu0 %v4040
    %7375 = vmatpush.msra.mxu0 %v4036
    %7376 = vmatpush.msra.mxu0 %v4032
    %7377 = vmatpush.msra.mxu0 %v4028
    %7378 = vmatpush.msra.mxu0 %v4024
    %7379 = vmatpush.msra.mxu0 %v4020
    %7380 = vmatpush.msra.mxu0 %v4016
    %7381 = vmatpush.msra.mxu0 %v4012
    %7382 = vmatpush.msra.mxu0 %v4008
    %7383 = vmatpush.msra.mxu0 %v4004
    %7384 = vmatpush.msra.mxu0 %v4000
    %7385 = vmatpush.msra.mxu0 %v3996
    %7386 = vmatmul.f32.gmra.mxu0 %v6302
    %v7387 = vpop.f32.mrf.mxu0
    %v7388 = vadd.f32 %v7368, %v7387
    %7389 = vdwg.mxu0
    %7390 = vmatpush.msra.mxu0 %v4120
    %7391 = vmatpush.msra.mxu0 %v4116
    %7392 = vmatpush.msra.mxu0 %v4112
    %7393 = vmatpush.msra.mxu0 %v4108
    %7394 = vmatpush.msra.mxu0 %v4104
    %7395 = vmatpush.msra.mxu0 %v4100
    %7396 = vmatpush.msra.mxu0 %v4096
    %7397 = vmatpush.msra.mxu0 %v4092
    %7398 = vmatpush.msra.mxu0 %v4088
    %7399 = vmatpush.msra.mxu0 %v4084
    %7400 = vmatpush.msra.mxu0 %v4080
    %7401 = vmatpush.msra.mxu0 %v4076
    %7402 = vmatpush.msra.mxu0 %v4072
    %7403 = vmatpush.msra.mxu0 %v4068
    %7404 = vmatpush.msra.mxu0 %v4064
    %7405 = vmatpush.msra.mxu0 %v4060
    %7406 = vmatmul.f32.gmra.mxu0 %v6303
    %v7407 = vpop.f32.mrf.mxu0
    %v7408 = vadd.f32 %v7388, %v7407
    %7409 = vdwg.mxu0
    %7410 = vmatpush.msra.mxu0 %v4184
    %7411 = vmatpush.msra.mxu0 %v4180
    %7412 = vmatpush.msra.mxu0 %v4176
    %7413 = vmatpush.msra.mxu0 %v4172
    %7414 = vmatpush.msra.mxu0 %v4168
    %7415 = vmatpush.msra.mxu0 %v4164
    %7416 = vmatpush.msra.mxu0 %v4160
    %7417 = vmatpush.msra.mxu0 %v4156
    %7418 = vmatpush.msra.mxu0 %v4152
    %7419 = vmatpush.msra.mxu0 %v4148
    %7420 = vmatpush.msra.mxu0 %v4144
    %7421 = vmatpush.msra.mxu0 %v4140
    %7422 = vmatpush.msra.mxu0 %v4136
    %7423 = vmatpush.msra.mxu0 %v4132
    %7424 = vmatpush.msra.mxu0 %v4128
    %7425 = vmatpush.msra.mxu0 %v4124
    %7426 = vmatmul.f32.gmra.mxu0 %v6304
    %v7427 = vpop.f32.mrf.mxu0
    %v7428 = vadd.f32 %v7408, %v7427
    %7429 = vdwg.mxu0
    %7430 = vmatpush.msra.mxu0 %v4248
    %7431 = vmatpush.msra.mxu0 %v4244
    %7432 = vmatpush.msra.mxu0 %v4240
    %7433 = vmatpush.msra.mxu0 %v4236
    %7434 = vmatpush.msra.mxu0 %v4232
    %7435 = vmatpush.msra.mxu0 %v4228
    %7436 = vmatpush.msra.mxu0 %v4224
    %7437 = vmatpush.msra.mxu0 %v4220
    %7438 = vmatpush.msra.mxu0 %v4216
    %7439 = vmatpush.msra.mxu0 %v4212
    %7440 = vmatpush.msra.mxu0 %v4208
    %7441 = vmatpush.msra.mxu0 %v4204
    %7442 = vmatpush.msra.mxu0 %v4200
    %7443 = vmatpush.msra.mxu0 %v4196
    %7444 = vmatpush.msra.mxu0 %v4192
    %7445 = vmatpush.msra.mxu0 %v4188
    %7446 = vmatmul.f32.gmra.mxu0 %v6305
    %v7447 = vpop.f32.mrf.mxu0
    %v7448 = vadd.f32 %v7428, %v7447
    %7449 = vdwg.mxu0
    %7450 = vmatpush.msra.mxu0 %v4312
    %7451 = vmatpush.msra.mxu0 %v4308
    %7452 = vmatpush.msra.mxu0 %v4304
    %7453 = vmatpush.msra.mxu0 %v4300
    %7454 = vmatpush.msra.mxu0 %v4296
    %7455 = vmatpush.msra.mxu0 %v4292
    %7456 = vmatpush.msra.mxu0 %v4288
    %7457 = vmatpush.msra.mxu0 %v4284
    %7458 = vmatpush.msra.mxu0 %v4280
    %7459 = vmatpush.msra.mxu0 %v4276
    %7460 = vmatpush.msra.mxu0 %v4272
    %7461 = vmatpush.msra.mxu0 %v4268
    %7462 = vmatpush.msra.mxu0 %v4264
    %7463 = vmatpush.msra.mxu0 %v4260
    %7464 = vmatpush.msra.mxu0 %v4256
    %7465 = vmatpush.msra.mxu0 %v4252
    %7466 = vmatmul.f32.gmra.mxu0 %v6306
    %v7467 = vpop.f32.mrf.mxu0
    %v7468 = vadd.f32 %v7448, %v7467
    %7469 = vdwg.mxu0
    %7470 = vmatpush.msra.mxu0 %v4376
    %7471 = vmatpush.msra.mxu0 %v4372
    %7472 = vmatpush.msra.mxu0 %v4368
    %7473 = vmatpush.msra.mxu0 %v4364
    %7474 = vmatpush.msra.mxu0 %v4360
    %7475 = vmatpush.msra.mxu0 %v4356
    %7476 = vmatpush.msra.mxu0 %v4352
    %7477 = vmatpush.msra.mxu0 %v4348
    %7478 = vmatpush.msra.mxu0 %v4344
    %7479 = vmatpush.msra.mxu0 %v4340
    %7480 = vmatpush.msra.mxu0 %v4336
    %7481 = vmatpush.msra.mxu0 %v4332
    %7482 = vmatpush.msra.mxu0 %v4328
    %7483 = vmatpush.msra.mxu0 %v4324
    %7484 = vmatpush.msra.mxu0 %v4320
    %7485 = vmatpush.msra.mxu0 %v4316
    %7486 = vmatmul.f32.gmra.mxu0 %v6307
    %v7487 = vpop.f32.mrf.mxu0
    %v7488 = vadd.f32 %v7468, %v7487
    %7489 = vdwg.mxu0
    %7490 = vmatpush.msra.mxu0 %v4440
    %7491 = vmatpush.msra.mxu0 %v4436
    %7492 = vmatpush.msra.mxu0 %v4432
    %7493 = vmatpush.msra.mxu0 %v4428
    %7494 = vmatpush.msra.mxu0 %v4424
    %7495 = vmatpush.msra.mxu0 %v4420
    %7496 = vmatpush.msra.mxu0 %v4416
    %7497 = vmatpush.msra.mxu0 %v4412
    %7498 = vmatpush.msra.mxu0 %v4408
    %7499 = vmatpush.msra.mxu0 %v4404
    %7500 = vmatpush.msra.mxu0 %v4400
    %7501 = vmatpush.msra.mxu0 %v4396
    %7502 = vmatpush.msra.mxu0 %v4392
    %7503 = vmatpush.msra.mxu0 %v4388
    %7504 = vmatpush.msra.mxu0 %v4384
    %7505 = vmatpush.msra.mxu0 %v4380
    %7506 = vmatmul.f32.gmra.mxu0 %v6308
    %v7507 = vpop.f32.mrf.mxu0
    %v7508 = vadd.f32 %v7488, %v7507
    %7509 = vdwg.mxu0
    %7510 = vmatpush.msra.mxu0 %v4504
    %7511 = vmatpush.msra.mxu0 %v4500
    %7512 = vmatpush.msra.mxu0 %v4496
    %7513 = vmatpush.msra.mxu0 %v4492
    %7514 = vmatpush.msra.mxu0 %v4488
    %7515 = vmatpush.msra.mxu0 %v4484
    %7516 = vmatpush.msra.mxu0 %v4480
    %7517 = vmatpush.msra.mxu0 %v4476
    %7518 = vmatpush.msra.mxu0 %v4472
    %7519 = vmatpush.msra.mxu0 %v4468
    %7520 = vmatpush.msra.mxu0 %v4464
    %7521 = vmatpush.msra.mxu0 %v4460
    %7522 = vmatpush.msra.mxu0 %v4456
    %7523 = vmatpush.msra.mxu0 %v4452
    %7524 = vmatpush.msra.mxu0 %v4448
    %7525 = vmatpush.msra.mxu0 %v4444
    %7526 = vmatmul.f32.gmra.mxu0 %v6309
    %v7527 = vpop.f32.mrf.mxu0
    %v7528 = vadd.f32 %v7508, %v7527
    %7529 = vdwg.mxu0
    %7530 = vmatpush.msra.mxu0 %v4568
    %7531 = vmatpush.msra.mxu0 %v4564
    %7532 = vmatpush.msra.mxu0 %v4560
    %7533 = vmatpush.msra.mxu0 %v4556
    %7534 = vmatpush.msra.mxu0 %v4552
    %7535 = vmatpush.msra.mxu0 %v4548
    %7536 = vmatpush.msra.mxu0 %v4544
    %7537 = vmatpush.msra.mxu0 %v4540
    %7538 = vmatpush.msra.mxu0 %v4536
    %7539 = vmatpush.msra.mxu0 %v4532
    %7540 = vmatpush.msra.mxu0 %v4528
    %7541 = vmatpush.msra.mxu0 %v4524
    %7542 = vmatpush.msra.mxu0 %v4520
    %7543 = vmatpush.msra.mxu0 %v4516
    %7544 = vmatpush.msra.mxu0 %v4512
    %7545 = vmatpush.msra.mxu0 %v4508
    %7546 = vmatmul.f32.gmra.mxu0 %v6310
    %v7547 = vpop.f32.mrf.mxu0
    %v7548 = vadd.f32 %v7528, %v7547
    %7549 = vdwg.mxu0
    %7550 = vmatpush.msra.mxu0 %v4632
    %7551 = vmatpush.msra.mxu0 %v4628
    %7552 = vmatpush.msra.mxu0 %v4624
    %7553 = vmatpush.msra.mxu0 %v4620
    %7554 = vmatpush.msra.mxu0 %v4616
    %7555 = vmatpush.msra.mxu0 %v4612
    %7556 = vmatpush.msra.mxu0 %v4608
    %7557 = vmatpush.msra.mxu0 %v4604
    %7558 = vmatpush.msra.mxu0 %v4600
    %7559 = vmatpush.msra.mxu0 %v4596
    %7560 = vmatpush.msra.mxu0 %v4592
    %7561 = vmatpush.msra.mxu0 %v4588
    %7562 = vmatpush.msra.mxu0 %v4584
    %7563 = vmatpush.msra.mxu0 %v4580
    %7564 = vmatpush.msra.mxu0 %v4576
    %7565 = vmatpush.msra.mxu0 %v4572
    %7566 = vmatmul.f32.gmra.mxu0 %v6311
    %v7567 = vpop.f32.mrf.mxu0
    %v7568 = vadd.f32 %v7548, %v7567
    %7569 = vdwg.mxu0
    %7570 = vmatpush.msra.mxu0 %v4696
    %7571 = vmatpush.msra.mxu0 %v4692
    %7572 = vmatpush.msra.mxu0 %v4688
    %7573 = vmatpush.msra.mxu0 %v4684
    %7574 = vmatpush.msra.mxu0 %v4680
    %7575 = vmatpush.msra.mxu0 %v4676
    %7576 = vmatpush.msra.mxu0 %v4672
    %7577 = vmatpush.msra.mxu0 %v4668
    %7578 = vmatpush.msra.mxu0 %v4664
    %7579 = vmatpush.msra.mxu0 %v4660
    %7580 = vmatpush.msra.mxu0 %v4656
    %7581 = vmatpush.msra.mxu0 %v4652
    %7582 = vmatpush.msra.mxu0 %v4648
    %7583 = vmatpush.msra.mxu0 %v4644
    %7584 = vmatpush.msra.mxu0 %v4640
    %7585 = vmatpush.msra.mxu0 %v4636
    %7586 = vmatmul.f32.gmra.mxu0 %v6312
    %v7587 = vpop.f32.mrf.mxu0
    %v7588 = vadd.f32 %v7568, %v7587
    %7589 = vdwg.mxu0
    %7590 = vmatpush.msra.mxu0 %v4760
    %7591 = vmatpush.msra.mxu0 %v4756
    %7592 = vmatpush.msra.mxu0 %v4752
    %7593 = vmatpush.msra.mxu0 %v4748
    %7594 = vmatpush.msra.mxu0 %v4744
    %7595 = vmatpush.msra.mxu0 %v4740
    %7596 = vmatpush.msra.mxu0 %v4736
    %7597 = vmatpush.msra.mxu0 %v4732
    %7598 = vmatpush.msra.mxu0 %v4728
    %7599 = vmatpush.msra.mxu0 %v4724
    %7600 = vmatpush.msra.mxu0 %v4720
    %7601 = vmatpush.msra.mxu0 %v4716
    %7602 = vmatpush.msra.mxu0 %v4712
    %7603 = vmatpush.msra.mxu0 %v4708
    %7604 = vmatpush.msra.mxu0 %v4704
    %7605 = vmatpush.msra.mxu0 %v4700
    %7606 = vmatmul.f32.gmra.mxu0 %v6313
    %v7607 = vpop.f32.mrf.mxu0
    %v7608 = vadd.f32 %v7588, %v7607
    %7609 = vdwg.mxu0
    %v7614 = vrot.slane %v6968, 6
    %v7615 = vrot.slane %v7288, 4
    %v7616 = vrot.slane %v7608, 2
    %vm7617 = vcmask 1041408
    %v7618 = vsel %vm7617, %v6648, %v7614
    %vm7619 = vcmask 1045508
    %v7620 = vsel %vm7619, %v7615, %v7616
    %vm7621 = vcmask 1043456
    %v7622 = vsel %vm7621, %v7618, %v7620
    %v7624 = vadd.f32 %v3224, %v7622
    %7625 = vst [vmem:[#allocation2] sm:$0xff] %v7624
    // Predicated region
    $region74: #{tpu_custom_call.1} parent=1 // pred_check
      %p7626 = pneg %p146
    $region75: #{tpu_custom_call.1} parent=1 // pred_check_branch
      %7628 = sbr.rel (%p7626) target = $region77
    $region76: #{tpu_custom_call.1} parent=1 // pred_region
      %v7629 = vld [vmem:[#allocation2] sm:$0xff]
      %v7630 = vld [vmem:[#allocation6] sm:$0xf]
      %v7632 = vperm.slane %v7630, 0
      %v7633 = vperm.slane %v7630, 1
      %v7634 = vperm.slane %v7630, 2
      %v7635 = vperm.slane %v7630, 3
      %v7636 = vrot.slane %v7633, 6
      %v7637 = vrot.slane %v7634, 4
      %v7638 = vrot.slane %v7635, 2
      %v7639 = vsel %vm7617, %v7632, %v7636
      %v7640 = vsel %vm7619, %v7637, %v7638
      %v7641 = vsel %vm7621, %v7639, %v7640
      %v7643 = vadd.f32 %v7629, %v7641
      %v7644 = vld [vmem:[#allocation12] sm:$0xf]
      %v7645 = vadd.f32 %v7644, 1e-05
      %v7646 = vrsqrt.pop %v7645
      %v7647 = vmul.f32 %v7646, %v7645
      %v7648 = vmul.f32 %v7647, %v7646
      %v7649 = vmul.f32 0.5, %v7648
      %v7650 = vsub.f32 1.5, %v7649
      %v7651 = vmul.f32 %v7646, %v7650
      %vm7652 = vweird.f32 %v7645
      %vm7653 = vweird.f32 %v7646
      %vm7654 = vmor %vm7652, %vm7653
      %v7655 = vsel %vm7654, %v7646, %v7651
      %v7656 = vld [vmem:[#allocation11] sm:$0xf]
      %v7658 = vperm.slane %v7656, 0
      %v7659 = vperm.slane %v7656, 1
      %v7660 = vperm.slane %v7656, 2
      %v7661 = vperm.slane %v7656, 3
      %v7662 = vrot.slane %v7659, 6
      %v7663 = vrot.slane %v7660, 4
      %v7664 = vrot.slane %v7661, 2
      %v7665 = vsel %vm7617, %v7658, %v7662
      %v7666 = vsel %vm7619, %v7663, %v7664
      %v7667 = vsel %vm7621, %v7665, %v7666
      %v7669 = vsub.f32 %v7643, %v7667
      %v7671 = vperm.slane %v7655, 0
      %v7672 = vperm.slane %v7655, 1
      %v7673 = vperm.slane %v7655, 2
      %v7674 = vperm.slane %v7655, 3
      %v7675 = vrot.slane %v7672, 6
      %v7676 = vrot.slane %v7673, 4
      %v7677 = vrot.slane %v7674, 2
      %v7678 = vsel %vm7617, %v7671, %v7675
      %v7679 = vsel %vm7619, %v7676, %v7677
      %v7680 = vsel %vm7621, %v7678, %v7679
      %v7682 = vmul.f32 %v7669, %v7680
      %v7683 = vld [vmem:[#allocation8] sm:$0xf]
      %v7685 = vperm.slane %v7683, 0
      %v7686 = vperm.slane %v7683, 1
      %v7687 = vperm.slane %v7683, 2
      %v7688 = vperm.slane %v7683, 3
      %v7689 = vrot.slane %v7686, 6
      %v7690 = vrot.slane %v7687, 4
      %v7691 = vrot.slane %v7688, 2
      %v7692 = vsel %vm7617, %v7685, %v7689
      %v7693 = vsel %vm7619, %v7690, %v7691
      %v7694 = vsel %vm7621, %v7692, %v7693
      %v7696 = vmul.f32 %v7682, %v7694
      %v7697 = vld [vmem:[#allocation9] sm:$0xf]
      %v7699 = vperm.slane %v7697, 0
      %v7700 = vperm.slane %v7697, 1
      %v7701 = vperm.slane %v7697, 2
      %v7702 = vperm.slane %v7697, 3
      %v7703 = vrot.slane %v7700, 6
      %v7704 = vrot.slane %v7701, 4
      %v7705 = vrot.slane %v7702, 2
      %v7706 = vsel %vm7617, %v7699, %v7703
      %v7707 = vsel %vm7619, %v7704, %v7705
      %v7708 = vsel %vm7621, %v7706, %v7707
      %v7710 = vadd.f32 %v7696, %v7708
      %v7711 = vld [vmem:[#allocation14] sm:$0xff]
      %v7712 = vld [vmem:[#allocation14 + $0x8] sm:$0xff]
      %v7713 = vld [vmem:[#allocation14 + $0x10] sm:$0xff]
      %v7714 = vld [vmem:[#allocation14 + $0x18] sm:$0xff]
      %v7715 = vld [vmem:[#allocation14 + $0x20] sm:$0xff]
      %v7716 = vld [vmem:[#allocation14 + $0x28] sm:$0xff]
      %v7717 = vld [vmem:[#allocation14 + $0x30] sm:$0xff]
      %v7718 = vld [vmem:[#allocation14 + $0x38] sm:$0xff]
      %v7719 = vld [vmem:[#allocation14 + $0x40] sm:$0xff]
      %v7720 = vld [vmem:[#allocation14 + $0x48] sm:$0xff]
      %v7721 = vld [vmem:[#allocation14 + $0x50] sm:$0xff]
      %v7722 = vld [vmem:[#allocation14 + $0x58] sm:$0xff]
      %v7723 = vld [vmem:[#allocation14 + $0x60] sm:$0xff]
      %v7724 = vld [vmem:[#allocation14 + $0x68] sm:$0xff]
      %v7725 = vld [vmem:[#allocation14 + $0x70] sm:$0xff]
      %v7726 = vld [vmem:[#allocation14 + $0x78] sm:$0xff]
      %v7727 = vld [vmem:[#allocation14 + $0x80] sm:$0xff]
      %v7728 = vld [vmem:[#allocation14 + $0x88] sm:$0xff]
      %v7729 = vld [vmem:[#allocation14 + $0x90] sm:$0xff]
      %v7730 = vld [vmem:[#allocation14 + $0x98] sm:$0xff]
      %v7731 = vld [vmem:[#allocation14 + $0xa0] sm:$0xff]
      %v7732 = vld [vmem:[#allocation14 + $0xa8] sm:$0xff]
      %v7733 = vld [vmem:[#allocation14 + $0xb0] sm:$0xff]
      %v7734 = vld [vmem:[#allocation14 + $0xb8] sm:$0xff]
      %v7735 = vld [vmem:[#allocation14 + $0xc0] sm:$0xff]
      %v7736 = vld [vmem:[#allocation14 + $0xc8] sm:$0xff]
      %v7737 = vld [vmem:[#allocation14 + $0xd0] sm:$0xff]
      %v7738 = vld [vmem:[#allocation14 + $0xd8] sm:$0xff]
      %v7739 = vld [vmem:[#allocation14 + $0xe0] sm:$0xff]
      %v7740 = vld [vmem:[#allocation14 + $0xe8] sm:$0xff]
      %v7741 = vld [vmem:[#allocation14 + $0xf0] sm:$0xff]
      %v7742 = vld [vmem:[#allocation14 + $0xf8] sm:$0xff]
      %v7743 = vld [vmem:[#allocation14 + $0x100] sm:$0xff]
      %v7744 = vld [vmem:[#allocation14 + $0x108] sm:$0xff]
      %v7745 = vld [vmem:[#allocation14 + $0x110] sm:$0xff]
      %v7746 = vld [vmem:[#allocation14 + $0x118] sm:$0xff]
      %v7747 = vld [vmem:[#allocation14 + $0x120] sm:$0xff]
      %v7748 = vld [vmem:[#allocation14 + $0x128] sm:$0xff]
      %v7749 = vld [vmem:[#allocation14 + $0x130] sm:$0xff]
      %v7750 = vld [vmem:[#allocation14 + $0x138] sm:$0xff]
      %v7751 = vld [vmem:[#allocation14 + $0x140] sm:$0xff]
      %v7752 = vld [vmem:[#allocation14 + $0x148] sm:$0xff]
      %v7753 = vld [vmem:[#allocation14 + $0x150] sm:$0xff]
      %v7754 = vld [vmem:[#allocation14 + $0x158] sm:$0xff]
      %v7755 = vld [vmem:[#allocation14 + $0x160] sm:$0xff]
      %v7756 = vld [vmem:[#allocation14 + $0x168] sm:$0xff]
      %v7757 = vld [vmem:[#allocation14 + $0x170] sm:$0xff]
      %v7758 = vld [vmem:[#allocation14 + $0x178] sm:$0xff]
      %v7759 = vld [vmem:[#allocation14 + $0x180] sm:$0xff]
      %v7760 = vld [vmem:[#allocation14 + $0x188] sm:$0xff]
      %v7761 = vld [vmem:[#allocation14 + $0x190] sm:$0xff]
      %v7762 = vld [vmem:[#allocation14 + $0x198] sm:$0xff]
      %v7763 = vld [vmem:[#allocation14 + $0x1a0] sm:$0xff]
      %v7764 = vld [vmem:[#allocation14 + $0x1a8] sm:$0xff]
      %v7765 = vld [vmem:[#allocation14 + $0x1b0] sm:$0xff]
      %v7766 = vld [vmem:[#allocation14 + $0x1b8] sm:$0xff]
      %v7767 = vld [vmem:[#allocation14 + $0x1c0] sm:$0xff]
      %v7768 = vld [vmem:[#allocation14 + $0x1c8] sm:$0xff]
      %v7769 = vld [vmem:[#allocation14 + $0x1d0] sm:$0xff]
      %v7770 = vld [vmem:[#allocation14 + $0x1d8] sm:$0xff]
      %v7771 = vld [vmem:[#allocation14 + $0x1e0] sm:$0xff]
      %v7772 = vld [vmem:[#allocation14 + $0x1e8] sm:$0xff]
      %v7773 = vld [vmem:[#allocation14 + $0x1f0] sm:$0xff]
      %v7774 = vld [vmem:[#allocation14 + $0x1f8] sm:$0xff]
      %v7775 = vld [vmem:[#allocation15] sm:$0x1]
      %v7777 = vperm.slane %v7775, 0
      %7780 = vst [vmem:[#allocation1] ss:$4 sm:$0xff] %v7710
      %v7781 = vld.sshfl [vmem:[#allocation1] sm:$0xff pattern:$0x73625140]
      %v7782 = vld.sshfl [vmem:[#allocation1 + $0x8] sm:$0xff pattern:$0x73625140]
      %v7783 = vld.sshfl [vmem:[#allocation1 + $0x10] sm:$0xff pattern:$0x73625140]
      %v7784 = vld.sshfl [vmem:[#allocation1 + $0x18] sm:$0xff pattern:$0x73625140]
      %7789 = vmatpush.msra.mxu0 %v7726
      %7790 = vmatpush.msra.mxu0 %v7725
      %7791 = vmatpush.msra.mxu0 %v7724
      %7792 = vmatpush.msra.mxu0 %v7723
      %7793 = vmatpush.msra.mxu0 %v7722
      %7794 = vmatpush.msra.mxu0 %v7721
      %7795 = vmatpush.msra.mxu0 %v7720
      %7796 = vmatpush.msra.mxu0 %v7719
      %7797 = vmatpush.msra.mxu0 %v7718
      %7798 = vmatpush.msra.mxu0 %v7717
      %7799 = vmatpush.msra.mxu0 %v7716
      %7800 = vmatpush.msra.mxu0 %v7715
      %7801 = vmatpush.msra.mxu0 %v7714
      %7802 = vmatpush.msra.mxu0 %v7713
      %7803 = vmatpush.msra.mxu0 %v7712
      %7804 = vmatpush.msra.mxu0 %v7711
      %7805 = vmatmul.f32.gmra.mxu0 %v7781
      %v7806 = vpop.f32.mrf.mxu0
      %v7807 = vadd.f32 %v7777, %v7806
      %7808 = vdwg.mxu0
      %7809 = vmatpush.msra.mxu0 %v7742
      %7810 = vmatpush.msra.mxu0 %v7741
      %7811 = vmatpush.msra.mxu0 %v7740
      %7812 = vmatpush.msra.mxu0 %v7739
      %7813 = vmatpush.msra.mxu0 %v7738
      %7814 = vmatpush.msra.mxu0 %v7737
      %7815 = vmatpush.msra.mxu0 %v7736
      %7816 = vmatpush.msra.mxu0 %v7735
      %7817 = vmatpush.msra.mxu0 %v7734
      %7818 = vmatpush.msra.mxu0 %v7733
      %7819 = vmatpush.msra.mxu0 %v7732
      %7820 = vmatpush.msra.mxu0 %v7731
      %7821 = vmatpush.msra.mxu0 %v7730
      %7822 = vmatpush.msra.mxu0 %v7729
      %7823 = vmatpush.msra.mxu0 %v7728
      %7824 = vmatpush.msra.mxu0 %v7727
      %7825 = vmatmul.f32.gmra.mxu0 %v7782
      %v7826 = vpop.f32.mrf.mxu0
      %v7827 = vadd.f32 %v7807, %v7826
      %7828 = vdwg.mxu0
      %7829 = vmatpush.msra.mxu0 %v7758
      %7830 = vmatpush.msra.mxu0 %v7757
      %7831 = vmatpush.msra.mxu0 %v7756
      %7832 = vmatpush.msra.mxu0 %v7755
      %7833 = vmatpush.msra.mxu0 %v7754
      %7834 = vmatpush.msra.mxu0 %v7753
      %7835 = vmatpush.msra.mxu0 %v7752
      %7836 = vmatpush.msra.mxu0 %v7751
      %7837 = vmatpush.msra.mxu0 %v7750
      %7838 = vmatpush.msra.mxu0 %v7749
      %7839 = vmatpush.msra.mxu0 %v7748
      %7840 = vmatpush.msra.mxu0 %v7747
      %7841 = vmatpush.msra.mxu0 %v7746
      %7842 = vmatpush.msra.mxu0 %v7745
      %7843 = vmatpush.msra.mxu0 %v7744
      %7844 = vmatpush.msra.mxu0 %v7743
      %7845 = vmatmul.f32.gmra.mxu0 %v7783
      %v7846 = vpop.f32.mrf.mxu0
      %v7847 = vadd.f32 %v7827, %v7846
      %7848 = vdwg.mxu0
      %7849 = vmatpush.msra.mxu0 %v7774
      %7850 = vmatpush.msra.mxu0 %v7773
      %7851 = vmatpush.msra.mxu0 %v7772
      %7852 = vmatpush.msra.mxu0 %v7771
      %7853 = vmatpush.msra.mxu0 %v7770
      %7854 = vmatpush.msra.mxu0 %v7769
      %7855 = vmatpush.msra.mxu0 %v7768
      %7856 = vmatpush.msra.mxu0 %v7767
      %7857 = vmatpush.msra.mxu0 %v7766
      %7858 = vmatpush.msra.mxu0 %v7765
      %7859 = vmatpush.msra.mxu0 %v7764
      %7860 = vmatpush.msra.mxu0 %v7763
      %7861 = vmatpush.msra.mxu0 %v7762
      %7862 = vmatpush.msra.mxu0 %v7761
      %7863 = vmatpush.msra.mxu0 %v7760
      %7864 = vmatpush.msra.mxu0 %v7759
      %7865 = vmatmul.f32.gmra.mxu0 %v7784
      %v7866 = vpop.f32.mrf.mxu0
      %v7867 = vadd.f32 %v7847, %v7866
      %7868 = vdwg.mxu0
      %7869 = vst [vmem:[#allocation17] sm:$0x3] %v7867
    $region77: #{tpu_custom_call.1} parent=1 // pred_fallthru
      _
    // Predicated region
    $region78: #{tpu_custom_call.1} parent=1 // pred_check
      _
    $region79: #{tpu_custom_call.1} parent=1 // pred_check_branch
      %7871 = sbr.rel (0) target = $region81
    $region80: #{tpu_custom_call.1} parent=1 // pred_region
      %7873 = vsyncadd [#allocation5], 0
      %s7875 = sshll.u32 [#allocation17], 4
      %s7876 = int_to_ptr.vmem [resolvable:$true] %s7875
      %s7877 = sshll.u32 %s9, 4
      %s7878 = int_to_ptr.hbm [resolvable:$true] %s7877
      %7880 = dma.vmem_to_hbm [thread:$0]  %s7876, 32, %s7878, [#allocation5]
    $region81: #{tpu_custom_call.1} parent=1 // pred_fallthru
      _
    // Predicated region
    $region82: #{tpu_custom_call.1} parent=1 // pred_check
      _
    $region83: #{tpu_custom_call.1} parent=1 // pred_check_branch
      %7882 = sbr.rel (0) target = $region85
    $region84: #{tpu_custom_call.1} parent=1 // pred_region
      %7884 = dma.done [#allocation5], 32
    $region85: #{tpu_custom_call.1} parent=1 // pred_fallthru
      _
    %7885 = vsyncpa [#allocation4], 1
    %7886 = vsyncpa [#allocation7], 1
    %7887 = vsyncpa [#allocation10], 1
    %7888 = vsyncpa [#allocation13], 1
    %7889 = vsyncpa [#allocation16], 1
    %7890 = vsyncpa [#allocation5], 1

</llo_original>
